<compile_context>
chip_gen: v6e
topology: v6e:2x2x1
jax: 0.10.0
libtpu: 0.0.40
codegen_flags: <defaults>
</compile_context>

<pallas_src>
import math

import jax
import jax.numpy as jnp
from jax import lax
from jax.experimental import pallas as pl
from jax.experimental.pallas import tpu as pltpu

# ----------------------- model hyper-parameters (small) -----------------------
BATCH      = 2
SEQ        = 8
EMBED      = 128          # embedding.embed_size == SelfAttention.in_features
NUM_HEADS  = 8
HEAD_DIM   = EMBED // NUM_HEADS
FF_HIDDEN  = 256
NUM_LAYERS = 2
VOCAB      = 50
LN_EPS     = 1e-5

PER_LAYER_PARAMS = 12   # wqh, bqh, wkh, bkh, wvh, bvh, woh, bo, w1, b1, w2, b2


# --------------------------------- kernel ------------------------------------
def _layernorm(y, g, b):
    mean = jnp.mean(y, axis=-1, keepdims=True)
    c = y - mean
    var = jnp.mean(c * c, axis=-1, keepdims=True)
    return c * lax.rsqrt(var + LN_EPS) * g + b


def encoder_stack_kernel(x_ref, *refs):
    """Full NUM_LAYERS encoder stack for one batch element ([1, S, D] block)."""
    o_ref = refs[-1]
    wrefs = refs[:-1]
    gamma = wrefs[-2][...]      # [1, D] f32 (shared LayerNorm)
    beta = wrefs[-1][...]       # [1, D] f32

    x = x_ref[0]                # [S, D] f32

    for layer in range(NUM_LAYERS):        # static unroll over layers
        (wqh, bqh, wkh, bkh, wvh, bvh, woh, bo,
         w1, b1, w2, b2) = wrefs[layer * PER_LAYER_PARAMS:
                                 (layer + 1) * PER_LAYER_PARAMS]

        # --- self attention (masking=False) ---
        xb = jnp.broadcast_to(x.astype(jnp.bfloat16)[None],
                              (NUM_HEADS, SEQ, EMBED))           # [H, S, D]

        # Per-head projections as batched matmuls (head axis = batch dim).
        # 1/sqrt(HEAD_DIM) is already folded into wqh / bqh on the host.
        qh = jnp.einsum('hsd,hdf->hsf', xb, wqh[...],
                        preferred_element_type=jnp.float32) + bqh[...]
        kh = jnp.einsum('hsd,hdf->hsf', xb, wkh[...],
                        preferred_element_type=jnp.float32) + bkh[...]
        vh = jnp.einsum('hsd,hdf->hsf', xb, wvh[...],
                        preferred_element_type=jnp.float32) + bvh[...]

        s = jnp.einsum('hqd,hkd->hqk', qh.astype(jnp.bfloat16),
                       kh.astype(jnp.bfloat16),
                       preferred_element_type=jnp.float32)       # [H, S, S]
        s = s - jnp.max(s, axis=-1, keepdims=True)
        e = jnp.exp(s)
        a = e * pl.reciprocal(jnp.sum(e, axis=-1, keepdims=True), approx=True)

        oh = jnp.einsum('hqk,hkd->hqd', a.astype(jnp.bfloat16),
                        vh.astype(jnp.bfloat16),
                        preferred_element_type=jnp.float32)      # [H, S, Dh]

        # Output projection per head (wo pre-split to [H, Dh, D]) + head sum.
        attn = jnp.einsum('hqd,hde->hqe', oh.astype(jnp.bfloat16), woh[...],
                          preferred_element_type=jnp.float32)    # [H, S, D]
        attn = jnp.sum(attn, axis=0) + bo[...]                   # [S, D]

        # residual + shared LayerNorm (dropout == identity in eval mode)
        x = _layernorm(x + attn, gamma, beta)

        # --- positionwise FF (ReLU after BOTH linears, as in the PyTorch FF) ---
        h1 = jnp.maximum(
            jnp.dot(x.astype(jnp.bfloat16), w1[...],
                    preferred_element_type=jnp.float32) + b1[...], 0.0)
        ff = jnp.maximum(
            jnp.dot(h1.astype(jnp.bfloat16), w2[...],
                    preferred_element_type=jnp.float32) + b2[...], 0.0)

        # residual + shared LayerNorm
        x = _layernorm(x + ff, gamma, beta)

    o_ref[0] = x


# -------------------------- host-side weight prep -----------------------------
def _prep_layer_params(layer):
    """torch-style per-layer params -> per-head bf16 slabs for the kernel."""
    wq, bq, wk, bk, wv, bv, wo, bo, w1, b1, w2, b2 = layer
    scale = 1.0 / math.sqrt(HEAD_DIM)

    def split_out_heads(wm):     # [D, D] -> [H, D, Dh] (head = output slice)
        return wm.reshape(EMBED, NUM_HEADS, HEAD_DIM).transpose(1, 0, 2)

    def split_bias(b_):          # [1, D] -> [H, 1, Dh]
        return b_.reshape(NUM_HEADS, 1, HEAD_DIM)

    wqh = (split_out_heads(wq) * scale).astype(jnp.bfloat16)
    bqh = (split_bias(bq) * scale).astype(jnp.float32)
    wkh = split_out_heads(wk).astype(jnp.bfloat16)
    bkh = split_bias(bk).astype(jnp.float32)
    wvh = split_out_heads(wv).astype(jnp.bfloat16)
    bvh = split_bias(bv).astype(jnp.float32)
    woh = wo.reshape(NUM_HEADS, HEAD_DIM, EMBED).astype(jnp.bfloat16)
    return (wqh, bqh, wkh, bkh, wvh, bvh, woh,
            bo.astype(jnp.float32),
            w1.astype(jnp.bfloat16), b1.astype(jnp.float32),
            w2.astype(jnp.bfloat16), b2.astype(jnp.float32))


# --------------------------------- wrapper ------------------------------------
@jax.jit
def encoder_forward(source, embed_table, layers, ln_params):
    # embedding lookup (glue, plain JAX; Dropout is identity in eval mode)
    x = jnp.take(embed_table, source, axis=0).astype(jnp.float32)   # [B, S, D]
    B, S, D = x.shape

    params = []
    for lp in layers:
        params.extend(_prep_layer_params(lp))
    gamma, beta = ln_params
    params.append(gamma.astype(jnp.float32))
    params.append(beta.astype(jnp.float32))

    # Weights are small and grid-invariant: keep them untiled & VMEM-resident
    # (no per-step pipelining / double buffering).
    weight_specs = [pl.BlockSpec(memory_space=pltpu.MemorySpace.VMEM)
                    for _ in params]

    return pl.pallas_call(
        encoder_stack_kernel,
        out_shape=jax.ShapeDtypeStruct((B, S, D), jnp.float32),
        grid=(B,),
        in_specs=[pl.BlockSpec((1, S, D), lambda b: (b, 0, 0))] + weight_specs,
        out_specs=pl.BlockSpec((1, S, D), lambda b: (b, 0, 0)),
        compiler_params=pltpu.CompilerParams(
            dimension_semantics=("parallel",)),
    )(x, *params)


# --------------------------- plain-JAX reference ------------------------------
def encoder_forward_ref(source, embed_table, layers, ln_params):
    x = jnp.take(embed_table, source, axis=0).astype(jnp.float32)
    g, be = ln_params

    def ln(y):
        m = jnp.mean(y, -1, keepdims=True)
        v_ = jnp.mean((y - m) ** 2, -1, keepdims=True)
        return (y - m) / jnp.sqrt(v_ + LN_EPS) * g + be

    for (wq, bq, wk, bk, wv, bv, wo, bo, w1, b1, w2, b2) in layers:
        B, S, D = x.shape
        q = (x @ wq + bq).reshape(B, S, NUM_HEADS, HEAD_DIM)
        k = (x @ wk + bk).reshape(B, S, NUM_HEADS, HEAD_DIM)
        v = (x @ wv + bv).reshape(B, S, NUM_HEADS, HEAD_DIM)
        qk = jnp.einsum('bqhd,bkhd->bhqk', q, k) / math.sqrt(HEAD_DIM)
        a = jax.nn.softmax(qk, axis=3)
        attn = jnp.einsum('bhqk,bkhd->bqhd', a, v).reshape(B, S, D)
        attn = attn @ wo + bo
        x = ln(x + attn)
        ff = jnp.maximum(jnp.maximum(x @ w1 + b1, 0.0) @ w2 + b2, 0.0)
        x = ln(x + ff)
    return x


# --------------------------------- driver ------------------------------------
def init_params(key):
    def rnd(k, shape, scale=0.05):
        return jax.random.normal(k, shape, dtype=jnp.float32) * scale

    layers = []
    for _ in range(NUM_LAYERS):
        keys = jax.random.split(key, 13)
        key = keys[0]
        wq = rnd(keys[1], (EMBED, EMBED)); bq = rnd(keys[2], (1, EMBED))
        wk = rnd(keys[3], (EMBED, EMBED)); bk = rnd(keys[4], (1, EMBED))
        wv = rnd(keys[5], (EMBED, EMBED)); bv = rnd(keys[6], (1, EMBED))
        wo = rnd(keys[7], (EMBED, EMBED)); bo = rnd(keys[8], (1, EMBED))
        w1 = rnd(keys[9], (EMBED, FF_HIDDEN)); b1 = rnd(keys[10], (1, FF_HIDDEN))
        w2 = rnd(keys[11], (FF_HIDDEN, EMBED)); b2 = rnd(keys[12], (1, EMBED))
        layers.append((wq, bq, wk, bk, wv, bv, wo, bo, w1, b1, w2, b2))

    # single shared LayerNorm (as in the PyTorch module)
    gamma = jnp.ones((1, EMBED), jnp.float32)
    beta = jnp.zeros((1, EMBED), jnp.float32)
    key, ek = jax.random.split(key)
    embed_table = rnd(ek, (VOCAB, EMBED), scale=0.5)
    return layers, (gamma, beta), embed_table, key


if __name__ == "__main__":
    key = jax.random.PRNGKey(0)
    layers, ln_params, embed_table, key = init_params(key)

    key, sk = jax.random.split(key)
    source = jax.random.randint(sk, (BATCH, SEQ), 0, VOCAB, dtype=jnp.int32)

    out = encoder_forward(source, embed_table, layers, ln_params)
    out = jax.block_until_ready(out)

    ref = encoder_forward_ref(source, embed_table, layers, ln_params)
    ref = jax.block_until_ready(ref)

    assert out.shape == (BATCH, SEQ, EMBED)
    max_err = float(jnp.max(jnp.abs(out - ref)))
    # Kernel uses bf16 MXU operands (f32 accumulation) vs. the pure-f32
    # reference, hence the modest tolerance; structural errors are >> 0.1.
    assert jnp.allclose(out, ref, atol=3e-2, rtol=3e-2), max_err
    print("KERNEL_OK")
</pallas_src>

<mosaic_0001>
module attributes {stable_mosaic.version = 11 : i64} {
  func.func @encoder_stack_kernel(%arg0: i32, %arg1: memref<1x8x128xf32, #tpu.memory_space<vmem>>, %arg2: memref<8x128x16xbf16, #tpu.memory_space<vmem>>, %arg3: memref<8x1x16xf32, #tpu.memory_space<vmem>>, %arg4: memref<8x128x16xbf16, #tpu.memory_space<vmem>>, %arg5: memref<8x1x16xf32, #tpu.memory_space<vmem>>, %arg6: memref<8x128x16xbf16, #tpu.memory_space<vmem>>, %arg7: memref<8x1x16xf32, #tpu.memory_space<vmem>>, %arg8: memref<8x16x128xbf16, #tpu.memory_space<vmem>>, %arg9: memref<1x128xf32, #tpu.memory_space<vmem>>, %arg10: memref<128x256xbf16, #tpu.memory_space<vmem>>, %arg11: memref<1x256xf32, #tpu.memory_space<vmem>>, %arg12: memref<256x128xbf16, #tpu.memory_space<vmem>>, %arg13: memref<1x128xf32, #tpu.memory_space<vmem>>, %arg14: memref<8x128x16xbf16, #tpu.memory_space<vmem>>, %arg15: memref<8x1x16xf32, #tpu.memory_space<vmem>>, %arg16: memref<8x128x16xbf16, #tpu.memory_space<vmem>>, %arg17: memref<8x1x16xf32, #tpu.memory_space<vmem>>, %arg18: memref<8x128x16xbf16, #tpu.memory_space<vmem>>, %arg19: memref<8x1x16xf32, #tpu.memory_space<vmem>>, %arg20: memref<8x16x128xbf16, #tpu.memory_space<vmem>>, %arg21: memref<1x128xf32, #tpu.memory_space<vmem>>, %arg22: memref<128x256xbf16, #tpu.memory_space<vmem>>, %arg23: memref<1x256xf32, #tpu.memory_space<vmem>>, %arg24: memref<256x128xbf16, #tpu.memory_space<vmem>>, %arg25: memref<1x128xf32, #tpu.memory_space<vmem>>, %arg26: memref<1x128xf32, #tpu.memory_space<vmem>>, %arg27: memref<1x128xf32, #tpu.memory_space<vmem>>, %arg28: memref<1x8x128xf32, #tpu.memory_space<vmem>>) attributes {dimension_semantics = [#tpu.dimension_semantics<parallel>], iteration_bounds = array<i64: 2>, scalar_prefetch = 0 : i64, scratch_operands = 0 : i64, tpu.core_type = #tpu.core_type<tc>, window_params = [{transform_indices = @transform_0, window_bounds = array<i64: 1, 8, 128>}, {pipeline_mode = #tpu.pipeline_mode<synchronous>, transform_indices = @transform_1, window_bounds = array<i64: 8, 128, 16>}, {pipeline_mode = #tpu.pipeline_mode<synchronous>, transform_indices = @transform_2, window_bounds = array<i64: 8, 1, 16>}, {pipeline_mode = #tpu.pipeline_mode<synchronous>, transform_indices = @transform_3, window_bounds = array<i64: 8, 128, 16>}, {pipeline_mode = #tpu.pipeline_mode<synchronous>, transform_indices = @transform_4, window_bounds = array<i64: 8, 1, 16>}, {pipeline_mode = #tpu.pipeline_mode<synchronous>, transform_indices = @transform_5, window_bounds = array<i64: 8, 128, 16>}, {pipeline_mode = #tpu.pipeline_mode<synchronous>, transform_indices = @transform_6, window_bounds = array<i64: 8, 1, 16>}, {pipeline_mode = #tpu.pipeline_mode<synchronous>, transform_indices = @transform_7, window_bounds = array<i64: 8, 16, 128>}, {pipeline_mode = #tpu.pipeline_mode<synchronous>, transform_indices = @transform_8, window_bounds = array<i64: 1, 128>}, {pipeline_mode = #tpu.pipeline_mode<synchronous>, transform_indices = @transform_9, window_bounds = array<i64: 128, 256>}, {pipeline_mode = #tpu.pipeline_mode<synchronous>, transform_indices = @transform_10, window_bounds = array<i64: 1, 256>}, {pipeline_mode = #tpu.pipeline_mode<synchronous>, transform_indices = @transform_11, window_bounds = array<i64: 256, 128>}, {pipeline_mode = #tpu.pipeline_mode<synchronous>, transform_indices = @transform_12, window_bounds = array<i64: 1, 128>}, {pipeline_mode = #tpu.pipeline_mode<synchronous>, transform_indices = @transform_13, window_bounds = array<i64: 8, 128, 16>}, {pipeline_mode = #tpu.pipeline_mode<synchronous>, transform_indices = @transform_14, window_bounds = array<i64: 8, 1, 16>}, {pipeline_mode = #tpu.pipeline_mode<synchronous>, transform_indices = @transform_15, window_bounds = array<i64: 8, 128, 16>}, {pipeline_mode = #tpu.pipeline_mode<synchronous>, transform_indices = @transform_16, window_bounds = array<i64: 8, 1, 16>}, {pipeline_mode = #tpu.pipeline_mode<synchronous>, transform_indices = @transform_17, window_bounds = array<i64: 8, 128, 16>}, {pipeline_mode = #tpu.pipeline_mode<synchronous>, transform_indices = @transform_18, window_bounds = array<i64: 8, 1, 16>}, {pipeline_mode = #tpu.pipeline_mode<synchronous>, transform_indices = @transform_19, window_bounds = array<i64: 8, 16, 128>}, {pipeline_mode = #tpu.pipeline_mode<synchronous>, transform_indices = @transform_20, window_bounds = array<i64: 1, 128>}, {pipeline_mode = #tpu.pipeline_mode<synchronous>, transform_indices = @transform_21, window_bounds = array<i64: 128, 256>}, {pipeline_mode = #tpu.pipeline_mode<synchronous>, transform_indices = @transform_22, window_bounds = array<i64: 1, 256>}, {pipeline_mode = #tpu.pipeline_mode<synchronous>, transform_indices = @transform_23, window_bounds = array<i64: 256, 128>}, {pipeline_mode = #tpu.pipeline_mode<synchronous>, transform_indices = @transform_24, window_bounds = array<i64: 1, 128>}, {pipeline_mode = #tpu.pipeline_mode<synchronous>, transform_indices = @transform_25, window_bounds = array<i64: 1, 128>}, {pipeline_mode = #tpu.pipeline_mode<synchronous>, transform_indices = @transform_26, window_bounds = array<i64: 1, 128>}, {transform_indices = @transform_27, window_bounds = array<i64: 1, 8, 128>}]} {
    %c0 = arith.constant 0 : index
    %c0_0 = arith.constant 0 : index
    %0 = vector.load %arg26[%c0, %c0_0] : memref<1x128xf32, #tpu.memory_space<vmem>>, vector<1x128xf32>
    %c0_1 = arith.constant 0 : index
    %c0_2 = arith.constant 0 : index
    %1 = vector.load %arg27[%c0_1, %c0_2] : memref<1x128xf32, #tpu.memory_space<vmem>>, vector<1x128xf32>
    %c0_3 = arith.constant 0 : index
    %c0_4 = arith.constant 0 : index
    %c0_5 = arith.constant 0 : index
    %2 = vector.load %arg1[%c0_3, %c0_4, %c0_5] : memref<1x8x128xf32, #tpu.memory_space<vmem>>, vector<1x8x128xf32>
    %3 = vector.shape_cast %2 : vector<1x8x128xf32> to vector<8x128xf32>
    %4 = arith.truncf %3 : vector<8x128xf32> to vector<8x128xbf16>
    %5 = vector.shape_cast %4 : vector<8x128xbf16> to vector<1x8x128xbf16>
    %6 = vector.shape_cast %5 : vector<1x8x128xbf16> to vector<1x8x128xbf16>
    %7 = vector.broadcast %6 : vector<1x8x128xbf16> to vector<8x8x128xbf16>
    %c0_6 = arith.constant 0 : index
    %c0_7 = arith.constant 0 : index
    %c0_8 = arith.constant 0 : index
    %8 = vector.load %arg2[%c0_6, %c0_7, %c0_8] : memref<8x128x16xbf16, #tpu.memory_space<vmem>>, vector<8x128x16xbf16>
    "tpu.trace_start"() <{level = 10 : i32, message = "hsd,hdf->hsf"}> : () -> ()
    %cst = arith.constant dense<0.000000e+00> : vector<8x8x16xf32>
    %9 = tpu.matmul %7, %8, %cst {dimension_numbers = #tpu.dot_dimension_numbers<[2], [1], [1], [2], [0, 0, 0, 1, 1, 2], [0], [0]>} : vector<8x8x128xbf16>, vector<8x128x16xbf16>, vector<8x8x16xf32> -> vector<8x8x16xf32>
    "tpu.trace_stop"() : () -> ()
    %c0_9 = arith.constant 0 : index
    %c0_10 = arith.constant 0 : index
    %c0_11 = arith.constant 0 : index
    %10 = vector.load %arg3[%c0_9, %c0_10, %c0_11] : memref<8x1x16xf32, #tpu.memory_space<vmem>>, vector<8x1x16xf32>
    %11 = vector.broadcast %10 : vector<8x1x16xf32> to vector<8x8x16xf32>
    %12 = arith.addf %9, %11 : vector<8x8x16xf32>
    %c0_12 = arith.constant 0 : index
    %c0_13 = arith.constant 0 : index
    %c0_14 = arith.constant 0 : index
    %13 = vector.load %arg4[%c0_12, %c0_13, %c0_14] : memref<8x128x16xbf16, #tpu.memory_space<vmem>>, vector<8x128x16xbf16>
    "tpu.trace_start"() <{level = 10 : i32, message = "hsd,hdf->hsf"}> : () -> ()
    %cst_15 = arith.constant dense<0.000000e+00> : vector<8x8x16xf32>
    %14 = tpu.matmul %7, %13, %cst_15 {dimension_numbers = #tpu.dot_dimension_numbers<[2], [1], [1], [2], [0, 0, 0, 1, 1, 2], [0], [0]>} : vector<8x8x128xbf16>, vector<8x128x16xbf16>, vector<8x8x16xf32> -> vector<8x8x16xf32>
    "tpu.trace_stop"() : () -> ()
    %c0_16 = arith.constant 0 : index
    %c0_17 = arith.constant 0 : index
    %c0_18 = arith.constant 0 : index
    %15 = vector.load %arg5[%c0_16, %c0_17, %c0_18] : memref<8x1x16xf32, #tpu.memory_space<vmem>>, vector<8x1x16xf32>
    %16 = vector.broadcast %15 : vector<8x1x16xf32> to vector<8x8x16xf32>
    %17 = arith.addf %14, %16 : vector<8x8x16xf32>
    %c0_19 = arith.constant 0 : index
    %c0_20 = arith.constant 0 : index
    %c0_21 = arith.constant 0 : index
    %18 = vector.load %arg6[%c0_19, %c0_20, %c0_21] : memref<8x128x16xbf16, #tpu.memory_space<vmem>>, vector<8x128x16xbf16>
    "tpu.trace_start"() <{level = 10 : i32, message = "hsd,hdf->hsf"}> : () -> ()
    %cst_22 = arith.constant dense<0.000000e+00> : vector<8x8x16xf32>
    %19 = tpu.matmul %7, %18, %cst_22 {dimension_numbers = #tpu.dot_dimension_numbers<[2], [1], [1], [2], [0, 0, 0, 1, 1, 2], [0], [0]>} : vector<8x8x128xbf16>, vector<8x128x16xbf16>, vector<8x8x16xf32> -> vector<8x8x16xf32>
    "tpu.trace_stop"() : () -> ()
    %c0_23 = arith.constant 0 : index
    %c0_24 = arith.constant 0 : index
    %c0_25 = arith.constant 0 : index
    %20 = vector.load %arg7[%c0_23, %c0_24, %c0_25] : memref<8x1x16xf32, #tpu.memory_space<vmem>>, vector<8x1x16xf32>
    %21 = vector.broadcast %20 : vector<8x1x16xf32> to vector<8x8x16xf32>
    %22 = arith.addf %19, %21 : vector<8x8x16xf32>
    %23 = arith.truncf %12 : vector<8x8x16xf32> to vector<8x8x16xbf16>
    %24 = arith.truncf %17 : vector<8x8x16xf32> to vector<8x8x16xbf16>
    "tpu.trace_start"() <{level = 10 : i32, message = "hqd,hkd->hqk"}> : () -> ()
    %cst_26 = arith.constant dense<0.000000e+00> : vector<8x8x8xf32>
    %25 = tpu.matmul %23, %24, %cst_26 {dimension_numbers = #tpu.dot_dimension_numbers<[2], [2], [1], [1], [0, 0, 0, 1, 1, 1], [0], [0]>} : vector<8x8x16xbf16>, vector<8x8x16xbf16>, vector<8x8x8xf32> -> vector<8x8x8xf32>
    "tpu.trace_stop"() : () -> ()
    %cst_27 = arith.constant dense<0xFF800000> : vector<8x8xf32>
    %26 = vector.multi_reduction <maximumf>, %25, %cst_27 [2] : vector<8x8x8xf32> to vector<8x8xf32>
    %27 = vector.shape_cast %26 : vector<8x8xf32> to vector<8x8x1xf32>
    %28 = vector.broadcast %27 : vector<8x8x1xf32> to vector<8x8x8xf32>
    %29 = arith.subf %25, %28 : vector<8x8x8xf32>
    %30 = math.exp %29 : vector<8x8x8xf32>
    %cst_28 = arith.constant dense<0.000000e+00> : vector<8x8xf32>
    %31 = vector.multi_reduction <add>, %30, %cst_28 [2] : vector<8x8x8xf32> to vector<8x8xf32>
    %32 = vector.shape_cast %31 : vector<8x8xf32> to vector<8x8x1xf32>
    %33 = tpu.reciprocal %32 {approx = true} : vector<8x8x1xf32> -> vector<8x8x1xf32>
    %34 = vector.broadcast %33 : vector<8x8x1xf32> to vector<8x8x8xf32>
    %35 = arith.mulf %30, %34 : vector<8x8x8xf32>
    %36 = arith.truncf %35 : vector<8x8x8xf32> to vector<8x8x8xbf16>
    %37 = arith.truncf %22 : vector<8x8x16xf32> to vector<8x8x16xbf16>
    "tpu.trace_start"() <{level = 10 : i32, message = "hqk,hkd->hqd"}> : () -> ()
    %cst_29 = arith.constant dense<0.000000e+00> : vector<8x8x16xf32>
    %38 = tpu.matmul %36, %37, %cst_29 {dimension_numbers = #tpu.dot_dimension_numbers<[2], [1], [1], [2], [0, 0, 0, 1, 1, 2], [0], [0]>} : vector<8x8x8xbf16>, vector<8x8x16xbf16>, vector<8x8x16xf32> -> vector<8x8x16xf32>
    "tpu.trace_stop"() : () -> ()
    %39 = arith.truncf %38 : vector<8x8x16xf32> to vector<8x8x16xbf16>
    %c0_30 = arith.constant 0 : index
    %c0_31 = arith.constant 0 : index
    %c0_32 = arith.constant 0 : index
    %40 = vector.load %arg8[%c0_30, %c0_31, %c0_32] : memref<8x16x128xbf16, #tpu.memory_space<vmem>>, vector<8x16x128xbf16>
    "tpu.trace_start"() <{level = 10 : i32, message = "hqd,hde->hqe"}> : () -> ()
    %cst_33 = arith.constant dense<0.000000e+00> : vector<8x8x128xf32>
    %41 = tpu.matmul %39, %40, %cst_33 {dimension_numbers = #tpu.dot_dimension_numbers<[2], [1], [1], [2], [0, 0, 0, 1, 1, 2], [0], [0]>} : vector<8x8x16xbf16>, vector<8x16x128xbf16>, vector<8x8x128xf32> -> vector<8x8x128xf32>
    "tpu.trace_stop"() : () -> ()
    %cst_34 = arith.constant dense<0.000000e+00> : vector<8x128xf32>
    %42 = vector.multi_reduction <add>, %41, %cst_34 [0] : vector<8x8x128xf32> to vector<8x128xf32>
    %c0_35 = arith.constant 0 : index
    %c0_36 = arith.constant 0 : index
    %43 = vector.load %arg9[%c0_35, %c0_36] : memref<1x128xf32, #tpu.memory_space<vmem>>, vector<1x128xf32>
    %44 = vector.broadcast %43 : vector<1x128xf32> to vector<8x128xf32>
    %45 = arith.addf %42, %44 : vector<8x128xf32>
    %46 = arith.addf %3, %45 : vector<8x128xf32>
    %cst_37 = arith.constant dense<0.000000e+00> : vector<8xf32>
    %47 = vector.multi_reduction <add>, %46, %cst_37 [1] : vector<8x128xf32> to vector<8xf32>
    %48 = vector.shape_cast %47 : vector<8xf32> to vector<8x1xf32>
    %cst_38 = arith.constant 1.280000e+02 : f32
    %49 = vector.broadcast %cst_38 : f32 to vector<8x1xf32>
    %50 = arith.divf %48, %49 : vector<8x1xf32>
    %51 = vector.broadcast %50 : vector<8x1xf32> to vector<8x128xf32>
    %52 = arith.subf %46, %51 : vector<8x128xf32>
    %53 = arith.mulf %52, %52 : vector<8x128xf32>
    %cst_39 = arith.constant dense<0.000000e+00> : vector<8xf32>
    %54 = vector.multi_reduction <add>, %53, %cst_39 [1] : vector<8x128xf32> to vector<8xf32>
    %55 = vector.shape_cast %54 : vector<8xf32> to vector<8x1xf32>
    %cst_40 = arith.constant 1.280000e+02 : f32
    %56 = vector.broadcast %cst_40 : f32 to vector<8x1xf32>
    %57 = arith.divf %55, %56 : vector<8x1xf32>
    %cst_41 = arith.constant 9.99999974E-6 : f32
    %58 = vector.broadcast %cst_41 : f32 to vector<8x1xf32>
    %59 = arith.addf %57, %58 : vector<8x1xf32>
    %60 = math.rsqrt %59 : vector<8x1xf32>
    %61 = vector.broadcast %60 : vector<8x1xf32> to vector<8x128xf32>
    %62 = arith.mulf %52, %61 : vector<8x128xf32>
    %63 = vector.broadcast %0 : vector<1x128xf32> to vector<8x128xf32>
    %64 = arith.mulf %62, %63 : vector<8x128xf32>
    %65 = vector.broadcast %1 : vector<1x128xf32> to vector<8x128xf32>
    %66 = arith.addf %64, %65 : vector<8x128xf32>
    %67 = arith.truncf %66 : vector<8x128xf32> to vector<8x128xbf16>
    %c0_42 = arith.constant 0 : index
    %c0_43 = arith.constant 0 : index
    %68 = vector.load %arg10[%c0_42, %c0_43] : memref<128x256xbf16, #tpu.memory_space<vmem>>, vector<128x256xbf16>
    %cst_44 = arith.constant dense<0.000000e+00> : vector<8x256xf32>
    %69 = tpu.matmul %67, %68, %cst_44 {dimension_numbers = #tpu.dot_dimension_numbers<[1], [0], [0], [1], [0, 0, 1, 1], [], []>} : vector<8x128xbf16>, vector<128x256xbf16>, vector<8x256xf32> -> vector<8x256xf32>
    %c0_45 = arith.constant 0 : index
    %c0_46 = arith.constant 0 : index
    %70 = vector.load %arg11[%c0_45, %c0_46] : memref<1x256xf32, #tpu.memory_space<vmem>>, vector<1x256xf32>
    %71 = vector.broadcast %70 : vector<1x256xf32> to vector<8x256xf32>
    %72 = arith.addf %69, %71 : vector<8x256xf32>
    %cst_47 = arith.constant 0.000000e+00 : f32
    %73 = vector.broadcast %cst_47 : f32 to vector<8x256xf32>
    %74 = arith.maximumf %72, %73 : vector<8x256xf32>
    %75 = arith.truncf %74 : vector<8x256xf32> to vector<8x256xbf16>
    %c0_48 = arith.constant 0 : index
    %c0_49 = arith.constant 0 : index
    %76 = vector.load %arg12[%c0_48, %c0_49] : memref<256x128xbf16, #tpu.memory_space<vmem>>, vector<256x128xbf16>
    %cst_50 = arith.constant dense<0.000000e+00> : vector<8x128xf32>
    %77 = tpu.matmul %75, %76, %cst_50 {dimension_numbers = #tpu.dot_dimension_numbers<[1], [0], [0], [1], [0, 0, 1, 1], [], []>} : vector<8x256xbf16>, vector<256x128xbf16>, vector<8x128xf32> -> vector<8x128xf32>
    %c0_51 = arith.constant 0 : index
    %c0_52 = arith.constant 0 : index
    %78 = vector.load %arg13[%c0_51, %c0_52] : memref<1x128xf32, #tpu.memory_space<vmem>>, vector<1x128xf32>
    %79 = vector.broadcast %78 : vector<1x128xf32> to vector<8x128xf32>
    %80 = arith.addf %77, %79 : vector<8x128xf32>
    %cst_53 = arith.constant 0.000000e+00 : f32
    %81 = vector.broadcast %cst_53 : f32 to vector<8x128xf32>
    %82 = arith.maximumf %80, %81 : vector<8x128xf32>
    %83 = arith.addf %66, %82 : vector<8x128xf32>
    %cst_54 = arith.constant dense<0.000000e+00> : vector<8xf32>
    %84 = vector.multi_reduction <add>, %83, %cst_54 [1] : vector<8x128xf32> to vector<8xf32>
    %85 = vector.shape_cast %84 : vector<8xf32> to vector<8x1xf32>
    %cst_55 = arith.constant 1.280000e+02 : f32
    %86 = vector.broadcast %cst_55 : f32 to vector<8x1xf32>
    %87 = arith.divf %85, %86 : vector<8x1xf32>
    %88 = vector.broadcast %87 : vector<8x1xf32> to vector<8x128xf32>
    %89 = arith.subf %83, %88 : vector<8x128xf32>
    %90 = arith.mulf %89, %89 : vector<8x128xf32>
    %cst_56 = arith.constant dense<0.000000e+00> : vector<8xf32>
    %91 = vector.multi_reduction <add>, %90, %cst_56 [1] : vector<8x128xf32> to vector<8xf32>
    %92 = vector.shape_cast %91 : vector<8xf32> to vector<8x1xf32>
    %cst_57 = arith.constant 1.280000e+02 : f32
    %93 = vector.broadcast %cst_57 : f32 to vector<8x1xf32>
    %94 = arith.divf %92, %93 : vector<8x1xf32>
    %cst_58 = arith.constant 9.99999974E-6 : f32
    %95 = vector.broadcast %cst_58 : f32 to vector<8x1xf32>
    %96 = arith.addf %94, %95 : vector<8x1xf32>
    %97 = math.rsqrt %96 : vector<8x1xf32>
    %98 = vector.broadcast %97 : vector<8x1xf32> to vector<8x128xf32>
    %99 = arith.mulf %89, %98 : vector<8x128xf32>
    %100 = vector.broadcast %0 : vector<1x128xf32> to vector<8x128xf32>
    %101 = arith.mulf %99, %100 : vector<8x128xf32>
    %102 = vector.broadcast %1 : vector<1x128xf32> to vector<8x128xf32>
    %103 = arith.addf %101, %102 : vector<8x128xf32>
    %104 = arith.truncf %103 : vector<8x128xf32> to vector<8x128xbf16>
    %105 = vector.shape_cast %104 : vector<8x128xbf16> to vector<1x8x128xbf16>
    %106 = vector.shape_cast %105 : vector<1x8x128xbf16> to vector<1x8x128xbf16>
    %107 = vector.broadcast %106 : vector<1x8x128xbf16> to vector<8x8x128xbf16>
    %c0_59 = arith.constant 0 : index
    %c0_60 = arith.constant 0 : index
    %c0_61 = arith.constant 0 : index
    %108 = vector.load %arg14[%c0_59, %c0_60, %c0_61] : memref<8x128x16xbf16, #tpu.memory_space<vmem>>, vector<8x128x16xbf16>
    "tpu.trace_start"() <{level = 10 : i32, message = "hsd,hdf->hsf"}> : () -> ()
    %cst_62 = arith.constant dense<0.000000e+00> : vector<8x8x16xf32>
    %109 = tpu.matmul %107, %108, %cst_62 {dimension_numbers = #tpu.dot_dimension_numbers<[2], [1], [1], [2], [0, 0, 0, 1, 1, 2], [0], [0]>} : vector<8x8x128xbf16>, vector<8x128x16xbf16>, vector<8x8x16xf32> -> vector<8x8x16xf32>
    "tpu.trace_stop"() : () -> ()
    %c0_63 = arith.constant 0 : index
    %c0_64 = arith.constant 0 : index
    %c0_65 = arith.constant 0 : index
    %110 = vector.load %arg15[%c0_63, %c0_64, %c0_65] : memref<8x1x16xf32, #tpu.memory_space<vmem>>, vector<8x1x16xf32>
    %111 = vector.broadcast %110 : vector<8x1x16xf32> to vector<8x8x16xf32>
    %112 = arith.addf %109, %111 : vector<8x8x16xf32>
    %c0_66 = arith.constant 0 : index
    %c0_67 = arith.constant 0 : index
    %c0_68 = arith.constant 0 : index
    %113 = vector.load %arg16[%c0_66, %c0_67, %c0_68] : memref<8x128x16xbf16, #tpu.memory_space<vmem>>, vector<8x128x16xbf16>
    "tpu.trace_start"() <{level = 10 : i32, message = "hsd,hdf->hsf"}> : () -> ()
    %cst_69 = arith.constant dense<0.000000e+00> : vector<8x8x16xf32>
    %114 = tpu.matmul %107, %113, %cst_69 {dimension_numbers = #tpu.dot_dimension_numbers<[2], [1], [1], [2], [0, 0, 0, 1, 1, 2], [0], [0]>} : vector<8x8x128xbf16>, vector<8x128x16xbf16>, vector<8x8x16xf32> -> vector<8x8x16xf32>
    "tpu.trace_stop"() : () -> ()
    %c0_70 = arith.constant 0 : index
    %c0_71 = arith.constant 0 : index
    %c0_72 = arith.constant 0 : index
    %115 = vector.load %arg17[%c0_70, %c0_71, %c0_72] : memref<8x1x16xf32, #tpu.memory_space<vmem>>, vector<8x1x16xf32>
    %116 = vector.broadcast %115 : vector<8x1x16xf32> to vector<8x8x16xf32>
    %117 = arith.addf %114, %116 : vector<8x8x16xf32>
    %c0_73 = arith.constant 0 : index
    %c0_74 = arith.constant 0 : index
    %c0_75 = arith.constant 0 : index
    %118 = vector.load %arg18[%c0_73, %c0_74, %c0_75] : memref<8x128x16xbf16, #tpu.memory_space<vmem>>, vector<8x128x16xbf16>
    "tpu.trace_start"() <{level = 10 : i32, message = "hsd,hdf->hsf"}> : () -> ()
    %cst_76 = arith.constant dense<0.000000e+00> : vector<8x8x16xf32>
    %119 = tpu.matmul %107, %118, %cst_76 {dimension_numbers = #tpu.dot_dimension_numbers<[2], [1], [1], [2], [0, 0, 0, 1, 1, 2], [0], [0]>} : vector<8x8x128xbf16>, vector<8x128x16xbf16>, vector<8x8x16xf32> -> vector<8x8x16xf32>
    "tpu.trace_stop"() : () -> ()
    %c0_77 = arith.constant 0 : index
    %c0_78 = arith.constant 0 : index
    %c0_79 = arith.constant 0 : index
    %120 = vector.load %arg19[%c0_77, %c0_78, %c0_79] : memref<8x1x16xf32, #tpu.memory_space<vmem>>, vector<8x1x16xf32>
    %121 = vector.broadcast %120 : vector<8x1x16xf32> to vector<8x8x16xf32>
    %122 = arith.addf %119, %121 : vector<8x8x16xf32>
    %123 = arith.truncf %112 : vector<8x8x16xf32> to vector<8x8x16xbf16>
    %124 = arith.truncf %117 : vector<8x8x16xf32> to vector<8x8x16xbf16>
    "tpu.trace_start"() <{level = 10 : i32, message = "hqd,hkd->hqk"}> : () -> ()
    %cst_80 = arith.constant dense<0.000000e+00> : vector<8x8x8xf32>
    %125 = tpu.matmul %123, %124, %cst_80 {dimension_numbers = #tpu.dot_dimension_numbers<[2], [2], [1], [1], [0, 0, 0, 1, 1, 1], [0], [0]>} : vector<8x8x16xbf16>, vector<8x8x16xbf16>, vector<8x8x8xf32> -> vector<8x8x8xf32>
    "tpu.trace_stop"() : () -> ()
    %cst_81 = arith.constant dense<0xFF800000> : vector<8x8xf32>
    %126 = vector.multi_reduction <maximumf>, %125, %cst_81 [2] : vector<8x8x8xf32> to vector<8x8xf32>
    %127 = vector.shape_cast %126 : vector<8x8xf32> to vector<8x8x1xf32>
    %128 = vector.broadcast %127 : vector<8x8x1xf32> to vector<8x8x8xf32>
    %129 = arith.subf %125, %128 : vector<8x8x8xf32>
    %130 = math.exp %129 : vector<8x8x8xf32>
    %cst_82 = arith.constant dense<0.000000e+00> : vector<8x8xf32>
    %131 = vector.multi_reduction <add>, %130, %cst_82 [2] : vector<8x8x8xf32> to vector<8x8xf32>
    %132 = vector.shape_cast %131 : vector<8x8xf32> to vector<8x8x1xf32>
    %133 = tpu.reciprocal %132 {approx = true} : vector<8x8x1xf32> -> vector<8x8x1xf32>
    %134 = vector.broadcast %133 : vector<8x8x1xf32> to vector<8x8x8xf32>
    %135 = arith.mulf %130, %134 : vector<8x8x8xf32>
    %136 = arith.truncf %135 : vector<8x8x8xf32> to vector<8x8x8xbf16>
    %137 = arith.truncf %122 : vector<8x8x16xf32> to vector<8x8x16xbf16>
    "tpu.trace_start"() <{level = 10 : i32, message = "hqk,hkd->hqd"}> : () -> ()
    %cst_83 = arith.constant dense<0.000000e+00> : vector<8x8x16xf32>
    %138 = tpu.matmul %136, %137, %cst_83 {dimension_numbers = #tpu.dot_dimension_numbers<[2], [1], [1], [2], [0, 0, 0, 1, 1, 2], [0], [0]>} : vector<8x8x8xbf16>, vector<8x8x16xbf16>, vector<8x8x16xf32> -> vector<8x8x16xf32>
    "tpu.trace_stop"() : () -> ()
    %139 = arith.truncf %138 : vector<8x8x16xf32> to vector<8x8x16xbf16>
    %c0_84 = arith.constant 0 : index
    %c0_85 = arith.constant 0 : index
    %c0_86 = arith.constant 0 : index
    %140 = vector.load %arg20[%c0_84, %c0_85, %c0_86] : memref<8x16x128xbf16, #tpu.memory_space<vmem>>, vector<8x16x128xbf16>
    "tpu.trace_start"() <{level = 10 : i32, message = "hqd,hde->hqe"}> : () -> ()
    %cst_87 = arith.constant dense<0.000000e+00> : vector<8x8x128xf32>
    %141 = tpu.matmul %139, %140, %cst_87 {dimension_numbers = #tpu.dot_dimension_numbers<[2], [1], [1], [2], [0, 0, 0, 1, 1, 2], [0], [0]>} : vector<8x8x16xbf16>, vector<8x16x128xbf16>, vector<8x8x128xf32> -> vector<8x8x128xf32>
    "tpu.trace_stop"() : () -> ()
    %cst_88 = arith.constant dense<0.000000e+00> : vector<8x128xf32>
    %142 = vector.multi_reduction <add>, %141, %cst_88 [0] : vector<8x8x128xf32> to vector<8x128xf32>
    %c0_89 = arith.constant 0 : index
    %c0_90 = arith.constant 0 : index
    %143 = vector.load %arg21[%c0_89, %c0_90] : memref<1x128xf32, #tpu.memory_space<vmem>>, vector<1x128xf32>
    %144 = vector.broadcast %143 : vector<1x128xf32> to vector<8x128xf32>
    %145 = arith.addf %142, %144 : vector<8x128xf32>
    %146 = arith.addf %103, %145 : vector<8x128xf32>
    %cst_91 = arith.constant dense<0.000000e+00> : vector<8xf32>
    %147 = vector.multi_reduction <add>, %146, %cst_91 [1] : vector<8x128xf32> to vector<8xf32>
    %148 = vector.shape_cast %147 : vector<8xf32> to vector<8x1xf32>
    %cst_92 = arith.constant 1.280000e+02 : f32
    %149 = vector.broadcast %cst_92 : f32 to vector<8x1xf32>
    %150 = arith.divf %148, %149 : vector<8x1xf32>
    %151 = vector.broadcast %150 : vector<8x1xf32> to vector<8x128xf32>
    %152 = arith.subf %146, %151 : vector<8x128xf32>
    %153 = arith.mulf %152, %152 : vector<8x128xf32>
    %cst_93 = arith.constant dense<0.000000e+00> : vector<8xf32>
    %154 = vector.multi_reduction <add>, %153, %cst_93 [1] : vector<8x128xf32> to vector<8xf32>
    %155 = vector.shape_cast %154 : vector<8xf32> to vector<8x1xf32>
    %cst_94 = arith.constant 1.280000e+02 : f32
    %156 = vector.broadcast %cst_94 : f32 to vector<8x1xf32>
    %157 = arith.divf %155, %156 : vector<8x1xf32>
    %cst_95 = arith.constant 9.99999974E-6 : f32
    %158 = vector.broadcast %cst_95 : f32 to vector<8x1xf32>
    %159 = arith.addf %157, %158 : vector<8x1xf32>
    %160 = math.rsqrt %159 : vector<8x1xf32>
    %161 = vector.broadcast %160 : vector<8x1xf32> to vector<8x128xf32>
    %162 = arith.mulf %152, %161 : vector<8x128xf32>
    %163 = vector.broadcast %0 : vector<1x128xf32> to vector<8x128xf32>
    %164 = arith.mulf %162, %163 : vector<8x128xf32>
    %165 = vector.broadcast %1 : vector<1x128xf32> to vector<8x128xf32>
    %166 = arith.addf %164, %165 : vector<8x128xf32>
    %167 = arith.truncf %166 : vector<8x128xf32> to vector<8x128xbf16>
    %c0_96 = arith.constant 0 : index
    %c0_97 = arith.constant 0 : index
    %168 = vector.load %arg22[%c0_96, %c0_97] : memref<128x256xbf16, #tpu.memory_space<vmem>>, vector<128x256xbf16>
    %cst_98 = arith.constant dense<0.000000e+00> : vector<8x256xf32>
    %169 = tpu.matmul %167, %168, %cst_98 {dimension_numbers = #tpu.dot_dimension_numbers<[1], [0], [0], [1], [0, 0, 1, 1], [], []>} : vector<8x128xbf16>, vector<128x256xbf16>, vector<8x256xf32> -> vector<8x256xf32>
    %c0_99 = arith.constant 0 : index
    %c0_100 = arith.constant 0 : index
    %170 = vector.load %arg23[%c0_99, %c0_100] : memref<1x256xf32, #tpu.memory_space<vmem>>, vector<1x256xf32>
    %171 = vector.broadcast %170 : vector<1x256xf32> to vector<8x256xf32>
    %172 = arith.addf %169, %171 : vector<8x256xf32>
    %cst_101 = arith.constant 0.000000e+00 : f32
    %173 = vector.broadcast %cst_101 : f32 to vector<8x256xf32>
    %174 = arith.maximumf %172, %173 : vector<8x256xf32>
    %175 = arith.truncf %174 : vector<8x256xf32> to vector<8x256xbf16>
    %c0_102 = arith.constant 0 : index
    %c0_103 = arith.constant 0 : index
    %176 = vector.load %arg24[%c0_102, %c0_103] : memref<256x128xbf16, #tpu.memory_space<vmem>>, vector<256x128xbf16>
    %cst_104 = arith.constant dense<0.000000e+00> : vector<8x128xf32>
    %177 = tpu.matmul %175, %176, %cst_104 {dimension_numbers = #tpu.dot_dimension_numbers<[1], [0], [0], [1], [0, 0, 1, 1], [], []>} : vector<8x256xbf16>, vector<256x128xbf16>, vector<8x128xf32> -> vector<8x128xf32>
    %c0_105 = arith.constant 0 : index
    %c0_106 = arith.constant 0 : index
    %178 = vector.load %arg25[%c0_105, %c0_106] : memref<1x128xf32, #tpu.memory_space<vmem>>, vector<1x128xf32>
    %179 = vector.broadcast %178 : vector<1x128xf32> to vector<8x128xf32>
    %180 = arith.addf %177, %179 : vector<8x128xf32>
    %cst_107 = arith.constant 0.000000e+00 : f32
    %181 = vector.broadcast %cst_107 : f32 to vector<8x128xf32>
    %182 = arith.maximumf %180, %181 : vector<8x128xf32>
    %183 = arith.addf %166, %182 : vector<8x128xf32>
    %cst_108 = arith.constant dense<0.000000e+00> : vector<8xf32>
    %184 = vector.multi_reduction <add>, %183, %cst_108 [1] : vector<8x128xf32> to vector<8xf32>
    %185 = vector.shape_cast %184 : vector<8xf32> to vector<8x1xf32>
    %cst_109 = arith.constant 1.280000e+02 : f32
    %186 = vector.broadcast %cst_109 : f32 to vector<8x1xf32>
    %187 = arith.divf %185, %186 : vector<8x1xf32>
    %188 = vector.broadcast %187 : vector<8x1xf32> to vector<8x128xf32>
    %189 = arith.subf %183, %188 : vector<8x128xf32>
    %190 = arith.mulf %189, %189 : vector<8x128xf32>
    %cst_110 = arith.constant dense<0.000000e+00> : vector<8xf32>
    %191 = vector.multi_reduction <add>, %190, %cst_110 [1] : vector<8x128xf32> to vector<8xf32>
    %192 = vector.shape_cast %191 : vector<8xf32> to vector<8x1xf32>
    %cst_111 = arith.constant 1.280000e+02 : f32
    %193 = vector.broadcast %cst_111 : f32 to vector<8x1xf32>
    %194 = arith.divf %192, %193 : vector<8x1xf32>
    %cst_112 = arith.constant 9.99999974E-6 : f32
    %195 = vector.broadcast %cst_112 : f32 to vector<8x1xf32>
    %196 = arith.addf %194, %195 : vector<8x1xf32>
    %197 = math.rsqrt %196 : vector<8x1xf32>
    %198 = vector.broadcast %197 : vector<8x1xf32> to vector<8x128xf32>
    %199 = arith.mulf %189, %198 : vector<8x128xf32>
    %200 = vector.broadcast %0 : vector<1x128xf32> to vector<8x128xf32>
    %201 = arith.mulf %199, %200 : vector<8x128xf32>
    %202 = vector.broadcast %1 : vector<1x128xf32> to vector<8x128xf32>
    %203 = arith.addf %201, %202 : vector<8x128xf32>
    %c0_113 = arith.constant 0 : index
    %c0_114 = arith.constant 0 : index
    %c0_115 = arith.constant 0 : index
    %204 = vector.load %arg28[%c0_113, %c0_114, %c0_115] : memref<1x8x128xf32, #tpu.memory_space<vmem>>, vector<1x8x128xf32>
    %205 = vector.shape_cast %204 : vector<1x8x128xf32> to vector<8x128xf32>
    %206 = vector.shape_cast %203 : vector<8x128xf32> to vector<1x8x128xf32>
    tpu.vector_store %arg28[%c0_113, %c0_114, %c0_115], %206 {strides = array<i32>} : memref<1x8x128xf32, #tpu.memory_space<vmem>>, vector<1x8x128xf32>,
    return
  }
  func.func @transform_0(%arg0: i32) -> (i32, i32, i32) {
    %c0_i32 = arith.constant 0 : i32
    %c0_i32_0 = arith.constant 0 : i32
    %c0_i32_1 = arith.constant 0 : i32
    return %arg0, %c0_i32, %c0_i32_0 : i32, i32, i32
  }
  func.func @transform_1(%arg0: i32) -> (i32, i32, i32) {
    %c0_i32 = arith.constant 0 : i32
    %c0_i32_0 = arith.constant 0 : i32
    %c0_i32_1 = arith.constant 0 : i32
    %c0_i32_2 = arith.constant 0 : i32
    return %c0_i32, %c0_i32_0, %c0_i32_1 : i32, i32, i32
  }
  func.func @transform_2(%arg0: i32) -> (i32, i32, i32) {
    %c0_i32 = arith.constant 0 : i32
    %c0_i32_0 = arith.constant 0 : i32
    %c0_i32_1 = arith.constant 0 : i32
    %c0_i32_2 = arith.constant 0 : i32
    return %c0_i32, %c0_i32_0, %c0_i32_1 : i32, i32, i32
  }
  func.func @transform_3(%arg0: i32) -> (i32, i32, i32) {
    %c0_i32 = arith.constant 0 : i32
    %c0_i32_0 = arith.constant 0 : i32
    %c0_i32_1 = arith.constant 0 : i32
    %c0_i32_2 = arith.constant 0 : i32
    return %c0_i32, %c0_i32_0, %c0_i32_1 : i32, i32, i32
  }
  func.func @transform_4(%arg0: i32) -> (i32, i32, i32) {
    %c0_i32 = arith.constant 0 : i32
    %c0_i32_0 = arith.constant 0 : i32
    %c0_i32_1 = arith.constant 0 : i32
    %c0_i32_2 = arith.constant 0 : i32
    return %c0_i32, %c0_i32_0, %c0_i32_1 : i32, i32, i32
  }
  func.func @transform_5(%arg0: i32) -> (i32, i32, i32) {
    %c0_i32 = arith.constant 0 : i32
    %c0_i32_0 = arith.constant 0 : i32
    %c0_i32_1 = arith.constant 0 : i32
    %c0_i32_2 = arith.constant 0 : i32
    return %c0_i32, %c0_i32_0, %c0_i32_1 : i32, i32, i32
  }
  func.func @transform_6(%arg0: i32) -> (i32, i32, i32) {
    %c0_i32 = arith.constant 0 : i32
    %c0_i32_0 = arith.constant 0 : i32
    %c0_i32_1 = arith.constant 0 : i32
    %c0_i32_2 = arith.constant 0 : i32
    return %c0_i32, %c0_i32_0, %c0_i32_1 : i32, i32, i32
  }
  func.func @transform_7(%arg0: i32) -> (i32, i32, i32) {
    %c0_i32 = arith.constant 0 : i32
    %c0_i32_0 = arith.constant 0 : i32
    %c0_i32_1 = arith.constant 0 : i32
    %c0_i32_2 = arith.constant 0 : i32
    return %c0_i32, %c0_i32_0, %c0_i32_1 : i32, i32, i32
  }
  func.func @transform_8(%arg0: i32) -> (i32, i32) {
    %c0_i32 = arith.constant 0 : i32
    %c0_i32_0 = arith.constant 0 : i32
    %c0_i32_1 = arith.constant 0 : i32
    return %c0_i32, %c0_i32_0 : i32, i32
  }
  func.func @transform_9(%arg0: i32) -> (i32, i32) {
    %c0_i32 = arith.constant 0 : i32
    %c0_i32_0 = arith.constant 0 : i32
    %c0_i32_1 = arith.constant 0 : i32
    return %c0_i32, %c0_i32_0 : i32, i32
  }
  func.func @transform_10(%arg0: i32) -> (i32, i32) {
    %c0_i32 = arith.constant 0 : i32
    %c0_i32_0 = arith.constant 0 : i32
    %c0_i32_1 = arith.constant 0 : i32
    return %c0_i32, %c0_i32_0 : i32, i32
  }
  func.func @transform_11(%arg0: i32) -> (i32, i32) {
    %c0_i32 = arith.constant 0 : i32
    %c0_i32_0 = arith.constant 0 : i32
    %c0_i32_1 = arith.constant 0 : i32
    return %c0_i32, %c0_i32_0 : i32, i32
  }
  func.func @transform_12(%arg0: i32) -> (i32, i32) {
    %c0_i32 = arith.constant 0 : i32
    %c0_i32_0 = arith.constant 0 : i32
    %c0_i32_1 = arith.constant 0 : i32
    return %c0_i32, %c0_i32_0 : i32, i32
  }
  func.func @transform_13(%arg0: i32) -> (i32, i32, i32) {
    %c0_i32 = arith.constant 0 : i32
    %c0_i32_0 = arith.constant 0 : i32
    %c0_i32_1 = arith.constant 0 : i32
    %c0_i32_2 = arith.constant 0 : i32
    return %c0_i32, %c0_i32_0, %c0_i32_1 : i32, i32, i32
  }
  func.func @transform_14(%arg0: i32) -> (i32, i32, i32) {
    %c0_i32 = arith.constant 0 : i32
    %c0_i32_0 = arith.constant 0 : i32
    %c0_i32_1 = arith.constant 0 : i32
    %c0_i32_2 = arith.constant 0 : i32
    return %c0_i32, %c0_i32_0, %c0_i32_1 : i32, i32, i32
  }
  func.func @transform_15(%arg0: i32) -> (i32, i32, i32) {
    %c0_i32 = arith.constant 0 : i32
    %c0_i32_0 = arith.constant 0 : i32
    %c0_i32_1 = arith.constant 0 : i32
    %c0_i32_2 = arith.constant 0 : i32
    return %c0_i32, %c0_i32_0, %c0_i32_1 : i32, i32, i32
  }
  func.func @transform_16(%arg0: i32) -> (i32, i32, i32) {
    %c0_i32 = arith.constant 0 : i32
    %c0_i32_0 = arith.constant 0 : i32
    %c0_i32_1 = arith.constant 0 : i32
    %c0_i32_2 = arith.constant 0 : i32
    return %c0_i32, %c0_i32_0, %c0_i32_1 : i32, i32, i32
  }
  func.func @transform_17(%arg0: i32) -> (i32, i32, i32) {
    %c0_i32 = arith.constant 0 : i32
    %c0_i32_0 = arith.constant 0 : i32
    %c0_i32_1 = arith.constant 0 : i32
    %c0_i32_2 = arith.constant 0 : i32
    return %c0_i32, %c0_i32_0, %c0_i32_1 : i32, i32, i32
  }
  func.func @transform_18(%arg0: i32) -> (i32, i32, i32) {
    %c0_i32 = arith.constant 0 : i32
    %c0_i32_0 = arith.constant 0 : i32
    %c0_i32_1 = arith.constant 0 : i32
    %c0_i32_2 = arith.constant 0 : i32
    return %c0_i32, %c0_i32_0, %c0_i32_1 : i32, i32, i32
  }
  func.func @transform_19(%arg0: i32) -> (i32, i32, i32) {
    %c0_i32 = arith.constant 0 : i32
    %c0_i32_0 = arith.constant 0 : i32
    %c0_i32_1 = arith.constant 0 : i32
    %c0_i32_2 = arith.constant 0 : i32
    return %c0_i32, %c0_i32_0, %c0_i32_1 : i32, i32, i32
  }
  func.func @transform_20(%arg0: i32) -> (i32, i32) {
    %c0_i32 = arith.constant 0 : i32
    %c0_i32_0 = arith.constant 0 : i32
    %c0_i32_1 = arith.constant 0 : i32
    return %c0_i32, %c0_i32_0 : i32, i32
  }
  func.func @transform_21(%arg0: i32) -> (i32, i32) {
    %c0_i32 = arith.constant 0 : i32
    %c0_i32_0 = arith.constant 0 : i32
    %c0_i32_1 = arith.constant 0 : i32
    return %c0_i32, %c0_i32_0 : i32, i32
  }
  func.func @transform_22(%arg0: i32) -> (i32, i32) {
    %c0_i32 = arith.constant 0 : i32
    %c0_i32_0 = arith.constant 0 : i32
    %c0_i32_1 = arith.constant 0 : i32
    return %c0_i32, %c0_i32_0 : i32, i32
  }
  func.func @transform_23(%arg0: i32) -> (i32, i32) {
    %c0_i32 = arith.constant 0 : i32
    %c0_i32_0 = arith.constant 0 : i32
    %c0_i32_1 = arith.constant 0 : i32
    return %c0_i32, %c0_i32_0 : i32, i32
  }
  func.func @transform_24(%arg0: i32) -> (i32, i32) {
    %c0_i32 = arith.constant 0 : i32
    %c0_i32_0 = arith.constant 0 : i32
    %c0_i32_1 = arith.constant 0 : i32
    return %c0_i32, %c0_i32_0 : i32, i32
  }
  func.func @transform_25(%arg0: i32) -> (i32, i32) {
    %c0_i32 = arith.constant 0 : i32
    %c0_i32_0 = arith.constant 0 : i32
    %c0_i32_1 = arith.constant 0 : i32
    return %c0_i32, %c0_i32_0 : i32, i32
  }
  func.func @transform_26(%arg0: i32) -> (i32, i32) {
    %c0_i32 = arith.constant 0 : i32
    %c0_i32_0 = arith.constant 0 : i32
    %c0_i32_1 = arith.constant 0 : i32
    return %c0_i32, %c0_i32_0 : i32, i32
  }
  func.func @transform_27(%arg0: i32) -> (i32, i32, i32) {
    %c0_i32 = arith.constant 0 : i32
    %c0_i32_0 = arith.constant 0 : i32
    %c0_i32_1 = arith.constant 0 : i32
    return %arg0, %c0_i32, %c0_i32_0 : i32, i32, i32
  }
}

</mosaic_0001>

<llo_original>
// kernel: encoder_forward.1
$region0: #{encoder_forward.1}
  #allocation0 [shape = 'u32[]', space=smem, size = 0x4, offset = 0x4, fixed_abs, tag = 'smem constant byte address 0x4 - core index']
  #allocation1 [shape = 'u32[144,128]{1,0:T(1,128)}', space=vmem, size = 0x12000, scoped, tag = 'internal scratch']
  %s0 = inlined_call_operand.vmem [shape: f32[2,8,128], index: 0, kind: input, shape index: {}]
  %s1 = inlined_call_operand.vmem [shape: bf16[8,128,16], index: 1, kind: input, shape index: {}]
  %s2 = inlined_call_operand.vmem [shape: f32[8,1,16], index: 2, kind: input, shape index: {}]
  %s3 = inlined_call_operand.vmem [shape: bf16[8,128,16], index: 3, kind: input, shape index: {}]
  %s4 = inlined_call_operand.vmem [shape: f32[8,1,16], index: 4, kind: input, shape index: {}]
  %s5 = inlined_call_operand.vmem [shape: bf16[8,128,16], index: 5, kind: input, shape index: {}]
  %s6 = inlined_call_operand.vmem [shape: f32[8,1,16], index: 6, kind: input, shape index: {}]
  %s7 = inlined_call_operand.vmem [shape: bf16[8,16,128], index: 7, kind: input, shape index: {}]
  %s8 = inlined_call_operand.vmem [shape: f32[1,128], index: 8, kind: input, shape index: {}]
  %s9 = inlined_call_operand.vmem [shape: bf16[128,256], index: 9, kind: input, shape index: {}]
  %s10 = inlined_call_operand.vmem [shape: f32[1,256], index: 10, kind: input, shape index: {}]
  %s11 = inlined_call_operand.vmem [shape: bf16[256,128], index: 11, kind: input, shape index: {}]
  %s12 = inlined_call_operand.vmem [shape: f32[1,128], index: 12, kind: input, shape index: {}]
  %s13 = inlined_call_operand.vmem [shape: bf16[8,128,16], index: 13, kind: input, shape index: {}]
  %s14 = inlined_call_operand.vmem [shape: f32[8,1,16], index: 14, kind: input, shape index: {}]
  %s15 = inlined_call_operand.vmem [shape: bf16[8,128,16], index: 15, kind: input, shape index: {}]
  %s16 = inlined_call_operand.vmem [shape: f32[8,1,16], index: 16, kind: input, shape index: {}]
  %s17 = inlined_call_operand.vmem [shape: bf16[8,128,16], index: 17, kind: input, shape index: {}]
  %s18 = inlined_call_operand.vmem [shape: f32[8,1,16], index: 18, kind: input, shape index: {}]
  %s19 = inlined_call_operand.vmem [shape: bf16[8,16,128], index: 19, kind: input, shape index: {}]
  %s20 = inlined_call_operand.vmem [shape: f32[1,128], index: 20, kind: input, shape index: {}]
  %s21 = inlined_call_operand.vmem [shape: bf16[128,256], index: 21, kind: input, shape index: {}]
  %s22 = inlined_call_operand.vmem [shape: f32[1,256], index: 22, kind: input, shape index: {}]
  %s23 = inlined_call_operand.vmem [shape: bf16[256,128], index: 23, kind: input, shape index: {}]
  %s24 = inlined_call_operand.vmem [shape: f32[1,128], index: 24, kind: input, shape index: {}]
  %s25 = inlined_call_operand.vmem [shape: f32[1,128], index: 25, kind: input, shape index: {}]
  %s26 = inlined_call_operand.vmem [shape: f32[1,128], index: 26, kind: input, shape index: {}]
  %s27 = inlined_call_operand.hbm [shape: f32[2,8,128], index: 27, kind: output, shape index: {}]
  %s28 = sld [smem:[#allocation0]]
  $region141: #{encoder_forward.1} parent=0
    _
  %s30 = ssub.s32 1, %s28
  %s31 = scalar_select 0, %s30, %s28
  $region1: #{encoder_forward.1} parent=0
    #allocation2 [shape = 'u8[8192]{0}', space=vmem, size = 0x2000, scoped, tag = 'output window, operand 0']
    #allocation3 [shape = 's32[2]{0}', space=sflag, size = 0x8, scoped, tag = 'scoped memory for encoder_forward.1']
    %32 = vsyncpa [#allocation3], 0
    %s33 = scalar_lea.sflag [#allocation3], 1
    %34 = vsyncpa %s33, 0
    loop: start=0, step=1, limit=4
    $region2: #{encoder_forward.1} parent=1 // loop_pre_header
      _
    $region3: #{encoder_forward.1} parent=1 // loop_header
      %s36 = sphi 0, %s40
      %p37 = scmp.ge.s32.totalorder %s36, 4
      %s46 = sphi 0, %s48
      %s49 = sphi 0, %s46
      %s50 = sphi 0, %s49
      %s66 = sphi 0, %s50
      %s70 = sphi 0, %s70
      %s72 = sphi 0, %s70
      %s73 = sphi 0, %s72
      %s87 = sphi 0, %s73
      %s91 = sphi 0, %s91
      %s93 = sphi 0, %s91
      %s94 = sphi 0, %s93
      %s108 = sphi 0, %s94
      %s112 = sphi 0, %s112
      %s114 = sphi 0, %s112
      %s115 = sphi 0, %s114
      %s129 = sphi 0, %s115
      %s133 = sphi 0, %s133
      %s135 = sphi 0, %s133
      %s136 = sphi 0, %s135
      %s150 = sphi 0, %s136
      %s154 = sphi 0, %s154
      %s156 = sphi 0, %s154
      %s157 = sphi 0, %s156
      %s171 = sphi 0, %s157
      %s175 = sphi 0, %s175
      %s177 = sphi 0, %s175
      %s178 = sphi 0, %s177
      %s192 = sphi 0, %s178
      %s196 = sphi 0, %s196
      %s198 = sphi 0, %s196
      %s199 = sphi 0, %s198
      %s213 = sphi 0, %s199
      %s217 = sphi 0, %s217
      %s219 = sphi 0, %s217
      %s220 = sphi 0, %s219
      %s234 = sphi 0, %s220
      %s238 = sphi 0, %s238
      %s240 = sphi 0, %s238
      %s241 = sphi 0, %s240
      %s255 = sphi 0, %s241
      %s259 = sphi 0, %s259
      %s261 = sphi 0, %s259
      %s262 = sphi 0, %s261
      %s276 = sphi 0, %s262
      %s280 = sphi 0, %s280
      %s282 = sphi 0, %s280
      %s283 = sphi 0, %s282
      %s297 = sphi 0, %s283
      %s301 = sphi 0, %s301
      %s303 = sphi 0, %s301
      %s304 = sphi 0, %s303
      %s318 = sphi 0, %s304
      %s322 = sphi 0, %s322
      %s324 = sphi 0, %s322
      %s325 = sphi 0, %s324
      %s339 = sphi 0, %s325
      %s343 = sphi 0, %s343
      %s345 = sphi 0, %s343
      %s346 = sphi 0, %s345
      %s360 = sphi 0, %s346
      %s364 = sphi 0, %s364
      %s366 = sphi 0, %s364
      %s367 = sphi 0, %s366
      %s381 = sphi 0, %s367
      %s385 = sphi 0, %s385
      %s387 = sphi 0, %s385
      %s388 = sphi 0, %s387
      %s402 = sphi 0, %s388
      %s406 = sphi 0, %s406
      %s408 = sphi 0, %s406
      %s409 = sphi 0, %s408
      %s423 = sphi 0, %s409
      %s427 = sphi 0, %s427
      %s429 = sphi 0, %s427
      %s430 = sphi 0, %s429
      %s444 = sphi 0, %s430
      %s448 = sphi 0, %s448
      %s450 = sphi 0, %s448
      %s451 = sphi 0, %s450
      %s465 = sphi 0, %s451
      %s469 = sphi 0, %s469
      %s471 = sphi 0, %s469
      %s472 = sphi 0, %s471
      %s486 = sphi 0, %s472
      %s490 = sphi 0, %s490
      %s492 = sphi 0, %s490
      %s493 = sphi 0, %s492
      %s507 = sphi 0, %s493
      %s511 = sphi 0, %s511
      %s513 = sphi 0, %s511
      %s514 = sphi 0, %s513
      %s528 = sphi 0, %s514
      %s532 = sphi 0, %s532
      %s534 = sphi 0, %s532
      %s535 = sphi 0, %s534
      %s549 = sphi 0, %s535
      %s553 = sphi 0, %s553
      %s555 = sphi 0, %s553
      %s556 = sphi 0, %s555
      %s570 = sphi 0, %s556
      %s574 = sphi 0, %s574
      %s576 = sphi 0, %s574
      %s577 = sphi 0, %s576
      %s591 = sphi 0, %s577
      %s595 = sphi 0, %s595
      %s597 = sphi 0, %s595
      %s598 = sphi 0, %s597
      %s612 = sphi 0, %s598
      %s618 = sphi 0, %s620
      %s621 = sphi 0, %s618
      %s622 = sphi 0, %s621
      %s638 = sphi 0, %s622
    $region4: #{encoder_forward.1} parent=1 // loop_header_branch
      %39 = sbr.rel (%p37) target = $region8
    $region5: #{encoder_forward.1} parent=1 // loop_body
      %s41 = ssub.s32 %s36, 1
      %s42 = ssub.s32 %s36, 2
      %s43 = sadd.s32 %s36, 1
      %s44 = ssub.s32 %s36, %s43
      %p45 = scmp.eq.s32.totalorder %s44, 0
      %s47 = sadd.s32 %s46, 1
      %s48 = scalar_select %p45, %s46, %s47
      %p51 = pneg %p45
      %p52 = scmp.eq.s32.totalorder %s36, 1
      %p53 = por %p51, %p52
      %p54 = scmp.ne.s32.totalorder %s46, %s49
      %p55 = scmp.eq.s32.totalorder %s36, 0
      %p56 = por %p54, %p55
      %p57 = scmp.ne.s32.totalorder %s46, %s49
      %p58 = scmp.eq.s32.totalorder %s41, 1
      %p59 = por %p57, %p58
      %p60 = scmp.ne.s32.totalorder %s49, %s50
      %p61 = scmp.eq.s32.totalorder %s41, 0
      %p62 = por %p60, %p61
      %p63 = scmp.ne.s32.totalorder %s49, %s50
      %p64 = scmp.eq.s32.totalorder %s42, 1
      %p65 = por %p63, %p64
      %p67 = scmp.ne.s32.totalorder %s50, %s66
      %p68 = scmp.eq.s32.totalorder %s42, 0
      %p69 = por %p67, %p68
      %s71 = sadd.s32 %s70, 1
      %p74 = scmp.eq.s32.totalorder %s36, 1
      %p75 = scmp.ne.s32.totalorder %s70, %s72
      %p76 = scmp.eq.s32.totalorder %s36, 0
      %p77 = por %p75, %p76
      %p78 = scmp.ne.s32.totalorder %s70, %s72
      %p79 = scmp.eq.s32.totalorder %s41, 1
      %p80 = por %p78, %p79
      %p81 = scmp.ne.s32.totalorder %s72, %s73
      %p82 = scmp.eq.s32.totalorder %s41, 0
      %p83 = por %p81, %p82
      %p84 = scmp.ne.s32.totalorder %s72, %s73
      %p85 = scmp.eq.s32.totalorder %s42, 1
      %p86 = por %p84, %p85
      %p88 = scmp.ne.s32.totalorder %s73, %s87
      %p89 = scmp.eq.s32.totalorder %s42, 0
      %p90 = por %p88, %p89
      %s92 = sadd.s32 %s91, 1
      %p95 = scmp.eq.s32.totalorder %s36, 1
      %p96 = scmp.ne.s32.totalorder %s91, %s93
      %p97 = scmp.eq.s32.totalorder %s36, 0
      %p98 = por %p96, %p97
      %p99 = scmp.ne.s32.totalorder %s91, %s93
      %p100 = scmp.eq.s32.totalorder %s41, 1
      %p101 = por %p99, %p100
      %p102 = scmp.ne.s32.totalorder %s93, %s94
      %p103 = scmp.eq.s32.totalorder %s41, 0
      %p104 = por %p102, %p103
      %p105 = scmp.ne.s32.totalorder %s93, %s94
      %p106 = scmp.eq.s32.totalorder %s42, 1
      %p107 = por %p105, %p106
      %p109 = scmp.ne.s32.totalorder %s94, %s108
      %p110 = scmp.eq.s32.totalorder %s42, 0
      %p111 = por %p109, %p110
      %s113 = sadd.s32 %s112, 1
      %p116 = scmp.eq.s32.totalorder %s36, 1
      %p117 = scmp.ne.s32.totalorder %s112, %s114
      %p118 = scmp.eq.s32.totalorder %s36, 0
      %p119 = por %p117, %p118
      %p120 = scmp.ne.s32.totalorder %s112, %s114
      %p121 = scmp.eq.s32.totalorder %s41, 1
      %p122 = por %p120, %p121
      %p123 = scmp.ne.s32.totalorder %s114, %s115
      %p124 = scmp.eq.s32.totalorder %s41, 0
      %p125 = por %p123, %p124
      %p126 = scmp.ne.s32.totalorder %s114, %s115
      %p127 = scmp.eq.s32.totalorder %s42, 1
      %p128 = por %p126, %p127
      %p130 = scmp.ne.s32.totalorder %s115, %s129
      %p131 = scmp.eq.s32.totalorder %s42, 0
      %p132 = por %p130, %p131
      %s134 = sadd.s32 %s133, 1
      %p137 = scmp.eq.s32.totalorder %s36, 1
      %p138 = scmp.ne.s32.totalorder %s133, %s135
      %p139 = scmp.eq.s32.totalorder %s36, 0
      %p140 = por %p138, %p139
      %p141 = scmp.ne.s32.totalorder %s133, %s135
      %p142 = scmp.eq.s32.totalorder %s41, 1
      %p143 = por %p141, %p142
      %p144 = scmp.ne.s32.totalorder %s135, %s136
      %p145 = scmp.eq.s32.totalorder %s41, 0
      %p146 = por %p144, %p145
      %p147 = scmp.ne.s32.totalorder %s135, %s136
      %p148 = scmp.eq.s32.totalorder %s42, 1
      %p149 = por %p147, %p148
      %p151 = scmp.ne.s32.totalorder %s136, %s150
      %p152 = scmp.eq.s32.totalorder %s42, 0
      %p153 = por %p151, %p152
      %s155 = sadd.s32 %s154, 1
      %p158 = scmp.eq.s32.totalorder %s36, 1
      %p159 = scmp.ne.s32.totalorder %s154, %s156
      %p160 = scmp.eq.s32.totalorder %s36, 0
      %p161 = por %p159, %p160
      %p162 = scmp.ne.s32.totalorder %s154, %s156
      %p163 = scmp.eq.s32.totalorder %s41, 1
      %p164 = por %p162, %p163
      %p165 = scmp.ne.s32.totalorder %s156, %s157
      %p166 = scmp.eq.s32.totalorder %s41, 0
      %p167 = por %p165, %p166
      %p168 = scmp.ne.s32.totalorder %s156, %s157
      %p169 = scmp.eq.s32.totalorder %s42, 1
      %p170 = por %p168, %p169
      %p172 = scmp.ne.s32.totalorder %s157, %s171
      %p173 = scmp.eq.s32.totalorder %s42, 0
      %p174 = por %p172, %p173
      %s176 = sadd.s32 %s175, 1
      %p179 = scmp.eq.s32.totalorder %s36, 1
      %p180 = scmp.ne.s32.totalorder %s175, %s177
      %p181 = scmp.eq.s32.totalorder %s36, 0
      %p182 = por %p180, %p181
      %p183 = scmp.ne.s32.totalorder %s175, %s177
      %p184 = scmp.eq.s32.totalorder %s41, 1
      %p185 = por %p183, %p184
      %p186 = scmp.ne.s32.totalorder %s177, %s178
      %p187 = scmp.eq.s32.totalorder %s41, 0
      %p188 = por %p186, %p187
      %p189 = scmp.ne.s32.totalorder %s177, %s178
      %p190 = scmp.eq.s32.totalorder %s42, 1
      %p191 = por %p189, %p190
      %p193 = scmp.ne.s32.totalorder %s178, %s192
      %p194 = scmp.eq.s32.totalorder %s42, 0
      %p195 = por %p193, %p194
      %s197 = sadd.s32 %s196, 1
      %p200 = scmp.eq.s32.totalorder %s36, 1
      %p201 = scmp.ne.s32.totalorder %s196, %s198
      %p202 = scmp.eq.s32.totalorder %s36, 0
      %p203 = por %p201, %p202
      %p204 = scmp.ne.s32.totalorder %s196, %s198
      %p205 = scmp.eq.s32.totalorder %s41, 1
      %p206 = por %p204, %p205
      %p207 = scmp.ne.s32.totalorder %s198, %s199
      %p208 = scmp.eq.s32.totalorder %s41, 0
      %p209 = por %p207, %p208
      %p210 = scmp.ne.s32.totalorder %s198, %s199
      %p211 = scmp.eq.s32.totalorder %s42, 1
      %p212 = por %p210, %p211
      %p214 = scmp.ne.s32.totalorder %s199, %s213
      %p215 = scmp.eq.s32.totalorder %s42, 0
      %p216 = por %p214, %p215
      %s218 = sadd.s32 %s217, 1
      %p221 = scmp.eq.s32.totalorder %s36, 1
      %p222 = scmp.ne.s32.totalorder %s217, %s219
      %p223 = scmp.eq.s32.totalorder %s36, 0
      %p224 = por %p222, %p223
      %p225 = scmp.ne.s32.totalorder %s217, %s219
      %p226 = scmp.eq.s32.totalorder %s41, 1
      %p227 = por %p225, %p226
      %p228 = scmp.ne.s32.totalorder %s219, %s220
      %p229 = scmp.eq.s32.totalorder %s41, 0
      %p230 = por %p228, %p229
      %p231 = scmp.ne.s32.totalorder %s219, %s220
      %p232 = scmp.eq.s32.totalorder %s42, 1
      %p233 = por %p231, %p232
      %p235 = scmp.ne.s32.totalorder %s220, %s234
      %p236 = scmp.eq.s32.totalorder %s42, 0
      %p237 = por %p235, %p236
      %s239 = sadd.s32 %s238, 1
      %p242 = scmp.eq.s32.totalorder %s36, 1
      %p243 = scmp.ne.s32.totalorder %s238, %s240
      %p244 = scmp.eq.s32.totalorder %s36, 0
      %p245 = por %p243, %p244
      %p246 = scmp.ne.s32.totalorder %s238, %s240
      %p247 = scmp.eq.s32.totalorder %s41, 1
      %p248 = por %p246, %p247
      %p249 = scmp.ne.s32.totalorder %s240, %s241
      %p250 = scmp.eq.s32.totalorder %s41, 0
      %p251 = por %p249, %p250
      %p252 = scmp.ne.s32.totalorder %s240, %s241
      %p253 = scmp.eq.s32.totalorder %s42, 1
      %p254 = por %p252, %p253
      %p256 = scmp.ne.s32.totalorder %s241, %s255
      %p257 = scmp.eq.s32.totalorder %s42, 0
      %p258 = por %p256, %p257
      %s260 = sadd.s32 %s259, 1
      %p263 = scmp.eq.s32.totalorder %s36, 1
      %p264 = scmp.ne.s32.totalorder %s259, %s261
      %p265 = scmp.eq.s32.totalorder %s36, 0
      %p266 = por %p264, %p265
      %p267 = scmp.ne.s32.totalorder %s259, %s261
      %p268 = scmp.eq.s32.totalorder %s41, 1
      %p269 = por %p267, %p268
      %p270 = scmp.ne.s32.totalorder %s261, %s262
      %p271 = scmp.eq.s32.totalorder %s41, 0
      %p272 = por %p270, %p271
      %p273 = scmp.ne.s32.totalorder %s261, %s262
      %p274 = scmp.eq.s32.totalorder %s42, 1
      %p275 = por %p273, %p274
      %p277 = scmp.ne.s32.totalorder %s262, %s276
      %p278 = scmp.eq.s32.totalorder %s42, 0
      %p279 = por %p277, %p278
      %s281 = sadd.s32 %s280, 1
      %p284 = scmp.eq.s32.totalorder %s36, 1
      %p285 = scmp.ne.s32.totalorder %s280, %s282
      %p286 = scmp.eq.s32.totalorder %s36, 0
      %p287 = por %p285, %p286
      %p288 = scmp.ne.s32.totalorder %s280, %s282
      %p289 = scmp.eq.s32.totalorder %s41, 1
      %p290 = por %p288, %p289
      %p291 = scmp.ne.s32.totalorder %s282, %s283
      %p292 = scmp.eq.s32.totalorder %s41, 0
      %p293 = por %p291, %p292
      %p294 = scmp.ne.s32.totalorder %s282, %s283
      %p295 = scmp.eq.s32.totalorder %s42, 1
      %p296 = por %p294, %p295
      %p298 = scmp.ne.s32.totalorder %s283, %s297
      %p299 = scmp.eq.s32.totalorder %s42, 0
      %p300 = por %p298, %p299
      %s302 = sadd.s32 %s301, 1
      %p305 = scmp.eq.s32.totalorder %s36, 1
      %p306 = scmp.ne.s32.totalorder %s301, %s303
      %p307 = scmp.eq.s32.totalorder %s36, 0
      %p308 = por %p306, %p307
      %p309 = scmp.ne.s32.totalorder %s301, %s303
      %p310 = scmp.eq.s32.totalorder %s41, 1
      %p311 = por %p309, %p310
      %p312 = scmp.ne.s32.totalorder %s303, %s304
      %p313 = scmp.eq.s32.totalorder %s41, 0
      %p314 = por %p312, %p313
      %p315 = scmp.ne.s32.totalorder %s303, %s304
      %p316 = scmp.eq.s32.totalorder %s42, 1
      %p317 = por %p315, %p316
      %p319 = scmp.ne.s32.totalorder %s304, %s318
      %p320 = scmp.eq.s32.totalorder %s42, 0
      %p321 = por %p319, %p320
      %s323 = sadd.s32 %s322, 1
      %p326 = scmp.eq.s32.totalorder %s36, 1
      %p327 = scmp.ne.s32.totalorder %s322, %s324
      %p328 = scmp.eq.s32.totalorder %s36, 0
      %p329 = por %p327, %p328
      %p330 = scmp.ne.s32.totalorder %s322, %s324
      %p331 = scmp.eq.s32.totalorder %s41, 1
      %p332 = por %p330, %p331
      %p333 = scmp.ne.s32.totalorder %s324, %s325
      %p334 = scmp.eq.s32.totalorder %s41, 0
      %p335 = por %p333, %p334
      %p336 = scmp.ne.s32.totalorder %s324, %s325
      %p337 = scmp.eq.s32.totalorder %s42, 1
      %p338 = por %p336, %p337
      %p340 = scmp.ne.s32.totalorder %s325, %s339
      %p341 = scmp.eq.s32.totalorder %s42, 0
      %p342 = por %p340, %p341
      %s344 = sadd.s32 %s343, 1
      %p347 = scmp.eq.s32.totalorder %s36, 1
      %p348 = scmp.ne.s32.totalorder %s343, %s345
      %p349 = scmp.eq.s32.totalorder %s36, 0
      %p350 = por %p348, %p349
      %p351 = scmp.ne.s32.totalorder %s343, %s345
      %p352 = scmp.eq.s32.totalorder %s41, 1
      %p353 = por %p351, %p352
      %p354 = scmp.ne.s32.totalorder %s345, %s346
      %p355 = scmp.eq.s32.totalorder %s41, 0
      %p356 = por %p354, %p355
      %p357 = scmp.ne.s32.totalorder %s345, %s346
      %p358 = scmp.eq.s32.totalorder %s42, 1
      %p359 = por %p357, %p358
      %p361 = scmp.ne.s32.totalorder %s346, %s360
      %p362 = scmp.eq.s32.totalorder %s42, 0
      %p363 = por %p361, %p362
      %s365 = sadd.s32 %s364, 1
      %p368 = scmp.eq.s32.totalorder %s36, 1
      %p369 = scmp.ne.s32.totalorder %s364, %s366
      %p370 = scmp.eq.s32.totalorder %s36, 0
      %p371 = por %p369, %p370
      %p372 = scmp.ne.s32.totalorder %s364, %s366
      %p373 = scmp.eq.s32.totalorder %s41, 1
      %p374 = por %p372, %p373
      %p375 = scmp.ne.s32.totalorder %s366, %s367
      %p376 = scmp.eq.s32.totalorder %s41, 0
      %p377 = por %p375, %p376
      %p378 = scmp.ne.s32.totalorder %s366, %s367
      %p379 = scmp.eq.s32.totalorder %s42, 1
      %p380 = por %p378, %p379
      %p382 = scmp.ne.s32.totalorder %s367, %s381
      %p383 = scmp.eq.s32.totalorder %s42, 0
      %p384 = por %p382, %p383
      %s386 = sadd.s32 %s385, 1
      %p389 = scmp.eq.s32.totalorder %s36, 1
      %p390 = scmp.ne.s32.totalorder %s385, %s387
      %p391 = scmp.eq.s32.totalorder %s36, 0
      %p392 = por %p390, %p391
      %p393 = scmp.ne.s32.totalorder %s385, %s387
      %p394 = scmp.eq.s32.totalorder %s41, 1
      %p395 = por %p393, %p394
      %p396 = scmp.ne.s32.totalorder %s387, %s388
      %p397 = scmp.eq.s32.totalorder %s41, 0
      %p398 = por %p396, %p397
      %p399 = scmp.ne.s32.totalorder %s387, %s388
      %p400 = scmp.eq.s32.totalorder %s42, 1
      %p401 = por %p399, %p400
      %p403 = scmp.ne.s32.totalorder %s388, %s402
      %p404 = scmp.eq.s32.totalorder %s42, 0
      %p405 = por %p403, %p404
      %s407 = sadd.s32 %s406, 1
      %p410 = scmp.eq.s32.totalorder %s36, 1
      %p411 = scmp.ne.s32.totalorder %s406, %s408
      %p412 = scmp.eq.s32.totalorder %s36, 0
      %p413 = por %p411, %p412
      %p414 = scmp.ne.s32.totalorder %s406, %s408
      %p415 = scmp.eq.s32.totalorder %s41, 1
      %p416 = por %p414, %p415
      %p417 = scmp.ne.s32.totalorder %s408, %s409
      %p418 = scmp.eq.s32.totalorder %s41, 0
      %p419 = por %p417, %p418
      %p420 = scmp.ne.s32.totalorder %s408, %s409
      %p421 = scmp.eq.s32.totalorder %s42, 1
      %p422 = por %p420, %p421
      %p424 = scmp.ne.s32.totalorder %s409, %s423
      %p425 = scmp.eq.s32.totalorder %s42, 0
      %p426 = por %p424, %p425
      %s428 = sadd.s32 %s427, 1
      %p431 = scmp.eq.s32.totalorder %s36, 1
      %p432 = scmp.ne.s32.totalorder %s427, %s429
      %p433 = scmp.eq.s32.totalorder %s36, 0
      %p434 = por %p432, %p433
      %p435 = scmp.ne.s32.totalorder %s427, %s429
      %p436 = scmp.eq.s32.totalorder %s41, 1
      %p437 = por %p435, %p436
      %p438 = scmp.ne.s32.totalorder %s429, %s430
      %p439 = scmp.eq.s32.totalorder %s41, 0
      %p440 = por %p438, %p439
      %p441 = scmp.ne.s32.totalorder %s429, %s430
      %p442 = scmp.eq.s32.totalorder %s42, 1
      %p443 = por %p441, %p442
      %p445 = scmp.ne.s32.totalorder %s430, %s444
      %p446 = scmp.eq.s32.totalorder %s42, 0
      %p447 = por %p445, %p446
      %s449 = sadd.s32 %s448, 1
      %p452 = scmp.eq.s32.totalorder %s36, 1
      %p453 = scmp.ne.s32.totalorder %s448, %s450
      %p454 = scmp.eq.s32.totalorder %s36, 0
      %p455 = por %p453, %p454
      %p456 = scmp.ne.s32.totalorder %s448, %s450
      %p457 = scmp.eq.s32.totalorder %s41, 1
      %p458 = por %p456, %p457
      %p459 = scmp.ne.s32.totalorder %s450, %s451
      %p460 = scmp.eq.s32.totalorder %s41, 0
      %p461 = por %p459, %p460
      %p462 = scmp.ne.s32.totalorder %s450, %s451
      %p463 = scmp.eq.s32.totalorder %s42, 1
      %p464 = por %p462, %p463
      %p466 = scmp.ne.s32.totalorder %s451, %s465
      %p467 = scmp.eq.s32.totalorder %s42, 0
      %p468 = por %p466, %p467
      %s470 = sadd.s32 %s469, 1
      %p473 = scmp.eq.s32.totalorder %s36, 1
      %p474 = scmp.ne.s32.totalorder %s469, %s471
      %p475 = scmp.eq.s32.totalorder %s36, 0
      %p476 = por %p474, %p475
      %p477 = scmp.ne.s32.totalorder %s469, %s471
      %p478 = scmp.eq.s32.totalorder %s41, 1
      %p479 = por %p477, %p478
      %p480 = scmp.ne.s32.totalorder %s471, %s472
      %p481 = scmp.eq.s32.totalorder %s41, 0
      %p482 = por %p480, %p481
      %p483 = scmp.ne.s32.totalorder %s471, %s472
      %p484 = scmp.eq.s32.totalorder %s42, 1
      %p485 = por %p483, %p484
      %p487 = scmp.ne.s32.totalorder %s472, %s486
      %p488 = scmp.eq.s32.totalorder %s42, 0
      %p489 = por %p487, %p488
      %s491 = sadd.s32 %s490, 1
      %p494 = scmp.eq.s32.totalorder %s36, 1
      %p495 = scmp.ne.s32.totalorder %s490, %s492
      %p496 = scmp.eq.s32.totalorder %s36, 0
      %p497 = por %p495, %p496
      %p498 = scmp.ne.s32.totalorder %s490, %s492
      %p499 = scmp.eq.s32.totalorder %s41, 1
      %p500 = por %p498, %p499
      %p501 = scmp.ne.s32.totalorder %s492, %s493
      %p502 = scmp.eq.s32.totalorder %s41, 0
      %p503 = por %p501, %p502
      %p504 = scmp.ne.s32.totalorder %s492, %s493
      %p505 = scmp.eq.s32.totalorder %s42, 1
      %p506 = por %p504, %p505
      %p508 = scmp.ne.s32.totalorder %s493, %s507
      %p509 = scmp.eq.s32.totalorder %s42, 0
      %p510 = por %p508, %p509
      %s512 = sadd.s32 %s511, 1
      %p515 = scmp.eq.s32.totalorder %s36, 1
      %p516 = scmp.ne.s32.totalorder %s511, %s513
      %p517 = scmp.eq.s32.totalorder %s36, 0
      %p518 = por %p516, %p517
      %p519 = scmp.ne.s32.totalorder %s511, %s513
      %p520 = scmp.eq.s32.totalorder %s41, 1
      %p521 = por %p519, %p520
      %p522 = scmp.ne.s32.totalorder %s513, %s514
      %p523 = scmp.eq.s32.totalorder %s41, 0
      %p524 = por %p522, %p523
      %p525 = scmp.ne.s32.totalorder %s513, %s514
      %p526 = scmp.eq.s32.totalorder %s42, 1
      %p527 = por %p525, %p526
      %p529 = scmp.ne.s32.totalorder %s514, %s528
      %p530 = scmp.eq.s32.totalorder %s42, 0
      %p531 = por %p529, %p530
      %s533 = sadd.s32 %s532, 1
      %p536 = scmp.eq.s32.totalorder %s36, 1
      %p537 = scmp.ne.s32.totalorder %s532, %s534
      %p538 = scmp.eq.s32.totalorder %s36, 0
      %p539 = por %p537, %p538
      %p540 = scmp.ne.s32.totalorder %s532, %s534
      %p541 = scmp.eq.s32.totalorder %s41, 1
      %p542 = por %p540, %p541
      %p543 = scmp.ne.s32.totalorder %s534, %s535
      %p544 = scmp.eq.s32.totalorder %s41, 0
      %p545 = por %p543, %p544
      %p546 = scmp.ne.s32.totalorder %s534, %s535
      %p547 = scmp.eq.s32.totalorder %s42, 1
      %p548 = por %p546, %p547
      %p550 = scmp.ne.s32.totalorder %s535, %s549
      %p551 = scmp.eq.s32.totalorder %s42, 0
      %p552 = por %p550, %p551
      %s554 = sadd.s32 %s553, 1
      %p557 = scmp.eq.s32.totalorder %s36, 1
      %p558 = scmp.ne.s32.totalorder %s553, %s555
      %p559 = scmp.eq.s32.totalorder %s36, 0
      %p560 = por %p558, %p559
      %p561 = scmp.ne.s32.totalorder %s553, %s555
      %p562 = scmp.eq.s32.totalorder %s41, 1
      %p563 = por %p561, %p562
      %p564 = scmp.ne.s32.totalorder %s555, %s556
      %p565 = scmp.eq.s32.totalorder %s41, 0
      %p566 = por %p564, %p565
      %p567 = scmp.ne.s32.totalorder %s555, %s556
      %p568 = scmp.eq.s32.totalorder %s42, 1
      %p569 = por %p567, %p568
      %p571 = scmp.ne.s32.totalorder %s556, %s570
      %p572 = scmp.eq.s32.totalorder %s42, 0
      %p573 = por %p571, %p572
      %s575 = sadd.s32 %s574, 1
      %p578 = scmp.eq.s32.totalorder %s36, 1
      %p579 = scmp.ne.s32.totalorder %s574, %s576
      %p580 = scmp.eq.s32.totalorder %s36, 0
      %p581 = por %p579, %p580
      %p582 = scmp.ne.s32.totalorder %s574, %s576
      %p583 = scmp.eq.s32.totalorder %s41, 1
      %p584 = por %p582, %p583
      %p585 = scmp.ne.s32.totalorder %s576, %s577
      %p586 = scmp.eq.s32.totalorder %s41, 0
      %p587 = por %p585, %p586
      %p588 = scmp.ne.s32.totalorder %s576, %s577
      %p589 = scmp.eq.s32.totalorder %s42, 1
      %p590 = por %p588, %p589
      %p592 = scmp.ne.s32.totalorder %s577, %s591
      %p593 = scmp.eq.s32.totalorder %s42, 0
      %p594 = por %p592, %p593
      %s596 = sadd.s32 %s595, 1
      %p599 = scmp.eq.s32.totalorder %s36, 1
      %p600 = scmp.ne.s32.totalorder %s595, %s597
      %p601 = scmp.eq.s32.totalorder %s36, 0
      %p602 = por %p600, %p601
      %p603 = scmp.ne.s32.totalorder %s595, %s597
      %p604 = scmp.eq.s32.totalorder %s41, 1
      %p605 = por %p603, %p604
      %p606 = scmp.ne.s32.totalorder %s597, %s598
      %p607 = scmp.eq.s32.totalorder %s41, 0
      %p608 = por %p606, %p607
      %p609 = scmp.ne.s32.totalorder %s597, %s598
      %p610 = scmp.eq.s32.totalorder %s42, 1
      %p611 = por %p609, %p610
      %p613 = scmp.ne.s32.totalorder %s598, %s612
      %p614 = scmp.eq.s32.totalorder %s42, 0
      %p615 = por %p613, %p614
      %s616 = ssub.s32 %s36, %s43
      %p617 = scmp.eq.s32.totalorder %s616, 0
      %s619 = sadd.s32 %s618, 1
      %s620 = scalar_select %p617, %s618, %s619
      %p623 = pneg %p617
      %p624 = scmp.eq.s32.totalorder %s36, 1
      %p625 = por %p623, %p624
      %p626 = scmp.ne.s32.totalorder %s618, %s621
      %p627 = scmp.eq.s32.totalorder %s36, 0
      %p628 = por %p626, %p627
      %p629 = scmp.ne.s32.totalorder %s618, %s621
      %p630 = scmp.eq.s32.totalorder %s41, 1
      %p631 = por %p629, %p630
      %p632 = scmp.ne.s32.totalorder %s621, %s622
      %p633 = scmp.eq.s32.totalorder %s41, 0
      %p634 = por %p632, %p633
      %p635 = scmp.ne.s32.totalorder %s621, %s622
      %p636 = scmp.eq.s32.totalorder %s42, 1
      %p637 = por %p635, %p636
      %p639 = scmp.ne.s32.totalorder %s622, %s638
      %p640 = scmp.eq.s32.totalorder %s42, 0
      %p641 = por %p639, %p640
      %p642 = scmp.le.s32.totalorder 1, %s36
      %p643 = scmp.lt.s32.totalorder %s36, 3
      %p644 = pnand %p642, %p643
      %p645 = pneg %p644
      // Predicated region
      $region9: #{encoder_forward.1} parent=5 // pred_check
        _
      $region10: #{encoder_forward.1} parent=5 // pred_check_branch
        %647 = sbr.rel (%p644) target = $region12
      $region11: #{encoder_forward.1} parent=5 // pred_region
        %s648 = ssub.s32 %s36, 1
        // Predicated region
        $region13: #{encoder_forward.1} parent=11 // pred_check
          %p649 = pneg %p83
        $region14: #{encoder_forward.1} parent=11 // pred_check_branch
          %651 = sbr.rel (%p649) target = $region16
        $region15: #{encoder_forward.1} parent=11 // pred_region
          _
        $region16: #{encoder_forward.1} parent=11 // pred_fallthru
          _
        // Predicated region
        $region17: #{encoder_forward.1} parent=11 // pred_check
          %p652 = pneg %p104
        $region18: #{encoder_forward.1} parent=11 // pred_check_branch
          %654 = sbr.rel (%p652) target = $region20
        $region19: #{encoder_forward.1} parent=11 // pred_region
          _
        $region20: #{encoder_forward.1} parent=11 // pred_fallthru
          _
        // Predicated region
        $region21: #{encoder_forward.1} parent=11 // pred_check
          %p655 = pneg %p125
        $region22: #{encoder_forward.1} parent=11 // pred_check_branch
          %657 = sbr.rel (%p655) target = $region24
        $region23: #{encoder_forward.1} parent=11 // pred_region
          _
        $region24: #{encoder_forward.1} parent=11 // pred_fallthru
          _
        // Predicated region
        $region25: #{encoder_forward.1} parent=11 // pred_check
          %p658 = pneg %p146
        $region26: #{encoder_forward.1} parent=11 // pred_check_branch
          %660 = sbr.rel (%p658) target = $region28
        $region27: #{encoder_forward.1} parent=11 // pred_region
          _
        $region28: #{encoder_forward.1} parent=11 // pred_fallthru
          _
        // Predicated region
        $region29: #{encoder_forward.1} parent=11 // pred_check
          %p661 = pneg %p167
        $region30: #{encoder_forward.1} parent=11 // pred_check_branch
          %663 = sbr.rel (%p661) target = $region32
        $region31: #{encoder_forward.1} parent=11 // pred_region
          _
        $region32: #{encoder_forward.1} parent=11 // pred_fallthru
          _
        // Predicated region
        $region33: #{encoder_forward.1} parent=11 // pred_check
          %p664 = pneg %p188
        $region34: #{encoder_forward.1} parent=11 // pred_check_branch
          %666 = sbr.rel (%p664) target = $region36
        $region35: #{encoder_forward.1} parent=11 // pred_region
          _
        $region36: #{encoder_forward.1} parent=11 // pred_fallthru
          _
        // Predicated region
        $region37: #{encoder_forward.1} parent=11 // pred_check
          %p667 = pneg %p209
        $region38: #{encoder_forward.1} parent=11 // pred_check_branch
          %669 = sbr.rel (%p667) target = $region40
        $region39: #{encoder_forward.1} parent=11 // pred_region
          _
        $region40: #{encoder_forward.1} parent=11 // pred_fallthru
          _
        // Predicated region
        $region41: #{encoder_forward.1} parent=11 // pred_check
          %p670 = pneg %p230
        $region42: #{encoder_forward.1} parent=11 // pred_check_branch
          %672 = sbr.rel (%p670) target = $region44
        $region43: #{encoder_forward.1} parent=11 // pred_region
          _
        $region44: #{encoder_forward.1} parent=11 // pred_fallthru
          _
        // Predicated region
        $region45: #{encoder_forward.1} parent=11 // pred_check
          %p673 = pneg %p251
        $region46: #{encoder_forward.1} parent=11 // pred_check_branch
          %675 = sbr.rel (%p673) target = $region48
        $region47: #{encoder_forward.1} parent=11 // pred_region
          _
        $region48: #{encoder_forward.1} parent=11 // pred_fallthru
          _
        // Predicated region
        $region49: #{encoder_forward.1} parent=11 // pred_check
          %p676 = pneg %p272
        $region50: #{encoder_forward.1} parent=11 // pred_check_branch
          %678 = sbr.rel (%p676) target = $region52
        $region51: #{encoder_forward.1} parent=11 // pred_region
          _
        $region52: #{encoder_forward.1} parent=11 // pred_fallthru
          _
        // Predicated region
        $region53: #{encoder_forward.1} parent=11 // pred_check
          %p679 = pneg %p293
        $region54: #{encoder_forward.1} parent=11 // pred_check_branch
          %681 = sbr.rel (%p679) target = $region56
        $region55: #{encoder_forward.1} parent=11 // pred_region
          _
        $region56: #{encoder_forward.1} parent=11 // pred_fallthru
          _
        // Predicated region
        $region57: #{encoder_forward.1} parent=11 // pred_check
          %p682 = pneg %p314
        $region58: #{encoder_forward.1} parent=11 // pred_check_branch
          %684 = sbr.rel (%p682) target = $region60
        $region59: #{encoder_forward.1} parent=11 // pred_region
          _
        $region60: #{encoder_forward.1} parent=11 // pred_fallthru
          _
        // Predicated region
        $region61: #{encoder_forward.1} parent=11 // pred_check
          %p685 = pneg %p335
        $region62: #{encoder_forward.1} parent=11 // pred_check_branch
          %687 = sbr.rel (%p685) target = $region64
        $region63: #{encoder_forward.1} parent=11 // pred_region
          _
        $region64: #{encoder_forward.1} parent=11 // pred_fallthru
          _
        // Predicated region
        $region65: #{encoder_forward.1} parent=11 // pred_check
          %p688 = pneg %p356
        $region66: #{encoder_forward.1} parent=11 // pred_check_branch
          %690 = sbr.rel (%p688) target = $region68
        $region67: #{encoder_forward.1} parent=11 // pred_region
          _
        $region68: #{encoder_forward.1} parent=11 // pred_fallthru
          _
        // Predicated region
        $region69: #{encoder_forward.1} parent=11 // pred_check
          %p691 = pneg %p377
        $region70: #{encoder_forward.1} parent=11 // pred_check_branch
          %693 = sbr.rel (%p691) target = $region72
        $region71: #{encoder_forward.1} parent=11 // pred_region
          _
        $region72: #{encoder_forward.1} parent=11 // pred_fallthru
          _
        // Predicated region
        $region73: #{encoder_forward.1} parent=11 // pred_check
          %p694 = pneg %p398
        $region74: #{encoder_forward.1} parent=11 // pred_check_branch
          %696 = sbr.rel (%p694) target = $region76
        $region75: #{encoder_forward.1} parent=11 // pred_region
          _
        $region76: #{encoder_forward.1} parent=11 // pred_fallthru
          _
        // Predicated region
        $region77: #{encoder_forward.1} parent=11 // pred_check
          %p697 = pneg %p419
        $region78: #{encoder_forward.1} parent=11 // pred_check_branch
          %699 = sbr.rel (%p697) target = $region80
        $region79: #{encoder_forward.1} parent=11 // pred_region
          _
        $region80: #{encoder_forward.1} parent=11 // pred_fallthru
          _
        // Predicated region
        $region81: #{encoder_forward.1} parent=11 // pred_check
          %p700 = pneg %p440
        $region82: #{encoder_forward.1} parent=11 // pred_check_branch
          %702 = sbr.rel (%p700) target = $region84
        $region83: #{encoder_forward.1} parent=11 // pred_region
          _
        $region84: #{encoder_forward.1} parent=11 // pred_fallthru
          _
        // Predicated region
        $region85: #{encoder_forward.1} parent=11 // pred_check
          %p703 = pneg %p461
        $region86: #{encoder_forward.1} parent=11 // pred_check_branch
          %705 = sbr.rel (%p703) target = $region88
        $region87: #{encoder_forward.1} parent=11 // pred_region
          _
        $region88: #{encoder_forward.1} parent=11 // pred_fallthru
          _
        // Predicated region
        $region89: #{encoder_forward.1} parent=11 // pred_check
          %p706 = pneg %p482
        $region90: #{encoder_forward.1} parent=11 // pred_check_branch
          %708 = sbr.rel (%p706) target = $region92
        $region91: #{encoder_forward.1} parent=11 // pred_region
          _
        $region92: #{encoder_forward.1} parent=11 // pred_fallthru
          _
        // Predicated region
        $region93: #{encoder_forward.1} parent=11 // pred_check
          %p709 = pneg %p503
        $region94: #{encoder_forward.1} parent=11 // pred_check_branch
          %711 = sbr.rel (%p709) target = $region96
        $region95: #{encoder_forward.1} parent=11 // pred_region
          _
        $region96: #{encoder_forward.1} parent=11 // pred_fallthru
          _
        // Predicated region
        $region97: #{encoder_forward.1} parent=11 // pred_check
          %p712 = pneg %p524
        $region98: #{encoder_forward.1} parent=11 // pred_check_branch
          %714 = sbr.rel (%p712) target = $region100
        $region99: #{encoder_forward.1} parent=11 // pred_region
          _
        $region100: #{encoder_forward.1} parent=11 // pred_fallthru
          _
        // Predicated region
        $region101: #{encoder_forward.1} parent=11 // pred_check
          %p715 = pneg %p545
        $region102: #{encoder_forward.1} parent=11 // pred_check_branch
          %717 = sbr.rel (%p715) target = $region104
        $region103: #{encoder_forward.1} parent=11 // pred_region
          _
        $region104: #{encoder_forward.1} parent=11 // pred_fallthru
          _
        // Predicated region
        $region105: #{encoder_forward.1} parent=11 // pred_check
          %p718 = pneg %p566
        $region106: #{encoder_forward.1} parent=11 // pred_check_branch
          %720 = sbr.rel (%p718) target = $region108
        $region107: #{encoder_forward.1} parent=11 // pred_region
          _
        $region108: #{encoder_forward.1} parent=11 // pred_fallthru
          _
        // Predicated region
        $region109: #{encoder_forward.1} parent=11 // pred_check
          %p721 = pneg %p587
        $region110: #{encoder_forward.1} parent=11 // pred_check_branch
          %723 = sbr.rel (%p721) target = $region112
        $region111: #{encoder_forward.1} parent=11 // pred_region
          _
        $region112: #{encoder_forward.1} parent=11 // pred_fallthru
          _
        // Predicated region
        $region113: #{encoder_forward.1} parent=11 // pred_check
          %p724 = pneg %p608
        $region114: #{encoder_forward.1} parent=11 // pred_check_branch
          %726 = sbr.rel (%p724) target = $region116
        $region115: #{encoder_forward.1} parent=11 // pred_region
          _
        $region116: #{encoder_forward.1} parent=11 // pred_fallthru
          _
      $region12: #{encoder_forward.1} parent=5 // pred_fallthru
        _
      %p727 = scmp.lt.s32.totalorder %s36, 2
      // Predicated region
      $region117: #{encoder_forward.1} parent=5 // pred_check
        %p728 = pneg %p727
      $region118: #{encoder_forward.1} parent=5 // pred_check_branch
        %730 = sbr.rel (%p728) target = $region120
      $region119: #{encoder_forward.1} parent=5 // pred_region
        // Predicated region
        $region121: #{encoder_forward.1} parent=119 // pred_check
          %p731 = pneg %p56
        $region122: #{encoder_forward.1} parent=119 // pred_check_branch
          %733 = sbr.rel (%p731) target = $region124
        $region123: #{encoder_forward.1} parent=119 // pred_region
          %p734 = scmp.lt.s32.totalorder %s36, 1
          %s735 = scalar_select %p734, %s36, 1
          %s736 = smul.addr %s735, 8
          %s737 = scalar_lea.vmem %s0, %s736
        $region124: #{encoder_forward.1} parent=119 // pred_fallthru
          _
      $region120: #{encoder_forward.1} parent=5 // pred_fallthru
        _
      %p738 = scmp.le.s32.totalorder 1, %s36
      %p739 = scmp.lt.s32.totalorder %s36, 3
      %p740 = pnand %p738, %p739
      %p741 = pneg %p740
      // Predicated region
      $region125: #{encoder_forward.1} parent=5 // pred_check
        _
      $region126: #{encoder_forward.1} parent=5 // pred_check_branch
        %743 = sbr.rel (%p740) target = $region128
      $region127: #{encoder_forward.1} parent=5 // pred_region
        %s744 = ssub.s32 %s36, 1
        %p745 = scmp.lt.s32.totalorder %s41, 1
        %s746 = scalar_select %p745, %s41, 1
        %s747 = smul.addr %s746, 8
        %s748 = scalar_lea.vmem %s0, %s747
        %p749 = pneg %p62
        %p750 = pneg %p59
        %p751 = pneg %p83
        %p752 = pneg %p80
        %p753 = pneg %p104
        %p754 = pneg %p101
        %p755 = pneg %p125
        %p756 = pneg %p122
        %p757 = pneg %p146
        %p758 = pneg %p143
        %p759 = pneg %p167
        %p760 = pneg %p164
        %p761 = pneg %p188
        %p762 = pneg %p185
        %p763 = pneg %p209
        %p764 = pneg %p206
        %p765 = pneg %p230
        %p766 = pneg %p227
        %p767 = pneg %p251
        %p768 = pneg %p248
        %p769 = pneg %p272
        %p770 = pneg %p269
        %p771 = pneg %p293
        %p772 = pneg %p290
        %p773 = pneg %p314
        %p774 = pneg %p311
        %p775 = pneg %p335
        %p776 = pneg %p332
        %p777 = pneg %p356
        %p778 = pneg %p353
        %p779 = pneg %p377
        %p780 = pneg %p374
        %p781 = pneg %p398
        %p782 = pneg %p395
        %p783 = pneg %p419
        %p784 = pneg %p416
        %p785 = pneg %p440
        %p786 = pneg %p437
        %p787 = pneg %p461
        %p788 = pneg %p458
        %p789 = pneg %p482
        %p790 = pneg %p479
        %p791 = pneg %p503
        %p792 = pneg %p500
        %p793 = pneg %p524
        %p794 = pneg %p521
        %p795 = pneg %p545
        %p796 = pneg %p542
        %p797 = pneg %p566
        %p798 = pneg %p563
        %p799 = pneg %p587
        %p800 = pneg %p584
        %p801 = pneg %p608
        %p802 = pneg %p605
        %p803 = pneg %p634
        %p804 = pneg %p631
        %s805 = sand.u32 %s621, 1
        %s806 = scalar_lea.sflag [#allocation3], %s805
        %s807 = sand.u32 %s621, 1
        %s808 = smul.addr %s807, 8
        %s809 = scalar_lea.vmem [#allocation2], %s808
        %p810 = scmp.lt.s32.totalorder %s41, 1
        %s811 = scalar_select %p810, %s41, 1
        %s812 = smul.addr %s811, 8
        %s813 = scalar_lea.vmem %s0, %s812
        %v815 = vld [vmem:[%s25] sm:$0x1]
        %v816 = vld [vmem:[%s26] sm:$0x1]
        %v817 = vld [vmem:[%s813] sm:$0xff]
        %v818 = vpack.c.bf16 %v817, %v817
        %v819 = vld [vmem:[%s1] sm:$0xf]
        %v820 = vld [vmem:[%s1 + $0x4] sm:$0xf]
        %v821 = vld [vmem:[%s1 + $0x8] sm:$0xf]
        %v822 = vld [vmem:[%s1 + $0xc] sm:$0xf]
        %v823 = vld [vmem:[%s1 + $0x10] sm:$0xf]
        %v824 = vld [vmem:[%s1 + $0x14] sm:$0xf]
        %v825 = vld [vmem:[%s1 + $0x18] sm:$0xf]
        %v826 = vld [vmem:[%s1 + $0x1c] sm:$0xf]
        %v827 = vld [vmem:[%s1 + $0x20] sm:$0xf]
        %v828 = vld [vmem:[%s1 + $0x24] sm:$0xf]
        %v829 = vld [vmem:[%s1 + $0x28] sm:$0xf]
        %v830 = vld [vmem:[%s1 + $0x2c] sm:$0xf]
        %v831 = vld [vmem:[%s1 + $0x30] sm:$0xf]
        %v832 = vld [vmem:[%s1 + $0x34] sm:$0xf]
        %v833 = vld [vmem:[%s1 + $0x38] sm:$0xf]
        %v834 = vld [vmem:[%s1 + $0x3c] sm:$0xf]
        %v835 = vld [vmem:[%s1 + $0x40] sm:$0xf]
        %v836 = vld [vmem:[%s1 + $0x44] sm:$0xf]
        %v837 = vld [vmem:[%s1 + $0x48] sm:$0xf]
        %v838 = vld [vmem:[%s1 + $0x4c] sm:$0xf]
        %v839 = vld [vmem:[%s1 + $0x50] sm:$0xf]
        %v840 = vld [vmem:[%s1 + $0x54] sm:$0xf]
        %v841 = vld [vmem:[%s1 + $0x58] sm:$0xf]
        %v842 = vld [vmem:[%s1 + $0x5c] sm:$0xf]
        %v843 = vld [vmem:[%s1 + $0x60] sm:$0xf]
        %v844 = vld [vmem:[%s1 + $0x64] sm:$0xf]
        %v845 = vld [vmem:[%s1 + $0x68] sm:$0xf]
        %v846 = vld [vmem:[%s1 + $0x6c] sm:$0xf]
        %v847 = vld [vmem:[%s1 + $0x70] sm:$0xf]
        %v848 = vld [vmem:[%s1 + $0x74] sm:$0xf]
        %v849 = vld [vmem:[%s1 + $0x78] sm:$0xf]
        %v850 = vld [vmem:[%s1 + $0x7c] sm:$0xf]
        %v851 = vld [vmem:[%s1 + $0x80] sm:$0xf]
        %v852 = vld [vmem:[%s1 + $0x84] sm:$0xf]
        %v853 = vld [vmem:[%s1 + $0x88] sm:$0xf]
        %v854 = vld [vmem:[%s1 + $0x8c] sm:$0xf]
        %v855 = vld [vmem:[%s1 + $0x90] sm:$0xf]
        %v856 = vld [vmem:[%s1 + $0x94] sm:$0xf]
        %v857 = vld [vmem:[%s1 + $0x98] sm:$0xf]
        %v858 = vld [vmem:[%s1 + $0x9c] sm:$0xf]
        %v859 = vld [vmem:[%s1 + $0xa0] sm:$0xf]
        %v860 = vld [vmem:[%s1 + $0xa4] sm:$0xf]
        %v861 = vld [vmem:[%s1 + $0xa8] sm:$0xf]
        %v862 = vld [vmem:[%s1 + $0xac] sm:$0xf]
        %v863 = vld [vmem:[%s1 + $0xb0] sm:$0xf]
        %v864 = vld [vmem:[%s1 + $0xb4] sm:$0xf]
        %v865 = vld [vmem:[%s1 + $0xb8] sm:$0xf]
        %v866 = vld [vmem:[%s1 + $0xbc] sm:$0xf]
        %v867 = vld [vmem:[%s1 + $0xc0] sm:$0xf]
        %v868 = vld [vmem:[%s1 + $0xc4] sm:$0xf]
        %v869 = vld [vmem:[%s1 + $0xc8] sm:$0xf]
        %v870 = vld [vmem:[%s1 + $0xcc] sm:$0xf]
        %v871 = vld [vmem:[%s1 + $0xd0] sm:$0xf]
        %v872 = vld [vmem:[%s1 + $0xd4] sm:$0xf]
        %v873 = vld [vmem:[%s1 + $0xd8] sm:$0xf]
        %v874 = vld [vmem:[%s1 + $0xdc] sm:$0xf]
        %v875 = vld [vmem:[%s1 + $0xe0] sm:$0xf]
        %v876 = vld [vmem:[%s1 + $0xe4] sm:$0xf]
        %v877 = vld [vmem:[%s1 + $0xe8] sm:$0xf]
        %v878 = vld [vmem:[%s1 + $0xec] sm:$0xf]
        %v879 = vld [vmem:[%s1 + $0xf0] sm:$0xf]
        %v880 = vld [vmem:[%s1 + $0xf4] sm:$0xf]
        %v881 = vld [vmem:[%s1 + $0xf8] sm:$0xf]
        %v882 = vld [vmem:[%s1 + $0xfc] sm:$0xf]
        %v883 = vld [vmem:[%s1 + $0x100] sm:$0xf]
        %v884 = vld [vmem:[%s1 + $0x104] sm:$0xf]
        %v885 = vld [vmem:[%s1 + $0x108] sm:$0xf]
        %v886 = vld [vmem:[%s1 + $0x10c] sm:$0xf]
        %v887 = vld [vmem:[%s1 + $0x110] sm:$0xf]
        %v888 = vld [vmem:[%s1 + $0x114] sm:$0xf]
        %v889 = vld [vmem:[%s1 + $0x118] sm:$0xf]
        %v890 = vld [vmem:[%s1 + $0x11c] sm:$0xf]
        %v891 = vld [vmem:[%s1 + $0x120] sm:$0xf]
        %v892 = vld [vmem:[%s1 + $0x124] sm:$0xf]
        %v893 = vld [vmem:[%s1 + $0x128] sm:$0xf]
        %v894 = vld [vmem:[%s1 + $0x12c] sm:$0xf]
        %v895 = vld [vmem:[%s1 + $0x130] sm:$0xf]
        %v896 = vld [vmem:[%s1 + $0x134] sm:$0xf]
        %v897 = vld [vmem:[%s1 + $0x138] sm:$0xf]
        %v898 = vld [vmem:[%s1 + $0x13c] sm:$0xf]
        %v899 = vld [vmem:[%s1 + $0x140] sm:$0xf]
        %v900 = vld [vmem:[%s1 + $0x144] sm:$0xf]
        %v901 = vld [vmem:[%s1 + $0x148] sm:$0xf]
        %v902 = vld [vmem:[%s1 + $0x14c] sm:$0xf]
        %v903 = vld [vmem:[%s1 + $0x150] sm:$0xf]
        %v904 = vld [vmem:[%s1 + $0x154] sm:$0xf]
        %v905 = vld [vmem:[%s1 + $0x158] sm:$0xf]
        %v906 = vld [vmem:[%s1 + $0x15c] sm:$0xf]
        %v907 = vld [vmem:[%s1 + $0x160] sm:$0xf]
        %v908 = vld [vmem:[%s1 + $0x164] sm:$0xf]
        %v909 = vld [vmem:[%s1 + $0x168] sm:$0xf]
        %v910 = vld [vmem:[%s1 + $0x16c] sm:$0xf]
        %v911 = vld [vmem:[%s1 + $0x170] sm:$0xf]
        %v912 = vld [vmem:[%s1 + $0x174] sm:$0xf]
        %v913 = vld [vmem:[%s1 + $0x178] sm:$0xf]
        %v914 = vld [vmem:[%s1 + $0x17c] sm:$0xf]
        %v915 = vld [vmem:[%s1 + $0x180] sm:$0xf]
        %v916 = vld [vmem:[%s1 + $0x184] sm:$0xf]
        %v917 = vld [vmem:[%s1 + $0x188] sm:$0xf]
        %v918 = vld [vmem:[%s1 + $0x18c] sm:$0xf]
        %v919 = vld [vmem:[%s1 + $0x190] sm:$0xf]
        %v920 = vld [vmem:[%s1 + $0x194] sm:$0xf]
        %v921 = vld [vmem:[%s1 + $0x198] sm:$0xf]
        %v922 = vld [vmem:[%s1 + $0x19c] sm:$0xf]
        %v923 = vld [vmem:[%s1 + $0x1a0] sm:$0xf]
        %v924 = vld [vmem:[%s1 + $0x1a4] sm:$0xf]
        %v925 = vld [vmem:[%s1 + $0x1a8] sm:$0xf]
        %v926 = vld [vmem:[%s1 + $0x1ac] sm:$0xf]
        %v927 = vld [vmem:[%s1 + $0x1b0] sm:$0xf]
        %v928 = vld [vmem:[%s1 + $0x1b4] sm:$0xf]
        %v929 = vld [vmem:[%s1 + $0x1b8] sm:$0xf]
        %v930 = vld [vmem:[%s1 + $0x1bc] sm:$0xf]
        %v931 = vld [vmem:[%s1 + $0x1c0] sm:$0xf]
        %v932 = vld [vmem:[%s1 + $0x1c4] sm:$0xf]
        %v933 = vld [vmem:[%s1 + $0x1c8] sm:$0xf]
        %v934 = vld [vmem:[%s1 + $0x1cc] sm:$0xf]
        %v935 = vld [vmem:[%s1 + $0x1d0] sm:$0xf]
        %v936 = vld [vmem:[%s1 + $0x1d4] sm:$0xf]
        %v937 = vld [vmem:[%s1 + $0x1d8] sm:$0xf]
        %v938 = vld [vmem:[%s1 + $0x1dc] sm:$0xf]
        %v939 = vld [vmem:[%s1 + $0x1e0] sm:$0xf]
        %v940 = vld [vmem:[%s1 + $0x1e4] sm:$0xf]
        %v941 = vld [vmem:[%s1 + $0x1e8] sm:$0xf]
        %v942 = vld [vmem:[%s1 + $0x1ec] sm:$0xf]
        %v943 = vld [vmem:[%s1 + $0x1f0] sm:$0xf]
        %v944 = vld [vmem:[%s1 + $0x1f4] sm:$0xf]
        %v945 = vld [vmem:[%s1 + $0x1f8] sm:$0xf]
        %v946 = vld [vmem:[%s1 + $0x1fc] sm:$0xf]
        %v947 = vld [vmem:[%s2] sm:$0x1]
        %v948 = vld [vmem:[%s2 + $0x1] sm:$0x1]
        %v949 = vld [vmem:[%s2 + $0x2] sm:$0x1]
        %v950 = vld [vmem:[%s2 + $0x3] sm:$0x1]
        %v951 = vld [vmem:[%s2 + $0x4] sm:$0x1]
        %v952 = vld [vmem:[%s2 + $0x5] sm:$0x1]
        %v953 = vld [vmem:[%s2 + $0x6] sm:$0x1]
        %v954 = vld [vmem:[%s2 + $0x7] sm:$0x1]
        %v963 = vlaneseq
        %v964 = vshrl.u32 %v963, 7
        %v965 = vsub.s32 0, %v964
        %v966 = vrot.slane %v947, %v965
        %v967 = vlaneseq
        %v968 = vshrl.u32 %v967, 7
        %v969 = vsub.s32 0, %v968
        %v970 = vrot.slane %v948, %v969
        %v971 = vlaneseq
        %v972 = vshrl.u32 %v971, 7
        %v973 = vsub.s32 0, %v972
        %v974 = vrot.slane %v949, %v973
        %v975 = vlaneseq
        %v976 = vshrl.u32 %v975, 7
        %v977 = vsub.s32 0, %v976
        %v978 = vrot.slane %v950, %v977
        %v979 = vlaneseq
        %v980 = vshrl.u32 %v979, 7
        %v981 = vsub.s32 0, %v980
        %v982 = vrot.slane %v951, %v981
        %v983 = vlaneseq
        %v984 = vshrl.u32 %v983, 7
        %v985 = vsub.s32 0, %v984
        %v986 = vrot.slane %v952, %v985
        %v987 = vlaneseq
        %v988 = vshrl.u32 %v987, 7
        %v989 = vsub.s32 0, %v988
        %v990 = vrot.slane %v953, %v989
        %v991 = vlaneseq
        %v992 = vshrl.u32 %v991, 7
        %v993 = vsub.s32 0, %v992
        %v994 = vrot.slane %v954, %v993
        %v1019 = vunpack.c.l.b16 %v819
        %v1020 = vunpack.c.l.b16 %v820
        %v1021 = vunpack.c.l.b16 %v821
        %v1022 = vunpack.c.l.b16 %v822
        %v1023 = vunpack.c.l.b16 %v823
        %v1024 = vunpack.c.l.b16 %v824
        %v1025 = vunpack.c.l.b16 %v825
        %v1026 = vunpack.c.l.b16 %v826
        %v1027 = vunpack.c.l.b16 %v827
        %v1028 = vunpack.c.l.b16 %v828
        %v1029 = vunpack.c.l.b16 %v829
        %v1030 = vunpack.c.l.b16 %v830
        %v1031 = vunpack.c.l.b16 %v831
        %v1032 = vunpack.c.l.b16 %v832
        %v1033 = vunpack.c.l.b16 %v833
        %v1034 = vunpack.c.l.b16 %v834
        %v1035 = vpack.c.b16 %v1020, %v1019
        %v1036 = vpack.c.b16 %v1022, %v1021
        %v1037 = vpack.c.b16 %v1024, %v1023
        %v1038 = vpack.c.b16 %v1026, %v1025
        %v1039 = vpack.c.b16 %v1028, %v1027
        %v1040 = vpack.c.b16 %v1030, %v1029
        %v1041 = vpack.c.b16 %v1032, %v1031
        %v1042 = vpack.c.b16 %v1034, %v1033
        %1051 = vmatprep.subr.bf16.mxu0 0
        %1052 = vmatpush1.bf16.msra.mxu0 %v1042
        %1053 = vmatprep.subr.bf16.mxu0 0
        %1054 = vmatpush1.bf16.msra.mxu0 %v1041
        %1055 = vmatprep.subr.bf16.mxu0 0
        %1056 = vmatpush1.bf16.msra.mxu0 %v1040
        %1057 = vmatprep.subr.bf16.mxu0 0
        %1058 = vmatpush1.bf16.msra.mxu0 %v1039
        %1059 = vmatprep.subr.bf16.mxu0 0
        %1060 = vmatpush1.bf16.msra.mxu0 %v1038
        %1061 = vmatprep.subr.bf16.mxu0 0
        %1062 = vmatpush1.bf16.msra.mxu0 %v1037
        %1063 = vmatprep.subr.bf16.mxu0 0
        %1064 = vmatpush1.bf16.msra.mxu0 %v1036
        %1065 = vmatprep.subr.bf16.mxu0 0
        %1066 = vmatpush1.bf16.msra.mxu0 %v1035
        %1067 = vmatprep.subr.bf16.mxu0 0
        %1068 = vmatpush2.bf16.msra.mxu0 0
        %1069 = vmatprep.subr.bf16.mxu0 0
        %1070 = vmatpush2.bf16.msra.mxu0 0
        %1071 = vmatprep.subr.bf16.mxu0 0
        %1072 = vmatpush2.bf16.msra.mxu0 0
        %1073 = vmatprep.subr.bf16.mxu0 0
        %1074 = vmatpush2.bf16.msra.mxu0 0
        %1075 = vmatprep.subr.bf16.mxu0 0
        %1076 = vmatpush2.bf16.msra.mxu0 0
        %1077 = vmatprep.subr.bf16.mxu0 0
        %1078 = vmatpush2.bf16.msra.mxu0 0
        %1079 = vmatprep.subr.bf16.mxu0 0
        %1080 = vmatpush2.bf16.msra.mxu0 0
        %1081 = vmatprep.subr.bf16.mxu0 0
        %1082 = vmatpush2.bf16.msra.mxu0 0
        %1083 = vmatprep.mubr.bf16.mxu0 0
        %1084 = vmatmul.mubr.bf16.gmra.mxu0 %v818
        %v1085 = vpop.f32.mrf.mxu0
        %v1086 = vadd.f32 %v966, %v1085
        %v1087 = vpop.f32.mrf.mxu0
        %v1088 = vpop.f32.mrf.mxu0
        %v1089 = vpop.f32.mrf.mxu0
        %1090 = vdwg.mxu0
        %v1107 = vunpack.c.l.b16 %v835
        %v1108 = vunpack.c.l.b16 %v836
        %v1109 = vunpack.c.l.b16 %v837
        %v1110 = vunpack.c.l.b16 %v838
        %v1111 = vunpack.c.l.b16 %v839
        %v1112 = vunpack.c.l.b16 %v840
        %v1113 = vunpack.c.l.b16 %v841
        %v1114 = vunpack.c.l.b16 %v842
        %v1115 = vunpack.c.l.b16 %v843
        %v1116 = vunpack.c.l.b16 %v844
        %v1117 = vunpack.c.l.b16 %v845
        %v1118 = vunpack.c.l.b16 %v846
        %v1119 = vunpack.c.l.b16 %v847
        %v1120 = vunpack.c.l.b16 %v848
        %v1121 = vunpack.c.l.b16 %v849
        %v1122 = vunpack.c.l.b16 %v850
        %v1123 = vpack.c.b16 %v1108, %v1107
        %v1124 = vpack.c.b16 %v1110, %v1109
        %v1125 = vpack.c.b16 %v1112, %v1111
        %v1126 = vpack.c.b16 %v1114, %v1113
        %v1127 = vpack.c.b16 %v1116, %v1115
        %v1128 = vpack.c.b16 %v1118, %v1117
        %v1129 = vpack.c.b16 %v1120, %v1119
        %v1130 = vpack.c.b16 %v1122, %v1121
        %1139 = vmatprep.subr.bf16.mxu0 0
        %1140 = vmatpush1.bf16.msra.mxu0 %v1130
        %1141 = vmatprep.subr.bf16.mxu0 0
        %1142 = vmatpush1.bf16.msra.mxu0 %v1129
        %1143 = vmatprep.subr.bf16.mxu0 0
        %1144 = vmatpush1.bf16.msra.mxu0 %v1128
        %1145 = vmatprep.subr.bf16.mxu0 0
        %1146 = vmatpush1.bf16.msra.mxu0 %v1127
        %1147 = vmatprep.subr.bf16.mxu0 0
        %1148 = vmatpush1.bf16.msra.mxu0 %v1126
        %1149 = vmatprep.subr.bf16.mxu0 0
        %1150 = vmatpush1.bf16.msra.mxu0 %v1125
        %1151 = vmatprep.subr.bf16.mxu0 0
        %1152 = vmatpush1.bf16.msra.mxu0 %v1124
        %1153 = vmatprep.subr.bf16.mxu0 0
        %1154 = vmatpush1.bf16.msra.mxu0 %v1123
        %1155 = vmatprep.subr.bf16.mxu0 0
        %1156 = vmatpush2.bf16.msra.mxu0 0
        %1157 = vmatprep.subr.bf16.mxu0 0
        %1158 = vmatpush2.bf16.msra.mxu0 0
        %1159 = vmatprep.subr.bf16.mxu0 0
        %1160 = vmatpush2.bf16.msra.mxu0 0
        %1161 = vmatprep.subr.bf16.mxu0 0
        %1162 = vmatpush2.bf16.msra.mxu0 0
        %1163 = vmatprep.subr.bf16.mxu0 0
        %1164 = vmatpush2.bf16.msra.mxu0 0
        %1165 = vmatprep.subr.bf16.mxu0 0
        %1166 = vmatpush2.bf16.msra.mxu0 0
        %1167 = vmatprep.subr.bf16.mxu0 0
        %1168 = vmatpush2.bf16.msra.mxu0 0
        %1169 = vmatprep.subr.bf16.mxu0 0
        %1170 = vmatpush2.bf16.msra.mxu0 0
        %1171 = vmatprep.mubr.bf16.mxu0 0
        %1172 = vmatmul.mubr.bf16.gmra.mxu0 %v818
        %v1173 = vpop.f32.mrf.mxu0
        %v1174 = vadd.f32 %v970, %v1173
        %v1175 = vpop.f32.mrf.mxu0
        %v1176 = vpop.f32.mrf.mxu0
        %v1177 = vpop.f32.mrf.mxu0
        %1178 = vdwg.mxu0
        %v1195 = vunpack.c.l.b16 %v851
        %v1196 = vunpack.c.l.b16 %v852
        %v1197 = vunpack.c.l.b16 %v853
        %v1198 = vunpack.c.l.b16 %v854
        %v1199 = vunpack.c.l.b16 %v855
        %v1200 = vunpack.c.l.b16 %v856
        %v1201 = vunpack.c.l.b16 %v857
        %v1202 = vunpack.c.l.b16 %v858
        %v1203 = vunpack.c.l.b16 %v859
        %v1204 = vunpack.c.l.b16 %v860
        %v1205 = vunpack.c.l.b16 %v861
        %v1206 = vunpack.c.l.b16 %v862
        %v1207 = vunpack.c.l.b16 %v863
        %v1208 = vunpack.c.l.b16 %v864
        %v1209 = vunpack.c.l.b16 %v865
        %v1210 = vunpack.c.l.b16 %v866
        %v1211 = vpack.c.b16 %v1196, %v1195
        %v1212 = vpack.c.b16 %v1198, %v1197
        %v1213 = vpack.c.b16 %v1200, %v1199
        %v1214 = vpack.c.b16 %v1202, %v1201
        %v1215 = vpack.c.b16 %v1204, %v1203
        %v1216 = vpack.c.b16 %v1206, %v1205
        %v1217 = vpack.c.b16 %v1208, %v1207
        %v1218 = vpack.c.b16 %v1210, %v1209
        %1227 = vmatprep.subr.bf16.mxu0 0
        %1228 = vmatpush1.bf16.msra.mxu0 %v1218
        %1229 = vmatprep.subr.bf16.mxu0 0
        %1230 = vmatpush1.bf16.msra.mxu0 %v1217
        %1231 = vmatprep.subr.bf16.mxu0 0
        %1232 = vmatpush1.bf16.msra.mxu0 %v1216
        %1233 = vmatprep.subr.bf16.mxu0 0
        %1234 = vmatpush1.bf16.msra.mxu0 %v1215
        %1235 = vmatprep.subr.bf16.mxu0 0
        %1236 = vmatpush1.bf16.msra.mxu0 %v1214
        %1237 = vmatprep.subr.bf16.mxu0 0
        %1238 = vmatpush1.bf16.msra.mxu0 %v1213
        %1239 = vmatprep.subr.bf16.mxu0 0
        %1240 = vmatpush1.bf16.msra.mxu0 %v1212
        %1241 = vmatprep.subr.bf16.mxu0 0
        %1242 = vmatpush1.bf16.msra.mxu0 %v1211
        %1243 = vmatprep.subr.bf16.mxu0 0
        %1244 = vmatpush2.bf16.msra.mxu0 0
        %1245 = vmatprep.subr.bf16.mxu0 0
        %1246 = vmatpush2.bf16.msra.mxu0 0
        %1247 = vmatprep.subr.bf16.mxu0 0
        %1248 = vmatpush2.bf16.msra.mxu0 0
        %1249 = vmatprep.subr.bf16.mxu0 0
        %1250 = vmatpush2.bf16.msra.mxu0 0
        %1251 = vmatprep.subr.bf16.mxu0 0
        %1252 = vmatpush2.bf16.msra.mxu0 0
        %1253 = vmatprep.subr.bf16.mxu0 0
        %1254 = vmatpush2.bf16.msra.mxu0 0
        %1255 = vmatprep.subr.bf16.mxu0 0
        %1256 = vmatpush2.bf16.msra.mxu0 0
        %1257 = vmatprep.subr.bf16.mxu0 0
        %1258 = vmatpush2.bf16.msra.mxu0 0
        %1259 = vmatprep.mubr.bf16.mxu0 0
        %1260 = vmatmul.mubr.bf16.gmra.mxu0 %v818
        %v1261 = vpop.f32.mrf.mxu0
        %v1262 = vadd.f32 %v974, %v1261
        %v1263 = vpop.f32.mrf.mxu0
        %v1264 = vpop.f32.mrf.mxu0
        %v1265 = vpop.f32.mrf.mxu0
        %1266 = vdwg.mxu0
        %v1283 = vunpack.c.l.b16 %v867
        %v1284 = vunpack.c.l.b16 %v868
        %v1285 = vunpack.c.l.b16 %v869
        %v1286 = vunpack.c.l.b16 %v870
        %v1287 = vunpack.c.l.b16 %v871
        %v1288 = vunpack.c.l.b16 %v872
        %v1289 = vunpack.c.l.b16 %v873
        %v1290 = vunpack.c.l.b16 %v874
        %v1291 = vunpack.c.l.b16 %v875
        %v1292 = vunpack.c.l.b16 %v876
        %v1293 = vunpack.c.l.b16 %v877
        %v1294 = vunpack.c.l.b16 %v878
        %v1295 = vunpack.c.l.b16 %v879
        %v1296 = vunpack.c.l.b16 %v880
        %v1297 = vunpack.c.l.b16 %v881
        %v1298 = vunpack.c.l.b16 %v882
        %v1299 = vpack.c.b16 %v1284, %v1283
        %v1300 = vpack.c.b16 %v1286, %v1285
        %v1301 = vpack.c.b16 %v1288, %v1287
        %v1302 = vpack.c.b16 %v1290, %v1289
        %v1303 = vpack.c.b16 %v1292, %v1291
        %v1304 = vpack.c.b16 %v1294, %v1293
        %v1305 = vpack.c.b16 %v1296, %v1295
        %v1306 = vpack.c.b16 %v1298, %v1297
        %1315 = vmatprep.subr.bf16.mxu0 0
        %1316 = vmatpush1.bf16.msra.mxu0 %v1306
        %1317 = vmatprep.subr.bf16.mxu0 0
        %1318 = vmatpush1.bf16.msra.mxu0 %v1305
        %1319 = vmatprep.subr.bf16.mxu0 0
        %1320 = vmatpush1.bf16.msra.mxu0 %v1304
        %1321 = vmatprep.subr.bf16.mxu0 0
        %1322 = vmatpush1.bf16.msra.mxu0 %v1303
        %1323 = vmatprep.subr.bf16.mxu0 0
        %1324 = vmatpush1.bf16.msra.mxu0 %v1302
        %1325 = vmatprep.subr.bf16.mxu0 0
        %1326 = vmatpush1.bf16.msra.mxu0 %v1301
        %1327 = vmatprep.subr.bf16.mxu0 0
        %1328 = vmatpush1.bf16.msra.mxu0 %v1300
        %1329 = vmatprep.subr.bf16.mxu0 0
        %1330 = vmatpush1.bf16.msra.mxu0 %v1299
        %1331 = vmatprep.subr.bf16.mxu0 0
        %1332 = vmatpush2.bf16.msra.mxu0 0
        %1333 = vmatprep.subr.bf16.mxu0 0
        %1334 = vmatpush2.bf16.msra.mxu0 0
        %1335 = vmatprep.subr.bf16.mxu0 0
        %1336 = vmatpush2.bf16.msra.mxu0 0
        %1337 = vmatprep.subr.bf16.mxu0 0
        %1338 = vmatpush2.bf16.msra.mxu0 0
        %1339 = vmatprep.subr.bf16.mxu0 0
        %1340 = vmatpush2.bf16.msra.mxu0 0
        %1341 = vmatprep.subr.bf16.mxu0 0
        %1342 = vmatpush2.bf16.msra.mxu0 0
        %1343 = vmatprep.subr.bf16.mxu0 0
        %1344 = vmatpush2.bf16.msra.mxu0 0
        %1345 = vmatprep.subr.bf16.mxu0 0
        %1346 = vmatpush2.bf16.msra.mxu0 0
        %1347 = vmatprep.mubr.bf16.mxu0 0
        %1348 = vmatmul.mubr.bf16.gmra.mxu0 %v818
        %v1349 = vpop.f32.mrf.mxu0
        %v1350 = vadd.f32 %v978, %v1349
        %v1351 = vpop.f32.mrf.mxu0
        %v1352 = vpop.f32.mrf.mxu0
        %v1353 = vpop.f32.mrf.mxu0
        %1354 = vdwg.mxu0
        %v1371 = vunpack.c.l.b16 %v883
        %v1372 = vunpack.c.l.b16 %v884
        %v1373 = vunpack.c.l.b16 %v885
        %v1374 = vunpack.c.l.b16 %v886
        %v1375 = vunpack.c.l.b16 %v887
        %v1376 = vunpack.c.l.b16 %v888
        %v1377 = vunpack.c.l.b16 %v889
        %v1378 = vunpack.c.l.b16 %v890
        %v1379 = vunpack.c.l.b16 %v891
        %v1380 = vunpack.c.l.b16 %v892
        %v1381 = vunpack.c.l.b16 %v893
        %v1382 = vunpack.c.l.b16 %v894
        %v1383 = vunpack.c.l.b16 %v895
        %v1384 = vunpack.c.l.b16 %v896
        %v1385 = vunpack.c.l.b16 %v897
        %v1386 = vunpack.c.l.b16 %v898
        %v1387 = vpack.c.b16 %v1372, %v1371
        %v1388 = vpack.c.b16 %v1374, %v1373
        %v1389 = vpack.c.b16 %v1376, %v1375
        %v1390 = vpack.c.b16 %v1378, %v1377
        %v1391 = vpack.c.b16 %v1380, %v1379
        %v1392 = vpack.c.b16 %v1382, %v1381
        %v1393 = vpack.c.b16 %v1384, %v1383
        %v1394 = vpack.c.b16 %v1386, %v1385
        %1403 = vmatprep.subr.bf16.mxu0 0
        %1404 = vmatpush1.bf16.msra.mxu0 %v1394
        %1405 = vmatprep.subr.bf16.mxu0 0
        %1406 = vmatpush1.bf16.msra.mxu0 %v1393
        %1407 = vmatprep.subr.bf16.mxu0 0
        %1408 = vmatpush1.bf16.msra.mxu0 %v1392
        %1409 = vmatprep.subr.bf16.mxu0 0
        %1410 = vmatpush1.bf16.msra.mxu0 %v1391
        %1411 = vmatprep.subr.bf16.mxu0 0
        %1412 = vmatpush1.bf16.msra.mxu0 %v1390
        %1413 = vmatprep.subr.bf16.mxu0 0
        %1414 = vmatpush1.bf16.msra.mxu0 %v1389
        %1415 = vmatprep.subr.bf16.mxu0 0
        %1416 = vmatpush1.bf16.msra.mxu0 %v1388
        %1417 = vmatprep.subr.bf16.mxu0 0
        %1418 = vmatpush1.bf16.msra.mxu0 %v1387
        %1419 = vmatprep.subr.bf16.mxu0 0
        %1420 = vmatpush2.bf16.msra.mxu0 0
        %1421 = vmatprep.subr.bf16.mxu0 0
        %1422 = vmatpush2.bf16.msra.mxu0 0
        %1423 = vmatprep.subr.bf16.mxu0 0
        %1424 = vmatpush2.bf16.msra.mxu0 0
        %1425 = vmatprep.subr.bf16.mxu0 0
        %1426 = vmatpush2.bf16.msra.mxu0 0
        %1427 = vmatprep.subr.bf16.mxu0 0
        %1428 = vmatpush2.bf16.msra.mxu0 0
        %1429 = vmatprep.subr.bf16.mxu0 0
        %1430 = vmatpush2.bf16.msra.mxu0 0
        %1431 = vmatprep.subr.bf16.mxu0 0
        %1432 = vmatpush2.bf16.msra.mxu0 0
        %1433 = vmatprep.subr.bf16.mxu0 0
        %1434 = vmatpush2.bf16.msra.mxu0 0
        %1435 = vmatprep.mubr.bf16.mxu0 0
        %1436 = vmatmul.mubr.bf16.gmra.mxu0 %v818
        %v1437 = vpop.f32.mrf.mxu0
        %v1438 = vadd.f32 %v982, %v1437
        %v1439 = vpop.f32.mrf.mxu0
        %v1440 = vpop.f32.mrf.mxu0
        %v1441 = vpop.f32.mrf.mxu0
        %1442 = vdwg.mxu0
        %v1459 = vunpack.c.l.b16 %v899
        %v1460 = vunpack.c.l.b16 %v900
        %v1461 = vunpack.c.l.b16 %v901
        %v1462 = vunpack.c.l.b16 %v902
        %v1463 = vunpack.c.l.b16 %v903
        %v1464 = vunpack.c.l.b16 %v904
        %v1465 = vunpack.c.l.b16 %v905
        %v1466 = vunpack.c.l.b16 %v906
        %v1467 = vunpack.c.l.b16 %v907
        %v1468 = vunpack.c.l.b16 %v908
        %v1469 = vunpack.c.l.b16 %v909
        %v1470 = vunpack.c.l.b16 %v910
        %v1471 = vunpack.c.l.b16 %v911
        %v1472 = vunpack.c.l.b16 %v912
        %v1473 = vunpack.c.l.b16 %v913
        %v1474 = vunpack.c.l.b16 %v914
        %v1475 = vpack.c.b16 %v1460, %v1459
        %v1476 = vpack.c.b16 %v1462, %v1461
        %v1477 = vpack.c.b16 %v1464, %v1463
        %v1478 = vpack.c.b16 %v1466, %v1465
        %v1479 = vpack.c.b16 %v1468, %v1467
        %v1480 = vpack.c.b16 %v1470, %v1469
        %v1481 = vpack.c.b16 %v1472, %v1471
        %v1482 = vpack.c.b16 %v1474, %v1473
        %1491 = vmatprep.subr.bf16.mxu0 0
        %1492 = vmatpush1.bf16.msra.mxu0 %v1482
        %1493 = vmatprep.subr.bf16.mxu0 0
        %1494 = vmatpush1.bf16.msra.mxu0 %v1481
        %1495 = vmatprep.subr.bf16.mxu0 0
        %1496 = vmatpush1.bf16.msra.mxu0 %v1480
        %1497 = vmatprep.subr.bf16.mxu0 0
        %1498 = vmatpush1.bf16.msra.mxu0 %v1479
        %1499 = vmatprep.subr.bf16.mxu0 0
        %1500 = vmatpush1.bf16.msra.mxu0 %v1478
        %1501 = vmatprep.subr.bf16.mxu0 0
        %1502 = vmatpush1.bf16.msra.mxu0 %v1477
        %1503 = vmatprep.subr.bf16.mxu0 0
        %1504 = vmatpush1.bf16.msra.mxu0 %v1476
        %1505 = vmatprep.subr.bf16.mxu0 0
        %1506 = vmatpush1.bf16.msra.mxu0 %v1475
        %1507 = vmatprep.subr.bf16.mxu0 0
        %1508 = vmatpush2.bf16.msra.mxu0 0
        %1509 = vmatprep.subr.bf16.mxu0 0
        %1510 = vmatpush2.bf16.msra.mxu0 0
        %1511 = vmatprep.subr.bf16.mxu0 0
        %1512 = vmatpush2.bf16.msra.mxu0 0
        %1513 = vmatprep.subr.bf16.mxu0 0
        %1514 = vmatpush2.bf16.msra.mxu0 0
        %1515 = vmatprep.subr.bf16.mxu0 0
        %1516 = vmatpush2.bf16.msra.mxu0 0
        %1517 = vmatprep.subr.bf16.mxu0 0
        %1518 = vmatpush2.bf16.msra.mxu0 0
        %1519 = vmatprep.subr.bf16.mxu0 0
        %1520 = vmatpush2.bf16.msra.mxu0 0
        %1521 = vmatprep.subr.bf16.mxu0 0
        %1522 = vmatpush2.bf16.msra.mxu0 0
        %1523 = vmatprep.mubr.bf16.mxu0 0
        %1524 = vmatmul.mubr.bf16.gmra.mxu0 %v818
        %v1525 = vpop.f32.mrf.mxu0
        %v1526 = vadd.f32 %v986, %v1525
        %v1527 = vpop.f32.mrf.mxu0
        %v1528 = vpop.f32.mrf.mxu0
        %v1529 = vpop.f32.mrf.mxu0
        %1530 = vdwg.mxu0
        %v1547 = vunpack.c.l.b16 %v915
        %v1548 = vunpack.c.l.b16 %v916
        %v1549 = vunpack.c.l.b16 %v917
        %v1550 = vunpack.c.l.b16 %v918
        %v1551 = vunpack.c.l.b16 %v919
        %v1552 = vunpack.c.l.b16 %v920
        %v1553 = vunpack.c.l.b16 %v921
        %v1554 = vunpack.c.l.b16 %v922
        %v1555 = vunpack.c.l.b16 %v923
        %v1556 = vunpack.c.l.b16 %v924
        %v1557 = vunpack.c.l.b16 %v925
        %v1558 = vunpack.c.l.b16 %v926
        %v1559 = vunpack.c.l.b16 %v927
        %v1560 = vunpack.c.l.b16 %v928
        %v1561 = vunpack.c.l.b16 %v929
        %v1562 = vunpack.c.l.b16 %v930
        %v1563 = vpack.c.b16 %v1548, %v1547
        %v1564 = vpack.c.b16 %v1550, %v1549
        %v1565 = vpack.c.b16 %v1552, %v1551
        %v1566 = vpack.c.b16 %v1554, %v1553
        %v1567 = vpack.c.b16 %v1556, %v1555
        %v1568 = vpack.c.b16 %v1558, %v1557
        %v1569 = vpack.c.b16 %v1560, %v1559
        %v1570 = vpack.c.b16 %v1562, %v1561
        %1579 = vmatprep.subr.bf16.mxu0 0
        %1580 = vmatpush1.bf16.msra.mxu0 %v1570
        %1581 = vmatprep.subr.bf16.mxu0 0
        %1582 = vmatpush1.bf16.msra.mxu0 %v1569
        %1583 = vmatprep.subr.bf16.mxu0 0
        %1584 = vmatpush1.bf16.msra.mxu0 %v1568
        %1585 = vmatprep.subr.bf16.mxu0 0
        %1586 = vmatpush1.bf16.msra.mxu0 %v1567
        %1587 = vmatprep.subr.bf16.mxu0 0
        %1588 = vmatpush1.bf16.msra.mxu0 %v1566
        %1589 = vmatprep.subr.bf16.mxu0 0
        %1590 = vmatpush1.bf16.msra.mxu0 %v1565
        %1591 = vmatprep.subr.bf16.mxu0 0
        %1592 = vmatpush1.bf16.msra.mxu0 %v1564
        %1593 = vmatprep.subr.bf16.mxu0 0
        %1594 = vmatpush1.bf16.msra.mxu0 %v1563
        %1595 = vmatprep.subr.bf16.mxu0 0
        %1596 = vmatpush2.bf16.msra.mxu0 0
        %1597 = vmatprep.subr.bf16.mxu0 0
        %1598 = vmatpush2.bf16.msra.mxu0 0
        %1599 = vmatprep.subr.bf16.mxu0 0
        %1600 = vmatpush2.bf16.msra.mxu0 0
        %1601 = vmatprep.subr.bf16.mxu0 0
        %1602 = vmatpush2.bf16.msra.mxu0 0
        %1603 = vmatprep.subr.bf16.mxu0 0
        %1604 = vmatpush2.bf16.msra.mxu0 0
        %1605 = vmatprep.subr.bf16.mxu0 0
        %1606 = vmatpush2.bf16.msra.mxu0 0
        %1607 = vmatprep.subr.bf16.mxu0 0
        %1608 = vmatpush2.bf16.msra.mxu0 0
        %1609 = vmatprep.subr.bf16.mxu0 0
        %1610 = vmatpush2.bf16.msra.mxu0 0
        %1611 = vmatprep.mubr.bf16.mxu0 0
        %1612 = vmatmul.mubr.bf16.gmra.mxu0 %v818
        %v1613 = vpop.f32.mrf.mxu0
        %v1614 = vadd.f32 %v990, %v1613
        %v1615 = vpop.f32.mrf.mxu0
        %v1616 = vpop.f32.mrf.mxu0
        %v1617 = vpop.f32.mrf.mxu0
        %1618 = vdwg.mxu0
        %v1635 = vunpack.c.l.b16 %v931
        %v1636 = vunpack.c.l.b16 %v932
        %v1637 = vunpack.c.l.b16 %v933
        %v1638 = vunpack.c.l.b16 %v934
        %v1639 = vunpack.c.l.b16 %v935
        %v1640 = vunpack.c.l.b16 %v936
        %v1641 = vunpack.c.l.b16 %v937
        %v1642 = vunpack.c.l.b16 %v938
        %v1643 = vunpack.c.l.b16 %v939
        %v1644 = vunpack.c.l.b16 %v940
        %v1645 = vunpack.c.l.b16 %v941
        %v1646 = vunpack.c.l.b16 %v942
        %v1647 = vunpack.c.l.b16 %v943
        %v1648 = vunpack.c.l.b16 %v944
        %v1649 = vunpack.c.l.b16 %v945
        %v1650 = vunpack.c.l.b16 %v946
        %v1651 = vpack.c.b16 %v1636, %v1635
        %v1652 = vpack.c.b16 %v1638, %v1637
        %v1653 = vpack.c.b16 %v1640, %v1639
        %v1654 = vpack.c.b16 %v1642, %v1641
        %v1655 = vpack.c.b16 %v1644, %v1643
        %v1656 = vpack.c.b16 %v1646, %v1645
        %v1657 = vpack.c.b16 %v1648, %v1647
        %v1658 = vpack.c.b16 %v1650, %v1649
        %1667 = vmatprep.subr.bf16.mxu0 0
        %1668 = vmatpush1.bf16.msra.mxu0 %v1658
        %1669 = vmatprep.subr.bf16.mxu0 0
        %1670 = vmatpush1.bf16.msra.mxu0 %v1657
        %1671 = vmatprep.subr.bf16.mxu0 0
        %1672 = vmatpush1.bf16.msra.mxu0 %v1656
        %1673 = vmatprep.subr.bf16.mxu0 0
        %1674 = vmatpush1.bf16.msra.mxu0 %v1655
        %1675 = vmatprep.subr.bf16.mxu0 0
        %1676 = vmatpush1.bf16.msra.mxu0 %v1654
        %1677 = vmatprep.subr.bf16.mxu0 0
        %1678 = vmatpush1.bf16.msra.mxu0 %v1653
        %1679 = vmatprep.subr.bf16.mxu0 0
        %1680 = vmatpush1.bf16.msra.mxu0 %v1652
        %1681 = vmatprep.subr.bf16.mxu0 0
        %1682 = vmatpush1.bf16.msra.mxu0 %v1651
        %1683 = vmatprep.subr.bf16.mxu0 0
        %1684 = vmatpush2.bf16.msra.mxu0 0
        %1685 = vmatprep.subr.bf16.mxu0 0
        %1686 = vmatpush2.bf16.msra.mxu0 0
        %1687 = vmatprep.subr.bf16.mxu0 0
        %1688 = vmatpush2.bf16.msra.mxu0 0
        %1689 = vmatprep.subr.bf16.mxu0 0
        %1690 = vmatpush2.bf16.msra.mxu0 0
        %1691 = vmatprep.subr.bf16.mxu0 0
        %1692 = vmatpush2.bf16.msra.mxu0 0
        %1693 = vmatprep.subr.bf16.mxu0 0
        %1694 = vmatpush2.bf16.msra.mxu0 0
        %1695 = vmatprep.subr.bf16.mxu0 0
        %1696 = vmatpush2.bf16.msra.mxu0 0
        %1697 = vmatprep.subr.bf16.mxu0 0
        %1698 = vmatpush2.bf16.msra.mxu0 0
        %1699 = vmatprep.mubr.bf16.mxu0 0
        %1700 = vmatmul.mubr.bf16.gmra.mxu0 %v818
        %v1701 = vpop.f32.mrf.mxu0
        %v1702 = vadd.f32 %v994, %v1701
        %v1703 = vpop.f32.mrf.mxu0
        %v1704 = vpop.f32.mrf.mxu0
        %v1705 = vpop.f32.mrf.mxu0
        %1706 = vdwg.mxu0
        %v1707 = vld [vmem:[%s3] sm:$0xf]
        %v1708 = vld [vmem:[%s3 + $0x4] sm:$0xf]
        %v1709 = vld [vmem:[%s3 + $0x8] sm:$0xf]
        %v1710 = vld [vmem:[%s3 + $0xc] sm:$0xf]
        %v1711 = vld [vmem:[%s3 + $0x10] sm:$0xf]
        %v1712 = vld [vmem:[%s3 + $0x14] sm:$0xf]
        %v1713 = vld [vmem:[%s3 + $0x18] sm:$0xf]
        %v1714 = vld [vmem:[%s3 + $0x1c] sm:$0xf]
        %v1715 = vld [vmem:[%s3 + $0x20] sm:$0xf]
        %v1716 = vld [vmem:[%s3 + $0x24] sm:$0xf]
        %v1717 = vld [vmem:[%s3 + $0x28] sm:$0xf]
        %v1718 = vld [vmem:[%s3 + $0x2c] sm:$0xf]
        %v1719 = vld [vmem:[%s3 + $0x30] sm:$0xf]
        %v1720 = vld [vmem:[%s3 + $0x34] sm:$0xf]
        %v1721 = vld [vmem:[%s3 + $0x38] sm:$0xf]
        %v1722 = vld [vmem:[%s3 + $0x3c] sm:$0xf]
        %v1723 = vld [vmem:[%s3 + $0x40] sm:$0xf]
        %v1724 = vld [vmem:[%s3 + $0x44] sm:$0xf]
        %v1725 = vld [vmem:[%s3 + $0x48] sm:$0xf]
        %v1726 = vld [vmem:[%s3 + $0x4c] sm:$0xf]
        %v1727 = vld [vmem:[%s3 + $0x50] sm:$0xf]
        %v1728 = vld [vmem:[%s3 + $0x54] sm:$0xf]
        %v1729 = vld [vmem:[%s3 + $0x58] sm:$0xf]
        %v1730 = vld [vmem:[%s3 + $0x5c] sm:$0xf]
        %v1731 = vld [vmem:[%s3 + $0x60] sm:$0xf]
        %v1732 = vld [vmem:[%s3 + $0x64] sm:$0xf]
        %v1733 = vld [vmem:[%s3 + $0x68] sm:$0xf]
        %v1734 = vld [vmem:[%s3 + $0x6c] sm:$0xf]
        %v1735 = vld [vmem:[%s3 + $0x70] sm:$0xf]
        %v1736 = vld [vmem:[%s3 + $0x74] sm:$0xf]
        %v1737 = vld [vmem:[%s3 + $0x78] sm:$0xf]
        %v1738 = vld [vmem:[%s3 + $0x7c] sm:$0xf]
        %v1739 = vld [vmem:[%s3 + $0x80] sm:$0xf]
        %v1740 = vld [vmem:[%s3 + $0x84] sm:$0xf]
        %v1741 = vld [vmem:[%s3 + $0x88] sm:$0xf]
        %v1742 = vld [vmem:[%s3 + $0x8c] sm:$0xf]
        %v1743 = vld [vmem:[%s3 + $0x90] sm:$0xf]
        %v1744 = vld [vmem:[%s3 + $0x94] sm:$0xf]
        %v1745 = vld [vmem:[%s3 + $0x98] sm:$0xf]
        %v1746 = vld [vmem:[%s3 + $0x9c] sm:$0xf]
        %v1747 = vld [vmem:[%s3 + $0xa0] sm:$0xf]
        %v1748 = vld [vmem:[%s3 + $0xa4] sm:$0xf]
        %v1749 = vld [vmem:[%s3 + $0xa8] sm:$0xf]
        %v1750 = vld [vmem:[%s3 + $0xac] sm:$0xf]
        %v1751 = vld [vmem:[%s3 + $0xb0] sm:$0xf]
        %v1752 = vld [vmem:[%s3 + $0xb4] sm:$0xf]
        %v1753 = vld [vmem:[%s3 + $0xb8] sm:$0xf]
        %v1754 = vld [vmem:[%s3 + $0xbc] sm:$0xf]
        %v1755 = vld [vmem:[%s3 + $0xc0] sm:$0xf]
        %v1756 = vld [vmem:[%s3 + $0xc4] sm:$0xf]
        %v1757 = vld [vmem:[%s3 + $0xc8] sm:$0xf]
        %v1758 = vld [vmem:[%s3 + $0xcc] sm:$0xf]
        %v1759 = vld [vmem:[%s3 + $0xd0] sm:$0xf]
        %v1760 = vld [vmem:[%s3 + $0xd4] sm:$0xf]
        %v1761 = vld [vmem:[%s3 + $0xd8] sm:$0xf]
        %v1762 = vld [vmem:[%s3 + $0xdc] sm:$0xf]
        %v1763 = vld [vmem:[%s3 + $0xe0] sm:$0xf]
        %v1764 = vld [vmem:[%s3 + $0xe4] sm:$0xf]
        %v1765 = vld [vmem:[%s3 + $0xe8] sm:$0xf]
        %v1766 = vld [vmem:[%s3 + $0xec] sm:$0xf]
        %v1767 = vld [vmem:[%s3 + $0xf0] sm:$0xf]
        %v1768 = vld [vmem:[%s3 + $0xf4] sm:$0xf]
        %v1769 = vld [vmem:[%s3 + $0xf8] sm:$0xf]
        %v1770 = vld [vmem:[%s3 + $0xfc] sm:$0xf]
        %v1771 = vld [vmem:[%s3 + $0x100] sm:$0xf]
        %v1772 = vld [vmem:[%s3 + $0x104] sm:$0xf]
        %v1773 = vld [vmem:[%s3 + $0x108] sm:$0xf]
        %v1774 = vld [vmem:[%s3 + $0x10c] sm:$0xf]
        %v1775 = vld [vmem:[%s3 + $0x110] sm:$0xf]
        %v1776 = vld [vmem:[%s3 + $0x114] sm:$0xf]
        %v1777 = vld [vmem:[%s3 + $0x118] sm:$0xf]
        %v1778 = vld [vmem:[%s3 + $0x11c] sm:$0xf]
        %v1779 = vld [vmem:[%s3 + $0x120] sm:$0xf]
        %v1780 = vld [vmem:[%s3 + $0x124] sm:$0xf]
        %v1781 = vld [vmem:[%s3 + $0x128] sm:$0xf]
        %v1782 = vld [vmem:[%s3 + $0x12c] sm:$0xf]
        %v1783 = vld [vmem:[%s3 + $0x130] sm:$0xf]
        %v1784 = vld [vmem:[%s3 + $0x134] sm:$0xf]
        %v1785 = vld [vmem:[%s3 + $0x138] sm:$0xf]
        %v1786 = vld [vmem:[%s3 + $0x13c] sm:$0xf]
        %v1787 = vld [vmem:[%s3 + $0x140] sm:$0xf]
        %v1788 = vld [vmem:[%s3 + $0x144] sm:$0xf]
        %v1789 = vld [vmem:[%s3 + $0x148] sm:$0xf]
        %v1790 = vld [vmem:[%s3 + $0x14c] sm:$0xf]
        %v1791 = vld [vmem:[%s3 + $0x150] sm:$0xf]
        %v1792 = vld [vmem:[%s3 + $0x154] sm:$0xf]
        %v1793 = vld [vmem:[%s3 + $0x158] sm:$0xf]
        %v1794 = vld [vmem:[%s3 + $0x15c] sm:$0xf]
        %v1795 = vld [vmem:[%s3 + $0x160] sm:$0xf]
        %v1796 = vld [vmem:[%s3 + $0x164] sm:$0xf]
        %v1797 = vld [vmem:[%s3 + $0x168] sm:$0xf]
        %v1798 = vld [vmem:[%s3 + $0x16c] sm:$0xf]
        %v1799 = vld [vmem:[%s3 + $0x170] sm:$0xf]
        %v1800 = vld [vmem:[%s3 + $0x174] sm:$0xf]
        %v1801 = vld [vmem:[%s3 + $0x178] sm:$0xf]
        %v1802 = vld [vmem:[%s3 + $0x17c] sm:$0xf]
        %v1803 = vld [vmem:[%s3 + $0x180] sm:$0xf]
        %v1804 = vld [vmem:[%s3 + $0x184] sm:$0xf]
        %v1805 = vld [vmem:[%s3 + $0x188] sm:$0xf]
        %v1806 = vld [vmem:[%s3 + $0x18c] sm:$0xf]
        %v1807 = vld [vmem:[%s3 + $0x190] sm:$0xf]
        %v1808 = vld [vmem:[%s3 + $0x194] sm:$0xf]
        %v1809 = vld [vmem:[%s3 + $0x198] sm:$0xf]
        %v1810 = vld [vmem:[%s3 + $0x19c] sm:$0xf]
        %v1811 = vld [vmem:[%s3 + $0x1a0] sm:$0xf]
        %v1812 = vld [vmem:[%s3 + $0x1a4] sm:$0xf]
        %v1813 = vld [vmem:[%s3 + $0x1a8] sm:$0xf]
        %v1814 = vld [vmem:[%s3 + $0x1ac] sm:$0xf]
        %v1815 = vld [vmem:[%s3 + $0x1b0] sm:$0xf]
        %v1816 = vld [vmem:[%s3 + $0x1b4] sm:$0xf]
        %v1817 = vld [vmem:[%s3 + $0x1b8] sm:$0xf]
        %v1818 = vld [vmem:[%s3 + $0x1bc] sm:$0xf]
        %v1819 = vld [vmem:[%s3 + $0x1c0] sm:$0xf]
        %v1820 = vld [vmem:[%s3 + $0x1c4] sm:$0xf]
        %v1821 = vld [vmem:[%s3 + $0x1c8] sm:$0xf]
        %v1822 = vld [vmem:[%s3 + $0x1cc] sm:$0xf]
        %v1823 = vld [vmem:[%s3 + $0x1d0] sm:$0xf]
        %v1824 = vld [vmem:[%s3 + $0x1d4] sm:$0xf]
        %v1825 = vld [vmem:[%s3 + $0x1d8] sm:$0xf]
        %v1826 = vld [vmem:[%s3 + $0x1dc] sm:$0xf]
        %v1827 = vld [vmem:[%s3 + $0x1e0] sm:$0xf]
        %v1828 = vld [vmem:[%s3 + $0x1e4] sm:$0xf]
        %v1829 = vld [vmem:[%s3 + $0x1e8] sm:$0xf]
        %v1830 = vld [vmem:[%s3 + $0x1ec] sm:$0xf]
        %v1831 = vld [vmem:[%s3 + $0x1f0] sm:$0xf]
        %v1832 = vld [vmem:[%s3 + $0x1f4] sm:$0xf]
        %v1833 = vld [vmem:[%s3 + $0x1f8] sm:$0xf]
        %v1834 = vld [vmem:[%s3 + $0x1fc] sm:$0xf]
        %v1835 = vld [vmem:[%s4] sm:$0x1]
        %v1836 = vld [vmem:[%s4 + $0x1] sm:$0x1]
        %v1837 = vld [vmem:[%s4 + $0x2] sm:$0x1]
        %v1838 = vld [vmem:[%s4 + $0x3] sm:$0x1]
        %v1839 = vld [vmem:[%s4 + $0x4] sm:$0x1]
        %v1840 = vld [vmem:[%s4 + $0x5] sm:$0x1]
        %v1841 = vld [vmem:[%s4 + $0x6] sm:$0x1]
        %v1842 = vld [vmem:[%s4 + $0x7] sm:$0x1]
        %v1851 = vlaneseq
        %v1852 = vshrl.u32 %v1851, 7
        %v1853 = vsub.s32 0, %v1852
        %v1854 = vrot.slane %v1835, %v1853
        %v1855 = vlaneseq
        %v1856 = vshrl.u32 %v1855, 7
        %v1857 = vsub.s32 0, %v1856
        %v1858 = vrot.slane %v1836, %v1857
        %v1859 = vlaneseq
        %v1860 = vshrl.u32 %v1859, 7
        %v1861 = vsub.s32 0, %v1860
        %v1862 = vrot.slane %v1837, %v1861
        %v1863 = vlaneseq
        %v1864 = vshrl.u32 %v1863, 7
        %v1865 = vsub.s32 0, %v1864
        %v1866 = vrot.slane %v1838, %v1865
        %v1867 = vlaneseq
        %v1868 = vshrl.u32 %v1867, 7
        %v1869 = vsub.s32 0, %v1868
        %v1870 = vrot.slane %v1839, %v1869
        %v1871 = vlaneseq
        %v1872 = vshrl.u32 %v1871, 7
        %v1873 = vsub.s32 0, %v1872
        %v1874 = vrot.slane %v1840, %v1873
        %v1875 = vlaneseq
        %v1876 = vshrl.u32 %v1875, 7
        %v1877 = vsub.s32 0, %v1876
        %v1878 = vrot.slane %v1841, %v1877
        %v1879 = vlaneseq
        %v1880 = vshrl.u32 %v1879, 7
        %v1881 = vsub.s32 0, %v1880
        %v1882 = vrot.slane %v1842, %v1881
        %v1907 = vunpack.c.l.b16 %v1707
        %v1908 = vunpack.c.l.b16 %v1708
        %v1909 = vunpack.c.l.b16 %v1709
        %v1910 = vunpack.c.l.b16 %v1710
        %v1911 = vunpack.c.l.b16 %v1711
        %v1912 = vunpack.c.l.b16 %v1712
        %v1913 = vunpack.c.l.b16 %v1713
        %v1914 = vunpack.c.l.b16 %v1714
        %v1915 = vunpack.c.l.b16 %v1715
        %v1916 = vunpack.c.l.b16 %v1716
        %v1917 = vunpack.c.l.b16 %v1717
        %v1918 = vunpack.c.l.b16 %v1718
        %v1919 = vunpack.c.l.b16 %v1719
        %v1920 = vunpack.c.l.b16 %v1720
        %v1921 = vunpack.c.l.b16 %v1721
        %v1922 = vunpack.c.l.b16 %v1722
        %v1923 = vpack.c.b16 %v1908, %v1907
        %v1924 = vpack.c.b16 %v1910, %v1909
        %v1925 = vpack.c.b16 %v1912, %v1911
        %v1926 = vpack.c.b16 %v1914, %v1913
        %v1927 = vpack.c.b16 %v1916, %v1915
        %v1928 = vpack.c.b16 %v1918, %v1917
        %v1929 = vpack.c.b16 %v1920, %v1919
        %v1930 = vpack.c.b16 %v1922, %v1921
        %1939 = vmatprep.subr.bf16.mxu0 0
        %1940 = vmatpush1.bf16.msra.mxu0 %v1930
        %1941 = vmatprep.subr.bf16.mxu0 0
        %1942 = vmatpush1.bf16.msra.mxu0 %v1929
        %1943 = vmatprep.subr.bf16.mxu0 0
        %1944 = vmatpush1.bf16.msra.mxu0 %v1928
        %1945 = vmatprep.subr.bf16.mxu0 0
        %1946 = vmatpush1.bf16.msra.mxu0 %v1927
        %1947 = vmatprep.subr.bf16.mxu0 0
        %1948 = vmatpush1.bf16.msra.mxu0 %v1926
        %1949 = vmatprep.subr.bf16.mxu0 0
        %1950 = vmatpush1.bf16.msra.mxu0 %v1925
        %1951 = vmatprep.subr.bf16.mxu0 0
        %1952 = vmatpush1.bf16.msra.mxu0 %v1924
        %1953 = vmatprep.subr.bf16.mxu0 0
        %1954 = vmatpush1.bf16.msra.mxu0 %v1923
        %1955 = vmatprep.subr.bf16.mxu0 0
        %1956 = vmatpush2.bf16.msra.mxu0 0
        %1957 = vmatprep.subr.bf16.mxu0 0
        %1958 = vmatpush2.bf16.msra.mxu0 0
        %1959 = vmatprep.subr.bf16.mxu0 0
        %1960 = vmatpush2.bf16.msra.mxu0 0
        %1961 = vmatprep.subr.bf16.mxu0 0
        %1962 = vmatpush2.bf16.msra.mxu0 0
        %1963 = vmatprep.subr.bf16.mxu0 0
        %1964 = vmatpush2.bf16.msra.mxu0 0
        %1965 = vmatprep.subr.bf16.mxu0 0
        %1966 = vmatpush2.bf16.msra.mxu0 0
        %1967 = vmatprep.subr.bf16.mxu0 0
        %1968 = vmatpush2.bf16.msra.mxu0 0
        %1969 = vmatprep.subr.bf16.mxu0 0
        %1970 = vmatpush2.bf16.msra.mxu0 0
        %1971 = vmatprep.mubr.bf16.mxu0 0
        %1972 = vmatmul.mubr.bf16.gmra.mxu0 %v818
        %v1973 = vpop.f32.mrf.mxu0
        %v1974 = vadd.f32 %v1854, %v1973
        %v1975 = vpop.f32.mrf.mxu0
        %v1976 = vpop.f32.mrf.mxu0
        %v1977 = vpop.f32.mrf.mxu0
        %1978 = vdwg.mxu0
        %v1995 = vunpack.c.l.b16 %v1723
        %v1996 = vunpack.c.l.b16 %v1724
        %v1997 = vunpack.c.l.b16 %v1725
        %v1998 = vunpack.c.l.b16 %v1726
        %v1999 = vunpack.c.l.b16 %v1727
        %v2000 = vunpack.c.l.b16 %v1728
        %v2001 = vunpack.c.l.b16 %v1729
        %v2002 = vunpack.c.l.b16 %v1730
        %v2003 = vunpack.c.l.b16 %v1731
        %v2004 = vunpack.c.l.b16 %v1732
        %v2005 = vunpack.c.l.b16 %v1733
        %v2006 = vunpack.c.l.b16 %v1734
        %v2007 = vunpack.c.l.b16 %v1735
        %v2008 = vunpack.c.l.b16 %v1736
        %v2009 = vunpack.c.l.b16 %v1737
        %v2010 = vunpack.c.l.b16 %v1738
        %v2011 = vpack.c.b16 %v1996, %v1995
        %v2012 = vpack.c.b16 %v1998, %v1997
        %v2013 = vpack.c.b16 %v2000, %v1999
        %v2014 = vpack.c.b16 %v2002, %v2001
        %v2015 = vpack.c.b16 %v2004, %v2003
        %v2016 = vpack.c.b16 %v2006, %v2005
        %v2017 = vpack.c.b16 %v2008, %v2007
        %v2018 = vpack.c.b16 %v2010, %v2009
        %2027 = vmatprep.subr.bf16.mxu0 0
        %2028 = vmatpush1.bf16.msra.mxu0 %v2018
        %2029 = vmatprep.subr.bf16.mxu0 0
        %2030 = vmatpush1.bf16.msra.mxu0 %v2017
        %2031 = vmatprep.subr.bf16.mxu0 0
        %2032 = vmatpush1.bf16.msra.mxu0 %v2016
        %2033 = vmatprep.subr.bf16.mxu0 0
        %2034 = vmatpush1.bf16.msra.mxu0 %v2015
        %2035 = vmatprep.subr.bf16.mxu0 0
        %2036 = vmatpush1.bf16.msra.mxu0 %v2014
        %2037 = vmatprep.subr.bf16.mxu0 0
        %2038 = vmatpush1.bf16.msra.mxu0 %v2013
        %2039 = vmatprep.subr.bf16.mxu0 0
        %2040 = vmatpush1.bf16.msra.mxu0 %v2012
        %2041 = vmatprep.subr.bf16.mxu0 0
        %2042 = vmatpush1.bf16.msra.mxu0 %v2011
        %2043 = vmatprep.subr.bf16.mxu0 0
        %2044 = vmatpush2.bf16.msra.mxu0 0
        %2045 = vmatprep.subr.bf16.mxu0 0
        %2046 = vmatpush2.bf16.msra.mxu0 0
        %2047 = vmatprep.subr.bf16.mxu0 0
        %2048 = vmatpush2.bf16.msra.mxu0 0
        %2049 = vmatprep.subr.bf16.mxu0 0
        %2050 = vmatpush2.bf16.msra.mxu0 0
        %2051 = vmatprep.subr.bf16.mxu0 0
        %2052 = vmatpush2.bf16.msra.mxu0 0
        %2053 = vmatprep.subr.bf16.mxu0 0
        %2054 = vmatpush2.bf16.msra.mxu0 0
        %2055 = vmatprep.subr.bf16.mxu0 0
        %2056 = vmatpush2.bf16.msra.mxu0 0
        %2057 = vmatprep.subr.bf16.mxu0 0
        %2058 = vmatpush2.bf16.msra.mxu0 0
        %2059 = vmatprep.mubr.bf16.mxu0 0
        %2060 = vmatmul.mubr.bf16.gmra.mxu0 %v818
        %v2061 = vpop.f32.mrf.mxu0
        %v2062 = vadd.f32 %v1858, %v2061
        %v2063 = vpop.f32.mrf.mxu0
        %v2064 = vpop.f32.mrf.mxu0
        %v2065 = vpop.f32.mrf.mxu0
        %2066 = vdwg.mxu0
        %v2083 = vunpack.c.l.b16 %v1739
        %v2084 = vunpack.c.l.b16 %v1740
        %v2085 = vunpack.c.l.b16 %v1741
        %v2086 = vunpack.c.l.b16 %v1742
        %v2087 = vunpack.c.l.b16 %v1743
        %v2088 = vunpack.c.l.b16 %v1744
        %v2089 = vunpack.c.l.b16 %v1745
        %v2090 = vunpack.c.l.b16 %v1746
        %v2091 = vunpack.c.l.b16 %v1747
        %v2092 = vunpack.c.l.b16 %v1748
        %v2093 = vunpack.c.l.b16 %v1749
        %v2094 = vunpack.c.l.b16 %v1750
        %v2095 = vunpack.c.l.b16 %v1751
        %v2096 = vunpack.c.l.b16 %v1752
        %v2097 = vunpack.c.l.b16 %v1753
        %v2098 = vunpack.c.l.b16 %v1754
        %v2099 = vpack.c.b16 %v2084, %v2083
        %v2100 = vpack.c.b16 %v2086, %v2085
        %v2101 = vpack.c.b16 %v2088, %v2087
        %v2102 = vpack.c.b16 %v2090, %v2089
        %v2103 = vpack.c.b16 %v2092, %v2091
        %v2104 = vpack.c.b16 %v2094, %v2093
        %v2105 = vpack.c.b16 %v2096, %v2095
        %v2106 = vpack.c.b16 %v2098, %v2097
        %2115 = vmatprep.subr.bf16.mxu0 0
        %2116 = vmatpush1.bf16.msra.mxu0 %v2106
        %2117 = vmatprep.subr.bf16.mxu0 0
        %2118 = vmatpush1.bf16.msra.mxu0 %v2105
        %2119 = vmatprep.subr.bf16.mxu0 0
        %2120 = vmatpush1.bf16.msra.mxu0 %v2104
        %2121 = vmatprep.subr.bf16.mxu0 0
        %2122 = vmatpush1.bf16.msra.mxu0 %v2103
        %2123 = vmatprep.subr.bf16.mxu0 0
        %2124 = vmatpush1.bf16.msra.mxu0 %v2102
        %2125 = vmatprep.subr.bf16.mxu0 0
        %2126 = vmatpush1.bf16.msra.mxu0 %v2101
        %2127 = vmatprep.subr.bf16.mxu0 0
        %2128 = vmatpush1.bf16.msra.mxu0 %v2100
        %2129 = vmatprep.subr.bf16.mxu0 0
        %2130 = vmatpush1.bf16.msra.mxu0 %v2099
        %2131 = vmatprep.subr.bf16.mxu0 0
        %2132 = vmatpush2.bf16.msra.mxu0 0
        %2133 = vmatprep.subr.bf16.mxu0 0
        %2134 = vmatpush2.bf16.msra.mxu0 0
        %2135 = vmatprep.subr.bf16.mxu0 0
        %2136 = vmatpush2.bf16.msra.mxu0 0
        %2137 = vmatprep.subr.bf16.mxu0 0
        %2138 = vmatpush2.bf16.msra.mxu0 0
        %2139 = vmatprep.subr.bf16.mxu0 0
        %2140 = vmatpush2.bf16.msra.mxu0 0
        %2141 = vmatprep.subr.bf16.mxu0 0
        %2142 = vmatpush2.bf16.msra.mxu0 0
        %2143 = vmatprep.subr.bf16.mxu0 0
        %2144 = vmatpush2.bf16.msra.mxu0 0
        %2145 = vmatprep.subr.bf16.mxu0 0
        %2146 = vmatpush2.bf16.msra.mxu0 0
        %2147 = vmatprep.mubr.bf16.mxu0 0
        %2148 = vmatmul.mubr.bf16.gmra.mxu0 %v818
        %v2149 = vpop.f32.mrf.mxu0
        %v2150 = vadd.f32 %v1862, %v2149
        %v2151 = vpop.f32.mrf.mxu0
        %v2152 = vpop.f32.mrf.mxu0
        %v2153 = vpop.f32.mrf.mxu0
        %2154 = vdwg.mxu0
        %v2171 = vunpack.c.l.b16 %v1755
        %v2172 = vunpack.c.l.b16 %v1756
        %v2173 = vunpack.c.l.b16 %v1757
        %v2174 = vunpack.c.l.b16 %v1758
        %v2175 = vunpack.c.l.b16 %v1759
        %v2176 = vunpack.c.l.b16 %v1760
        %v2177 = vunpack.c.l.b16 %v1761
        %v2178 = vunpack.c.l.b16 %v1762
        %v2179 = vunpack.c.l.b16 %v1763
        %v2180 = vunpack.c.l.b16 %v1764
        %v2181 = vunpack.c.l.b16 %v1765
        %v2182 = vunpack.c.l.b16 %v1766
        %v2183 = vunpack.c.l.b16 %v1767
        %v2184 = vunpack.c.l.b16 %v1768
        %v2185 = vunpack.c.l.b16 %v1769
        %v2186 = vunpack.c.l.b16 %v1770
        %v2187 = vpack.c.b16 %v2172, %v2171
        %v2188 = vpack.c.b16 %v2174, %v2173
        %v2189 = vpack.c.b16 %v2176, %v2175
        %v2190 = vpack.c.b16 %v2178, %v2177
        %v2191 = vpack.c.b16 %v2180, %v2179
        %v2192 = vpack.c.b16 %v2182, %v2181
        %v2193 = vpack.c.b16 %v2184, %v2183
        %v2194 = vpack.c.b16 %v2186, %v2185
        %2203 = vmatprep.subr.bf16.mxu0 0
        %2204 = vmatpush1.bf16.msra.mxu0 %v2194
        %2205 = vmatprep.subr.bf16.mxu0 0
        %2206 = vmatpush1.bf16.msra.mxu0 %v2193
        %2207 = vmatprep.subr.bf16.mxu0 0
        %2208 = vmatpush1.bf16.msra.mxu0 %v2192
        %2209 = vmatprep.subr.bf16.mxu0 0
        %2210 = vmatpush1.bf16.msra.mxu0 %v2191
        %2211 = vmatprep.subr.bf16.mxu0 0
        %2212 = vmatpush1.bf16.msra.mxu0 %v2190
        %2213 = vmatprep.subr.bf16.mxu0 0
        %2214 = vmatpush1.bf16.msra.mxu0 %v2189
        %2215 = vmatprep.subr.bf16.mxu0 0
        %2216 = vmatpush1.bf16.msra.mxu0 %v2188
        %2217 = vmatprep.subr.bf16.mxu0 0
        %2218 = vmatpush1.bf16.msra.mxu0 %v2187
        %2219 = vmatprep.subr.bf16.mxu0 0
        %2220 = vmatpush2.bf16.msra.mxu0 0
        %2221 = vmatprep.subr.bf16.mxu0 0
        %2222 = vmatpush2.bf16.msra.mxu0 0
        %2223 = vmatprep.subr.bf16.mxu0 0
        %2224 = vmatpush2.bf16.msra.mxu0 0
        %2225 = vmatprep.subr.bf16.mxu0 0
        %2226 = vmatpush2.bf16.msra.mxu0 0
        %2227 = vmatprep.subr.bf16.mxu0 0
        %2228 = vmatpush2.bf16.msra.mxu0 0
        %2229 = vmatprep.subr.bf16.mxu0 0
        %2230 = vmatpush2.bf16.msra.mxu0 0
        %2231 = vmatprep.subr.bf16.mxu0 0
        %2232 = vmatpush2.bf16.msra.mxu0 0
        %2233 = vmatprep.subr.bf16.mxu0 0
        %2234 = vmatpush2.bf16.msra.mxu0 0
        %2235 = vmatprep.mubr.bf16.mxu0 0
        %2236 = vmatmul.mubr.bf16.gmra.mxu0 %v818
        %v2237 = vpop.f32.mrf.mxu0
        %v2238 = vadd.f32 %v1866, %v2237
        %v2239 = vpop.f32.mrf.mxu0
        %v2240 = vpop.f32.mrf.mxu0
        %v2241 = vpop.f32.mrf.mxu0
        %2242 = vdwg.mxu0
        %v2259 = vunpack.c.l.b16 %v1771
        %v2260 = vunpack.c.l.b16 %v1772
        %v2261 = vunpack.c.l.b16 %v1773
        %v2262 = vunpack.c.l.b16 %v1774
        %v2263 = vunpack.c.l.b16 %v1775
        %v2264 = vunpack.c.l.b16 %v1776
        %v2265 = vunpack.c.l.b16 %v1777
        %v2266 = vunpack.c.l.b16 %v1778
        %v2267 = vunpack.c.l.b16 %v1779
        %v2268 = vunpack.c.l.b16 %v1780
        %v2269 = vunpack.c.l.b16 %v1781
        %v2270 = vunpack.c.l.b16 %v1782
        %v2271 = vunpack.c.l.b16 %v1783
        %v2272 = vunpack.c.l.b16 %v1784
        %v2273 = vunpack.c.l.b16 %v1785
        %v2274 = vunpack.c.l.b16 %v1786
        %v2275 = vpack.c.b16 %v2260, %v2259
        %v2276 = vpack.c.b16 %v2262, %v2261
        %v2277 = vpack.c.b16 %v2264, %v2263
        %v2278 = vpack.c.b16 %v2266, %v2265
        %v2279 = vpack.c.b16 %v2268, %v2267
        %v2280 = vpack.c.b16 %v2270, %v2269
        %v2281 = vpack.c.b16 %v2272, %v2271
        %v2282 = vpack.c.b16 %v2274, %v2273
        %2291 = vmatprep.subr.bf16.mxu0 0
        %2292 = vmatpush1.bf16.msra.mxu0 %v2282
        %2293 = vmatprep.subr.bf16.mxu0 0
        %2294 = vmatpush1.bf16.msra.mxu0 %v2281
        %2295 = vmatprep.subr.bf16.mxu0 0
        %2296 = vmatpush1.bf16.msra.mxu0 %v2280
        %2297 = vmatprep.subr.bf16.mxu0 0
        %2298 = vmatpush1.bf16.msra.mxu0 %v2279
        %2299 = vmatprep.subr.bf16.mxu0 0
        %2300 = vmatpush1.bf16.msra.mxu0 %v2278
        %2301 = vmatprep.subr.bf16.mxu0 0
        %2302 = vmatpush1.bf16.msra.mxu0 %v2277
        %2303 = vmatprep.subr.bf16.mxu0 0
        %2304 = vmatpush1.bf16.msra.mxu0 %v2276
        %2305 = vmatprep.subr.bf16.mxu0 0
        %2306 = vmatpush1.bf16.msra.mxu0 %v2275
        %2307 = vmatprep.subr.bf16.mxu0 0
        %2308 = vmatpush2.bf16.msra.mxu0 0
        %2309 = vmatprep.subr.bf16.mxu0 0
        %2310 = vmatpush2.bf16.msra.mxu0 0
        %2311 = vmatprep.subr.bf16.mxu0 0
        %2312 = vmatpush2.bf16.msra.mxu0 0
        %2313 = vmatprep.subr.bf16.mxu0 0
        %2314 = vmatpush2.bf16.msra.mxu0 0
        %2315 = vmatprep.subr.bf16.mxu0 0
        %2316 = vmatpush2.bf16.msra.mxu0 0
        %2317 = vmatprep.subr.bf16.mxu0 0
        %2318 = vmatpush2.bf16.msra.mxu0 0
        %2319 = vmatprep.subr.bf16.mxu0 0
        %2320 = vmatpush2.bf16.msra.mxu0 0
        %2321 = vmatprep.subr.bf16.mxu0 0
        %2322 = vmatpush2.bf16.msra.mxu0 0
        %2323 = vmatprep.mubr.bf16.mxu0 0
        %2324 = vmatmul.mubr.bf16.gmra.mxu0 %v818
        %v2325 = vpop.f32.mrf.mxu0
        %v2326 = vadd.f32 %v1870, %v2325
        %v2327 = vpop.f32.mrf.mxu0
        %v2328 = vpop.f32.mrf.mxu0
        %v2329 = vpop.f32.mrf.mxu0
        %2330 = vdwg.mxu0
        %v2347 = vunpack.c.l.b16 %v1787
        %v2348 = vunpack.c.l.b16 %v1788
        %v2349 = vunpack.c.l.b16 %v1789
        %v2350 = vunpack.c.l.b16 %v1790
        %v2351 = vunpack.c.l.b16 %v1791
        %v2352 = vunpack.c.l.b16 %v1792
        %v2353 = vunpack.c.l.b16 %v1793
        %v2354 = vunpack.c.l.b16 %v1794
        %v2355 = vunpack.c.l.b16 %v1795
        %v2356 = vunpack.c.l.b16 %v1796
        %v2357 = vunpack.c.l.b16 %v1797
        %v2358 = vunpack.c.l.b16 %v1798
        %v2359 = vunpack.c.l.b16 %v1799
        %v2360 = vunpack.c.l.b16 %v1800
        %v2361 = vunpack.c.l.b16 %v1801
        %v2362 = vunpack.c.l.b16 %v1802
        %v2363 = vpack.c.b16 %v2348, %v2347
        %v2364 = vpack.c.b16 %v2350, %v2349
        %v2365 = vpack.c.b16 %v2352, %v2351
        %v2366 = vpack.c.b16 %v2354, %v2353
        %v2367 = vpack.c.b16 %v2356, %v2355
        %v2368 = vpack.c.b16 %v2358, %v2357
        %v2369 = vpack.c.b16 %v2360, %v2359
        %v2370 = vpack.c.b16 %v2362, %v2361
        %2379 = vmatprep.subr.bf16.mxu0 0
        %2380 = vmatpush1.bf16.msra.mxu0 %v2370
        %2381 = vmatprep.subr.bf16.mxu0 0
        %2382 = vmatpush1.bf16.msra.mxu0 %v2369
        %2383 = vmatprep.subr.bf16.mxu0 0
        %2384 = vmatpush1.bf16.msra.mxu0 %v2368
        %2385 = vmatprep.subr.bf16.mxu0 0
        %2386 = vmatpush1.bf16.msra.mxu0 %v2367
        %2387 = vmatprep.subr.bf16.mxu0 0
        %2388 = vmatpush1.bf16.msra.mxu0 %v2366
        %2389 = vmatprep.subr.bf16.mxu0 0
        %2390 = vmatpush1.bf16.msra.mxu0 %v2365
        %2391 = vmatprep.subr.bf16.mxu0 0
        %2392 = vmatpush1.bf16.msra.mxu0 %v2364
        %2393 = vmatprep.subr.bf16.mxu0 0
        %2394 = vmatpush1.bf16.msra.mxu0 %v2363
        %2395 = vmatprep.subr.bf16.mxu0 0
        %2396 = vmatpush2.bf16.msra.mxu0 0
        %2397 = vmatprep.subr.bf16.mxu0 0
        %2398 = vmatpush2.bf16.msra.mxu0 0
        %2399 = vmatprep.subr.bf16.mxu0 0
        %2400 = vmatpush2.bf16.msra.mxu0 0
        %2401 = vmatprep.subr.bf16.mxu0 0
        %2402 = vmatpush2.bf16.msra.mxu0 0
        %2403 = vmatprep.subr.bf16.mxu0 0
        %2404 = vmatpush2.bf16.msra.mxu0 0
        %2405 = vmatprep.subr.bf16.mxu0 0
        %2406 = vmatpush2.bf16.msra.mxu0 0
        %2407 = vmatprep.subr.bf16.mxu0 0
        %2408 = vmatpush2.bf16.msra.mxu0 0
        %2409 = vmatprep.subr.bf16.mxu0 0
        %2410 = vmatpush2.bf16.msra.mxu0 0
        %2411 = vmatprep.mubr.bf16.mxu0 0
        %2412 = vmatmul.mubr.bf16.gmra.mxu0 %v818
        %v2413 = vpop.f32.mrf.mxu0
        %v2414 = vadd.f32 %v1874, %v2413
        %v2415 = vpop.f32.mrf.mxu0
        %v2416 = vpop.f32.mrf.mxu0
        %v2417 = vpop.f32.mrf.mxu0
        %2418 = vdwg.mxu0
        %v2435 = vunpack.c.l.b16 %v1803
        %v2436 = vunpack.c.l.b16 %v1804
        %v2437 = vunpack.c.l.b16 %v1805
        %v2438 = vunpack.c.l.b16 %v1806
        %v2439 = vunpack.c.l.b16 %v1807
        %v2440 = vunpack.c.l.b16 %v1808
        %v2441 = vunpack.c.l.b16 %v1809
        %v2442 = vunpack.c.l.b16 %v1810
        %v2443 = vunpack.c.l.b16 %v1811
        %v2444 = vunpack.c.l.b16 %v1812
        %v2445 = vunpack.c.l.b16 %v1813
        %v2446 = vunpack.c.l.b16 %v1814
        %v2447 = vunpack.c.l.b16 %v1815
        %v2448 = vunpack.c.l.b16 %v1816
        %v2449 = vunpack.c.l.b16 %v1817
        %v2450 = vunpack.c.l.b16 %v1818
        %v2451 = vpack.c.b16 %v2436, %v2435
        %v2452 = vpack.c.b16 %v2438, %v2437
        %v2453 = vpack.c.b16 %v2440, %v2439
        %v2454 = vpack.c.b16 %v2442, %v2441
        %v2455 = vpack.c.b16 %v2444, %v2443
        %v2456 = vpack.c.b16 %v2446, %v2445
        %v2457 = vpack.c.b16 %v2448, %v2447
        %v2458 = vpack.c.b16 %v2450, %v2449
        %2467 = vmatprep.subr.bf16.mxu0 0
        %2468 = vmatpush1.bf16.msra.mxu0 %v2458
        %2469 = vmatprep.subr.bf16.mxu0 0
        %2470 = vmatpush1.bf16.msra.mxu0 %v2457
        %2471 = vmatprep.subr.bf16.mxu0 0
        %2472 = vmatpush1.bf16.msra.mxu0 %v2456
        %2473 = vmatprep.subr.bf16.mxu0 0
        %2474 = vmatpush1.bf16.msra.mxu0 %v2455
        %2475 = vmatprep.subr.bf16.mxu0 0
        %2476 = vmatpush1.bf16.msra.mxu0 %v2454
        %2477 = vmatprep.subr.bf16.mxu0 0
        %2478 = vmatpush1.bf16.msra.mxu0 %v2453
        %2479 = vmatprep.subr.bf16.mxu0 0
        %2480 = vmatpush1.bf16.msra.mxu0 %v2452
        %2481 = vmatprep.subr.bf16.mxu0 0
        %2482 = vmatpush1.bf16.msra.mxu0 %v2451
        %2483 = vmatprep.subr.bf16.mxu0 0
        %2484 = vmatpush2.bf16.msra.mxu0 0
        %2485 = vmatprep.subr.bf16.mxu0 0
        %2486 = vmatpush2.bf16.msra.mxu0 0
        %2487 = vmatprep.subr.bf16.mxu0 0
        %2488 = vmatpush2.bf16.msra.mxu0 0
        %2489 = vmatprep.subr.bf16.mxu0 0
        %2490 = vmatpush2.bf16.msra.mxu0 0
        %2491 = vmatprep.subr.bf16.mxu0 0
        %2492 = vmatpush2.bf16.msra.mxu0 0
        %2493 = vmatprep.subr.bf16.mxu0 0
        %2494 = vmatpush2.bf16.msra.mxu0 0
        %2495 = vmatprep.subr.bf16.mxu0 0
        %2496 = vmatpush2.bf16.msra.mxu0 0
        %2497 = vmatprep.subr.bf16.mxu0 0
        %2498 = vmatpush2.bf16.msra.mxu0 0
        %2499 = vmatprep.mubr.bf16.mxu0 0
        %2500 = vmatmul.mubr.bf16.gmra.mxu0 %v818
        %v2501 = vpop.f32.mrf.mxu0
        %v2502 = vadd.f32 %v1878, %v2501
        %v2503 = vpop.f32.mrf.mxu0
        %v2504 = vpop.f32.mrf.mxu0
        %v2505 = vpop.f32.mrf.mxu0
        %2506 = vdwg.mxu0
        %v2523 = vunpack.c.l.b16 %v1819
        %v2524 = vunpack.c.l.b16 %v1820
        %v2525 = vunpack.c.l.b16 %v1821
        %v2526 = vunpack.c.l.b16 %v1822
        %v2527 = vunpack.c.l.b16 %v1823
        %v2528 = vunpack.c.l.b16 %v1824
        %v2529 = vunpack.c.l.b16 %v1825
        %v2530 = vunpack.c.l.b16 %v1826
        %v2531 = vunpack.c.l.b16 %v1827
        %v2532 = vunpack.c.l.b16 %v1828
        %v2533 = vunpack.c.l.b16 %v1829
        %v2534 = vunpack.c.l.b16 %v1830
        %v2535 = vunpack.c.l.b16 %v1831
        %v2536 = vunpack.c.l.b16 %v1832
        %v2537 = vunpack.c.l.b16 %v1833
        %v2538 = vunpack.c.l.b16 %v1834
        %v2539 = vpack.c.b16 %v2524, %v2523
        %v2540 = vpack.c.b16 %v2526, %v2525
        %v2541 = vpack.c.b16 %v2528, %v2527
        %v2542 = vpack.c.b16 %v2530, %v2529
        %v2543 = vpack.c.b16 %v2532, %v2531
        %v2544 = vpack.c.b16 %v2534, %v2533
        %v2545 = vpack.c.b16 %v2536, %v2535
        %v2546 = vpack.c.b16 %v2538, %v2537
        %2555 = vmatprep.subr.bf16.mxu0 0
        %2556 = vmatpush1.bf16.msra.mxu0 %v2546
        %2557 = vmatprep.subr.bf16.mxu0 0
        %2558 = vmatpush1.bf16.msra.mxu0 %v2545
        %2559 = vmatprep.subr.bf16.mxu0 0
        %2560 = vmatpush1.bf16.msra.mxu0 %v2544
        %2561 = vmatprep.subr.bf16.mxu0 0
        %2562 = vmatpush1.bf16.msra.mxu0 %v2543
        %2563 = vmatprep.subr.bf16.mxu0 0
        %2564 = vmatpush1.bf16.msra.mxu0 %v2542
        %2565 = vmatprep.subr.bf16.mxu0 0
        %2566 = vmatpush1.bf16.msra.mxu0 %v2541
        %2567 = vmatprep.subr.bf16.mxu0 0
        %2568 = vmatpush1.bf16.msra.mxu0 %v2540
        %2569 = vmatprep.subr.bf16.mxu0 0
        %2570 = vmatpush1.bf16.msra.mxu0 %v2539
        %2571 = vmatprep.subr.bf16.mxu0 0
        %2572 = vmatpush2.bf16.msra.mxu0 0
        %2573 = vmatprep.subr.bf16.mxu0 0
        %2574 = vmatpush2.bf16.msra.mxu0 0
        %2575 = vmatprep.subr.bf16.mxu0 0
        %2576 = vmatpush2.bf16.msra.mxu0 0
        %2577 = vmatprep.subr.bf16.mxu0 0
        %2578 = vmatpush2.bf16.msra.mxu0 0
        %2579 = vmatprep.subr.bf16.mxu0 0
        %2580 = vmatpush2.bf16.msra.mxu0 0
        %2581 = vmatprep.subr.bf16.mxu0 0
        %2582 = vmatpush2.bf16.msra.mxu0 0
        %2583 = vmatprep.subr.bf16.mxu0 0
        %2584 = vmatpush2.bf16.msra.mxu0 0
        %2585 = vmatprep.subr.bf16.mxu0 0
        %2586 = vmatpush2.bf16.msra.mxu0 0
        %2587 = vmatprep.mubr.bf16.mxu0 0
        %2588 = vmatmul.mubr.bf16.gmra.mxu0 %v818
        %v2589 = vpop.f32.mrf.mxu0
        %v2590 = vadd.f32 %v1882, %v2589
        %v2591 = vpop.f32.mrf.mxu0
        %v2592 = vpop.f32.mrf.mxu0
        %v2593 = vpop.f32.mrf.mxu0
        %2594 = vdwg.mxu0
        %v2595 = vld [vmem:[%s5] sm:$0xf]
        %v2596 = vld [vmem:[%s5 + $0x4] sm:$0xf]
        %v2597 = vld [vmem:[%s5 + $0x8] sm:$0xf]
        %v2598 = vld [vmem:[%s5 + $0xc] sm:$0xf]
        %v2599 = vld [vmem:[%s5 + $0x10] sm:$0xf]
        %v2600 = vld [vmem:[%s5 + $0x14] sm:$0xf]
        %v2601 = vld [vmem:[%s5 + $0x18] sm:$0xf]
        %v2602 = vld [vmem:[%s5 + $0x1c] sm:$0xf]
        %v2603 = vld [vmem:[%s5 + $0x20] sm:$0xf]
        %v2604 = vld [vmem:[%s5 + $0x24] sm:$0xf]
        %v2605 = vld [vmem:[%s5 + $0x28] sm:$0xf]
        %v2606 = vld [vmem:[%s5 + $0x2c] sm:$0xf]
        %v2607 = vld [vmem:[%s5 + $0x30] sm:$0xf]
        %v2608 = vld [vmem:[%s5 + $0x34] sm:$0xf]
        %v2609 = vld [vmem:[%s5 + $0x38] sm:$0xf]
        %v2610 = vld [vmem:[%s5 + $0x3c] sm:$0xf]
        %v2611 = vld [vmem:[%s5 + $0x40] sm:$0xf]
        %v2612 = vld [vmem:[%s5 + $0x44] sm:$0xf]
        %v2613 = vld [vmem:[%s5 + $0x48] sm:$0xf]
        %v2614 = vld [vmem:[%s5 + $0x4c] sm:$0xf]
        %v2615 = vld [vmem:[%s5 + $0x50] sm:$0xf]
        %v2616 = vld [vmem:[%s5 + $0x54] sm:$0xf]
        %v2617 = vld [vmem:[%s5 + $0x58] sm:$0xf]
        %v2618 = vld [vmem:[%s5 + $0x5c] sm:$0xf]
        %v2619 = vld [vmem:[%s5 + $0x60] sm:$0xf]
        %v2620 = vld [vmem:[%s5 + $0x64] sm:$0xf]
        %v2621 = vld [vmem:[%s5 + $0x68] sm:$0xf]
        %v2622 = vld [vmem:[%s5 + $0x6c] sm:$0xf]
        %v2623 = vld [vmem:[%s5 + $0x70] sm:$0xf]
        %v2624 = vld [vmem:[%s5 + $0x74] sm:$0xf]
        %v2625 = vld [vmem:[%s5 + $0x78] sm:$0xf]
        %v2626 = vld [vmem:[%s5 + $0x7c] sm:$0xf]
        %v2627 = vld [vmem:[%s5 + $0x80] sm:$0xf]
        %v2628 = vld [vmem:[%s5 + $0x84] sm:$0xf]
        %v2629 = vld [vmem:[%s5 + $0x88] sm:$0xf]
        %v2630 = vld [vmem:[%s5 + $0x8c] sm:$0xf]
        %v2631 = vld [vmem:[%s5 + $0x90] sm:$0xf]
        %v2632 = vld [vmem:[%s5 + $0x94] sm:$0xf]
        %v2633 = vld [vmem:[%s5 + $0x98] sm:$0xf]
        %v2634 = vld [vmem:[%s5 + $0x9c] sm:$0xf]
        %v2635 = vld [vmem:[%s5 + $0xa0] sm:$0xf]
        %v2636 = vld [vmem:[%s5 + $0xa4] sm:$0xf]
        %v2637 = vld [vmem:[%s5 + $0xa8] sm:$0xf]
        %v2638 = vld [vmem:[%s5 + $0xac] sm:$0xf]
        %v2639 = vld [vmem:[%s5 + $0xb0] sm:$0xf]
        %v2640 = vld [vmem:[%s5 + $0xb4] sm:$0xf]
        %v2641 = vld [vmem:[%s5 + $0xb8] sm:$0xf]
        %v2642 = vld [vmem:[%s5 + $0xbc] sm:$0xf]
        %v2643 = vld [vmem:[%s5 + $0xc0] sm:$0xf]
        %v2644 = vld [vmem:[%s5 + $0xc4] sm:$0xf]
        %v2645 = vld [vmem:[%s5 + $0xc8] sm:$0xf]
        %v2646 = vld [vmem:[%s5 + $0xcc] sm:$0xf]
        %v2647 = vld [vmem:[%s5 + $0xd0] sm:$0xf]
        %v2648 = vld [vmem:[%s5 + $0xd4] sm:$0xf]
        %v2649 = vld [vmem:[%s5 + $0xd8] sm:$0xf]
        %v2650 = vld [vmem:[%s5 + $0xdc] sm:$0xf]
        %v2651 = vld [vmem:[%s5 + $0xe0] sm:$0xf]
        %v2652 = vld [vmem:[%s5 + $0xe4] sm:$0xf]
        %v2653 = vld [vmem:[%s5 + $0xe8] sm:$0xf]
        %v2654 = vld [vmem:[%s5 + $0xec] sm:$0xf]
        %v2655 = vld [vmem:[%s5 + $0xf0] sm:$0xf]
        %v2656 = vld [vmem:[%s5 + $0xf4] sm:$0xf]
        %v2657 = vld [vmem:[%s5 + $0xf8] sm:$0xf]
        %v2658 = vld [vmem:[%s5 + $0xfc] sm:$0xf]
        %v2659 = vld [vmem:[%s5 + $0x100] sm:$0xf]
        %v2660 = vld [vmem:[%s5 + $0x104] sm:$0xf]
        %v2661 = vld [vmem:[%s5 + $0x108] sm:$0xf]
        %v2662 = vld [vmem:[%s5 + $0x10c] sm:$0xf]
        %v2663 = vld [vmem:[%s5 + $0x110] sm:$0xf]
        %v2664 = vld [vmem:[%s5 + $0x114] sm:$0xf]
        %v2665 = vld [vmem:[%s5 + $0x118] sm:$0xf]
        %v2666 = vld [vmem:[%s5 + $0x11c] sm:$0xf]
        %v2667 = vld [vmem:[%s5 + $0x120] sm:$0xf]
        %v2668 = vld [vmem:[%s5 + $0x124] sm:$0xf]
        %v2669 = vld [vmem:[%s5 + $0x128] sm:$0xf]
        %v2670 = vld [vmem:[%s5 + $0x12c] sm:$0xf]
        %v2671 = vld [vmem:[%s5 + $0x130] sm:$0xf]
        %v2672 = vld [vmem:[%s5 + $0x134] sm:$0xf]
        %v2673 = vld [vmem:[%s5 + $0x138] sm:$0xf]
        %v2674 = vld [vmem:[%s5 + $0x13c] sm:$0xf]
        %v2675 = vld [vmem:[%s5 + $0x140] sm:$0xf]
        %v2676 = vld [vmem:[%s5 + $0x144] sm:$0xf]
        %v2677 = vld [vmem:[%s5 + $0x148] sm:$0xf]
        %v2678 = vld [vmem:[%s5 + $0x14c] sm:$0xf]
        %v2679 = vld [vmem:[%s5 + $0x150] sm:$0xf]
        %v2680 = vld [vmem:[%s5 + $0x154] sm:$0xf]
        %v2681 = vld [vmem:[%s5 + $0x158] sm:$0xf]
        %v2682 = vld [vmem:[%s5 + $0x15c] sm:$0xf]
        %v2683 = vld [vmem:[%s5 + $0x160] sm:$0xf]
        %v2684 = vld [vmem:[%s5 + $0x164] sm:$0xf]
        %v2685 = vld [vmem:[%s5 + $0x168] sm:$0xf]
        %v2686 = vld [vmem:[%s5 + $0x16c] sm:$0xf]
        %v2687 = vld [vmem:[%s5 + $0x170] sm:$0xf]
        %v2688 = vld [vmem:[%s5 + $0x174] sm:$0xf]
        %v2689 = vld [vmem:[%s5 + $0x178] sm:$0xf]
        %v2690 = vld [vmem:[%s5 + $0x17c] sm:$0xf]
        %v2691 = vld [vmem:[%s5 + $0x180] sm:$0xf]
        %v2692 = vld [vmem:[%s5 + $0x184] sm:$0xf]
        %v2693 = vld [vmem:[%s5 + $0x188] sm:$0xf]
        %v2694 = vld [vmem:[%s5 + $0x18c] sm:$0xf]
        %v2695 = vld [vmem:[%s5 + $0x190] sm:$0xf]
        %v2696 = vld [vmem:[%s5 + $0x194] sm:$0xf]
        %v2697 = vld [vmem:[%s5 + $0x198] sm:$0xf]
        %v2698 = vld [vmem:[%s5 + $0x19c] sm:$0xf]
        %v2699 = vld [vmem:[%s5 + $0x1a0] sm:$0xf]
        %v2700 = vld [vmem:[%s5 + $0x1a4] sm:$0xf]
        %v2701 = vld [vmem:[%s5 + $0x1a8] sm:$0xf]
        %v2702 = vld [vmem:[%s5 + $0x1ac] sm:$0xf]
        %v2703 = vld [vmem:[%s5 + $0x1b0] sm:$0xf]
        %v2704 = vld [vmem:[%s5 + $0x1b4] sm:$0xf]
        %v2705 = vld [vmem:[%s5 + $0x1b8] sm:$0xf]
        %v2706 = vld [vmem:[%s5 + $0x1bc] sm:$0xf]
        %v2707 = vld [vmem:[%s5 + $0x1c0] sm:$0xf]
        %v2708 = vld [vmem:[%s5 + $0x1c4] sm:$0xf]
        %v2709 = vld [vmem:[%s5 + $0x1c8] sm:$0xf]
        %v2710 = vld [vmem:[%s5 + $0x1cc] sm:$0xf]
        %v2711 = vld [vmem:[%s5 + $0x1d0] sm:$0xf]
        %v2712 = vld [vmem:[%s5 + $0x1d4] sm:$0xf]
        %v2713 = vld [vmem:[%s5 + $0x1d8] sm:$0xf]
        %v2714 = vld [vmem:[%s5 + $0x1dc] sm:$0xf]
        %v2715 = vld [vmem:[%s5 + $0x1e0] sm:$0xf]
        %v2716 = vld [vmem:[%s5 + $0x1e4] sm:$0xf]
        %v2717 = vld [vmem:[%s5 + $0x1e8] sm:$0xf]
        %v2718 = vld [vmem:[%s5 + $0x1ec] sm:$0xf]
        %v2719 = vld [vmem:[%s5 + $0x1f0] sm:$0xf]
        %v2720 = vld [vmem:[%s5 + $0x1f4] sm:$0xf]
        %v2721 = vld [vmem:[%s5 + $0x1f8] sm:$0xf]
        %v2722 = vld [vmem:[%s5 + $0x1fc] sm:$0xf]
        %v2723 = vld [vmem:[%s6] sm:$0x1]
        %v2724 = vld [vmem:[%s6 + $0x1] sm:$0x1]
        %v2725 = vld [vmem:[%s6 + $0x2] sm:$0x1]
        %v2726 = vld [vmem:[%s6 + $0x3] sm:$0x1]
        %v2727 = vld [vmem:[%s6 + $0x4] sm:$0x1]
        %v2728 = vld [vmem:[%s6 + $0x5] sm:$0x1]
        %v2729 = vld [vmem:[%s6 + $0x6] sm:$0x1]
        %v2730 = vld [vmem:[%s6 + $0x7] sm:$0x1]
        %v2739 = vlaneseq
        %v2740 = vshrl.u32 %v2739, 7
        %v2741 = vsub.s32 0, %v2740
        %v2742 = vrot.slane %v2723, %v2741
        %v2743 = vlaneseq
        %v2744 = vshrl.u32 %v2743, 7
        %v2745 = vsub.s32 0, %v2744
        %v2746 = vrot.slane %v2724, %v2745
        %v2747 = vlaneseq
        %v2748 = vshrl.u32 %v2747, 7
        %v2749 = vsub.s32 0, %v2748
        %v2750 = vrot.slane %v2725, %v2749
        %v2751 = vlaneseq
        %v2752 = vshrl.u32 %v2751, 7
        %v2753 = vsub.s32 0, %v2752
        %v2754 = vrot.slane %v2726, %v2753
        %v2755 = vlaneseq
        %v2756 = vshrl.u32 %v2755, 7
        %v2757 = vsub.s32 0, %v2756
        %v2758 = vrot.slane %v2727, %v2757
        %v2759 = vlaneseq
        %v2760 = vshrl.u32 %v2759, 7
        %v2761 = vsub.s32 0, %v2760
        %v2762 = vrot.slane %v2728, %v2761
        %v2763 = vlaneseq
        %v2764 = vshrl.u32 %v2763, 7
        %v2765 = vsub.s32 0, %v2764
        %v2766 = vrot.slane %v2729, %v2765
        %v2767 = vlaneseq
        %v2768 = vshrl.u32 %v2767, 7
        %v2769 = vsub.s32 0, %v2768
        %v2770 = vrot.slane %v2730, %v2769
        %v2795 = vunpack.c.l.b16 %v2595
        %v2796 = vunpack.c.l.b16 %v2596
        %v2797 = vunpack.c.l.b16 %v2597
        %v2798 = vunpack.c.l.b16 %v2598
        %v2799 = vunpack.c.l.b16 %v2599
        %v2800 = vunpack.c.l.b16 %v2600
        %v2801 = vunpack.c.l.b16 %v2601
        %v2802 = vunpack.c.l.b16 %v2602
        %v2803 = vunpack.c.l.b16 %v2603
        %v2804 = vunpack.c.l.b16 %v2604
        %v2805 = vunpack.c.l.b16 %v2605
        %v2806 = vunpack.c.l.b16 %v2606
        %v2807 = vunpack.c.l.b16 %v2607
        %v2808 = vunpack.c.l.b16 %v2608
        %v2809 = vunpack.c.l.b16 %v2609
        %v2810 = vunpack.c.l.b16 %v2610
        %v2811 = vpack.c.b16 %v2796, %v2795
        %v2812 = vpack.c.b16 %v2798, %v2797
        %v2813 = vpack.c.b16 %v2800, %v2799
        %v2814 = vpack.c.b16 %v2802, %v2801
        %v2815 = vpack.c.b16 %v2804, %v2803
        %v2816 = vpack.c.b16 %v2806, %v2805
        %v2817 = vpack.c.b16 %v2808, %v2807
        %v2818 = vpack.c.b16 %v2810, %v2809
        %2827 = vmatprep.subr.bf16.mxu0 0
        %2828 = vmatpush1.bf16.msra.mxu0 %v2818
        %2829 = vmatprep.subr.bf16.mxu0 0
        %2830 = vmatpush1.bf16.msra.mxu0 %v2817
        %2831 = vmatprep.subr.bf16.mxu0 0
        %2832 = vmatpush1.bf16.msra.mxu0 %v2816
        %2833 = vmatprep.subr.bf16.mxu0 0
        %2834 = vmatpush1.bf16.msra.mxu0 %v2815
        %2835 = vmatprep.subr.bf16.mxu0 0
        %2836 = vmatpush1.bf16.msra.mxu0 %v2814
        %2837 = vmatprep.subr.bf16.mxu0 0
        %2838 = vmatpush1.bf16.msra.mxu0 %v2813
        %2839 = vmatprep.subr.bf16.mxu0 0
        %2840 = vmatpush1.bf16.msra.mxu0 %v2812
        %2841 = vmatprep.subr.bf16.mxu0 0
        %2842 = vmatpush1.bf16.msra.mxu0 %v2811
        %2843 = vmatprep.subr.bf16.mxu0 0
        %2844 = vmatpush2.bf16.msra.mxu0 0
        %2845 = vmatprep.subr.bf16.mxu0 0
        %2846 = vmatpush2.bf16.msra.mxu0 0
        %2847 = vmatprep.subr.bf16.mxu0 0
        %2848 = vmatpush2.bf16.msra.mxu0 0
        %2849 = vmatprep.subr.bf16.mxu0 0
        %2850 = vmatpush2.bf16.msra.mxu0 0
        %2851 = vmatprep.subr.bf16.mxu0 0
        %2852 = vmatpush2.bf16.msra.mxu0 0
        %2853 = vmatprep.subr.bf16.mxu0 0
        %2854 = vmatpush2.bf16.msra.mxu0 0
        %2855 = vmatprep.subr.bf16.mxu0 0
        %2856 = vmatpush2.bf16.msra.mxu0 0
        %2857 = vmatprep.subr.bf16.mxu0 0
        %2858 = vmatpush2.bf16.msra.mxu0 0
        %2859 = vmatprep.mubr.bf16.mxu0 0
        %2860 = vmatmul.mubr.bf16.gmra.mxu0 %v818
        %v2861 = vpop.f32.mrf.mxu0
        %v2862 = vadd.f32 %v2742, %v2861
        %v2863 = vpop.f32.mrf.mxu0
        %v2864 = vpop.f32.mrf.mxu0
        %v2865 = vpop.f32.mrf.mxu0
        %2866 = vdwg.mxu0
        %v2883 = vunpack.c.l.b16 %v2611
        %v2884 = vunpack.c.l.b16 %v2612
        %v2885 = vunpack.c.l.b16 %v2613
        %v2886 = vunpack.c.l.b16 %v2614
        %v2887 = vunpack.c.l.b16 %v2615
        %v2888 = vunpack.c.l.b16 %v2616
        %v2889 = vunpack.c.l.b16 %v2617
        %v2890 = vunpack.c.l.b16 %v2618
        %v2891 = vunpack.c.l.b16 %v2619
        %v2892 = vunpack.c.l.b16 %v2620
        %v2893 = vunpack.c.l.b16 %v2621
        %v2894 = vunpack.c.l.b16 %v2622
        %v2895 = vunpack.c.l.b16 %v2623
        %v2896 = vunpack.c.l.b16 %v2624
        %v2897 = vunpack.c.l.b16 %v2625
        %v2898 = vunpack.c.l.b16 %v2626
        %v2899 = vpack.c.b16 %v2884, %v2883
        %v2900 = vpack.c.b16 %v2886, %v2885
        %v2901 = vpack.c.b16 %v2888, %v2887
        %v2902 = vpack.c.b16 %v2890, %v2889
        %v2903 = vpack.c.b16 %v2892, %v2891
        %v2904 = vpack.c.b16 %v2894, %v2893
        %v2905 = vpack.c.b16 %v2896, %v2895
        %v2906 = vpack.c.b16 %v2898, %v2897
        %2915 = vmatprep.subr.bf16.mxu0 0
        %2916 = vmatpush1.bf16.msra.mxu0 %v2906
        %2917 = vmatprep.subr.bf16.mxu0 0
        %2918 = vmatpush1.bf16.msra.mxu0 %v2905
        %2919 = vmatprep.subr.bf16.mxu0 0
        %2920 = vmatpush1.bf16.msra.mxu0 %v2904
        %2921 = vmatprep.subr.bf16.mxu0 0
        %2922 = vmatpush1.bf16.msra.mxu0 %v2903
        %2923 = vmatprep.subr.bf16.mxu0 0
        %2924 = vmatpush1.bf16.msra.mxu0 %v2902
        %2925 = vmatprep.subr.bf16.mxu0 0
        %2926 = vmatpush1.bf16.msra.mxu0 %v2901
        %2927 = vmatprep.subr.bf16.mxu0 0
        %2928 = vmatpush1.bf16.msra.mxu0 %v2900
        %2929 = vmatprep.subr.bf16.mxu0 0
        %2930 = vmatpush1.bf16.msra.mxu0 %v2899
        %2931 = vmatprep.subr.bf16.mxu0 0
        %2932 = vmatpush2.bf16.msra.mxu0 0
        %2933 = vmatprep.subr.bf16.mxu0 0
        %2934 = vmatpush2.bf16.msra.mxu0 0
        %2935 = vmatprep.subr.bf16.mxu0 0
        %2936 = vmatpush2.bf16.msra.mxu0 0
        %2937 = vmatprep.subr.bf16.mxu0 0
        %2938 = vmatpush2.bf16.msra.mxu0 0
        %2939 = vmatprep.subr.bf16.mxu0 0
        %2940 = vmatpush2.bf16.msra.mxu0 0
        %2941 = vmatprep.subr.bf16.mxu0 0
        %2942 = vmatpush2.bf16.msra.mxu0 0
        %2943 = vmatprep.subr.bf16.mxu0 0
        %2944 = vmatpush2.bf16.msra.mxu0 0
        %2945 = vmatprep.subr.bf16.mxu0 0
        %2946 = vmatpush2.bf16.msra.mxu0 0
        %2947 = vmatprep.mubr.bf16.mxu0 0
        %2948 = vmatmul.mubr.bf16.gmra.mxu0 %v818
        %v2949 = vpop.f32.mrf.mxu0
        %v2950 = vadd.f32 %v2746, %v2949
        %v2951 = vpop.f32.mrf.mxu0
        %v2952 = vpop.f32.mrf.mxu0
        %v2953 = vpop.f32.mrf.mxu0
        %2954 = vdwg.mxu0
        %v2971 = vunpack.c.l.b16 %v2627
        %v2972 = vunpack.c.l.b16 %v2628
        %v2973 = vunpack.c.l.b16 %v2629
        %v2974 = vunpack.c.l.b16 %v2630
        %v2975 = vunpack.c.l.b16 %v2631
        %v2976 = vunpack.c.l.b16 %v2632
        %v2977 = vunpack.c.l.b16 %v2633
        %v2978 = vunpack.c.l.b16 %v2634
        %v2979 = vunpack.c.l.b16 %v2635
        %v2980 = vunpack.c.l.b16 %v2636
        %v2981 = vunpack.c.l.b16 %v2637
        %v2982 = vunpack.c.l.b16 %v2638
        %v2983 = vunpack.c.l.b16 %v2639
        %v2984 = vunpack.c.l.b16 %v2640
        %v2985 = vunpack.c.l.b16 %v2641
        %v2986 = vunpack.c.l.b16 %v2642
        %v2987 = vpack.c.b16 %v2972, %v2971
        %v2988 = vpack.c.b16 %v2974, %v2973
        %v2989 = vpack.c.b16 %v2976, %v2975
        %v2990 = vpack.c.b16 %v2978, %v2977
        %v2991 = vpack.c.b16 %v2980, %v2979
        %v2992 = vpack.c.b16 %v2982, %v2981
        %v2993 = vpack.c.b16 %v2984, %v2983
        %v2994 = vpack.c.b16 %v2986, %v2985
        %3003 = vmatprep.subr.bf16.mxu0 0
        %3004 = vmatpush1.bf16.msra.mxu0 %v2994
        %3005 = vmatprep.subr.bf16.mxu0 0
        %3006 = vmatpush1.bf16.msra.mxu0 %v2993
        %3007 = vmatprep.subr.bf16.mxu0 0
        %3008 = vmatpush1.bf16.msra.mxu0 %v2992
        %3009 = vmatprep.subr.bf16.mxu0 0
        %3010 = vmatpush1.bf16.msra.mxu0 %v2991
        %3011 = vmatprep.subr.bf16.mxu0 0
        %3012 = vmatpush1.bf16.msra.mxu0 %v2990
        %3013 = vmatprep.subr.bf16.mxu0 0
        %3014 = vmatpush1.bf16.msra.mxu0 %v2989
        %3015 = vmatprep.subr.bf16.mxu0 0
        %3016 = vmatpush1.bf16.msra.mxu0 %v2988
        %3017 = vmatprep.subr.bf16.mxu0 0
        %3018 = vmatpush1.bf16.msra.mxu0 %v2987
        %3019 = vmatprep.subr.bf16.mxu0 0
        %3020 = vmatpush2.bf16.msra.mxu0 0
        %3021 = vmatprep.subr.bf16.mxu0 0
        %3022 = vmatpush2.bf16.msra.mxu0 0
        %3023 = vmatprep.subr.bf16.mxu0 0
        %3024 = vmatpush2.bf16.msra.mxu0 0
        %3025 = vmatprep.subr.bf16.mxu0 0
        %3026 = vmatpush2.bf16.msra.mxu0 0
        %3027 = vmatprep.subr.bf16.mxu0 0
        %3028 = vmatpush2.bf16.msra.mxu0 0
        %3029 = vmatprep.subr.bf16.mxu0 0
        %3030 = vmatpush2.bf16.msra.mxu0 0
        %3031 = vmatprep.subr.bf16.mxu0 0
        %3032 = vmatpush2.bf16.msra.mxu0 0
        %3033 = vmatprep.subr.bf16.mxu0 0
        %3034 = vmatpush2.bf16.msra.mxu0 0
        %3035 = vmatprep.mubr.bf16.mxu0 0
        %3036 = vmatmul.mubr.bf16.gmra.mxu0 %v818
        %v3037 = vpop.f32.mrf.mxu0
        %v3038 = vadd.f32 %v2750, %v3037
        %v3039 = vpop.f32.mrf.mxu0
        %v3040 = vpop.f32.mrf.mxu0
        %v3041 = vpop.f32.mrf.mxu0
        %3042 = vdwg.mxu0
        %v3059 = vunpack.c.l.b16 %v2643
        %v3060 = vunpack.c.l.b16 %v2644
        %v3061 = vunpack.c.l.b16 %v2645
        %v3062 = vunpack.c.l.b16 %v2646
        %v3063 = vunpack.c.l.b16 %v2647
        %v3064 = vunpack.c.l.b16 %v2648
        %v3065 = vunpack.c.l.b16 %v2649
        %v3066 = vunpack.c.l.b16 %v2650
        %v3067 = vunpack.c.l.b16 %v2651
        %v3068 = vunpack.c.l.b16 %v2652
        %v3069 = vunpack.c.l.b16 %v2653
        %v3070 = vunpack.c.l.b16 %v2654
        %v3071 = vunpack.c.l.b16 %v2655
        %v3072 = vunpack.c.l.b16 %v2656
        %v3073 = vunpack.c.l.b16 %v2657
        %v3074 = vunpack.c.l.b16 %v2658
        %v3075 = vpack.c.b16 %v3060, %v3059
        %v3076 = vpack.c.b16 %v3062, %v3061
        %v3077 = vpack.c.b16 %v3064, %v3063
        %v3078 = vpack.c.b16 %v3066, %v3065
        %v3079 = vpack.c.b16 %v3068, %v3067
        %v3080 = vpack.c.b16 %v3070, %v3069
        %v3081 = vpack.c.b16 %v3072, %v3071
        %v3082 = vpack.c.b16 %v3074, %v3073
        %3091 = vmatprep.subr.bf16.mxu0 0
        %3092 = vmatpush1.bf16.msra.mxu0 %v3082
        %3093 = vmatprep.subr.bf16.mxu0 0
        %3094 = vmatpush1.bf16.msra.mxu0 %v3081
        %3095 = vmatprep.subr.bf16.mxu0 0
        %3096 = vmatpush1.bf16.msra.mxu0 %v3080
        %3097 = vmatprep.subr.bf16.mxu0 0
        %3098 = vmatpush1.bf16.msra.mxu0 %v3079
        %3099 = vmatprep.subr.bf16.mxu0 0
        %3100 = vmatpush1.bf16.msra.mxu0 %v3078
        %3101 = vmatprep.subr.bf16.mxu0 0
        %3102 = vmatpush1.bf16.msra.mxu0 %v3077
        %3103 = vmatprep.subr.bf16.mxu0 0
        %3104 = vmatpush1.bf16.msra.mxu0 %v3076
        %3105 = vmatprep.subr.bf16.mxu0 0
        %3106 = vmatpush1.bf16.msra.mxu0 %v3075
        %3107 = vmatprep.subr.bf16.mxu0 0
        %3108 = vmatpush2.bf16.msra.mxu0 0
        %3109 = vmatprep.subr.bf16.mxu0 0
        %3110 = vmatpush2.bf16.msra.mxu0 0
        %3111 = vmatprep.subr.bf16.mxu0 0
        %3112 = vmatpush2.bf16.msra.mxu0 0
        %3113 = vmatprep.subr.bf16.mxu0 0
        %3114 = vmatpush2.bf16.msra.mxu0 0
        %3115 = vmatprep.subr.bf16.mxu0 0
        %3116 = vmatpush2.bf16.msra.mxu0 0
        %3117 = vmatprep.subr.bf16.mxu0 0
        %3118 = vmatpush2.bf16.msra.mxu0 0
        %3119 = vmatprep.subr.bf16.mxu0 0
        %3120 = vmatpush2.bf16.msra.mxu0 0
        %3121 = vmatprep.subr.bf16.mxu0 0
        %3122 = vmatpush2.bf16.msra.mxu0 0
        %3123 = vmatprep.mubr.bf16.mxu0 0
        %3124 = vmatmul.mubr.bf16.gmra.mxu0 %v818
        %v3125 = vpop.f32.mrf.mxu0
        %v3126 = vadd.f32 %v2754, %v3125
        %v3127 = vpop.f32.mrf.mxu0
        %v3128 = vpop.f32.mrf.mxu0
        %v3129 = vpop.f32.mrf.mxu0
        %3130 = vdwg.mxu0
        %v3147 = vunpack.c.l.b16 %v2659
        %v3148 = vunpack.c.l.b16 %v2660
        %v3149 = vunpack.c.l.b16 %v2661
        %v3150 = vunpack.c.l.b16 %v2662
        %v3151 = vunpack.c.l.b16 %v2663
        %v3152 = vunpack.c.l.b16 %v2664
        %v3153 = vunpack.c.l.b16 %v2665
        %v3154 = vunpack.c.l.b16 %v2666
        %v3155 = vunpack.c.l.b16 %v2667
        %v3156 = vunpack.c.l.b16 %v2668
        %v3157 = vunpack.c.l.b16 %v2669
        %v3158 = vunpack.c.l.b16 %v2670
        %v3159 = vunpack.c.l.b16 %v2671
        %v3160 = vunpack.c.l.b16 %v2672
        %v3161 = vunpack.c.l.b16 %v2673
        %v3162 = vunpack.c.l.b16 %v2674
        %v3163 = vpack.c.b16 %v3148, %v3147
        %v3164 = vpack.c.b16 %v3150, %v3149
        %v3165 = vpack.c.b16 %v3152, %v3151
        %v3166 = vpack.c.b16 %v3154, %v3153
        %v3167 = vpack.c.b16 %v3156, %v3155
        %v3168 = vpack.c.b16 %v3158, %v3157
        %v3169 = vpack.c.b16 %v3160, %v3159
        %v3170 = vpack.c.b16 %v3162, %v3161
        %3179 = vmatprep.subr.bf16.mxu0 0
        %3180 = vmatpush1.bf16.msra.mxu0 %v3170
        %3181 = vmatprep.subr.bf16.mxu0 0
        %3182 = vmatpush1.bf16.msra.mxu0 %v3169
        %3183 = vmatprep.subr.bf16.mxu0 0
        %3184 = vmatpush1.bf16.msra.mxu0 %v3168
        %3185 = vmatprep.subr.bf16.mxu0 0
        %3186 = vmatpush1.bf16.msra.mxu0 %v3167
        %3187 = vmatprep.subr.bf16.mxu0 0
        %3188 = vmatpush1.bf16.msra.mxu0 %v3166
        %3189 = vmatprep.subr.bf16.mxu0 0
        %3190 = vmatpush1.bf16.msra.mxu0 %v3165
        %3191 = vmatprep.subr.bf16.mxu0 0
        %3192 = vmatpush1.bf16.msra.mxu0 %v3164
        %3193 = vmatprep.subr.bf16.mxu0 0
        %3194 = vmatpush1.bf16.msra.mxu0 %v3163
        %3195 = vmatprep.subr.bf16.mxu0 0
        %3196 = vmatpush2.bf16.msra.mxu0 0
        %3197 = vmatprep.subr.bf16.mxu0 0
        %3198 = vmatpush2.bf16.msra.mxu0 0
        %3199 = vmatprep.subr.bf16.mxu0 0
        %3200 = vmatpush2.bf16.msra.mxu0 0
        %3201 = vmatprep.subr.bf16.mxu0 0
        %3202 = vmatpush2.bf16.msra.mxu0 0
        %3203 = vmatprep.subr.bf16.mxu0 0
        %3204 = vmatpush2.bf16.msra.mxu0 0
        %3205 = vmatprep.subr.bf16.mxu0 0
        %3206 = vmatpush2.bf16.msra.mxu0 0
        %3207 = vmatprep.subr.bf16.mxu0 0
        %3208 = vmatpush2.bf16.msra.mxu0 0
        %3209 = vmatprep.subr.bf16.mxu0 0
        %3210 = vmatpush2.bf16.msra.mxu0 0
        %3211 = vmatprep.mubr.bf16.mxu0 0
        %3212 = vmatmul.mubr.bf16.gmra.mxu0 %v818
        %v3213 = vpop.f32.mrf.mxu0
        %v3214 = vadd.f32 %v2758, %v3213
        %v3215 = vpop.f32.mrf.mxu0
        %v3216 = vpop.f32.mrf.mxu0
        %v3217 = vpop.f32.mrf.mxu0
        %3218 = vdwg.mxu0
        %v3235 = vunpack.c.l.b16 %v2675
        %v3236 = vunpack.c.l.b16 %v2676
        %v3237 = vunpack.c.l.b16 %v2677
        %v3238 = vunpack.c.l.b16 %v2678
        %v3239 = vunpack.c.l.b16 %v2679
        %v3240 = vunpack.c.l.b16 %v2680
        %v3241 = vunpack.c.l.b16 %v2681
        %v3242 = vunpack.c.l.b16 %v2682
        %v3243 = vunpack.c.l.b16 %v2683
        %v3244 = vunpack.c.l.b16 %v2684
        %v3245 = vunpack.c.l.b16 %v2685
        %v3246 = vunpack.c.l.b16 %v2686
        %v3247 = vunpack.c.l.b16 %v2687
        %v3248 = vunpack.c.l.b16 %v2688
        %v3249 = vunpack.c.l.b16 %v2689
        %v3250 = vunpack.c.l.b16 %v2690
        %v3251 = vpack.c.b16 %v3236, %v3235
        %v3252 = vpack.c.b16 %v3238, %v3237
        %v3253 = vpack.c.b16 %v3240, %v3239
        %v3254 = vpack.c.b16 %v3242, %v3241
        %v3255 = vpack.c.b16 %v3244, %v3243
        %v3256 = vpack.c.b16 %v3246, %v3245
        %v3257 = vpack.c.b16 %v3248, %v3247
        %v3258 = vpack.c.b16 %v3250, %v3249
        %3267 = vmatprep.subr.bf16.mxu0 0
        %3268 = vmatpush1.bf16.msra.mxu0 %v3258
        %3269 = vmatprep.subr.bf16.mxu0 0
        %3270 = vmatpush1.bf16.msra.mxu0 %v3257
        %3271 = vmatprep.subr.bf16.mxu0 0
        %3272 = vmatpush1.bf16.msra.mxu0 %v3256
        %3273 = vmatprep.subr.bf16.mxu0 0
        %3274 = vmatpush1.bf16.msra.mxu0 %v3255
        %3275 = vmatprep.subr.bf16.mxu0 0
        %3276 = vmatpush1.bf16.msra.mxu0 %v3254
        %3277 = vmatprep.subr.bf16.mxu0 0
        %3278 = vmatpush1.bf16.msra.mxu0 %v3253
        %3279 = vmatprep.subr.bf16.mxu0 0
        %3280 = vmatpush1.bf16.msra.mxu0 %v3252
        %3281 = vmatprep.subr.bf16.mxu0 0
        %3282 = vmatpush1.bf16.msra.mxu0 %v3251
        %3283 = vmatprep.subr.bf16.mxu0 0
        %3284 = vmatpush2.bf16.msra.mxu0 0
        %3285 = vmatprep.subr.bf16.mxu0 0
        %3286 = vmatpush2.bf16.msra.mxu0 0
        %3287 = vmatprep.subr.bf16.mxu0 0
        %3288 = vmatpush2.bf16.msra.mxu0 0
        %3289 = vmatprep.subr.bf16.mxu0 0
        %3290 = vmatpush2.bf16.msra.mxu0 0
        %3291 = vmatprep.subr.bf16.mxu0 0
        %3292 = vmatpush2.bf16.msra.mxu0 0
        %3293 = vmatprep.subr.bf16.mxu0 0
        %3294 = vmatpush2.bf16.msra.mxu0 0
        %3295 = vmatprep.subr.bf16.mxu0 0
        %3296 = vmatpush2.bf16.msra.mxu0 0
        %3297 = vmatprep.subr.bf16.mxu0 0
        %3298 = vmatpush2.bf16.msra.mxu0 0
        %3299 = vmatprep.mubr.bf16.mxu0 0
        %3300 = vmatmul.mubr.bf16.gmra.mxu0 %v818
        %v3301 = vpop.f32.mrf.mxu0
        %v3302 = vadd.f32 %v2762, %v3301
        %v3303 = vpop.f32.mrf.mxu0
        %v3304 = vpop.f32.mrf.mxu0
        %v3305 = vpop.f32.mrf.mxu0
        %3306 = vdwg.mxu0
        %v3323 = vunpack.c.l.b16 %v2691
        %v3324 = vunpack.c.l.b16 %v2692
        %v3325 = vunpack.c.l.b16 %v2693
        %v3326 = vunpack.c.l.b16 %v2694
        %v3327 = vunpack.c.l.b16 %v2695
        %v3328 = vunpack.c.l.b16 %v2696
        %v3329 = vunpack.c.l.b16 %v2697
        %v3330 = vunpack.c.l.b16 %v2698
        %v3331 = vunpack.c.l.b16 %v2699
        %v3332 = vunpack.c.l.b16 %v2700
        %v3333 = vunpack.c.l.b16 %v2701
        %v3334 = vunpack.c.l.b16 %v2702
        %v3335 = vunpack.c.l.b16 %v2703
        %v3336 = vunpack.c.l.b16 %v2704
        %v3337 = vunpack.c.l.b16 %v2705
        %v3338 = vunpack.c.l.b16 %v2706
        %v3339 = vpack.c.b16 %v3324, %v3323
        %v3340 = vpack.c.b16 %v3326, %v3325
        %v3341 = vpack.c.b16 %v3328, %v3327
        %v3342 = vpack.c.b16 %v3330, %v3329
        %v3343 = vpack.c.b16 %v3332, %v3331
        %v3344 = vpack.c.b16 %v3334, %v3333
        %v3345 = vpack.c.b16 %v3336, %v3335
        %v3346 = vpack.c.b16 %v3338, %v3337
        %3355 = vmatprep.subr.bf16.mxu0 0
        %3356 = vmatpush1.bf16.msra.mxu0 %v3346
        %3357 = vmatprep.subr.bf16.mxu0 0
        %3358 = vmatpush1.bf16.msra.mxu0 %v3345
        %3359 = vmatprep.subr.bf16.mxu0 0
        %3360 = vmatpush1.bf16.msra.mxu0 %v3344
        %3361 = vmatprep.subr.bf16.mxu0 0
        %3362 = vmatpush1.bf16.msra.mxu0 %v3343
        %3363 = vmatprep.subr.bf16.mxu0 0
        %3364 = vmatpush1.bf16.msra.mxu0 %v3342
        %3365 = vmatprep.subr.bf16.mxu0 0
        %3366 = vmatpush1.bf16.msra.mxu0 %v3341
        %3367 = vmatprep.subr.bf16.mxu0 0
        %3368 = vmatpush1.bf16.msra.mxu0 %v3340
        %3369 = vmatprep.subr.bf16.mxu0 0
        %3370 = vmatpush1.bf16.msra.mxu0 %v3339
        %3371 = vmatprep.subr.bf16.mxu0 0
        %3372 = vmatpush2.bf16.msra.mxu0 0
        %3373 = vmatprep.subr.bf16.mxu0 0
        %3374 = vmatpush2.bf16.msra.mxu0 0
        %3375 = vmatprep.subr.bf16.mxu0 0
        %3376 = vmatpush2.bf16.msra.mxu0 0
        %3377 = vmatprep.subr.bf16.mxu0 0
        %3378 = vmatpush2.bf16.msra.mxu0 0
        %3379 = vmatprep.subr.bf16.mxu0 0
        %3380 = vmatpush2.bf16.msra.mxu0 0
        %3381 = vmatprep.subr.bf16.mxu0 0
        %3382 = vmatpush2.bf16.msra.mxu0 0
        %3383 = vmatprep.subr.bf16.mxu0 0
        %3384 = vmatpush2.bf16.msra.mxu0 0
        %3385 = vmatprep.subr.bf16.mxu0 0
        %3386 = vmatpush2.bf16.msra.mxu0 0
        %3387 = vmatprep.mubr.bf16.mxu0 0
        %3388 = vmatmul.mubr.bf16.gmra.mxu0 %v818
        %v3389 = vpop.f32.mrf.mxu0
        %v3390 = vadd.f32 %v2766, %v3389
        %v3391 = vpop.f32.mrf.mxu0
        %v3392 = vpop.f32.mrf.mxu0
        %v3393 = vpop.f32.mrf.mxu0
        %3394 = vdwg.mxu0
        %v3411 = vunpack.c.l.b16 %v2707
        %v3412 = vunpack.c.l.b16 %v2708
        %v3413 = vunpack.c.l.b16 %v2709
        %v3414 = vunpack.c.l.b16 %v2710
        %v3415 = vunpack.c.l.b16 %v2711
        %v3416 = vunpack.c.l.b16 %v2712
        %v3417 = vunpack.c.l.b16 %v2713
        %v3418 = vunpack.c.l.b16 %v2714
        %v3419 = vunpack.c.l.b16 %v2715
        %v3420 = vunpack.c.l.b16 %v2716
        %v3421 = vunpack.c.l.b16 %v2717
        %v3422 = vunpack.c.l.b16 %v2718
        %v3423 = vunpack.c.l.b16 %v2719
        %v3424 = vunpack.c.l.b16 %v2720
        %v3425 = vunpack.c.l.b16 %v2721
        %v3426 = vunpack.c.l.b16 %v2722
        %v3427 = vpack.c.b16 %v3412, %v3411
        %v3428 = vpack.c.b16 %v3414, %v3413
        %v3429 = vpack.c.b16 %v3416, %v3415
        %v3430 = vpack.c.b16 %v3418, %v3417
        %v3431 = vpack.c.b16 %v3420, %v3419
        %v3432 = vpack.c.b16 %v3422, %v3421
        %v3433 = vpack.c.b16 %v3424, %v3423
        %v3434 = vpack.c.b16 %v3426, %v3425
        %3443 = vmatprep.subr.bf16.mxu0 0
        %3444 = vmatpush1.bf16.msra.mxu0 %v3434
        %3445 = vmatprep.subr.bf16.mxu0 0
        %3446 = vmatpush1.bf16.msra.mxu0 %v3433
        %3447 = vmatprep.subr.bf16.mxu0 0
        %3448 = vmatpush1.bf16.msra.mxu0 %v3432
        %3449 = vmatprep.subr.bf16.mxu0 0
        %3450 = vmatpush1.bf16.msra.mxu0 %v3431
        %3451 = vmatprep.subr.bf16.mxu0 0
        %3452 = vmatpush1.bf16.msra.mxu0 %v3430
        %3453 = vmatprep.subr.bf16.mxu0 0
        %3454 = vmatpush1.bf16.msra.mxu0 %v3429
        %3455 = vmatprep.subr.bf16.mxu0 0
        %3456 = vmatpush1.bf16.msra.mxu0 %v3428
        %3457 = vmatprep.subr.bf16.mxu0 0
        %3458 = vmatpush1.bf16.msra.mxu0 %v3427
        %3459 = vmatprep.subr.bf16.mxu0 0
        %3460 = vmatpush2.bf16.msra.mxu0 0
        %3461 = vmatprep.subr.bf16.mxu0 0
        %3462 = vmatpush2.bf16.msra.mxu0 0
        %3463 = vmatprep.subr.bf16.mxu0 0
        %3464 = vmatpush2.bf16.msra.mxu0 0
        %3465 = vmatprep.subr.bf16.mxu0 0
        %3466 = vmatpush2.bf16.msra.mxu0 0
        %3467 = vmatprep.subr.bf16.mxu0 0
        %3468 = vmatpush2.bf16.msra.mxu0 0
        %3469 = vmatprep.subr.bf16.mxu0 0
        %3470 = vmatpush2.bf16.msra.mxu0 0
        %3471 = vmatprep.subr.bf16.mxu0 0
        %3472 = vmatpush2.bf16.msra.mxu0 0
        %3473 = vmatprep.subr.bf16.mxu0 0
        %3474 = vmatpush2.bf16.msra.mxu0 0
        %3475 = vmatprep.mubr.bf16.mxu0 0
        %3476 = vmatmul.mubr.bf16.gmra.mxu0 %v818
        %v3477 = vpop.f32.mrf.mxu0
        %v3478 = vadd.f32 %v2770, %v3477
        %v3479 = vpop.f32.mrf.mxu0
        %v3480 = vpop.f32.mrf.mxu0
        %v3481 = vpop.f32.mrf.mxu0
        %3482 = vdwg.mxu0
        %v3483 = vpack.c.bf16 %v1086, %v1086
        %v3484 = vpack.c.bf16 %v1174, %v1174
        %v3485 = vpack.c.bf16 %v1262, %v1262
        %v3486 = vpack.c.bf16 %v1350, %v1350
        %v3487 = vpack.c.bf16 %v1438, %v1438
        %v3488 = vpack.c.bf16 %v1526, %v1526
        %v3489 = vpack.c.bf16 %v1614, %v1614
        %v3490 = vpack.c.bf16 %v1702, %v1702
        %v3491 = vpack.c.bf16 %v1974, %v1974
        %v3492 = vpack.c.bf16 %v2062, %v2062
        %v3493 = vpack.c.bf16 %v2150, %v2150
        %v3494 = vpack.c.bf16 %v2238, %v2238
        %v3495 = vpack.c.bf16 %v2326, %v2326
        %v3496 = vpack.c.bf16 %v2414, %v2414
        %v3497 = vpack.c.bf16 %v2502, %v2502
        %v3498 = vpack.c.bf16 %v2590, %v2590
        %vm3499 = vcmask 130048
        %v3501 = vsel %vm3499, %v3483, 0
        %v3504 = vsel %vm3499, %v3491, 0
        %3506 = vmatprep.subr.bf16.mxu0 0
        %3507 = vmatpush1.bf16.xpose.msra.mxu0 0
        %3508 = vmatprep.subr.bf16.mxu0 0
        %3509 = vmatpush1.bf16.xpose.msra.mxu0 0
        %3510 = vmatprep.subr.bf16.mxu0 0
        %3511 = vmatpush1.bf16.xpose.msra.mxu0 0
        %3512 = vmatprep.subr.bf16.mxu0 0
        %3513 = vmatpush1.bf16.xpose.msra.mxu0 0
        %3514 = vmatprep.subr.bf16.mxu0 0
        %3515 = vmatpush1.bf16.xpose.msra.mxu0 0
        %3516 = vmatprep.subr.bf16.mxu0 0
        %3517 = vmatpush1.bf16.xpose.msra.mxu0 0
        %3518 = vmatprep.subr.bf16.mxu0 0
        %3519 = vmatpush1.bf16.xpose.msra.mxu0 0
        %3520 = vmatprep.subr.bf16.mxu0 0
        %3521 = vmatpush1.bf16.xpose.msra.mxu0 %v3504
        %3522 = vmatprep.subr.bf16.mxu0 0
        %3523 = vmatpush2.bf16.xpose.msra.mxu0 0
        %3524 = vmatprep.subr.bf16.mxu0 0
        %3525 = vmatpush2.bf16.xpose.msra.mxu0 0
        %3526 = vmatprep.subr.bf16.mxu0 0
        %3527 = vmatpush2.bf16.xpose.msra.mxu0 0
        %3528 = vmatprep.subr.bf16.mxu0 0
        %3529 = vmatpush2.bf16.xpose.msra.mxu0 0
        %3530 = vmatprep.subr.bf16.mxu0 0
        %3531 = vmatpush2.bf16.xpose.msra.mxu0 0
        %3532 = vmatprep.subr.bf16.mxu0 0
        %3533 = vmatpush2.bf16.xpose.msra.mxu0 0
        %3534 = vmatprep.subr.bf16.mxu0 0
        %3535 = vmatpush2.bf16.xpose.msra.mxu0 0
        %3536 = vmatprep.subr.bf16.mxu0 0
        %3537 = vmatpush2.bf16.xpose.msra.mxu0 0
        %3538 = vmatprep.mubr.bf16.mxu0 0
        %3539 = vmatmul.mubr.bf16.gmra.mxu0 %v3501
        %v3540 = vpop.f32.mrf.mxu0
        %v3541 = vadd.f32 0.0, %v3540
        %v3542 = vpop.f32.mrf.mxu0
        %v3543 = vpop.f32.mrf.mxu0
        %v3544 = vpop.f32.mrf.mxu0
        %3545 = vdwg.mxu0
        %v3547 = vsel %vm3499, %v3484, 0
        %v3550 = vsel %vm3499, %v3492, 0
        %3552 = vmatprep.subr.bf16.mxu0 0
        %3553 = vmatpush1.bf16.xpose.msra.mxu0 0
        %3554 = vmatprep.subr.bf16.mxu0 0
        %3555 = vmatpush1.bf16.xpose.msra.mxu0 0
        %3556 = vmatprep.subr.bf16.mxu0 0
        %3557 = vmatpush1.bf16.xpose.msra.mxu0 0
        %3558 = vmatprep.subr.bf16.mxu0 0
        %3559 = vmatpush1.bf16.xpose.msra.mxu0 0
        %3560 = vmatprep.subr.bf16.mxu0 0
        %3561 = vmatpush1.bf16.xpose.msra.mxu0 0
        %3562 = vmatprep.subr.bf16.mxu0 0
        %3563 = vmatpush1.bf16.xpose.msra.mxu0 0
        %3564 = vmatprep.subr.bf16.mxu0 0
        %3565 = vmatpush1.bf16.xpose.msra.mxu0 0
        %3566 = vmatprep.subr.bf16.mxu0 0
        %3567 = vmatpush1.bf16.xpose.msra.mxu0 %v3550
        %3568 = vmatprep.subr.bf16.mxu0 0
        %3569 = vmatpush2.bf16.xpose.msra.mxu0 0
        %3570 = vmatprep.subr.bf16.mxu0 0
        %3571 = vmatpush2.bf16.xpose.msra.mxu0 0
        %3572 = vmatprep.subr.bf16.mxu0 0
        %3573 = vmatpush2.bf16.xpose.msra.mxu0 0
        %3574 = vmatprep.subr.bf16.mxu0 0
        %3575 = vmatpush2.bf16.xpose.msra.mxu0 0
        %3576 = vmatprep.subr.bf16.mxu0 0
        %3577 = vmatpush2.bf16.xpose.msra.mxu0 0
        %3578 = vmatprep.subr.bf16.mxu0 0
        %3579 = vmatpush2.bf16.xpose.msra.mxu0 0
        %3580 = vmatprep.subr.bf16.mxu0 0
        %3581 = vmatpush2.bf16.xpose.msra.mxu0 0
        %3582 = vmatprep.subr.bf16.mxu0 0
        %3583 = vmatpush2.bf16.xpose.msra.mxu0 0
        %3584 = vmatprep.mubr.bf16.mxu0 0
        %3585 = vmatmul.mubr.bf16.gmra.mxu0 %v3547
        %v3586 = vpop.f32.mrf.mxu0
        %v3587 = vadd.f32 0.0, %v3586
        %v3588 = vpop.f32.mrf.mxu0
        %v3589 = vpop.f32.mrf.mxu0
        %v3590 = vpop.f32.mrf.mxu0
        %3591 = vdwg.mxu0
        %v3593 = vsel %vm3499, %v3485, 0
        %v3596 = vsel %vm3499, %v3493, 0
        %3598 = vmatprep.subr.bf16.mxu0 0
        %3599 = vmatpush1.bf16.xpose.msra.mxu0 0
        %3600 = vmatprep.subr.bf16.mxu0 0
        %3601 = vmatpush1.bf16.xpose.msra.mxu0 0
        %3602 = vmatprep.subr.bf16.mxu0 0
        %3603 = vmatpush1.bf16.xpose.msra.mxu0 0
        %3604 = vmatprep.subr.bf16.mxu0 0
        %3605 = vmatpush1.bf16.xpose.msra.mxu0 0
        %3606 = vmatprep.subr.bf16.mxu0 0
        %3607 = vmatpush1.bf16.xpose.msra.mxu0 0
        %3608 = vmatprep.subr.bf16.mxu0 0
        %3609 = vmatpush1.bf16.xpose.msra.mxu0 0
        %3610 = vmatprep.subr.bf16.mxu0 0
        %3611 = vmatpush1.bf16.xpose.msra.mxu0 0
        %3612 = vmatprep.subr.bf16.mxu0 0
        %3613 = vmatpush1.bf16.xpose.msra.mxu0 %v3596
        %3614 = vmatprep.subr.bf16.mxu0 0
        %3615 = vmatpush2.bf16.xpose.msra.mxu0 0
        %3616 = vmatprep.subr.bf16.mxu0 0
        %3617 = vmatpush2.bf16.xpose.msra.mxu0 0
        %3618 = vmatprep.subr.bf16.mxu0 0
        %3619 = vmatpush2.bf16.xpose.msra.mxu0 0
        %3620 = vmatprep.subr.bf16.mxu0 0
        %3621 = vmatpush2.bf16.xpose.msra.mxu0 0
        %3622 = vmatprep.subr.bf16.mxu0 0
        %3623 = vmatpush2.bf16.xpose.msra.mxu0 0
        %3624 = vmatprep.subr.bf16.mxu0 0
        %3625 = vmatpush2.bf16.xpose.msra.mxu0 0
        %3626 = vmatprep.subr.bf16.mxu0 0
        %3627 = vmatpush2.bf16.xpose.msra.mxu0 0
        %3628 = vmatprep.subr.bf16.mxu0 0
        %3629 = vmatpush2.bf16.xpose.msra.mxu0 0
        %3630 = vmatprep.mubr.bf16.mxu0 0
        %3631 = vmatmul.mubr.bf16.gmra.mxu0 %v3593
        %v3632 = vpop.f32.mrf.mxu0
        %v3633 = vadd.f32 0.0, %v3632
        %v3634 = vpop.f32.mrf.mxu0
        %v3635 = vpop.f32.mrf.mxu0
        %v3636 = vpop.f32.mrf.mxu0
        %3637 = vdwg.mxu0
        %v3639 = vsel %vm3499, %v3486, 0
        %v3642 = vsel %vm3499, %v3494, 0
        %3644 = vmatprep.subr.bf16.mxu0 0
        %3645 = vmatpush1.bf16.xpose.msra.mxu0 0
        %3646 = vmatprep.subr.bf16.mxu0 0
        %3647 = vmatpush1.bf16.xpose.msra.mxu0 0
        %3648 = vmatprep.subr.bf16.mxu0 0
        %3649 = vmatpush1.bf16.xpose.msra.mxu0 0
        %3650 = vmatprep.subr.bf16.mxu0 0
        %3651 = vmatpush1.bf16.xpose.msra.mxu0 0
        %3652 = vmatprep.subr.bf16.mxu0 0
        %3653 = vmatpush1.bf16.xpose.msra.mxu0 0
        %3654 = vmatprep.subr.bf16.mxu0 0
        %3655 = vmatpush1.bf16.xpose.msra.mxu0 0
        %3656 = vmatprep.subr.bf16.mxu0 0
        %3657 = vmatpush1.bf16.xpose.msra.mxu0 0
        %3658 = vmatprep.subr.bf16.mxu0 0
        %3659 = vmatpush1.bf16.xpose.msra.mxu0 %v3642
        %3660 = vmatprep.subr.bf16.mxu0 0
        %3661 = vmatpush2.bf16.xpose.msra.mxu0 0
        %3662 = vmatprep.subr.bf16.mxu0 0
        %3663 = vmatpush2.bf16.xpose.msra.mxu0 0
        %3664 = vmatprep.subr.bf16.mxu0 0
        %3665 = vmatpush2.bf16.xpose.msra.mxu0 0
        %3666 = vmatprep.subr.bf16.mxu0 0
        %3667 = vmatpush2.bf16.xpose.msra.mxu0 0
        %3668 = vmatprep.subr.bf16.mxu0 0
        %3669 = vmatpush2.bf16.xpose.msra.mxu0 0
        %3670 = vmatprep.subr.bf16.mxu0 0
        %3671 = vmatpush2.bf16.xpose.msra.mxu0 0
        %3672 = vmatprep.subr.bf16.mxu0 0
        %3673 = vmatpush2.bf16.xpose.msra.mxu0 0
        %3674 = vmatprep.subr.bf16.mxu0 0
        %3675 = vmatpush2.bf16.xpose.msra.mxu0 0
        %3676 = vmatprep.mubr.bf16.mxu0 0
        %3677 = vmatmul.mubr.bf16.gmra.mxu0 %v3639
        %v3678 = vpop.f32.mrf.mxu0
        %v3679 = vadd.f32 0.0, %v3678
        %v3680 = vpop.f32.mrf.mxu0
        %v3681 = vpop.f32.mrf.mxu0
        %v3682 = vpop.f32.mrf.mxu0
        %3683 = vdwg.mxu0
        %v3685 = vsel %vm3499, %v3487, 0
        %v3688 = vsel %vm3499, %v3495, 0
        %3690 = vmatprep.subr.bf16.mxu0 0
        %3691 = vmatpush1.bf16.xpose.msra.mxu0 0
        %3692 = vmatprep.subr.bf16.mxu0 0
        %3693 = vmatpush1.bf16.xpose.msra.mxu0 0
        %3694 = vmatprep.subr.bf16.mxu0 0
        %3695 = vmatpush1.bf16.xpose.msra.mxu0 0
        %3696 = vmatprep.subr.bf16.mxu0 0
        %3697 = vmatpush1.bf16.xpose.msra.mxu0 0
        %3698 = vmatprep.subr.bf16.mxu0 0
        %3699 = vmatpush1.bf16.xpose.msra.mxu0 0
        %3700 = vmatprep.subr.bf16.mxu0 0
        %3701 = vmatpush1.bf16.xpose.msra.mxu0 0
        %3702 = vmatprep.subr.bf16.mxu0 0
        %3703 = vmatpush1.bf16.xpose.msra.mxu0 0
        %3704 = vmatprep.subr.bf16.mxu0 0
        %3705 = vmatpush1.bf16.xpose.msra.mxu0 %v3688
        %3706 = vmatprep.subr.bf16.mxu0 0
        %3707 = vmatpush2.bf16.xpose.msra.mxu0 0
        %3708 = vmatprep.subr.bf16.mxu0 0
        %3709 = vmatpush2.bf16.xpose.msra.mxu0 0
        %3710 = vmatprep.subr.bf16.mxu0 0
        %3711 = vmatpush2.bf16.xpose.msra.mxu0 0
        %3712 = vmatprep.subr.bf16.mxu0 0
        %3713 = vmatpush2.bf16.xpose.msra.mxu0 0
        %3714 = vmatprep.subr.bf16.mxu0 0
        %3715 = vmatpush2.bf16.xpose.msra.mxu0 0
        %3716 = vmatprep.subr.bf16.mxu0 0
        %3717 = vmatpush2.bf16.xpose.msra.mxu0 0
        %3718 = vmatprep.subr.bf16.mxu0 0
        %3719 = vmatpush2.bf16.xpose.msra.mxu0 0
        %3720 = vmatprep.subr.bf16.mxu0 0
        %3721 = vmatpush2.bf16.xpose.msra.mxu0 0
        %3722 = vmatprep.mubr.bf16.mxu0 0
        %3723 = vmatmul.mubr.bf16.gmra.mxu0 %v3685
        %v3724 = vpop.f32.mrf.mxu0
        %v3725 = vadd.f32 0.0, %v3724
        %v3726 = vpop.f32.mrf.mxu0
        %v3727 = vpop.f32.mrf.mxu0
        %v3728 = vpop.f32.mrf.mxu0
        %3729 = vdwg.mxu0
        %v3731 = vsel %vm3499, %v3488, 0
        %v3734 = vsel %vm3499, %v3496, 0
        %3736 = vmatprep.subr.bf16.mxu0 0
        %3737 = vmatpush1.bf16.xpose.msra.mxu0 0
        %3738 = vmatprep.subr.bf16.mxu0 0
        %3739 = vmatpush1.bf16.xpose.msra.mxu0 0
        %3740 = vmatprep.subr.bf16.mxu0 0
        %3741 = vmatpush1.bf16.xpose.msra.mxu0 0
        %3742 = vmatprep.subr.bf16.mxu0 0
        %3743 = vmatpush1.bf16.xpose.msra.mxu0 0
        %3744 = vmatprep.subr.bf16.mxu0 0
        %3745 = vmatpush1.bf16.xpose.msra.mxu0 0
        %3746 = vmatprep.subr.bf16.mxu0 0
        %3747 = vmatpush1.bf16.xpose.msra.mxu0 0
        %3748 = vmatprep.subr.bf16.mxu0 0
        %3749 = vmatpush1.bf16.xpose.msra.mxu0 0
        %3750 = vmatprep.subr.bf16.mxu0 0
        %3751 = vmatpush1.bf16.xpose.msra.mxu0 %v3734
        %3752 = vmatprep.subr.bf16.mxu0 0
        %3753 = vmatpush2.bf16.xpose.msra.mxu0 0
        %3754 = vmatprep.subr.bf16.mxu0 0
        %3755 = vmatpush2.bf16.xpose.msra.mxu0 0
        %3756 = vmatprep.subr.bf16.mxu0 0
        %3757 = vmatpush2.bf16.xpose.msra.mxu0 0
        %3758 = vmatprep.subr.bf16.mxu0 0
        %3759 = vmatpush2.bf16.xpose.msra.mxu0 0
        %3760 = vmatprep.subr.bf16.mxu0 0
        %3761 = vmatpush2.bf16.xpose.msra.mxu0 0
        %3762 = vmatprep.subr.bf16.mxu0 0
        %3763 = vmatpush2.bf16.xpose.msra.mxu0 0
        %3764 = vmatprep.subr.bf16.mxu0 0
        %3765 = vmatpush2.bf16.xpose.msra.mxu0 0
        %3766 = vmatprep.subr.bf16.mxu0 0
        %3767 = vmatpush2.bf16.xpose.msra.mxu0 0
        %3768 = vmatprep.mubr.bf16.mxu0 0
        %3769 = vmatmul.mubr.bf16.gmra.mxu0 %v3731
        %v3770 = vpop.f32.mrf.mxu0
        %v3771 = vadd.f32 0.0, %v3770
        %v3772 = vpop.f32.mrf.mxu0
        %v3773 = vpop.f32.mrf.mxu0
        %v3774 = vpop.f32.mrf.mxu0
        %3775 = vdwg.mxu0
        %v3777 = vsel %vm3499, %v3489, 0
        %v3780 = vsel %vm3499, %v3497, 0
        %3782 = vmatprep.subr.bf16.mxu0 0
        %3783 = vmatpush1.bf16.xpose.msra.mxu0 0
        %3784 = vmatprep.subr.bf16.mxu0 0
        %3785 = vmatpush1.bf16.xpose.msra.mxu0 0
        %3786 = vmatprep.subr.bf16.mxu0 0
        %3787 = vmatpush1.bf16.xpose.msra.mxu0 0
        %3788 = vmatprep.subr.bf16.mxu0 0
        %3789 = vmatpush1.bf16.xpose.msra.mxu0 0
        %3790 = vmatprep.subr.bf16.mxu0 0
        %3791 = vmatpush1.bf16.xpose.msra.mxu0 0
        %3792 = vmatprep.subr.bf16.mxu0 0
        %3793 = vmatpush1.bf16.xpose.msra.mxu0 0
        %3794 = vmatprep.subr.bf16.mxu0 0
        %3795 = vmatpush1.bf16.xpose.msra.mxu0 0
        %3796 = vmatprep.subr.bf16.mxu0 0
        %3797 = vmatpush1.bf16.xpose.msra.mxu0 %v3780
        %3798 = vmatprep.subr.bf16.mxu0 0
        %3799 = vmatpush2.bf16.xpose.msra.mxu0 0
        %3800 = vmatprep.subr.bf16.mxu0 0
        %3801 = vmatpush2.bf16.xpose.msra.mxu0 0
        %3802 = vmatprep.subr.bf16.mxu0 0
        %3803 = vmatpush2.bf16.xpose.msra.mxu0 0
        %3804 = vmatprep.subr.bf16.mxu0 0
        %3805 = vmatpush2.bf16.xpose.msra.mxu0 0
        %3806 = vmatprep.subr.bf16.mxu0 0
        %3807 = vmatpush2.bf16.xpose.msra.mxu0 0
        %3808 = vmatprep.subr.bf16.mxu0 0
        %3809 = vmatpush2.bf16.xpose.msra.mxu0 0
        %3810 = vmatprep.subr.bf16.mxu0 0
        %3811 = vmatpush2.bf16.xpose.msra.mxu0 0
        %3812 = vmatprep.subr.bf16.mxu0 0
        %3813 = vmatpush2.bf16.xpose.msra.mxu0 0
        %3814 = vmatprep.mubr.bf16.mxu0 0
        %3815 = vmatmul.mubr.bf16.gmra.mxu0 %v3777
        %v3816 = vpop.f32.mrf.mxu0
        %v3817 = vadd.f32 0.0, %v3816
        %v3818 = vpop.f32.mrf.mxu0
        %v3819 = vpop.f32.mrf.mxu0
        %v3820 = vpop.f32.mrf.mxu0
        %3821 = vdwg.mxu0
        %v3823 = vsel %vm3499, %v3490, 0
        %v3826 = vsel %vm3499, %v3498, 0
        %3828 = vmatprep.subr.bf16.mxu0 0
        %3829 = vmatpush1.bf16.xpose.msra.mxu0 0
        %3830 = vmatprep.subr.bf16.mxu0 0
        %3831 = vmatpush1.bf16.xpose.msra.mxu0 0
        %3832 = vmatprep.subr.bf16.mxu0 0
        %3833 = vmatpush1.bf16.xpose.msra.mxu0 0
        %3834 = vmatprep.subr.bf16.mxu0 0
        %3835 = vmatpush1.bf16.xpose.msra.mxu0 0
        %3836 = vmatprep.subr.bf16.mxu0 0
        %3837 = vmatpush1.bf16.xpose.msra.mxu0 0
        %3838 = vmatprep.subr.bf16.mxu0 0
        %3839 = vmatpush1.bf16.xpose.msra.mxu0 0
        %3840 = vmatprep.subr.bf16.mxu0 0
        %3841 = vmatpush1.bf16.xpose.msra.mxu0 0
        %3842 = vmatprep.subr.bf16.mxu0 0
        %3843 = vmatpush1.bf16.xpose.msra.mxu0 %v3826
        %3844 = vmatprep.subr.bf16.mxu0 0
        %3845 = vmatpush2.bf16.xpose.msra.mxu0 0
        %3846 = vmatprep.subr.bf16.mxu0 0
        %3847 = vmatpush2.bf16.xpose.msra.mxu0 0
        %3848 = vmatprep.subr.bf16.mxu0 0
        %3849 = vmatpush2.bf16.xpose.msra.mxu0 0
        %3850 = vmatprep.subr.bf16.mxu0 0
        %3851 = vmatpush2.bf16.xpose.msra.mxu0 0
        %3852 = vmatprep.subr.bf16.mxu0 0
        %3853 = vmatpush2.bf16.xpose.msra.mxu0 0
        %3854 = vmatprep.subr.bf16.mxu0 0
        %3855 = vmatpush2.bf16.xpose.msra.mxu0 0
        %3856 = vmatprep.subr.bf16.mxu0 0
        %3857 = vmatpush2.bf16.xpose.msra.mxu0 0
        %3858 = vmatprep.subr.bf16.mxu0 0
        %3859 = vmatpush2.bf16.xpose.msra.mxu0 0
        %3860 = vmatprep.mubr.bf16.mxu0 0
        %3861 = vmatmul.mubr.bf16.gmra.mxu0 %v3823
        %v3862 = vpop.f32.mrf.mxu0
        %v3863 = vadd.f32 0.0, %v3862
        %v3864 = vpop.f32.mrf.mxu0
        %v3865 = vpop.f32.mrf.mxu0
        %v3866 = vpop.f32.mrf.mxu0
        %3867 = vdwg.mxu0
        %vm3868 = vcmask 64512
        %v3869 = vsel %vm3868, %v3541, -inf
        %3870 = vmax.xlane.f32.xlu0 %v3869
        %v3871 = vpop.xlane.xlu0 %3870
        %v3872 = vsel %vm3868, %v3587, -inf
        %3873 = vmax.xlane.f32.xlu0 %v3872
        %v3874 = vpop.xlane.xlu0 %3873
        %v3875 = vsel %vm3868, %v3633, -inf
        %3876 = vmax.xlane.f32.xlu0 %v3875
        %v3877 = vpop.xlane.xlu0 %3876
        %v3878 = vsel %vm3868, %v3679, -inf
        %3879 = vmax.xlane.f32.xlu0 %v3878
        %v3880 = vpop.xlane.xlu0 %3879
        %v3881 = vsel %vm3868, %v3725, -inf
        %3882 = vmax.xlane.f32.xlu0 %v3881
        %v3883 = vpop.xlane.xlu0 %3882
        %v3884 = vsel %vm3868, %v3771, -inf
        %3885 = vmax.xlane.f32.xlu0 %v3884
        %v3886 = vpop.xlane.xlu0 %3885
        %v3887 = vsel %vm3868, %v3817, -inf
        %3888 = vmax.xlane.f32.xlu0 %v3887
        %v3889 = vpop.xlane.xlu0 %3888
        %v3890 = vsel %vm3868, %v3863, -inf
        %3891 = vmax.xlane.f32.xlu0 %v3890
        %v3892 = vpop.xlane.xlu0 %3891
        %v3893 = vsub.f32 %v3541, %v3871
        %v3894 = vsub.f32 %v3587, %v3874
        %v3895 = vsub.f32 %v3633, %v3877
        %v3896 = vsub.f32 %v3679, %v3880
        %v3897 = vsub.f32 %v3725, %v3883
        %v3898 = vsub.f32 %v3771, %v3886
        %v3899 = vsub.f32 %v3817, %v3889
        %v3900 = vsub.f32 %v3863, %v3892
        %v3901 = vmul.f32 %v3893, 1.442695
        %v3902 = vpow.pop %v3901
        %v3903 = vmul.f32 %v3894, 1.442695
        %v3904 = vpow.pop %v3903
        %v3905 = vmul.f32 %v3895, 1.442695
        %v3906 = vpow.pop %v3905
        %v3907 = vmul.f32 %v3896, 1.442695
        %v3908 = vpow.pop %v3907
        %v3909 = vmul.f32 %v3897, 1.442695
        %v3910 = vpow.pop %v3909
        %v3911 = vmul.f32 %v3898, 1.442695
        %v3912 = vpow.pop %v3911
        %v3913 = vmul.f32 %v3899, 1.442695
        %v3914 = vpow.pop %v3913
        %v3915 = vmul.f32 %v3900, 1.442695
        %v3916 = vpow.pop %v3915
        %v3917 = vsel %vm3868, %v3902, 0.0
        %3918 = vadd.xlane.f32.xlu0 %v3917
        %v3919 = vpop.xlane.xlu0 %3918
        %v3920 = vsel %vm3868, %v3904, 0.0
        %3921 = vadd.xlane.f32.xlu0 %v3920
        %v3922 = vpop.xlane.xlu0 %3921
        %v3923 = vsel %vm3868, %v3906, 0.0
        %3924 = vadd.xlane.f32.xlu0 %v3923
        %v3925 = vpop.xlane.xlu0 %3924
        %v3926 = vsel %vm3868, %v3908, 0.0
        %3927 = vadd.xlane.f32.xlu0 %v3926
        %v3928 = vpop.xlane.xlu0 %3927
        %v3929 = vsel %vm3868, %v3910, 0.0
        %3930 = vadd.xlane.f32.xlu0 %v3929
        %v3931 = vpop.xlane.xlu0 %3930
        %v3932 = vsel %vm3868, %v3912, 0.0
        %3933 = vadd.xlane.f32.xlu0 %v3932
        %v3934 = vpop.xlane.xlu0 %3933
        %v3935 = vsel %vm3868, %v3914, 0.0
        %3936 = vadd.xlane.f32.xlu0 %v3935
        %v3937 = vpop.xlane.xlu0 %3936
        %v3938 = vsel %vm3868, %v3916, 0.0
        %3939 = vadd.xlane.f32.xlu0 %v3938
        %v3940 = vpop.xlane.xlu0 %3939
        %v3941 = vrcp.pop %v3919
        %v3942 = vrcp.pop %v3922
        %v3943 = vrcp.pop %v3925
        %v3944 = vrcp.pop %v3928
        %v3945 = vrcp.pop %v3931
        %v3946 = vrcp.pop %v3934
        %v3947 = vrcp.pop %v3937
        %v3948 = vrcp.pop %v3940
        %v3949 = vmul.f32 %v3902, %v3941
        %v3950 = vmul.f32 %v3904, %v3942
        %v3951 = vmul.f32 %v3906, %v3943
        %v3952 = vmul.f32 %v3908, %v3944
        %v3953 = vmul.f32 %v3910, %v3945
        %v3954 = vmul.f32 %v3912, %v3946
        %v3955 = vmul.f32 %v3914, %v3947
        %v3956 = vmul.f32 %v3916, %v3948
        %v3957 = vpack.c.bf16 %v3949, %v3949
        %v3958 = vpack.c.bf16 %v3950, %v3950
        %v3959 = vpack.c.bf16 %v3951, %v3951
        %v3960 = vpack.c.bf16 %v3952, %v3952
        %v3961 = vpack.c.bf16 %v3953, %v3953
        %v3962 = vpack.c.bf16 %v3954, %v3954
        %v3963 = vpack.c.bf16 %v3955, %v3955
        %v3964 = vpack.c.bf16 %v3956, %v3956
        %v3965 = vpack.c.bf16 %v2862, %v2862
        %v3966 = vpack.c.bf16 %v2950, %v2950
        %v3967 = vpack.c.bf16 %v3038, %v3038
        %v3968 = vpack.c.bf16 %v3126, %v3126
        %v3969 = vpack.c.bf16 %v3214, %v3214
        %v3970 = vpack.c.bf16 %v3302, %v3302
        %v3971 = vpack.c.bf16 %v3390, %v3390
        %v3972 = vpack.c.bf16 %v3478, %v3478
        %v3974 = vsel %vm3868, %v3957, 0
        %vm3976 = vcmask 1043456
        %v3978 = vsel %vm3976, %v3965, 0
        %3980 = vmatprep.subr.bf16.mxu0 0
        %3981 = vmatpush1.bf16.msra.mxu0 0
        %3982 = vmatprep.subr.bf16.mxu0 0
        %3983 = vmatpush1.bf16.msra.mxu0 0
        %3984 = vmatprep.subr.bf16.mxu0 0
        %3985 = vmatpush1.bf16.msra.mxu0 0
        %3986 = vmatprep.subr.bf16.mxu0 0
        %3987 = vmatpush1.bf16.msra.mxu0 0
        %3988 = vmatprep.subr.bf16.mxu0 0
        %3989 = vmatpush1.bf16.msra.mxu0 0
        %3990 = vmatprep.subr.bf16.mxu0 0
        %3991 = vmatpush1.bf16.msra.mxu0 0
        %3992 = vmatprep.subr.bf16.mxu0 0
        %3993 = vmatpush1.bf16.msra.mxu0 0
        %3994 = vmatprep.subr.bf16.mxu0 0
        %3995 = vmatpush1.bf16.msra.mxu0 %v3978
        %3996 = vmatprep.subr.bf16.mxu0 0
        %3997 = vmatpush2.bf16.msra.mxu0 0
        %3998 = vmatprep.subr.bf16.mxu0 0
        %3999 = vmatpush2.bf16.msra.mxu0 0
        %4000 = vmatprep.subr.bf16.mxu0 0
        %4001 = vmatpush2.bf16.msra.mxu0 0
        %4002 = vmatprep.subr.bf16.mxu0 0
        %4003 = vmatpush2.bf16.msra.mxu0 0
        %4004 = vmatprep.subr.bf16.mxu0 0
        %4005 = vmatpush2.bf16.msra.mxu0 0
        %4006 = vmatprep.subr.bf16.mxu0 0
        %4007 = vmatpush2.bf16.msra.mxu0 0
        %4008 = vmatprep.subr.bf16.mxu0 0
        %4009 = vmatpush2.bf16.msra.mxu0 0
        %4010 = vmatprep.subr.bf16.mxu0 0
        %4011 = vmatpush2.bf16.msra.mxu0 0
        %4012 = vmatprep.mubr.bf16.mxu0 0
        %4013 = vmatmul.mubr.bf16.gmra.mxu0 %v3974
        %v4014 = vpop.f32.mrf.mxu0
        %v4015 = vadd.f32 0.0, %v4014
        %v4016 = vpop.f32.mrf.mxu0
        %v4017 = vpop.f32.mrf.mxu0
        %v4018 = vpop.f32.mrf.mxu0
        %4019 = vdwg.mxu0
        %v4021 = vsel %vm3868, %v3958, 0
        %v4024 = vsel %vm3976, %v3966, 0
        %4026 = vmatprep.subr.bf16.mxu0 0
        %4027 = vmatpush1.bf16.msra.mxu0 0
        %4028 = vmatprep.subr.bf16.mxu0 0
        %4029 = vmatpush1.bf16.msra.mxu0 0
        %4030 = vmatprep.subr.bf16.mxu0 0
        %4031 = vmatpush1.bf16.msra.mxu0 0
        %4032 = vmatprep.subr.bf16.mxu0 0
        %4033 = vmatpush1.bf16.msra.mxu0 0
        %4034 = vmatprep.subr.bf16.mxu0 0
        %4035 = vmatpush1.bf16.msra.mxu0 0
        %4036 = vmatprep.subr.bf16.mxu0 0
        %4037 = vmatpush1.bf16.msra.mxu0 0
        %4038 = vmatprep.subr.bf16.mxu0 0
        %4039 = vmatpush1.bf16.msra.mxu0 0
        %4040 = vmatprep.subr.bf16.mxu0 0
        %4041 = vmatpush1.bf16.msra.mxu0 %v4024
        %4042 = vmatprep.subr.bf16.mxu0 0
        %4043 = vmatpush2.bf16.msra.mxu0 0
        %4044 = vmatprep.subr.bf16.mxu0 0
        %4045 = vmatpush2.bf16.msra.mxu0 0
        %4046 = vmatprep.subr.bf16.mxu0 0
        %4047 = vmatpush2.bf16.msra.mxu0 0
        %4048 = vmatprep.subr.bf16.mxu0 0
        %4049 = vmatpush2.bf16.msra.mxu0 0
        %4050 = vmatprep.subr.bf16.mxu0 0
        %4051 = vmatpush2.bf16.msra.mxu0 0
        %4052 = vmatprep.subr.bf16.mxu0 0
        %4053 = vmatpush2.bf16.msra.mxu0 0
        %4054 = vmatprep.subr.bf16.mxu0 0
        %4055 = vmatpush2.bf16.msra.mxu0 0
        %4056 = vmatprep.subr.bf16.mxu0 0
        %4057 = vmatpush2.bf16.msra.mxu0 0
        %4058 = vmatprep.mubr.bf16.mxu0 0
        %4059 = vmatmul.mubr.bf16.gmra.mxu0 %v4021
        %v4060 = vpop.f32.mrf.mxu0
        %v4061 = vadd.f32 0.0, %v4060
        %v4062 = vpop.f32.mrf.mxu0
        %v4063 = vpop.f32.mrf.mxu0
        %v4064 = vpop.f32.mrf.mxu0
        %4065 = vdwg.mxu0
        %v4067 = vsel %vm3868, %v3959, 0
        %v4070 = vsel %vm3976, %v3967, 0
        %4072 = vmatprep.subr.bf16.mxu0 0
        %4073 = vmatpush1.bf16.msra.mxu0 0
        %4074 = vmatprep.subr.bf16.mxu0 0
        %4075 = vmatpush1.bf16.msra.mxu0 0
        %4076 = vmatprep.subr.bf16.mxu0 0
        %4077 = vmatpush1.bf16.msra.mxu0 0
        %4078 = vmatprep.subr.bf16.mxu0 0
        %4079 = vmatpush1.bf16.msra.mxu0 0
        %4080 = vmatprep.subr.bf16.mxu0 0
        %4081 = vmatpush1.bf16.msra.mxu0 0
        %4082 = vmatprep.subr.bf16.mxu0 0
        %4083 = vmatpush1.bf16.msra.mxu0 0
        %4084 = vmatprep.subr.bf16.mxu0 0
        %4085 = vmatpush1.bf16.msra.mxu0 0
        %4086 = vmatprep.subr.bf16.mxu0 0
        %4087 = vmatpush1.bf16.msra.mxu0 %v4070
        %4088 = vmatprep.subr.bf16.mxu0 0
        %4089 = vmatpush2.bf16.msra.mxu0 0
        %4090 = vmatprep.subr.bf16.mxu0 0
        %4091 = vmatpush2.bf16.msra.mxu0 0
        %4092 = vmatprep.subr.bf16.mxu0 0
        %4093 = vmatpush2.bf16.msra.mxu0 0
        %4094 = vmatprep.subr.bf16.mxu0 0
        %4095 = vmatpush2.bf16.msra.mxu0 0
        %4096 = vmatprep.subr.bf16.mxu0 0
        %4097 = vmatpush2.bf16.msra.mxu0 0
        %4098 = vmatprep.subr.bf16.mxu0 0
        %4099 = vmatpush2.bf16.msra.mxu0 0
        %4100 = vmatprep.subr.bf16.mxu0 0
        %4101 = vmatpush2.bf16.msra.mxu0 0
        %4102 = vmatprep.subr.bf16.mxu0 0
        %4103 = vmatpush2.bf16.msra.mxu0 0
        %4104 = vmatprep.mubr.bf16.mxu0 0
        %4105 = vmatmul.mubr.bf16.gmra.mxu0 %v4067
        %v4106 = vpop.f32.mrf.mxu0
        %v4107 = vadd.f32 0.0, %v4106
        %v4108 = vpop.f32.mrf.mxu0
        %v4109 = vpop.f32.mrf.mxu0
        %v4110 = vpop.f32.mrf.mxu0
        %4111 = vdwg.mxu0
        %v4113 = vsel %vm3868, %v3960, 0
        %v4116 = vsel %vm3976, %v3968, 0
        %4118 = vmatprep.subr.bf16.mxu0 0
        %4119 = vmatpush1.bf16.msra.mxu0 0
        %4120 = vmatprep.subr.bf16.mxu0 0
        %4121 = vmatpush1.bf16.msra.mxu0 0
        %4122 = vmatprep.subr.bf16.mxu0 0
        %4123 = vmatpush1.bf16.msra.mxu0 0
        %4124 = vmatprep.subr.bf16.mxu0 0
        %4125 = vmatpush1.bf16.msra.mxu0 0
        %4126 = vmatprep.subr.bf16.mxu0 0
        %4127 = vmatpush1.bf16.msra.mxu0 0
        %4128 = vmatprep.subr.bf16.mxu0 0
        %4129 = vmatpush1.bf16.msra.mxu0 0
        %4130 = vmatprep.subr.bf16.mxu0 0
        %4131 = vmatpush1.bf16.msra.mxu0 0
        %4132 = vmatprep.subr.bf16.mxu0 0
        %4133 = vmatpush1.bf16.msra.mxu0 %v4116
        %4134 = vmatprep.subr.bf16.mxu0 0
        %4135 = vmatpush2.bf16.msra.mxu0 0
        %4136 = vmatprep.subr.bf16.mxu0 0
        %4137 = vmatpush2.bf16.msra.mxu0 0
        %4138 = vmatprep.subr.bf16.mxu0 0
        %4139 = vmatpush2.bf16.msra.mxu0 0
        %4140 = vmatprep.subr.bf16.mxu0 0
        %4141 = vmatpush2.bf16.msra.mxu0 0
        %4142 = vmatprep.subr.bf16.mxu0 0
        %4143 = vmatpush2.bf16.msra.mxu0 0
        %4144 = vmatprep.subr.bf16.mxu0 0
        %4145 = vmatpush2.bf16.msra.mxu0 0
        %4146 = vmatprep.subr.bf16.mxu0 0
        %4147 = vmatpush2.bf16.msra.mxu0 0
        %4148 = vmatprep.subr.bf16.mxu0 0
        %4149 = vmatpush2.bf16.msra.mxu0 0
        %4150 = vmatprep.mubr.bf16.mxu0 0
        %4151 = vmatmul.mubr.bf16.gmra.mxu0 %v4113
        %v4152 = vpop.f32.mrf.mxu0
        %v4153 = vadd.f32 0.0, %v4152
        %v4154 = vpop.f32.mrf.mxu0
        %v4155 = vpop.f32.mrf.mxu0
        %v4156 = vpop.f32.mrf.mxu0
        %4157 = vdwg.mxu0
        %v4159 = vsel %vm3868, %v3961, 0
        %v4162 = vsel %vm3976, %v3969, 0
        %4164 = vmatprep.subr.bf16.mxu0 0
        %4165 = vmatpush1.bf16.msra.mxu0 0
        %4166 = vmatprep.subr.bf16.mxu0 0
        %4167 = vmatpush1.bf16.msra.mxu0 0
        %4168 = vmatprep.subr.bf16.mxu0 0
        %4169 = vmatpush1.bf16.msra.mxu0 0
        %4170 = vmatprep.subr.bf16.mxu0 0
        %4171 = vmatpush1.bf16.msra.mxu0 0
        %4172 = vmatprep.subr.bf16.mxu0 0
        %4173 = vmatpush1.bf16.msra.mxu0 0
        %4174 = vmatprep.subr.bf16.mxu0 0
        %4175 = vmatpush1.bf16.msra.mxu0 0
        %4176 = vmatprep.subr.bf16.mxu0 0
        %4177 = vmatpush1.bf16.msra.mxu0 0
        %4178 = vmatprep.subr.bf16.mxu0 0
        %4179 = vmatpush1.bf16.msra.mxu0 %v4162
        %4180 = vmatprep.subr.bf16.mxu0 0
        %4181 = vmatpush2.bf16.msra.mxu0 0
        %4182 = vmatprep.subr.bf16.mxu0 0
        %4183 = vmatpush2.bf16.msra.mxu0 0
        %4184 = vmatprep.subr.bf16.mxu0 0
        %4185 = vmatpush2.bf16.msra.mxu0 0
        %4186 = vmatprep.subr.bf16.mxu0 0
        %4187 = vmatpush2.bf16.msra.mxu0 0
        %4188 = vmatprep.subr.bf16.mxu0 0
        %4189 = vmatpush2.bf16.msra.mxu0 0
        %4190 = vmatprep.subr.bf16.mxu0 0
        %4191 = vmatpush2.bf16.msra.mxu0 0
        %4192 = vmatprep.subr.bf16.mxu0 0
        %4193 = vmatpush2.bf16.msra.mxu0 0
        %4194 = vmatprep.subr.bf16.mxu0 0
        %4195 = vmatpush2.bf16.msra.mxu0 0
        %4196 = vmatprep.mubr.bf16.mxu0 0
        %4197 = vmatmul.mubr.bf16.gmra.mxu0 %v4159
        %v4198 = vpop.f32.mrf.mxu0
        %v4199 = vadd.f32 0.0, %v4198
        %v4200 = vpop.f32.mrf.mxu0
        %v4201 = vpop.f32.mrf.mxu0
        %v4202 = vpop.f32.mrf.mxu0
        %4203 = vdwg.mxu0
        %v4205 = vsel %vm3868, %v3962, 0
        %v4208 = vsel %vm3976, %v3970, 0
        %4210 = vmatprep.subr.bf16.mxu0 0
        %4211 = vmatpush1.bf16.msra.mxu0 0
        %4212 = vmatprep.subr.bf16.mxu0 0
        %4213 = vmatpush1.bf16.msra.mxu0 0
        %4214 = vmatprep.subr.bf16.mxu0 0
        %4215 = vmatpush1.bf16.msra.mxu0 0
        %4216 = vmatprep.subr.bf16.mxu0 0
        %4217 = vmatpush1.bf16.msra.mxu0 0
        %4218 = vmatprep.subr.bf16.mxu0 0
        %4219 = vmatpush1.bf16.msra.mxu0 0
        %4220 = vmatprep.subr.bf16.mxu0 0
        %4221 = vmatpush1.bf16.msra.mxu0 0
        %4222 = vmatprep.subr.bf16.mxu0 0
        %4223 = vmatpush1.bf16.msra.mxu0 0
        %4224 = vmatprep.subr.bf16.mxu0 0
        %4225 = vmatpush1.bf16.msra.mxu0 %v4208
        %4226 = vmatprep.subr.bf16.mxu0 0
        %4227 = vmatpush2.bf16.msra.mxu0 0
        %4228 = vmatprep.subr.bf16.mxu0 0
        %4229 = vmatpush2.bf16.msra.mxu0 0
        %4230 = vmatprep.subr.bf16.mxu0 0
        %4231 = vmatpush2.bf16.msra.mxu0 0
        %4232 = vmatprep.subr.bf16.mxu0 0
        %4233 = vmatpush2.bf16.msra.mxu0 0
        %4234 = vmatprep.subr.bf16.mxu0 0
        %4235 = vmatpush2.bf16.msra.mxu0 0
        %4236 = vmatprep.subr.bf16.mxu0 0
        %4237 = vmatpush2.bf16.msra.mxu0 0
        %4238 = vmatprep.subr.bf16.mxu0 0
        %4239 = vmatpush2.bf16.msra.mxu0 0
        %4240 = vmatprep.subr.bf16.mxu0 0
        %4241 = vmatpush2.bf16.msra.mxu0 0
        %4242 = vmatprep.mubr.bf16.mxu0 0
        %4243 = vmatmul.mubr.bf16.gmra.mxu0 %v4205
        %v4244 = vpop.f32.mrf.mxu0
        %v4245 = vadd.f32 0.0, %v4244
        %v4246 = vpop.f32.mrf.mxu0
        %v4247 = vpop.f32.mrf.mxu0
        %v4248 = vpop.f32.mrf.mxu0
        %4249 = vdwg.mxu0
        %v4251 = vsel %vm3868, %v3963, 0
        %v4254 = vsel %vm3976, %v3971, 0
        %4256 = vmatprep.subr.bf16.mxu0 0
        %4257 = vmatpush1.bf16.msra.mxu0 0
        %4258 = vmatprep.subr.bf16.mxu0 0
        %4259 = vmatpush1.bf16.msra.mxu0 0
        %4260 = vmatprep.subr.bf16.mxu0 0
        %4261 = vmatpush1.bf16.msra.mxu0 0
        %4262 = vmatprep.subr.bf16.mxu0 0
        %4263 = vmatpush1.bf16.msra.mxu0 0
        %4264 = vmatprep.subr.bf16.mxu0 0
        %4265 = vmatpush1.bf16.msra.mxu0 0
        %4266 = vmatprep.subr.bf16.mxu0 0
        %4267 = vmatpush1.bf16.msra.mxu0 0
        %4268 = vmatprep.subr.bf16.mxu0 0
        %4269 = vmatpush1.bf16.msra.mxu0 0
        %4270 = vmatprep.subr.bf16.mxu0 0
        %4271 = vmatpush1.bf16.msra.mxu0 %v4254
        %4272 = vmatprep.subr.bf16.mxu0 0
        %4273 = vmatpush2.bf16.msra.mxu0 0
        %4274 = vmatprep.subr.bf16.mxu0 0
        %4275 = vmatpush2.bf16.msra.mxu0 0
        %4276 = vmatprep.subr.bf16.mxu0 0
        %4277 = vmatpush2.bf16.msra.mxu0 0
        %4278 = vmatprep.subr.bf16.mxu0 0
        %4279 = vmatpush2.bf16.msra.mxu0 0
        %4280 = vmatprep.subr.bf16.mxu0 0
        %4281 = vmatpush2.bf16.msra.mxu0 0
        %4282 = vmatprep.subr.bf16.mxu0 0
        %4283 = vmatpush2.bf16.msra.mxu0 0
        %4284 = vmatprep.subr.bf16.mxu0 0
        %4285 = vmatpush2.bf16.msra.mxu0 0
        %4286 = vmatprep.subr.bf16.mxu0 0
        %4287 = vmatpush2.bf16.msra.mxu0 0
        %4288 = vmatprep.mubr.bf16.mxu0 0
        %4289 = vmatmul.mubr.bf16.gmra.mxu0 %v4251
        %v4290 = vpop.f32.mrf.mxu0
        %v4291 = vadd.f32 0.0, %v4290
        %v4292 = vpop.f32.mrf.mxu0
        %v4293 = vpop.f32.mrf.mxu0
        %v4294 = vpop.f32.mrf.mxu0
        %4295 = vdwg.mxu0
        %v4297 = vsel %vm3868, %v3964, 0
        %v4300 = vsel %vm3976, %v3972, 0
        %4302 = vmatprep.subr.bf16.mxu0 0
        %4303 = vmatpush1.bf16.msra.mxu0 0
        %4304 = vmatprep.subr.bf16.mxu0 0
        %4305 = vmatpush1.bf16.msra.mxu0 0
        %4306 = vmatprep.subr.bf16.mxu0 0
        %4307 = vmatpush1.bf16.msra.mxu0 0
        %4308 = vmatprep.subr.bf16.mxu0 0
        %4309 = vmatpush1.bf16.msra.mxu0 0
        %4310 = vmatprep.subr.bf16.mxu0 0
        %4311 = vmatpush1.bf16.msra.mxu0 0
        %4312 = vmatprep.subr.bf16.mxu0 0
        %4313 = vmatpush1.bf16.msra.mxu0 0
        %4314 = vmatprep.subr.bf16.mxu0 0
        %4315 = vmatpush1.bf16.msra.mxu0 0
        %4316 = vmatprep.subr.bf16.mxu0 0
        %4317 = vmatpush1.bf16.msra.mxu0 %v4300
        %4318 = vmatprep.subr.bf16.mxu0 0
        %4319 = vmatpush2.bf16.msra.mxu0 0
        %4320 = vmatprep.subr.bf16.mxu0 0
        %4321 = vmatpush2.bf16.msra.mxu0 0
        %4322 = vmatprep.subr.bf16.mxu0 0
        %4323 = vmatpush2.bf16.msra.mxu0 0
        %4324 = vmatprep.subr.bf16.mxu0 0
        %4325 = vmatpush2.bf16.msra.mxu0 0
        %4326 = vmatprep.subr.bf16.mxu0 0
        %4327 = vmatpush2.bf16.msra.mxu0 0
        %4328 = vmatprep.subr.bf16.mxu0 0
        %4329 = vmatpush2.bf16.msra.mxu0 0
        %4330 = vmatprep.subr.bf16.mxu0 0
        %4331 = vmatpush2.bf16.msra.mxu0 0
        %4332 = vmatprep.subr.bf16.mxu0 0
        %4333 = vmatpush2.bf16.msra.mxu0 0
        %4334 = vmatprep.mubr.bf16.mxu0 0
        %4335 = vmatmul.mubr.bf16.gmra.mxu0 %v4297
        %v4336 = vpop.f32.mrf.mxu0
        %v4337 = vadd.f32 0.0, %v4336
        %v4338 = vpop.f32.mrf.mxu0
        %v4339 = vpop.f32.mrf.mxu0
        %v4340 = vpop.f32.mrf.mxu0
        %4341 = vdwg.mxu0
        %v4342 = vpack.c.bf16 %v4015, %v4015
        %v4343 = vpack.c.bf16 %v4061, %v4061
        %v4344 = vpack.c.bf16 %v4107, %v4107
        %v4345 = vpack.c.bf16 %v4153, %v4153
        %v4346 = vpack.c.bf16 %v4199, %v4199
        %v4347 = vpack.c.bf16 %v4245, %v4245
        %v4348 = vpack.c.bf16 %v4291, %v4291
        %v4349 = vpack.c.bf16 %v4337, %v4337
        %v4350 = vld [vmem:[%s7] sm:$0xf]
        %v4351 = vld [vmem:[%s7 + $0x4] sm:$0xf]
        %v4352 = vld [vmem:[%s7 + $0x8] sm:$0xf]
        %v4353 = vld [vmem:[%s7 + $0xc] sm:$0xf]
        %v4354 = vld [vmem:[%s7 + $0x10] sm:$0xf]
        %v4355 = vld [vmem:[%s7 + $0x14] sm:$0xf]
        %v4356 = vld [vmem:[%s7 + $0x18] sm:$0xf]
        %v4357 = vld [vmem:[%s7 + $0x1c] sm:$0xf]
        %v4358 = vld [vmem:[%s7 + $0x20] sm:$0xf]
        %v4359 = vld [vmem:[%s7 + $0x24] sm:$0xf]
        %v4360 = vld [vmem:[%s7 + $0x28] sm:$0xf]
        %v4361 = vld [vmem:[%s7 + $0x2c] sm:$0xf]
        %v4362 = vld [vmem:[%s7 + $0x30] sm:$0xf]
        %v4363 = vld [vmem:[%s7 + $0x34] sm:$0xf]
        %v4364 = vld [vmem:[%s7 + $0x38] sm:$0xf]
        %v4365 = vld [vmem:[%s7 + $0x3c] sm:$0xf]
        %v4368 = vunpack.c.l.b16 %v4350
        %v4369 = vunpack.c.l.b16 %v4351
        %v4370 = vpack.c.b16 %v4369, %v4368
        %v4373 = vsel %vm3499, %v4342, 0
        %4375 = vmatprep.subr.bf16.mxu0 0
        %4376 = vmatpush1.bf16.msra.mxu0 0
        %4377 = vmatprep.subr.bf16.mxu0 0
        %4378 = vmatpush1.bf16.msra.mxu0 0
        %4379 = vmatprep.subr.bf16.mxu0 0
        %4380 = vmatpush1.bf16.msra.mxu0 0
        %4381 = vmatprep.subr.bf16.mxu0 0
        %4382 = vmatpush1.bf16.msra.mxu0 0
        %4383 = vmatprep.subr.bf16.mxu0 0
        %4384 = vmatpush1.bf16.msra.mxu0 0
        %4385 = vmatprep.subr.bf16.mxu0 0
        %4386 = vmatpush1.bf16.msra.mxu0 0
        %4387 = vmatprep.subr.bf16.mxu0 0
        %4388 = vmatpush1.bf16.msra.mxu0 0
        %4389 = vmatprep.subr.bf16.mxu0 0
        %4390 = vmatpush1.bf16.msra.mxu0 %v4370
        %4391 = vmatprep.subr.bf16.mxu0 0
        %4392 = vmatpush2.bf16.msra.mxu0 0
        %4393 = vmatprep.subr.bf16.mxu0 0
        %4394 = vmatpush2.bf16.msra.mxu0 0
        %4395 = vmatprep.subr.bf16.mxu0 0
        %4396 = vmatpush2.bf16.msra.mxu0 0
        %4397 = vmatprep.subr.bf16.mxu0 0
        %4398 = vmatpush2.bf16.msra.mxu0 0
        %4399 = vmatprep.subr.bf16.mxu0 0
        %4400 = vmatpush2.bf16.msra.mxu0 0
        %4401 = vmatprep.subr.bf16.mxu0 0
        %4402 = vmatpush2.bf16.msra.mxu0 0
        %4403 = vmatprep.subr.bf16.mxu0 0
        %4404 = vmatpush2.bf16.msra.mxu0 0
        %4405 = vmatprep.subr.bf16.mxu0 0
        %4406 = vmatpush2.bf16.msra.mxu0 0
        %4407 = vmatprep.mubr.bf16.mxu0 0
        %4408 = vmatmul.mubr.bf16.gmra.mxu0 %v4373
        %v4409 = vpop.f32.mrf.mxu0
        %v4410 = vadd.f32 0.0, %v4409
        %v4411 = vpop.f32.mrf.mxu0
        %v4412 = vpop.f32.mrf.mxu0
        %v4413 = vpop.f32.mrf.mxu0
        %4414 = vdwg.mxu0
        %v4417 = vunpack.c.l.b16 %v4352
        %v4418 = vunpack.c.l.b16 %v4353
        %v4419 = vpack.c.b16 %v4418, %v4417
        %v4422 = vsel %vm3499, %v4343, 0
        %4424 = vmatprep.subr.bf16.mxu0 0
        %4425 = vmatpush1.bf16.msra.mxu0 0
        %4426 = vmatprep.subr.bf16.mxu0 0
        %4427 = vmatpush1.bf16.msra.mxu0 0
        %4428 = vmatprep.subr.bf16.mxu0 0
        %4429 = vmatpush1.bf16.msra.mxu0 0
        %4430 = vmatprep.subr.bf16.mxu0 0
        %4431 = vmatpush1.bf16.msra.mxu0 0
        %4432 = vmatprep.subr.bf16.mxu0 0
        %4433 = vmatpush1.bf16.msra.mxu0 0
        %4434 = vmatprep.subr.bf16.mxu0 0
        %4435 = vmatpush1.bf16.msra.mxu0 0
        %4436 = vmatprep.subr.bf16.mxu0 0
        %4437 = vmatpush1.bf16.msra.mxu0 0
        %4438 = vmatprep.subr.bf16.mxu0 0
        %4439 = vmatpush1.bf16.msra.mxu0 %v4419
        %4440 = vmatprep.subr.bf16.mxu0 0
        %4441 = vmatpush2.bf16.msra.mxu0 0
        %4442 = vmatprep.subr.bf16.mxu0 0
        %4443 = vmatpush2.bf16.msra.mxu0 0
        %4444 = vmatprep.subr.bf16.mxu0 0
        %4445 = vmatpush2.bf16.msra.mxu0 0
        %4446 = vmatprep.subr.bf16.mxu0 0
        %4447 = vmatpush2.bf16.msra.mxu0 0
        %4448 = vmatprep.subr.bf16.mxu0 0
        %4449 = vmatpush2.bf16.msra.mxu0 0
        %4450 = vmatprep.subr.bf16.mxu0 0
        %4451 = vmatpush2.bf16.msra.mxu0 0
        %4452 = vmatprep.subr.bf16.mxu0 0
        %4453 = vmatpush2.bf16.msra.mxu0 0
        %4454 = vmatprep.subr.bf16.mxu0 0
        %4455 = vmatpush2.bf16.msra.mxu0 0
        %4456 = vmatprep.mubr.bf16.mxu0 0
        %4457 = vmatmul.mubr.bf16.gmra.mxu0 %v4422
        %v4458 = vpop.f32.mrf.mxu0
        %v4459 = vadd.f32 0.0, %v4458
        %v4460 = vpop.f32.mrf.mxu0
        %v4461 = vpop.f32.mrf.mxu0
        %v4462 = vpop.f32.mrf.mxu0
        %4463 = vdwg.mxu0
        %v4466 = vunpack.c.l.b16 %v4354
        %v4467 = vunpack.c.l.b16 %v4355
        %v4468 = vpack.c.b16 %v4467, %v4466
        %v4471 = vsel %vm3499, %v4344, 0
        %4473 = vmatprep.subr.bf16.mxu0 0
        %4474 = vmatpush1.bf16.msra.mxu0 0
        %4475 = vmatprep.subr.bf16.mxu0 0
        %4476 = vmatpush1.bf16.msra.mxu0 0
        %4477 = vmatprep.subr.bf16.mxu0 0
        %4478 = vmatpush1.bf16.msra.mxu0 0
        %4479 = vmatprep.subr.bf16.mxu0 0
        %4480 = vmatpush1.bf16.msra.mxu0 0
        %4481 = vmatprep.subr.bf16.mxu0 0
        %4482 = vmatpush1.bf16.msra.mxu0 0
        %4483 = vmatprep.subr.bf16.mxu0 0
        %4484 = vmatpush1.bf16.msra.mxu0 0
        %4485 = vmatprep.subr.bf16.mxu0 0
        %4486 = vmatpush1.bf16.msra.mxu0 0
        %4487 = vmatprep.subr.bf16.mxu0 0
        %4488 = vmatpush1.bf16.msra.mxu0 %v4468
        %4489 = vmatprep.subr.bf16.mxu0 0
        %4490 = vmatpush2.bf16.msra.mxu0 0
        %4491 = vmatprep.subr.bf16.mxu0 0
        %4492 = vmatpush2.bf16.msra.mxu0 0
        %4493 = vmatprep.subr.bf16.mxu0 0
        %4494 = vmatpush2.bf16.msra.mxu0 0
        %4495 = vmatprep.subr.bf16.mxu0 0
        %4496 = vmatpush2.bf16.msra.mxu0 0
        %4497 = vmatprep.subr.bf16.mxu0 0
        %4498 = vmatpush2.bf16.msra.mxu0 0
        %4499 = vmatprep.subr.bf16.mxu0 0
        %4500 = vmatpush2.bf16.msra.mxu0 0
        %4501 = vmatprep.subr.bf16.mxu0 0
        %4502 = vmatpush2.bf16.msra.mxu0 0
        %4503 = vmatprep.subr.bf16.mxu0 0
        %4504 = vmatpush2.bf16.msra.mxu0 0
        %4505 = vmatprep.mubr.bf16.mxu0 0
        %4506 = vmatmul.mubr.bf16.gmra.mxu0 %v4471
        %v4507 = vpop.f32.mrf.mxu0
        %v4508 = vadd.f32 0.0, %v4507
        %v4509 = vpop.f32.mrf.mxu0
        %v4510 = vpop.f32.mrf.mxu0
        %v4511 = vpop.f32.mrf.mxu0
        %4512 = vdwg.mxu0
        %v4515 = vunpack.c.l.b16 %v4356
        %v4516 = vunpack.c.l.b16 %v4357
        %v4517 = vpack.c.b16 %v4516, %v4515
        %v4520 = vsel %vm3499, %v4345, 0
        %4522 = vmatprep.subr.bf16.mxu0 0
        %4523 = vmatpush1.bf16.msra.mxu0 0
        %4524 = vmatprep.subr.bf16.mxu0 0
        %4525 = vmatpush1.bf16.msra.mxu0 0
        %4526 = vmatprep.subr.bf16.mxu0 0
        %4527 = vmatpush1.bf16.msra.mxu0 0
        %4528 = vmatprep.subr.bf16.mxu0 0
        %4529 = vmatpush1.bf16.msra.mxu0 0
        %4530 = vmatprep.subr.bf16.mxu0 0
        %4531 = vmatpush1.bf16.msra.mxu0 0
        %4532 = vmatprep.subr.bf16.mxu0 0
        %4533 = vmatpush1.bf16.msra.mxu0 0
        %4534 = vmatprep.subr.bf16.mxu0 0
        %4535 = vmatpush1.bf16.msra.mxu0 0
        %4536 = vmatprep.subr.bf16.mxu0 0
        %4537 = vmatpush1.bf16.msra.mxu0 %v4517
        %4538 = vmatprep.subr.bf16.mxu0 0
        %4539 = vmatpush2.bf16.msra.mxu0 0
        %4540 = vmatprep.subr.bf16.mxu0 0
        %4541 = vmatpush2.bf16.msra.mxu0 0
        %4542 = vmatprep.subr.bf16.mxu0 0
        %4543 = vmatpush2.bf16.msra.mxu0 0
        %4544 = vmatprep.subr.bf16.mxu0 0
        %4545 = vmatpush2.bf16.msra.mxu0 0
        %4546 = vmatprep.subr.bf16.mxu0 0
        %4547 = vmatpush2.bf16.msra.mxu0 0
        %4548 = vmatprep.subr.bf16.mxu0 0
        %4549 = vmatpush2.bf16.msra.mxu0 0
        %4550 = vmatprep.subr.bf16.mxu0 0
        %4551 = vmatpush2.bf16.msra.mxu0 0
        %4552 = vmatprep.subr.bf16.mxu0 0
        %4553 = vmatpush2.bf16.msra.mxu0 0
        %4554 = vmatprep.mubr.bf16.mxu0 0
        %4555 = vmatmul.mubr.bf16.gmra.mxu0 %v4520
        %v4556 = vpop.f32.mrf.mxu0
        %v4557 = vadd.f32 0.0, %v4556
        %v4558 = vpop.f32.mrf.mxu0
        %v4559 = vpop.f32.mrf.mxu0
        %v4560 = vpop.f32.mrf.mxu0
        %4561 = vdwg.mxu0
        %v4564 = vunpack.c.l.b16 %v4358
        %v4565 = vunpack.c.l.b16 %v4359
        %v4566 = vpack.c.b16 %v4565, %v4564
        %v4569 = vsel %vm3499, %v4346, 0
        %4571 = vmatprep.subr.bf16.mxu0 0
        %4572 = vmatpush1.bf16.msra.mxu0 0
        %4573 = vmatprep.subr.bf16.mxu0 0
        %4574 = vmatpush1.bf16.msra.mxu0 0
        %4575 = vmatprep.subr.bf16.mxu0 0
        %4576 = vmatpush1.bf16.msra.mxu0 0
        %4577 = vmatprep.subr.bf16.mxu0 0
        %4578 = vmatpush1.bf16.msra.mxu0 0
        %4579 = vmatprep.subr.bf16.mxu0 0
        %4580 = vmatpush1.bf16.msra.mxu0 0
        %4581 = vmatprep.subr.bf16.mxu0 0
        %4582 = vmatpush1.bf16.msra.mxu0 0
        %4583 = vmatprep.subr.bf16.mxu0 0
        %4584 = vmatpush1.bf16.msra.mxu0 0
        %4585 = vmatprep.subr.bf16.mxu0 0
        %4586 = vmatpush1.bf16.msra.mxu0 %v4566
        %4587 = vmatprep.subr.bf16.mxu0 0
        %4588 = vmatpush2.bf16.msra.mxu0 0
        %4589 = vmatprep.subr.bf16.mxu0 0
        %4590 = vmatpush2.bf16.msra.mxu0 0
        %4591 = vmatprep.subr.bf16.mxu0 0
        %4592 = vmatpush2.bf16.msra.mxu0 0
        %4593 = vmatprep.subr.bf16.mxu0 0
        %4594 = vmatpush2.bf16.msra.mxu0 0
        %4595 = vmatprep.subr.bf16.mxu0 0
        %4596 = vmatpush2.bf16.msra.mxu0 0
        %4597 = vmatprep.subr.bf16.mxu0 0
        %4598 = vmatpush2.bf16.msra.mxu0 0
        %4599 = vmatprep.subr.bf16.mxu0 0
        %4600 = vmatpush2.bf16.msra.mxu0 0
        %4601 = vmatprep.subr.bf16.mxu0 0
        %4602 = vmatpush2.bf16.msra.mxu0 0
        %4603 = vmatprep.mubr.bf16.mxu0 0
        %4604 = vmatmul.mubr.bf16.gmra.mxu0 %v4569
        %v4605 = vpop.f32.mrf.mxu0
        %v4606 = vadd.f32 0.0, %v4605
        %v4607 = vpop.f32.mrf.mxu0
        %v4608 = vpop.f32.mrf.mxu0
        %v4609 = vpop.f32.mrf.mxu0
        %4610 = vdwg.mxu0
        %v4613 = vunpack.c.l.b16 %v4360
        %v4614 = vunpack.c.l.b16 %v4361
        %v4615 = vpack.c.b16 %v4614, %v4613
        %v4618 = vsel %vm3499, %v4347, 0
        %4620 = vmatprep.subr.bf16.mxu0 0
        %4621 = vmatpush1.bf16.msra.mxu0 0
        %4622 = vmatprep.subr.bf16.mxu0 0
        %4623 = vmatpush1.bf16.msra.mxu0 0
        %4624 = vmatprep.subr.bf16.mxu0 0
        %4625 = vmatpush1.bf16.msra.mxu0 0
        %4626 = vmatprep.subr.bf16.mxu0 0
        %4627 = vmatpush1.bf16.msra.mxu0 0
        %4628 = vmatprep.subr.bf16.mxu0 0
        %4629 = vmatpush1.bf16.msra.mxu0 0
        %4630 = vmatprep.subr.bf16.mxu0 0
        %4631 = vmatpush1.bf16.msra.mxu0 0
        %4632 = vmatprep.subr.bf16.mxu0 0
        %4633 = vmatpush1.bf16.msra.mxu0 0
        %4634 = vmatprep.subr.bf16.mxu0 0
        %4635 = vmatpush1.bf16.msra.mxu0 %v4615
        %4636 = vmatprep.subr.bf16.mxu0 0
        %4637 = vmatpush2.bf16.msra.mxu0 0
        %4638 = vmatprep.subr.bf16.mxu0 0
        %4639 = vmatpush2.bf16.msra.mxu0 0
        %4640 = vmatprep.subr.bf16.mxu0 0
        %4641 = vmatpush2.bf16.msra.mxu0 0
        %4642 = vmatprep.subr.bf16.mxu0 0
        %4643 = vmatpush2.bf16.msra.mxu0 0
        %4644 = vmatprep.subr.bf16.mxu0 0
        %4645 = vmatpush2.bf16.msra.mxu0 0
        %4646 = vmatprep.subr.bf16.mxu0 0
        %4647 = vmatpush2.bf16.msra.mxu0 0
        %4648 = vmatprep.subr.bf16.mxu0 0
        %4649 = vmatpush2.bf16.msra.mxu0 0
        %4650 = vmatprep.subr.bf16.mxu0 0
        %4651 = vmatpush2.bf16.msra.mxu0 0
        %4652 = vmatprep.mubr.bf16.mxu0 0
        %4653 = vmatmul.mubr.bf16.gmra.mxu0 %v4618
        %v4654 = vpop.f32.mrf.mxu0
        %v4655 = vadd.f32 0.0, %v4654
        %v4656 = vpop.f32.mrf.mxu0
        %v4657 = vpop.f32.mrf.mxu0
        %v4658 = vpop.f32.mrf.mxu0
        %4659 = vdwg.mxu0
        %v4662 = vunpack.c.l.b16 %v4362
        %v4663 = vunpack.c.l.b16 %v4363
        %v4664 = vpack.c.b16 %v4663, %v4662
        %v4667 = vsel %vm3499, %v4348, 0
        %4669 = vmatprep.subr.bf16.mxu0 0
        %4670 = vmatpush1.bf16.msra.mxu0 0
        %4671 = vmatprep.subr.bf16.mxu0 0
        %4672 = vmatpush1.bf16.msra.mxu0 0
        %4673 = vmatprep.subr.bf16.mxu0 0
        %4674 = vmatpush1.bf16.msra.mxu0 0
        %4675 = vmatprep.subr.bf16.mxu0 0
        %4676 = vmatpush1.bf16.msra.mxu0 0
        %4677 = vmatprep.subr.bf16.mxu0 0
        %4678 = vmatpush1.bf16.msra.mxu0 0
        %4679 = vmatprep.subr.bf16.mxu0 0
        %4680 = vmatpush1.bf16.msra.mxu0 0
        %4681 = vmatprep.subr.bf16.mxu0 0
        %4682 = vmatpush1.bf16.msra.mxu0 0
        %4683 = vmatprep.subr.bf16.mxu0 0
        %4684 = vmatpush1.bf16.msra.mxu0 %v4664
        %4685 = vmatprep.subr.bf16.mxu0 0
        %4686 = vmatpush2.bf16.msra.mxu0 0
        %4687 = vmatprep.subr.bf16.mxu0 0
        %4688 = vmatpush2.bf16.msra.mxu0 0
        %4689 = vmatprep.subr.bf16.mxu0 0
        %4690 = vmatpush2.bf16.msra.mxu0 0
        %4691 = vmatprep.subr.bf16.mxu0 0
        %4692 = vmatpush2.bf16.msra.mxu0 0
        %4693 = vmatprep.subr.bf16.mxu0 0
        %4694 = vmatpush2.bf16.msra.mxu0 0
        %4695 = vmatprep.subr.bf16.mxu0 0
        %4696 = vmatpush2.bf16.msra.mxu0 0
        %4697 = vmatprep.subr.bf16.mxu0 0
        %4698 = vmatpush2.bf16.msra.mxu0 0
        %4699 = vmatprep.subr.bf16.mxu0 0
        %4700 = vmatpush2.bf16.msra.mxu0 0
        %4701 = vmatprep.mubr.bf16.mxu0 0
        %4702 = vmatmul.mubr.bf16.gmra.mxu0 %v4667
        %v4703 = vpop.f32.mrf.mxu0
        %v4704 = vadd.f32 0.0, %v4703
        %v4705 = vpop.f32.mrf.mxu0
        %v4706 = vpop.f32.mrf.mxu0
        %v4707 = vpop.f32.mrf.mxu0
        %4708 = vdwg.mxu0
        %v4711 = vunpack.c.l.b16 %v4364
        %v4712 = vunpack.c.l.b16 %v4365
        %v4713 = vpack.c.b16 %v4712, %v4711
        %v4716 = vsel %vm3499, %v4349, 0
        %4718 = vmatprep.subr.bf16.mxu0 0
        %4719 = vmatpush1.bf16.msra.mxu0 0
        %4720 = vmatprep.subr.bf16.mxu0 0
        %4721 = vmatpush1.bf16.msra.mxu0 0
        %4722 = vmatprep.subr.bf16.mxu0 0
        %4723 = vmatpush1.bf16.msra.mxu0 0
        %4724 = vmatprep.subr.bf16.mxu0 0
        %4725 = vmatpush1.bf16.msra.mxu0 0
        %4726 = vmatprep.subr.bf16.mxu0 0
        %4727 = vmatpush1.bf16.msra.mxu0 0
        %4728 = vmatprep.subr.bf16.mxu0 0
        %4729 = vmatpush1.bf16.msra.mxu0 0
        %4730 = vmatprep.subr.bf16.mxu0 0
        %4731 = vmatpush1.bf16.msra.mxu0 0
        %4732 = vmatprep.subr.bf16.mxu0 0
        %4733 = vmatpush1.bf16.msra.mxu0 %v4713
        %4734 = vmatprep.subr.bf16.mxu0 0
        %4735 = vmatpush2.bf16.msra.mxu0 0
        %4736 = vmatprep.subr.bf16.mxu0 0
        %4737 = vmatpush2.bf16.msra.mxu0 0
        %4738 = vmatprep.subr.bf16.mxu0 0
        %4739 = vmatpush2.bf16.msra.mxu0 0
        %4740 = vmatprep.subr.bf16.mxu0 0
        %4741 = vmatpush2.bf16.msra.mxu0 0
        %4742 = vmatprep.subr.bf16.mxu0 0
        %4743 = vmatpush2.bf16.msra.mxu0 0
        %4744 = vmatprep.subr.bf16.mxu0 0
        %4745 = vmatpush2.bf16.msra.mxu0 0
        %4746 = vmatprep.subr.bf16.mxu0 0
        %4747 = vmatpush2.bf16.msra.mxu0 0
        %4748 = vmatprep.subr.bf16.mxu0 0
        %4749 = vmatpush2.bf16.msra.mxu0 0
        %4750 = vmatprep.mubr.bf16.mxu0 0
        %4751 = vmatmul.mubr.bf16.gmra.mxu0 %v4716
        %v4752 = vpop.f32.mrf.mxu0
        %v4753 = vadd.f32 0.0, %v4752
        %v4754 = vpop.f32.mrf.mxu0
        %v4755 = vpop.f32.mrf.mxu0
        %v4756 = vpop.f32.mrf.mxu0
        %4757 = vdwg.mxu0
        %v4758 = vadd.f32 %v4410, %v4459
        %v4759 = vadd.f32 %v4758, %v4508
        %v4760 = vadd.f32 %v4759, %v4557
        %v4761 = vadd.f32 %v4760, %v4606
        %v4762 = vadd.f32 %v4761, %v4655
        %v4763 = vadd.f32 %v4762, %v4704
        %v4764 = vadd.f32 %v4763, %v4753
        %v4765 = vld [vmem:[%s8] sm:$0x1]
        %v4767 = vlaneseq
        %v4768 = vshrl.u32 %v4767, 7
        %v4769 = vsub.s32 0, %v4768
        %v4770 = vrot.slane %v4765, %v4769
        %v4772 = vadd.f32 %v4764, %v4770
        %v4773 = vadd.f32 %v817, %v4772
        %4774 = vadd.xlane.f32.xlu0 %v4773
        %v4775 = vpop.xlane.xlu0 %4774
        %v4776 = vrcp.pop 128.0
        %v4777 = vmul.f32 %v4775, %v4776
        %v4778 = vsub.f32 %v4773, %v4777
        %v4779 = vmul.f32 %v4778, %v4778
        %4780 = vadd.xlane.f32.xlu0 %v4779
        %v4781 = vpop.xlane.xlu0 %4780
        %v4782 = vmul.f32 %v4781, %v4776
        %v4783 = vadd.f32 %v4782, 1e-05
        %v4784 = vrsqrt.pop %v4783
        %v4785 = vmul.f32 %v4778, %v4784
        %v4787 = vlaneseq
        %v4788 = vshrl.u32 %v4787, 7
        %v4789 = vsub.s32 0, %v4788
        %v4790 = vrot.slane %v815, %v4789
        %v4792 = vmul.f32 %v4785, %v4790
        %v4794 = vlaneseq
        %v4795 = vshrl.u32 %v4794, 7
        %v4796 = vsub.s32 0, %v4795
        %v4797 = vrot.slane %v816, %v4796
        %v4799 = vadd.f32 %v4792, %v4797
        %v4800 = vpack.c.bf16 %v4799, %v4799
        %v4801 = vld [vmem:[%s9] sm:$0xff]
        %v4802 = vld [vmem:[%s9 + $0x8] sm:$0xff]
        %v4803 = vld [vmem:[%s9 + $0x10] sm:$0xff]
        %v4804 = vld [vmem:[%s9 + $0x18] sm:$0xff]
        %v4805 = vld [vmem:[%s9 + $0x20] sm:$0xff]
        %v4806 = vld [vmem:[%s9 + $0x28] sm:$0xff]
        %v4807 = vld [vmem:[%s9 + $0x30] sm:$0xff]
        %v4808 = vld [vmem:[%s9 + $0x38] sm:$0xff]
        %v4809 = vld [vmem:[%s9 + $0x40] sm:$0xff]
        %v4810 = vld [vmem:[%s9 + $0x48] sm:$0xff]
        %v4811 = vld [vmem:[%s9 + $0x50] sm:$0xff]
        %v4812 = vld [vmem:[%s9 + $0x58] sm:$0xff]
        %v4813 = vld [vmem:[%s9 + $0x60] sm:$0xff]
        %v4814 = vld [vmem:[%s9 + $0x68] sm:$0xff]
        %v4815 = vld [vmem:[%s9 + $0x70] sm:$0xff]
        %v4816 = vld [vmem:[%s9 + $0x78] sm:$0xff]
        %v4817 = vld [vmem:[%s10] sm:$0x3]
        %v4819 = vlaneseq
        %v4820 = vshrl.u32 %v4819, 7
        %v4821 = vsub.s32 0, %v4820
        %v4822 = vrot.slane %v4817, %v4821
        %v4823 = vlaneseq
        %v4824 = vshrl.u32 %v4823, 7
        %v4825 = vsub.s32 1, %v4824
        %v4826 = vrot.slane %v4817, %v4825
        %v4845 = vunpack.c.l.b16 %v4801
        %v4846 = vunpack.c.h.b16 %v4801
        %v4847 = vunpack.c.l.b16 %v4802
        %v4848 = vunpack.c.h.b16 %v4802
        %v4849 = vunpack.c.l.b16 %v4803
        %v4850 = vunpack.c.h.b16 %v4803
        %v4851 = vunpack.c.l.b16 %v4804
        %v4852 = vunpack.c.h.b16 %v4804
        %v4853 = vunpack.c.l.b16 %v4805
        %v4854 = vunpack.c.h.b16 %v4805
        %v4855 = vunpack.c.l.b16 %v4806
        %v4856 = vunpack.c.h.b16 %v4806
        %v4857 = vunpack.c.l.b16 %v4807
        %v4858 = vunpack.c.h.b16 %v4807
        %v4859 = vunpack.c.l.b16 %v4808
        %v4860 = vunpack.c.h.b16 %v4808
        %v4861 = vunpack.c.l.b16 %v4809
        %v4862 = vunpack.c.h.b16 %v4809
        %v4863 = vunpack.c.l.b16 %v4810
        %v4864 = vunpack.c.h.b16 %v4810
        %v4865 = vunpack.c.l.b16 %v4811
        %v4866 = vunpack.c.h.b16 %v4811
        %v4867 = vunpack.c.l.b16 %v4812
        %v4868 = vunpack.c.h.b16 %v4812
        %v4869 = vunpack.c.l.b16 %v4813
        %v4870 = vunpack.c.h.b16 %v4813
        %v4871 = vunpack.c.l.b16 %v4814
        %v4872 = vunpack.c.h.b16 %v4814
        %v4873 = vunpack.c.l.b16 %v4815
        %v4874 = vunpack.c.h.b16 %v4815
        %v4875 = vunpack.c.l.b16 %v4816
        %v4876 = vunpack.c.h.b16 %v4816
        %v4877 = vpack.c.b16 %v4847, %v4845
        %v4878 = vpack.c.b16 %v4848, %v4846
        %v4879 = vpack.c.b16 %v4851, %v4849
        %v4880 = vpack.c.b16 %v4852, %v4850
        %v4881 = vpack.c.b16 %v4855, %v4853
        %v4882 = vpack.c.b16 %v4856, %v4854
        %v4883 = vpack.c.b16 %v4859, %v4857
        %v4884 = vpack.c.b16 %v4860, %v4858
        %v4885 = vpack.c.b16 %v4863, %v4861
        %v4886 = vpack.c.b16 %v4864, %v4862
        %v4887 = vpack.c.b16 %v4867, %v4865
        %v4888 = vpack.c.b16 %v4868, %v4866
        %v4889 = vpack.c.b16 %v4871, %v4869
        %v4890 = vpack.c.b16 %v4872, %v4870
        %v4891 = vpack.c.b16 %v4875, %v4873
        %v4892 = vpack.c.b16 %v4876, %v4874
        %4909 = vmatprep.subr.bf16.mxu0 %v4892
        %4910 = vmatpush1.bf16.msra.mxu0 %v4891
        %4911 = vmatprep.subr.bf16.mxu0 %v4890
        %4912 = vmatpush1.bf16.msra.mxu0 %v4889
        %4913 = vmatprep.subr.bf16.mxu0 %v4888
        %4914 = vmatpush1.bf16.msra.mxu0 %v4887
        %4915 = vmatprep.subr.bf16.mxu0 %v4886
        %4916 = vmatpush1.bf16.msra.mxu0 %v4885
        %4917 = vmatprep.subr.bf16.mxu0 %v4884
        %4918 = vmatpush1.bf16.msra.mxu0 %v4883
        %4919 = vmatprep.subr.bf16.mxu0 %v4882
        %4920 = vmatpush1.bf16.msra.mxu0 %v4881
        %4921 = vmatprep.subr.bf16.mxu0 %v4880
        %4922 = vmatpush1.bf16.msra.mxu0 %v4879
        %4923 = vmatprep.subr.bf16.mxu0 %v4878
        %4924 = vmatpush1.bf16.msra.mxu0 %v4877
        %4925 = vmatprep.subr.bf16.mxu0 0
        %4926 = vmatpush2.bf16.msra.mxu0 0
        %4927 = vmatprep.subr.bf16.mxu0 0
        %4928 = vmatpush2.bf16.msra.mxu0 0
        %4929 = vmatprep.subr.bf16.mxu0 0
        %4930 = vmatpush2.bf16.msra.mxu0 0
        %4931 = vmatprep.subr.bf16.mxu0 0
        %4932 = vmatpush2.bf16.msra.mxu0 0
        %4933 = vmatprep.subr.bf16.mxu0 0
        %4934 = vmatpush2.bf16.msra.mxu0 0
        %4935 = vmatprep.subr.bf16.mxu0 0
        %4936 = vmatpush2.bf16.msra.mxu0 0
        %4937 = vmatprep.subr.bf16.mxu0 0
        %4938 = vmatpush2.bf16.msra.mxu0 0
        %4939 = vmatprep.subr.bf16.mxu0 0
        %4940 = vmatpush2.bf16.msra.mxu0 0
        %4941 = vmatprep.mubr.bf16.mxu0 0
        %4942 = vmatmul.mubr.bf16.gmra.mxu0 %v4800
        %v4943 = vpop.f32.mrf.mxu0
        %v4944 = vadd.f32 %v4822, %v4943
        %v4945 = vpop.f32.mrf.mxu0
        %v4946 = vadd.f32 %v4826, %v4945
        %v4947 = vpop.f32.mrf.mxu0
        %v4948 = vpop.f32.mrf.mxu0
        %4949 = vdwg.mxu0
        %v4950 = vmax.f32 %v4944, 0.0
        %v4951 = vmax.f32 %v4946, 0.0
        %v4952 = vpack.c.bf16 %v4950, %v4950
        %v4953 = vpack.c.bf16 %v4951, %v4951
        %v4954 = vld [vmem:[%s11] sm:$0xf]
        %v4955 = vld [vmem:[%s11 + $0x4] sm:$0xf]
        %v4956 = vld [vmem:[%s11 + $0x8] sm:$0xf]
        %v4957 = vld [vmem:[%s11 + $0xc] sm:$0xf]
        %v4958 = vld [vmem:[%s11 + $0x10] sm:$0xf]
        %v4959 = vld [vmem:[%s11 + $0x14] sm:$0xf]
        %v4960 = vld [vmem:[%s11 + $0x18] sm:$0xf]
        %v4961 = vld [vmem:[%s11 + $0x1c] sm:$0xf]
        %v4962 = vld [vmem:[%s11 + $0x20] sm:$0xf]
        %v4963 = vld [vmem:[%s11 + $0x24] sm:$0xf]
        %v4964 = vld [vmem:[%s11 + $0x28] sm:$0xf]
        %v4965 = vld [vmem:[%s11 + $0x2c] sm:$0xf]
        %v4966 = vld [vmem:[%s11 + $0x30] sm:$0xf]
        %v4967 = vld [vmem:[%s11 + $0x34] sm:$0xf]
        %v4968 = vld [vmem:[%s11 + $0x38] sm:$0xf]
        %v4969 = vld [vmem:[%s11 + $0x3c] sm:$0xf]
        %v4970 = vld [vmem:[%s11 + $0x40] sm:$0xf]
        %v4971 = vld [vmem:[%s11 + $0x44] sm:$0xf]
        %v4972 = vld [vmem:[%s11 + $0x48] sm:$0xf]
        %v4973 = vld [vmem:[%s11 + $0x4c] sm:$0xf]
        %v4974 = vld [vmem:[%s11 + $0x50] sm:$0xf]
        %v4975 = vld [vmem:[%s11 + $0x54] sm:$0xf]
        %v4976 = vld [vmem:[%s11 + $0x58] sm:$0xf]
        %v4977 = vld [vmem:[%s11 + $0x5c] sm:$0xf]
        %v4978 = vld [vmem:[%s11 + $0x60] sm:$0xf]
        %v4979 = vld [vmem:[%s11 + $0x64] sm:$0xf]
        %v4980 = vld [vmem:[%s11 + $0x68] sm:$0xf]
        %v4981 = vld [vmem:[%s11 + $0x6c] sm:$0xf]
        %v4982 = vld [vmem:[%s11 + $0x70] sm:$0xf]
        %v4983 = vld [vmem:[%s11 + $0x74] sm:$0xf]
        %v4984 = vld [vmem:[%s11 + $0x78] sm:$0xf]
        %v4985 = vld [vmem:[%s11 + $0x7c] sm:$0xf]
        %v4986 = vld [vmem:[%s12] sm:$0x1]
        %v4988 = vlaneseq
        %v4989 = vshrl.u32 %v4988, 7
        %v4990 = vsub.s32 0, %v4989
        %v4991 = vrot.slane %v4986, %v4990
        %v5025 = vunpack.c.l.b16 %v4954
        %v5026 = vunpack.c.l.b16 %v4955
        %v5027 = vunpack.c.l.b16 %v4956
        %v5028 = vunpack.c.l.b16 %v4957
        %v5029 = vunpack.c.l.b16 %v4958
        %v5030 = vunpack.c.l.b16 %v4959
        %v5031 = vunpack.c.l.b16 %v4960
        %v5032 = vunpack.c.l.b16 %v4961
        %v5033 = vunpack.c.l.b16 %v4962
        %v5034 = vunpack.c.l.b16 %v4963
        %v5035 = vunpack.c.l.b16 %v4964
        %v5036 = vunpack.c.l.b16 %v4965
        %v5037 = vunpack.c.l.b16 %v4966
        %v5038 = vunpack.c.l.b16 %v4967
        %v5039 = vunpack.c.l.b16 %v4968
        %v5040 = vunpack.c.l.b16 %v4969
        %v5041 = vunpack.c.l.b16 %v4970
        %v5042 = vunpack.c.l.b16 %v4971
        %v5043 = vunpack.c.l.b16 %v4972
        %v5044 = vunpack.c.l.b16 %v4973
        %v5045 = vunpack.c.l.b16 %v4974
        %v5046 = vunpack.c.l.b16 %v4975
        %v5047 = vunpack.c.l.b16 %v4976
        %v5048 = vunpack.c.l.b16 %v4977
        %v5049 = vunpack.c.l.b16 %v4978
        %v5050 = vunpack.c.l.b16 %v4979
        %v5051 = vunpack.c.l.b16 %v4980
        %v5052 = vunpack.c.l.b16 %v4981
        %v5053 = vunpack.c.l.b16 %v4982
        %v5054 = vunpack.c.l.b16 %v4983
        %v5055 = vunpack.c.l.b16 %v4984
        %v5056 = vunpack.c.l.b16 %v4985
        %v5057 = vpack.c.b16 %v5026, %v5025
        %v5058 = vpack.c.b16 %v5028, %v5027
        %v5059 = vpack.c.b16 %v5030, %v5029
        %v5060 = vpack.c.b16 %v5032, %v5031
        %v5061 = vpack.c.b16 %v5034, %v5033
        %v5062 = vpack.c.b16 %v5036, %v5035
        %v5063 = vpack.c.b16 %v5038, %v5037
        %v5064 = vpack.c.b16 %v5040, %v5039
        %v5065 = vpack.c.b16 %v5042, %v5041
        %v5066 = vpack.c.b16 %v5044, %v5043
        %v5067 = vpack.c.b16 %v5046, %v5045
        %v5068 = vpack.c.b16 %v5048, %v5047
        %v5069 = vpack.c.b16 %v5050, %v5049
        %v5070 = vpack.c.b16 %v5052, %v5051
        %v5071 = vpack.c.b16 %v5054, %v5053
        %v5072 = vpack.c.b16 %v5056, %v5055
        %5089 = vmatprep.subr.bf16.mxu0 0
        %5090 = vmatpush1.bf16.msra.mxu0 %v5064
        %5091 = vmatprep.subr.bf16.mxu0 0
        %5092 = vmatpush1.bf16.msra.mxu0 %v5063
        %5093 = vmatprep.subr.bf16.mxu0 0
        %5094 = vmatpush1.bf16.msra.mxu0 %v5062
        %5095 = vmatprep.subr.bf16.mxu0 0
        %5096 = vmatpush1.bf16.msra.mxu0 %v5061
        %5097 = vmatprep.subr.bf16.mxu0 0
        %5098 = vmatpush1.bf16.msra.mxu0 %v5060
        %5099 = vmatprep.subr.bf16.mxu0 0
        %5100 = vmatpush1.bf16.msra.mxu0 %v5059
        %5101 = vmatprep.subr.bf16.mxu0 0
        %5102 = vmatpush1.bf16.msra.mxu0 %v5058
        %5103 = vmatprep.subr.bf16.mxu0 0
        %5104 = vmatpush1.bf16.msra.mxu0 %v5057
        %5105 = vmatprep.subr.bf16.mxu0 0
        %5106 = vmatpush2.bf16.msra.mxu0 %v5072
        %5107 = vmatprep.subr.bf16.mxu0 0
        %5108 = vmatpush2.bf16.msra.mxu0 %v5071
        %5109 = vmatprep.subr.bf16.mxu0 0
        %5110 = vmatpush2.bf16.msra.mxu0 %v5070
        %5111 = vmatprep.subr.bf16.mxu0 0
        %5112 = vmatpush2.bf16.msra.mxu0 %v5069
        %5113 = vmatprep.subr.bf16.mxu0 0
        %5114 = vmatpush2.bf16.msra.mxu0 %v5068
        %5115 = vmatprep.subr.bf16.mxu0 0
        %5116 = vmatpush2.bf16.msra.mxu0 %v5067
        %5117 = vmatprep.subr.bf16.mxu0 0
        %5118 = vmatpush2.bf16.msra.mxu0 %v5066
        %5119 = vmatprep.subr.bf16.mxu0 0
        %5120 = vmatpush2.bf16.msra.mxu0 %v5065
        %5121 = vmatprep.mubr.bf16.mxu0 %v4953
        %5122 = vmatmul.mubr.bf16.gmra.mxu0 %v4952
        %v5123 = vpop.f32.mrf.mxu0
        %v5124 = vadd.f32 %v4991, %v5123
        %v5125 = vpop.f32.mrf.mxu0
        %v5126 = vpop.f32.mrf.mxu0
        %v5127 = vpop.f32.mrf.mxu0
        %5128 = vdwg.mxu0
        %v5129 = vmax.f32 %v5124, 0.0
        %v5130 = vadd.f32 %v4799, %v5129
        %5131 = vadd.xlane.f32.xlu0 %v5130
        %v5132 = vpop.xlane.xlu0 %5131
        %v5133 = vmul.f32 %v5132, %v4776
        %v5134 = vsub.f32 %v5130, %v5133
        %v5135 = vmul.f32 %v5134, %v5134
        %5136 = vadd.xlane.f32.xlu0 %v5135
        %v5137 = vpop.xlane.xlu0 %5136
        %v5138 = vmul.f32 %v5137, %v4776
        %v5139 = vadd.f32 %v5138, 1e-05
        %v5140 = vrsqrt.pop %v5139
        %v5141 = vmul.f32 %v5134, %v5140
        %v5142 = vmul.f32 %v5141, %v4790
        %v5143 = vadd.f32 %v5142, %v4797
        %v5144 = vpack.c.bf16 %v5143, %v5143
        %v5145 = vld [vmem:[%s13] sm:$0xf]
        %v5146 = vld [vmem:[%s13 + $0x4] sm:$0xf]
        %v5147 = vld [vmem:[%s13 + $0x8] sm:$0xf]
        %v5148 = vld [vmem:[%s13 + $0xc] sm:$0xf]
        %v5149 = vld [vmem:[%s13 + $0x10] sm:$0xf]
        %v5150 = vld [vmem:[%s13 + $0x14] sm:$0xf]
        %v5151 = vld [vmem:[%s13 + $0x18] sm:$0xf]
        %v5152 = vld [vmem:[%s13 + $0x1c] sm:$0xf]
        %v5153 = vld [vmem:[%s13 + $0x20] sm:$0xf]
        %v5154 = vld [vmem:[%s13 + $0x24] sm:$0xf]
        %v5155 = vld [vmem:[%s13 + $0x28] sm:$0xf]
        %v5156 = vld [vmem:[%s13 + $0x2c] sm:$0xf]
        %v5157 = vld [vmem:[%s13 + $0x30] sm:$0xf]
        %v5158 = vld [vmem:[%s13 + $0x34] sm:$0xf]
        %v5159 = vld [vmem:[%s13 + $0x38] sm:$0xf]
        %v5160 = vld [vmem:[%s13 + $0x3c] sm:$0xf]
        %v5161 = vld [vmem:[%s13 + $0x40] sm:$0xf]
        %v5162 = vld [vmem:[%s13 + $0x44] sm:$0xf]
        %v5163 = vld [vmem:[%s13 + $0x48] sm:$0xf]
        %v5164 = vld [vmem:[%s13 + $0x4c] sm:$0xf]
        %v5165 = vld [vmem:[%s13 + $0x50] sm:$0xf]
        %v5166 = vld [vmem:[%s13 + $0x54] sm:$0xf]
        %v5167 = vld [vmem:[%s13 + $0x58] sm:$0xf]
        %v5168 = vld [vmem:[%s13 + $0x5c] sm:$0xf]
        %v5169 = vld [vmem:[%s13 + $0x60] sm:$0xf]
        %v5170 = vld [vmem:[%s13 + $0x64] sm:$0xf]
        %v5171 = vld [vmem:[%s13 + $0x68] sm:$0xf]
        %v5172 = vld [vmem:[%s13 + $0x6c] sm:$0xf]
        %v5173 = vld [vmem:[%s13 + $0x70] sm:$0xf]
        %v5174 = vld [vmem:[%s13 + $0x74] sm:$0xf]
        %v5175 = vld [vmem:[%s13 + $0x78] sm:$0xf]
        %v5176 = vld [vmem:[%s13 + $0x7c] sm:$0xf]
        %v5177 = vld [vmem:[%s13 + $0x80] sm:$0xf]
        %v5178 = vld [vmem:[%s13 + $0x84] sm:$0xf]
        %v5179 = vld [vmem:[%s13 + $0x88] sm:$0xf]
        %v5180 = vld [vmem:[%s13 + $0x8c] sm:$0xf]
        %v5181 = vld [vmem:[%s13 + $0x90] sm:$0xf]
        %v5182 = vld [vmem:[%s13 + $0x94] sm:$0xf]
        %v5183 = vld [vmem:[%s13 + $0x98] sm:$0xf]
        %v5184 = vld [vmem:[%s13 + $0x9c] sm:$0xf]
        %v5185 = vld [vmem:[%s13 + $0xa0] sm:$0xf]
        %v5186 = vld [vmem:[%s13 + $0xa4] sm:$0xf]
        %v5187 = vld [vmem:[%s13 + $0xa8] sm:$0xf]
        %v5188 = vld [vmem:[%s13 + $0xac] sm:$0xf]
        %v5189 = vld [vmem:[%s13 + $0xb0] sm:$0xf]
        %v5190 = vld [vmem:[%s13 + $0xb4] sm:$0xf]
        %v5191 = vld [vmem:[%s13 + $0xb8] sm:$0xf]
        %v5192 = vld [vmem:[%s13 + $0xbc] sm:$0xf]
        %v5193 = vld [vmem:[%s13 + $0xc0] sm:$0xf]
        %v5194 = vld [vmem:[%s13 + $0xc4] sm:$0xf]
        %v5195 = vld [vmem:[%s13 + $0xc8] sm:$0xf]
        %v5196 = vld [vmem:[%s13 + $0xcc] sm:$0xf]
        %v5197 = vld [vmem:[%s13 + $0xd0] sm:$0xf]
        %v5198 = vld [vmem:[%s13 + $0xd4] sm:$0xf]
        %v5199 = vld [vmem:[%s13 + $0xd8] sm:$0xf]
        %v5200 = vld [vmem:[%s13 + $0xdc] sm:$0xf]
        %v5201 = vld [vmem:[%s13 + $0xe0] sm:$0xf]
        %v5202 = vld [vmem:[%s13 + $0xe4] sm:$0xf]
        %v5203 = vld [vmem:[%s13 + $0xe8] sm:$0xf]
        %v5204 = vld [vmem:[%s13 + $0xec] sm:$0xf]
        %v5205 = vld [vmem:[%s13 + $0xf0] sm:$0xf]
        %v5206 = vld [vmem:[%s13 + $0xf4] sm:$0xf]
        %v5207 = vld [vmem:[%s13 + $0xf8] sm:$0xf]
        %v5208 = vld [vmem:[%s13 + $0xfc] sm:$0xf]
        %v5209 = vld [vmem:[%s13 + $0x100] sm:$0xf]
        %v5210 = vld [vmem:[%s13 + $0x104] sm:$0xf]
        %v5211 = vld [vmem:[%s13 + $0x108] sm:$0xf]
        %v5212 = vld [vmem:[%s13 + $0x10c] sm:$0xf]
        %v5213 = vld [vmem:[%s13 + $0x110] sm:$0xf]
        %v5214 = vld [vmem:[%s13 + $0x114] sm:$0xf]
        %v5215 = vld [vmem:[%s13 + $0x118] sm:$0xf]
        %v5216 = vld [vmem:[%s13 + $0x11c] sm:$0xf]
        %v5217 = vld [vmem:[%s13 + $0x120] sm:$0xf]
        %v5218 = vld [vmem:[%s13 + $0x124] sm:$0xf]
        %v5219 = vld [vmem:[%s13 + $0x128] sm:$0xf]
        %v5220 = vld [vmem:[%s13 + $0x12c] sm:$0xf]
        %v5221 = vld [vmem:[%s13 + $0x130] sm:$0xf]
        %v5222 = vld [vmem:[%s13 + $0x134] sm:$0xf]
        %v5223 = vld [vmem:[%s13 + $0x138] sm:$0xf]
        %v5224 = vld [vmem:[%s13 + $0x13c] sm:$0xf]
        %v5225 = vld [vmem:[%s13 + $0x140] sm:$0xf]
        %v5226 = vld [vmem:[%s13 + $0x144] sm:$0xf]
        %v5227 = vld [vmem:[%s13 + $0x148] sm:$0xf]
        %v5228 = vld [vmem:[%s13 + $0x14c] sm:$0xf]
        %v5229 = vld [vmem:[%s13 + $0x150] sm:$0xf]
        %v5230 = vld [vmem:[%s13 + $0x154] sm:$0xf]
        %v5231 = vld [vmem:[%s13 + $0x158] sm:$0xf]
        %v5232 = vld [vmem:[%s13 + $0x15c] sm:$0xf]
        %v5233 = vld [vmem:[%s13 + $0x160] sm:$0xf]
        %v5234 = vld [vmem:[%s13 + $0x164] sm:$0xf]
        %v5235 = vld [vmem:[%s13 + $0x168] sm:$0xf]
        %v5236 = vld [vmem:[%s13 + $0x16c] sm:$0xf]
        %v5237 = vld [vmem:[%s13 + $0x170] sm:$0xf]
        %v5238 = vld [vmem:[%s13 + $0x174] sm:$0xf]
        %v5239 = vld [vmem:[%s13 + $0x178] sm:$0xf]
        %v5240 = vld [vmem:[%s13 + $0x17c] sm:$0xf]
        %v5241 = vld [vmem:[%s13 + $0x180] sm:$0xf]
        %v5242 = vld [vmem:[%s13 + $0x184] sm:$0xf]
        %v5243 = vld [vmem:[%s13 + $0x188] sm:$0xf]
        %v5244 = vld [vmem:[%s13 + $0x18c] sm:$0xf]
        %v5245 = vld [vmem:[%s13 + $0x190] sm:$0xf]
        %v5246 = vld [vmem:[%s13 + $0x194] sm:$0xf]
        %v5247 = vld [vmem:[%s13 + $0x198] sm:$0xf]
        %v5248 = vld [vmem:[%s13 + $0x19c] sm:$0xf]
        %v5249 = vld [vmem:[%s13 + $0x1a0] sm:$0xf]
        %v5250 = vld [vmem:[%s13 + $0x1a4] sm:$0xf]
        %v5251 = vld [vmem:[%s13 + $0x1a8] sm:$0xf]
        %v5252 = vld [vmem:[%s13 + $0x1ac] sm:$0xf]
        %v5253 = vld [vmem:[%s13 + $0x1b0] sm:$0xf]
        %v5254 = vld [vmem:[%s13 + $0x1b4] sm:$0xf]
        %v5255 = vld [vmem:[%s13 + $0x1b8] sm:$0xf]
        %v5256 = vld [vmem:[%s13 + $0x1bc] sm:$0xf]
        %v5257 = vld [vmem:[%s13 + $0x1c0] sm:$0xf]
        %v5258 = vld [vmem:[%s13 + $0x1c4] sm:$0xf]
        %v5259 = vld [vmem:[%s13 + $0x1c8] sm:$0xf]
        %v5260 = vld [vmem:[%s13 + $0x1cc] sm:$0xf]
        %v5261 = vld [vmem:[%s13 + $0x1d0] sm:$0xf]
        %v5262 = vld [vmem:[%s13 + $0x1d4] sm:$0xf]
        %v5263 = vld [vmem:[%s13 + $0x1d8] sm:$0xf]
        %v5264 = vld [vmem:[%s13 + $0x1dc] sm:$0xf]
        %v5265 = vld [vmem:[%s13 + $0x1e0] sm:$0xf]
        %v5266 = vld [vmem:[%s13 + $0x1e4] sm:$0xf]
        %v5267 = vld [vmem:[%s13 + $0x1e8] sm:$0xf]
        %v5268 = vld [vmem:[%s13 + $0x1ec] sm:$0xf]
        %v5269 = vld [vmem:[%s13 + $0x1f0] sm:$0xf]
        %v5270 = vld [vmem:[%s13 + $0x1f4] sm:$0xf]
        %v5271 = vld [vmem:[%s13 + $0x1f8] sm:$0xf]
        %v5272 = vld [vmem:[%s13 + $0x1fc] sm:$0xf]
        %v5273 = vld [vmem:[%s14] sm:$0x1]
        %v5274 = vld [vmem:[%s14 + $0x1] sm:$0x1]
        %v5275 = vld [vmem:[%s14 + $0x2] sm:$0x1]
        %v5276 = vld [vmem:[%s14 + $0x3] sm:$0x1]
        %v5277 = vld [vmem:[%s14 + $0x4] sm:$0x1]
        %v5278 = vld [vmem:[%s14 + $0x5] sm:$0x1]
        %v5279 = vld [vmem:[%s14 + $0x6] sm:$0x1]
        %v5280 = vld [vmem:[%s14 + $0x7] sm:$0x1]
        %v5289 = vlaneseq
        %v5290 = vshrl.u32 %v5289, 7
        %v5291 = vsub.s32 0, %v5290
        %v5292 = vrot.slane %v5273, %v5291
        %v5293 = vlaneseq
        %v5294 = vshrl.u32 %v5293, 7
        %v5295 = vsub.s32 0, %v5294
        %v5296 = vrot.slane %v5274, %v5295
        %v5297 = vlaneseq
        %v5298 = vshrl.u32 %v5297, 7
        %v5299 = vsub.s32 0, %v5298
        %v5300 = vrot.slane %v5275, %v5299
        %v5301 = vlaneseq
        %v5302 = vshrl.u32 %v5301, 7
        %v5303 = vsub.s32 0, %v5302
        %v5304 = vrot.slane %v5276, %v5303
        %v5305 = vlaneseq
        %v5306 = vshrl.u32 %v5305, 7
        %v5307 = vsub.s32 0, %v5306
        %v5308 = vrot.slane %v5277, %v5307
        %v5309 = vlaneseq
        %v5310 = vshrl.u32 %v5309, 7
        %v5311 = vsub.s32 0, %v5310
        %v5312 = vrot.slane %v5278, %v5311
        %v5313 = vlaneseq
        %v5314 = vshrl.u32 %v5313, 7
        %v5315 = vsub.s32 0, %v5314
        %v5316 = vrot.slane %v5279, %v5315
        %v5317 = vlaneseq
        %v5318 = vshrl.u32 %v5317, 7
        %v5319 = vsub.s32 0, %v5318
        %v5320 = vrot.slane %v5280, %v5319
        %v5345 = vunpack.c.l.b16 %v5145
        %v5346 = vunpack.c.l.b16 %v5146
        %v5347 = vunpack.c.l.b16 %v5147
        %v5348 = vunpack.c.l.b16 %v5148
        %v5349 = vunpack.c.l.b16 %v5149
        %v5350 = vunpack.c.l.b16 %v5150
        %v5351 = vunpack.c.l.b16 %v5151
        %v5352 = vunpack.c.l.b16 %v5152
        %v5353 = vunpack.c.l.b16 %v5153
        %v5354 = vunpack.c.l.b16 %v5154
        %v5355 = vunpack.c.l.b16 %v5155
        %v5356 = vunpack.c.l.b16 %v5156
        %v5357 = vunpack.c.l.b16 %v5157
        %v5358 = vunpack.c.l.b16 %v5158
        %v5359 = vunpack.c.l.b16 %v5159
        %v5360 = vunpack.c.l.b16 %v5160
        %v5361 = vpack.c.b16 %v5346, %v5345
        %v5362 = vpack.c.b16 %v5348, %v5347
        %v5363 = vpack.c.b16 %v5350, %v5349
        %v5364 = vpack.c.b16 %v5352, %v5351
        %v5365 = vpack.c.b16 %v5354, %v5353
        %v5366 = vpack.c.b16 %v5356, %v5355
        %v5367 = vpack.c.b16 %v5358, %v5357
        %v5368 = vpack.c.b16 %v5360, %v5359
        %5377 = vmatprep.subr.bf16.mxu0 0
        %5378 = vmatpush1.bf16.msra.mxu0 %v5368
        %5379 = vmatprep.subr.bf16.mxu0 0
        %5380 = vmatpush1.bf16.msra.mxu0 %v5367
        %5381 = vmatprep.subr.bf16.mxu0 0
        %5382 = vmatpush1.bf16.msra.mxu0 %v5366
        %5383 = vmatprep.subr.bf16.mxu0 0
        %5384 = vmatpush1.bf16.msra.mxu0 %v5365
        %5385 = vmatprep.subr.bf16.mxu0 0
        %5386 = vmatpush1.bf16.msra.mxu0 %v5364
        %5387 = vmatprep.subr.bf16.mxu0 0
        %5388 = vmatpush1.bf16.msra.mxu0 %v5363
        %5389 = vmatprep.subr.bf16.mxu0 0
        %5390 = vmatpush1.bf16.msra.mxu0 %v5362
        %5391 = vmatprep.subr.bf16.mxu0 0
        %5392 = vmatpush1.bf16.msra.mxu0 %v5361
        %5393 = vmatprep.subr.bf16.mxu0 0
        %5394 = vmatpush2.bf16.msra.mxu0 0
        %5395 = vmatprep.subr.bf16.mxu0 0
        %5396 = vmatpush2.bf16.msra.mxu0 0
        %5397 = vmatprep.subr.bf16.mxu0 0
        %5398 = vmatpush2.bf16.msra.mxu0 0
        %5399 = vmatprep.subr.bf16.mxu0 0
        %5400 = vmatpush2.bf16.msra.mxu0 0
        %5401 = vmatprep.subr.bf16.mxu0 0
        %5402 = vmatpush2.bf16.msra.mxu0 0
        %5403 = vmatprep.subr.bf16.mxu0 0
        %5404 = vmatpush2.bf16.msra.mxu0 0
        %5405 = vmatprep.subr.bf16.mxu0 0
        %5406 = vmatpush2.bf16.msra.mxu0 0
        %5407 = vmatprep.subr.bf16.mxu0 0
        %5408 = vmatpush2.bf16.msra.mxu0 0
        %5409 = vmatprep.mubr.bf16.mxu0 0
        %5410 = vmatmul.mubr.bf16.gmra.mxu0 %v5144
        %v5411 = vpop.f32.mrf.mxu0
        %v5412 = vadd.f32 %v5292, %v5411
        %v5413 = vpop.f32.mrf.mxu0
        %v5414 = vpop.f32.mrf.mxu0
        %v5415 = vpop.f32.mrf.mxu0
        %5416 = vdwg.mxu0
        %v5433 = vunpack.c.l.b16 %v5161
        %v5434 = vunpack.c.l.b16 %v5162
        %v5435 = vunpack.c.l.b16 %v5163
        %v5436 = vunpack.c.l.b16 %v5164
        %v5437 = vunpack.c.l.b16 %v5165
        %v5438 = vunpack.c.l.b16 %v5166
        %v5439 = vunpack.c.l.b16 %v5167
        %v5440 = vunpack.c.l.b16 %v5168
        %v5441 = vunpack.c.l.b16 %v5169
        %v5442 = vunpack.c.l.b16 %v5170
        %v5443 = vunpack.c.l.b16 %v5171
        %v5444 = vunpack.c.l.b16 %v5172
        %v5445 = vunpack.c.l.b16 %v5173
        %v5446 = vunpack.c.l.b16 %v5174
        %v5447 = vunpack.c.l.b16 %v5175
        %v5448 = vunpack.c.l.b16 %v5176
        %v5449 = vpack.c.b16 %v5434, %v5433
        %v5450 = vpack.c.b16 %v5436, %v5435
        %v5451 = vpack.c.b16 %v5438, %v5437
        %v5452 = vpack.c.b16 %v5440, %v5439
        %v5453 = vpack.c.b16 %v5442, %v5441
        %v5454 = vpack.c.b16 %v5444, %v5443
        %v5455 = vpack.c.b16 %v5446, %v5445
        %v5456 = vpack.c.b16 %v5448, %v5447
        %5465 = vmatprep.subr.bf16.mxu0 0
        %5466 = vmatpush1.bf16.msra.mxu0 %v5456
        %5467 = vmatprep.subr.bf16.mxu0 0
        %5468 = vmatpush1.bf16.msra.mxu0 %v5455
        %5469 = vmatprep.subr.bf16.mxu0 0
        %5470 = vmatpush1.bf16.msra.mxu0 %v5454
        %5471 = vmatprep.subr.bf16.mxu0 0
        %5472 = vmatpush1.bf16.msra.mxu0 %v5453
        %5473 = vmatprep.subr.bf16.mxu0 0
        %5474 = vmatpush1.bf16.msra.mxu0 %v5452
        %5475 = vmatprep.subr.bf16.mxu0 0
        %5476 = vmatpush1.bf16.msra.mxu0 %v5451
        %5477 = vmatprep.subr.bf16.mxu0 0
        %5478 = vmatpush1.bf16.msra.mxu0 %v5450
        %5479 = vmatprep.subr.bf16.mxu0 0
        %5480 = vmatpush1.bf16.msra.mxu0 %v5449
        %5481 = vmatprep.subr.bf16.mxu0 0
        %5482 = vmatpush2.bf16.msra.mxu0 0
        %5483 = vmatprep.subr.bf16.mxu0 0
        %5484 = vmatpush2.bf16.msra.mxu0 0
        %5485 = vmatprep.subr.bf16.mxu0 0
        %5486 = vmatpush2.bf16.msra.mxu0 0
        %5487 = vmatprep.subr.bf16.mxu0 0
        %5488 = vmatpush2.bf16.msra.mxu0 0
        %5489 = vmatprep.subr.bf16.mxu0 0
        %5490 = vmatpush2.bf16.msra.mxu0 0
        %5491 = vmatprep.subr.bf16.mxu0 0
        %5492 = vmatpush2.bf16.msra.mxu0 0
        %5493 = vmatprep.subr.bf16.mxu0 0
        %5494 = vmatpush2.bf16.msra.mxu0 0
        %5495 = vmatprep.subr.bf16.mxu0 0
        %5496 = vmatpush2.bf16.msra.mxu0 0
        %5497 = vmatprep.mubr.bf16.mxu0 0
        %5498 = vmatmul.mubr.bf16.gmra.mxu0 %v5144
        %v5499 = vpop.f32.mrf.mxu0
        %v5500 = vadd.f32 %v5296, %v5499
        %v5501 = vpop.f32.mrf.mxu0
        %v5502 = vpop.f32.mrf.mxu0
        %v5503 = vpop.f32.mrf.mxu0
        %5504 = vdwg.mxu0
        %v5521 = vunpack.c.l.b16 %v5177
        %v5522 = vunpack.c.l.b16 %v5178
        %v5523 = vunpack.c.l.b16 %v5179
        %v5524 = vunpack.c.l.b16 %v5180
        %v5525 = vunpack.c.l.b16 %v5181
        %v5526 = vunpack.c.l.b16 %v5182
        %v5527 = vunpack.c.l.b16 %v5183
        %v5528 = vunpack.c.l.b16 %v5184
        %v5529 = vunpack.c.l.b16 %v5185
        %v5530 = vunpack.c.l.b16 %v5186
        %v5531 = vunpack.c.l.b16 %v5187
        %v5532 = vunpack.c.l.b16 %v5188
        %v5533 = vunpack.c.l.b16 %v5189
        %v5534 = vunpack.c.l.b16 %v5190
        %v5535 = vunpack.c.l.b16 %v5191
        %v5536 = vunpack.c.l.b16 %v5192
        %v5537 = vpack.c.b16 %v5522, %v5521
        %v5538 = vpack.c.b16 %v5524, %v5523
        %v5539 = vpack.c.b16 %v5526, %v5525
        %v5540 = vpack.c.b16 %v5528, %v5527
        %v5541 = vpack.c.b16 %v5530, %v5529
        %v5542 = vpack.c.b16 %v5532, %v5531
        %v5543 = vpack.c.b16 %v5534, %v5533
        %v5544 = vpack.c.b16 %v5536, %v5535
        %5553 = vmatprep.subr.bf16.mxu0 0
        %5554 = vmatpush1.bf16.msra.mxu0 %v5544
        %5555 = vmatprep.subr.bf16.mxu0 0
        %5556 = vmatpush1.bf16.msra.mxu0 %v5543
        %5557 = vmatprep.subr.bf16.mxu0 0
        %5558 = vmatpush1.bf16.msra.mxu0 %v5542
        %5559 = vmatprep.subr.bf16.mxu0 0
        %5560 = vmatpush1.bf16.msra.mxu0 %v5541
        %5561 = vmatprep.subr.bf16.mxu0 0
        %5562 = vmatpush1.bf16.msra.mxu0 %v5540
        %5563 = vmatprep.subr.bf16.mxu0 0
        %5564 = vmatpush1.bf16.msra.mxu0 %v5539
        %5565 = vmatprep.subr.bf16.mxu0 0
        %5566 = vmatpush1.bf16.msra.mxu0 %v5538
        %5567 = vmatprep.subr.bf16.mxu0 0
        %5568 = vmatpush1.bf16.msra.mxu0 %v5537
        %5569 = vmatprep.subr.bf16.mxu0 0
        %5570 = vmatpush2.bf16.msra.mxu0 0
        %5571 = vmatprep.subr.bf16.mxu0 0
        %5572 = vmatpush2.bf16.msra.mxu0 0
        %5573 = vmatprep.subr.bf16.mxu0 0
        %5574 = vmatpush2.bf16.msra.mxu0 0
        %5575 = vmatprep.subr.bf16.mxu0 0
        %5576 = vmatpush2.bf16.msra.mxu0 0
        %5577 = vmatprep.subr.bf16.mxu0 0
        %5578 = vmatpush2.bf16.msra.mxu0 0
        %5579 = vmatprep.subr.bf16.mxu0 0
        %5580 = vmatpush2.bf16.msra.mxu0 0
        %5581 = vmatprep.subr.bf16.mxu0 0
        %5582 = vmatpush2.bf16.msra.mxu0 0
        %5583 = vmatprep.subr.bf16.mxu0 0
        %5584 = vmatpush2.bf16.msra.mxu0 0
        %5585 = vmatprep.mubr.bf16.mxu0 0
        %5586 = vmatmul.mubr.bf16.gmra.mxu0 %v5144
        %v5587 = vpop.f32.mrf.mxu0
        %v5588 = vadd.f32 %v5300, %v5587
        %v5589 = vpop.f32.mrf.mxu0
        %v5590 = vpop.f32.mrf.mxu0
        %v5591 = vpop.f32.mrf.mxu0
        %5592 = vdwg.mxu0
        %v5609 = vunpack.c.l.b16 %v5193
        %v5610 = vunpack.c.l.b16 %v5194
        %v5611 = vunpack.c.l.b16 %v5195
        %v5612 = vunpack.c.l.b16 %v5196
        %v5613 = vunpack.c.l.b16 %v5197
        %v5614 = vunpack.c.l.b16 %v5198
        %v5615 = vunpack.c.l.b16 %v5199
        %v5616 = vunpack.c.l.b16 %v5200
        %v5617 = vunpack.c.l.b16 %v5201
        %v5618 = vunpack.c.l.b16 %v5202
        %v5619 = vunpack.c.l.b16 %v5203
        %v5620 = vunpack.c.l.b16 %v5204
        %v5621 = vunpack.c.l.b16 %v5205
        %v5622 = vunpack.c.l.b16 %v5206
        %v5623 = vunpack.c.l.b16 %v5207
        %v5624 = vunpack.c.l.b16 %v5208
        %v5625 = vpack.c.b16 %v5610, %v5609
        %v5626 = vpack.c.b16 %v5612, %v5611
        %v5627 = vpack.c.b16 %v5614, %v5613
        %v5628 = vpack.c.b16 %v5616, %v5615
        %v5629 = vpack.c.b16 %v5618, %v5617
        %v5630 = vpack.c.b16 %v5620, %v5619
        %v5631 = vpack.c.b16 %v5622, %v5621
        %v5632 = vpack.c.b16 %v5624, %v5623
        %5641 = vmatprep.subr.bf16.mxu0 0
        %5642 = vmatpush1.bf16.msra.mxu0 %v5632
        %5643 = vmatprep.subr.bf16.mxu0 0
        %5644 = vmatpush1.bf16.msra.mxu0 %v5631
        %5645 = vmatprep.subr.bf16.mxu0 0
        %5646 = vmatpush1.bf16.msra.mxu0 %v5630
        %5647 = vmatprep.subr.bf16.mxu0 0
        %5648 = vmatpush1.bf16.msra.mxu0 %v5629
        %5649 = vmatprep.subr.bf16.mxu0 0
        %5650 = vmatpush1.bf16.msra.mxu0 %v5628
        %5651 = vmatprep.subr.bf16.mxu0 0
        %5652 = vmatpush1.bf16.msra.mxu0 %v5627
        %5653 = vmatprep.subr.bf16.mxu0 0
        %5654 = vmatpush1.bf16.msra.mxu0 %v5626
        %5655 = vmatprep.subr.bf16.mxu0 0
        %5656 = vmatpush1.bf16.msra.mxu0 %v5625
        %5657 = vmatprep.subr.bf16.mxu0 0
        %5658 = vmatpush2.bf16.msra.mxu0 0
        %5659 = vmatprep.subr.bf16.mxu0 0
        %5660 = vmatpush2.bf16.msra.mxu0 0
        %5661 = vmatprep.subr.bf16.mxu0 0
        %5662 = vmatpush2.bf16.msra.mxu0 0
        %5663 = vmatprep.subr.bf16.mxu0 0
        %5664 = vmatpush2.bf16.msra.mxu0 0
        %5665 = vmatprep.subr.bf16.mxu0 0
        %5666 = vmatpush2.bf16.msra.mxu0 0
        %5667 = vmatprep.subr.bf16.mxu0 0
        %5668 = vmatpush2.bf16.msra.mxu0 0
        %5669 = vmatprep.subr.bf16.mxu0 0
        %5670 = vmatpush2.bf16.msra.mxu0 0
        %5671 = vmatprep.subr.bf16.mxu0 0
        %5672 = vmatpush2.bf16.msra.mxu0 0
        %5673 = vmatprep.mubr.bf16.mxu0 0
        %5674 = vmatmul.mubr.bf16.gmra.mxu0 %v5144
        %v5675 = vpop.f32.mrf.mxu0
        %v5676 = vadd.f32 %v5304, %v5675
        %v5677 = vpop.f32.mrf.mxu0
        %v5678 = vpop.f32.mrf.mxu0
        %v5679 = vpop.f32.mrf.mxu0
        %5680 = vdwg.mxu0
        %v5697 = vunpack.c.l.b16 %v5209
        %v5698 = vunpack.c.l.b16 %v5210
        %v5699 = vunpack.c.l.b16 %v5211
        %v5700 = vunpack.c.l.b16 %v5212
        %v5701 = vunpack.c.l.b16 %v5213
        %v5702 = vunpack.c.l.b16 %v5214
        %v5703 = vunpack.c.l.b16 %v5215
        %v5704 = vunpack.c.l.b16 %v5216
        %v5705 = vunpack.c.l.b16 %v5217
        %v5706 = vunpack.c.l.b16 %v5218
        %v5707 = vunpack.c.l.b16 %v5219
        %v5708 = vunpack.c.l.b16 %v5220
        %v5709 = vunpack.c.l.b16 %v5221
        %v5710 = vunpack.c.l.b16 %v5222
        %v5711 = vunpack.c.l.b16 %v5223
        %v5712 = vunpack.c.l.b16 %v5224
        %v5713 = vpack.c.b16 %v5698, %v5697
        %v5714 = vpack.c.b16 %v5700, %v5699
        %v5715 = vpack.c.b16 %v5702, %v5701
        %v5716 = vpack.c.b16 %v5704, %v5703
        %v5717 = vpack.c.b16 %v5706, %v5705
        %v5718 = vpack.c.b16 %v5708, %v5707
        %v5719 = vpack.c.b16 %v5710, %v5709
        %v5720 = vpack.c.b16 %v5712, %v5711
        %5729 = vmatprep.subr.bf16.mxu0 0
        %5730 = vmatpush1.bf16.msra.mxu0 %v5720
        %5731 = vmatprep.subr.bf16.mxu0 0
        %5732 = vmatpush1.bf16.msra.mxu0 %v5719
        %5733 = vmatprep.subr.bf16.mxu0 0
        %5734 = vmatpush1.bf16.msra.mxu0 %v5718
        %5735 = vmatprep.subr.bf16.mxu0 0
        %5736 = vmatpush1.bf16.msra.mxu0 %v5717
        %5737 = vmatprep.subr.bf16.mxu0 0
        %5738 = vmatpush1.bf16.msra.mxu0 %v5716
        %5739 = vmatprep.subr.bf16.mxu0 0
        %5740 = vmatpush1.bf16.msra.mxu0 %v5715
        %5741 = vmatprep.subr.bf16.mxu0 0
        %5742 = vmatpush1.bf16.msra.mxu0 %v5714
        %5743 = vmatprep.subr.bf16.mxu0 0
        %5744 = vmatpush1.bf16.msra.mxu0 %v5713
        %5745 = vmatprep.subr.bf16.mxu0 0
        %5746 = vmatpush2.bf16.msra.mxu0 0
        %5747 = vmatprep.subr.bf16.mxu0 0
        %5748 = vmatpush2.bf16.msra.mxu0 0
        %5749 = vmatprep.subr.bf16.mxu0 0
        %5750 = vmatpush2.bf16.msra.mxu0 0
        %5751 = vmatprep.subr.bf16.mxu0 0
        %5752 = vmatpush2.bf16.msra.mxu0 0
        %5753 = vmatprep.subr.bf16.mxu0 0
        %5754 = vmatpush2.bf16.msra.mxu0 0
        %5755 = vmatprep.subr.bf16.mxu0 0
        %5756 = vmatpush2.bf16.msra.mxu0 0
        %5757 = vmatprep.subr.bf16.mxu0 0
        %5758 = vmatpush2.bf16.msra.mxu0 0
        %5759 = vmatprep.subr.bf16.mxu0 0
        %5760 = vmatpush2.bf16.msra.mxu0 0
        %5761 = vmatprep.mubr.bf16.mxu0 0
        %5762 = vmatmul.mubr.bf16.gmra.mxu0 %v5144
        %v5763 = vpop.f32.mrf.mxu0
        %v5764 = vadd.f32 %v5308, %v5763
        %v5765 = vpop.f32.mrf.mxu0
        %v5766 = vpop.f32.mrf.mxu0
        %v5767 = vpop.f32.mrf.mxu0
        %5768 = vdwg.mxu0
        %v5785 = vunpack.c.l.b16 %v5225
        %v5786 = vunpack.c.l.b16 %v5226
        %v5787 = vunpack.c.l.b16 %v5227
        %v5788 = vunpack.c.l.b16 %v5228
        %v5789 = vunpack.c.l.b16 %v5229
        %v5790 = vunpack.c.l.b16 %v5230
        %v5791 = vunpack.c.l.b16 %v5231
        %v5792 = vunpack.c.l.b16 %v5232
        %v5793 = vunpack.c.l.b16 %v5233
        %v5794 = vunpack.c.l.b16 %v5234
        %v5795 = vunpack.c.l.b16 %v5235
        %v5796 = vunpack.c.l.b16 %v5236
        %v5797 = vunpack.c.l.b16 %v5237
        %v5798 = vunpack.c.l.b16 %v5238
        %v5799 = vunpack.c.l.b16 %v5239
        %v5800 = vunpack.c.l.b16 %v5240
        %v5801 = vpack.c.b16 %v5786, %v5785
        %v5802 = vpack.c.b16 %v5788, %v5787
        %v5803 = vpack.c.b16 %v5790, %v5789
        %v5804 = vpack.c.b16 %v5792, %v5791
        %v5805 = vpack.c.b16 %v5794, %v5793
        %v5806 = vpack.c.b16 %v5796, %v5795
        %v5807 = vpack.c.b16 %v5798, %v5797
        %v5808 = vpack.c.b16 %v5800, %v5799
        %5817 = vmatprep.subr.bf16.mxu0 0
        %5818 = vmatpush1.bf16.msra.mxu0 %v5808
        %5819 = vmatprep.subr.bf16.mxu0 0
        %5820 = vmatpush1.bf16.msra.mxu0 %v5807
        %5821 = vmatprep.subr.bf16.mxu0 0
        %5822 = vmatpush1.bf16.msra.mxu0 %v5806
        %5823 = vmatprep.subr.bf16.mxu0 0
        %5824 = vmatpush1.bf16.msra.mxu0 %v5805
        %5825 = vmatprep.subr.bf16.mxu0 0
        %5826 = vmatpush1.bf16.msra.mxu0 %v5804
        %5827 = vmatprep.subr.bf16.mxu0 0
        %5828 = vmatpush1.bf16.msra.mxu0 %v5803
        %5829 = vmatprep.subr.bf16.mxu0 0
        %5830 = vmatpush1.bf16.msra.mxu0 %v5802
        %5831 = vmatprep.subr.bf16.mxu0 0
        %5832 = vmatpush1.bf16.msra.mxu0 %v5801
        %5833 = vmatprep.subr.bf16.mxu0 0
        %5834 = vmatpush2.bf16.msra.mxu0 0
        %5835 = vmatprep.subr.bf16.mxu0 0
        %5836 = vmatpush2.bf16.msra.mxu0 0
        %5837 = vmatprep.subr.bf16.mxu0 0
        %5838 = vmatpush2.bf16.msra.mxu0 0
        %5839 = vmatprep.subr.bf16.mxu0 0
        %5840 = vmatpush2.bf16.msra.mxu0 0
        %5841 = vmatprep.subr.bf16.mxu0 0
        %5842 = vmatpush2.bf16.msra.mxu0 0
        %5843 = vmatprep.subr.bf16.mxu0 0
        %5844 = vmatpush2.bf16.msra.mxu0 0
        %5845 = vmatprep.subr.bf16.mxu0 0
        %5846 = vmatpush2.bf16.msra.mxu0 0
        %5847 = vmatprep.subr.bf16.mxu0 0
        %5848 = vmatpush2.bf16.msra.mxu0 0
        %5849 = vmatprep.mubr.bf16.mxu0 0
        %5850 = vmatmul.mubr.bf16.gmra.mxu0 %v5144
        %v5851 = vpop.f32.mrf.mxu0
        %v5852 = vadd.f32 %v5312, %v5851
        %v5853 = vpop.f32.mrf.mxu0
        %v5854 = vpop.f32.mrf.mxu0
        %v5855 = vpop.f32.mrf.mxu0
        %5856 = vdwg.mxu0
        %v5873 = vunpack.c.l.b16 %v5241
        %v5874 = vunpack.c.l.b16 %v5242
        %v5875 = vunpack.c.l.b16 %v5243
        %v5876 = vunpack.c.l.b16 %v5244
        %v5877 = vunpack.c.l.b16 %v5245
        %v5878 = vunpack.c.l.b16 %v5246
        %v5879 = vunpack.c.l.b16 %v5247
        %v5880 = vunpack.c.l.b16 %v5248
        %v5881 = vunpack.c.l.b16 %v5249
        %v5882 = vunpack.c.l.b16 %v5250
        %v5883 = vunpack.c.l.b16 %v5251
        %v5884 = vunpack.c.l.b16 %v5252
        %v5885 = vunpack.c.l.b16 %v5253
        %v5886 = vunpack.c.l.b16 %v5254
        %v5887 = vunpack.c.l.b16 %v5255
        %v5888 = vunpack.c.l.b16 %v5256
        %v5889 = vpack.c.b16 %v5874, %v5873
        %v5890 = vpack.c.b16 %v5876, %v5875
        %v5891 = vpack.c.b16 %v5878, %v5877
        %v5892 = vpack.c.b16 %v5880, %v5879
        %v5893 = vpack.c.b16 %v5882, %v5881
        %v5894 = vpack.c.b16 %v5884, %v5883
        %v5895 = vpack.c.b16 %v5886, %v5885
        %v5896 = vpack.c.b16 %v5888, %v5887
        %5905 = vmatprep.subr.bf16.mxu0 0
        %5906 = vmatpush1.bf16.msra.mxu0 %v5896
        %5907 = vmatprep.subr.bf16.mxu0 0
        %5908 = vmatpush1.bf16.msra.mxu0 %v5895
        %5909 = vmatprep.subr.bf16.mxu0 0
        %5910 = vmatpush1.bf16.msra.mxu0 %v5894
        %5911 = vmatprep.subr.bf16.mxu0 0
        %5912 = vmatpush1.bf16.msra.mxu0 %v5893
        %5913 = vmatprep.subr.bf16.mxu0 0
        %5914 = vmatpush1.bf16.msra.mxu0 %v5892
        %5915 = vmatprep.subr.bf16.mxu0 0
        %5916 = vmatpush1.bf16.msra.mxu0 %v5891
        %5917 = vmatprep.subr.bf16.mxu0 0
        %5918 = vmatpush1.bf16.msra.mxu0 %v5890
        %5919 = vmatprep.subr.bf16.mxu0 0
        %5920 = vmatpush1.bf16.msra.mxu0 %v5889
        %5921 = vmatprep.subr.bf16.mxu0 0
        %5922 = vmatpush2.bf16.msra.mxu0 0
        %5923 = vmatprep.subr.bf16.mxu0 0
        %5924 = vmatpush2.bf16.msra.mxu0 0
        %5925 = vmatprep.subr.bf16.mxu0 0
        %5926 = vmatpush2.bf16.msra.mxu0 0
        %5927 = vmatprep.subr.bf16.mxu0 0
        %5928 = vmatpush2.bf16.msra.mxu0 0
        %5929 = vmatprep.subr.bf16.mxu0 0
        %5930 = vmatpush2.bf16.msra.mxu0 0
        %5931 = vmatprep.subr.bf16.mxu0 0
        %5932 = vmatpush2.bf16.msra.mxu0 0
        %5933 = vmatprep.subr.bf16.mxu0 0
        %5934 = vmatpush2.bf16.msra.mxu0 0
        %5935 = vmatprep.subr.bf16.mxu0 0
        %5936 = vmatpush2.bf16.msra.mxu0 0
        %5937 = vmatprep.mubr.bf16.mxu0 0
        %5938 = vmatmul.mubr.bf16.gmra.mxu0 %v5144
        %v5939 = vpop.f32.mrf.mxu0
        %v5940 = vadd.f32 %v5316, %v5939
        %v5941 = vpop.f32.mrf.mxu0
        %v5942 = vpop.f32.mrf.mxu0
        %v5943 = vpop.f32.mrf.mxu0
        %5944 = vdwg.mxu0
        %v5961 = vunpack.c.l.b16 %v5257
        %v5962 = vunpack.c.l.b16 %v5258
        %v5963 = vunpack.c.l.b16 %v5259
        %v5964 = vunpack.c.l.b16 %v5260
        %v5965 = vunpack.c.l.b16 %v5261
        %v5966 = vunpack.c.l.b16 %v5262
        %v5967 = vunpack.c.l.b16 %v5263
        %v5968 = vunpack.c.l.b16 %v5264
        %v5969 = vunpack.c.l.b16 %v5265
        %v5970 = vunpack.c.l.b16 %v5266
        %v5971 = vunpack.c.l.b16 %v5267
        %v5972 = vunpack.c.l.b16 %v5268
        %v5973 = vunpack.c.l.b16 %v5269
        %v5974 = vunpack.c.l.b16 %v5270
        %v5975 = vunpack.c.l.b16 %v5271
        %v5976 = vunpack.c.l.b16 %v5272
        %v5977 = vpack.c.b16 %v5962, %v5961
        %v5978 = vpack.c.b16 %v5964, %v5963
        %v5979 = vpack.c.b16 %v5966, %v5965
        %v5980 = vpack.c.b16 %v5968, %v5967
        %v5981 = vpack.c.b16 %v5970, %v5969
        %v5982 = vpack.c.b16 %v5972, %v5971
        %v5983 = vpack.c.b16 %v5974, %v5973
        %v5984 = vpack.c.b16 %v5976, %v5975
        %5993 = vmatprep.subr.bf16.mxu0 0
        %5994 = vmatpush1.bf16.msra.mxu0 %v5984
        %5995 = vmatprep.subr.bf16.mxu0 0
        %5996 = vmatpush1.bf16.msra.mxu0 %v5983
        %5997 = vmatprep.subr.bf16.mxu0 0
        %5998 = vmatpush1.bf16.msra.mxu0 %v5982
        %5999 = vmatprep.subr.bf16.mxu0 0
        %6000 = vmatpush1.bf16.msra.mxu0 %v5981
        %6001 = vmatprep.subr.bf16.mxu0 0
        %6002 = vmatpush1.bf16.msra.mxu0 %v5980
        %6003 = vmatprep.subr.bf16.mxu0 0
        %6004 = vmatpush1.bf16.msra.mxu0 %v5979
        %6005 = vmatprep.subr.bf16.mxu0 0
        %6006 = vmatpush1.bf16.msra.mxu0 %v5978
        %6007 = vmatprep.subr.bf16.mxu0 0
        %6008 = vmatpush1.bf16.msra.mxu0 %v5977
        %6009 = vmatprep.subr.bf16.mxu0 0
        %6010 = vmatpush2.bf16.msra.mxu0 0
        %6011 = vmatprep.subr.bf16.mxu0 0
        %6012 = vmatpush2.bf16.msra.mxu0 0
        %6013 = vmatprep.subr.bf16.mxu0 0
        %6014 = vmatpush2.bf16.msra.mxu0 0
        %6015 = vmatprep.subr.bf16.mxu0 0
        %6016 = vmatpush2.bf16.msra.mxu0 0
        %6017 = vmatprep.subr.bf16.mxu0 0
        %6018 = vmatpush2.bf16.msra.mxu0 0
        %6019 = vmatprep.subr.bf16.mxu0 0
        %6020 = vmatpush2.bf16.msra.mxu0 0
        %6021 = vmatprep.subr.bf16.mxu0 0
        %6022 = vmatpush2.bf16.msra.mxu0 0
        %6023 = vmatprep.subr.bf16.mxu0 0
        %6024 = vmatpush2.bf16.msra.mxu0 0
        %6025 = vmatprep.mubr.bf16.mxu0 0
        %6026 = vmatmul.mubr.bf16.gmra.mxu0 %v5144
        %v6027 = vpop.f32.mrf.mxu0
        %v6028 = vadd.f32 %v5320, %v6027
        %v6029 = vpop.f32.mrf.mxu0
        %v6030 = vpop.f32.mrf.mxu0
        %v6031 = vpop.f32.mrf.mxu0
        %6032 = vdwg.mxu0
        %v6033 = vld [vmem:[%s15] sm:$0xf]
        %v6034 = vld [vmem:[%s15 + $0x4] sm:$0xf]
        %v6035 = vld [vmem:[%s15 + $0x8] sm:$0xf]
        %v6036 = vld [vmem:[%s15 + $0xc] sm:$0xf]
        %v6037 = vld [vmem:[%s15 + $0x10] sm:$0xf]
        %v6038 = vld [vmem:[%s15 + $0x14] sm:$0xf]
        %v6039 = vld [vmem:[%s15 + $0x18] sm:$0xf]
        %v6040 = vld [vmem:[%s15 + $0x1c] sm:$0xf]
        %v6041 = vld [vmem:[%s15 + $0x20] sm:$0xf]
        %v6042 = vld [vmem:[%s15 + $0x24] sm:$0xf]
        %v6043 = vld [vmem:[%s15 + $0x28] sm:$0xf]
        %v6044 = vld [vmem:[%s15 + $0x2c] sm:$0xf]
        %v6045 = vld [vmem:[%s15 + $0x30] sm:$0xf]
        %v6046 = vld [vmem:[%s15 + $0x34] sm:$0xf]
        %v6047 = vld [vmem:[%s15 + $0x38] sm:$0xf]
        %v6048 = vld [vmem:[%s15 + $0x3c] sm:$0xf]
        %v6049 = vld [vmem:[%s15 + $0x40] sm:$0xf]
        %v6050 = vld [vmem:[%s15 + $0x44] sm:$0xf]
        %v6051 = vld [vmem:[%s15 + $0x48] sm:$0xf]
        %v6052 = vld [vmem:[%s15 + $0x4c] sm:$0xf]
        %v6053 = vld [vmem:[%s15 + $0x50] sm:$0xf]
        %v6054 = vld [vmem:[%s15 + $0x54] sm:$0xf]
        %v6055 = vld [vmem:[%s15 + $0x58] sm:$0xf]
        %v6056 = vld [vmem:[%s15 + $0x5c] sm:$0xf]
        %v6057 = vld [vmem:[%s15 + $0x60] sm:$0xf]
        %v6058 = vld [vmem:[%s15 + $0x64] sm:$0xf]
        %v6059 = vld [vmem:[%s15 + $0x68] sm:$0xf]
        %v6060 = vld [vmem:[%s15 + $0x6c] sm:$0xf]
        %v6061 = vld [vmem:[%s15 + $0x70] sm:$0xf]
        %v6062 = vld [vmem:[%s15 + $0x74] sm:$0xf]
        %v6063 = vld [vmem:[%s15 + $0x78] sm:$0xf]
        %v6064 = vld [vmem:[%s15 + $0x7c] sm:$0xf]
        %v6065 = vld [vmem:[%s15 + $0x80] sm:$0xf]
        %v6066 = vld [vmem:[%s15 + $0x84] sm:$0xf]
        %v6067 = vld [vmem:[%s15 + $0x88] sm:$0xf]
        %v6068 = vld [vmem:[%s15 + $0x8c] sm:$0xf]
        %v6069 = vld [vmem:[%s15 + $0x90] sm:$0xf]
        %v6070 = vld [vmem:[%s15 + $0x94] sm:$0xf]
        %v6071 = vld [vmem:[%s15 + $0x98] sm:$0xf]
        %v6072 = vld [vmem:[%s15 + $0x9c] sm:$0xf]
        %v6073 = vld [vmem:[%s15 + $0xa0] sm:$0xf]
        %v6074 = vld [vmem:[%s15 + $0xa4] sm:$0xf]
        %v6075 = vld [vmem:[%s15 + $0xa8] sm:$0xf]
        %v6076 = vld [vmem:[%s15 + $0xac] sm:$0xf]
        %v6077 = vld [vmem:[%s15 + $0xb0] sm:$0xf]
        %v6078 = vld [vmem:[%s15 + $0xb4] sm:$0xf]
        %v6079 = vld [vmem:[%s15 + $0xb8] sm:$0xf]
        %v6080 = vld [vmem:[%s15 + $0xbc] sm:$0xf]
        %v6081 = vld [vmem:[%s15 + $0xc0] sm:$0xf]
        %v6082 = vld [vmem:[%s15 + $0xc4] sm:$0xf]
        %v6083 = vld [vmem:[%s15 + $0xc8] sm:$0xf]
        %v6084 = vld [vmem:[%s15 + $0xcc] sm:$0xf]
        %v6085 = vld [vmem:[%s15 + $0xd0] sm:$0xf]
        %v6086 = vld [vmem:[%s15 + $0xd4] sm:$0xf]
        %v6087 = vld [vmem:[%s15 + $0xd8] sm:$0xf]
        %v6088 = vld [vmem:[%s15 + $0xdc] sm:$0xf]
        %v6089 = vld [vmem:[%s15 + $0xe0] sm:$0xf]
        %v6090 = vld [vmem:[%s15 + $0xe4] sm:$0xf]
        %v6091 = vld [vmem:[%s15 + $0xe8] sm:$0xf]
        %v6092 = vld [vmem:[%s15 + $0xec] sm:$0xf]
        %v6093 = vld [vmem:[%s15 + $0xf0] sm:$0xf]
        %v6094 = vld [vmem:[%s15 + $0xf4] sm:$0xf]
        %v6095 = vld [vmem:[%s15 + $0xf8] sm:$0xf]
        %v6096 = vld [vmem:[%s15 + $0xfc] sm:$0xf]
        %v6097 = vld [vmem:[%s15 + $0x100] sm:$0xf]
        %v6098 = vld [vmem:[%s15 + $0x104] sm:$0xf]
        %v6099 = vld [vmem:[%s15 + $0x108] sm:$0xf]
        %v6100 = vld [vmem:[%s15 + $0x10c] sm:$0xf]
        %v6101 = vld [vmem:[%s15 + $0x110] sm:$0xf]
        %v6102 = vld [vmem:[%s15 + $0x114] sm:$0xf]
        %v6103 = vld [vmem:[%s15 + $0x118] sm:$0xf]
        %v6104 = vld [vmem:[%s15 + $0x11c] sm:$0xf]
        %v6105 = vld [vmem:[%s15 + $0x120] sm:$0xf]
        %v6106 = vld [vmem:[%s15 + $0x124] sm:$0xf]
        %v6107 = vld [vmem:[%s15 + $0x128] sm:$0xf]
        %v6108 = vld [vmem:[%s15 + $0x12c] sm:$0xf]
        %v6109 = vld [vmem:[%s15 + $0x130] sm:$0xf]
        %v6110 = vld [vmem:[%s15 + $0x134] sm:$0xf]
        %v6111 = vld [vmem:[%s15 + $0x138] sm:$0xf]
        %v6112 = vld [vmem:[%s15 + $0x13c] sm:$0xf]
        %v6113 = vld [vmem:[%s15 + $0x140] sm:$0xf]
        %v6114 = vld [vmem:[%s15 + $0x144] sm:$0xf]
        %v6115 = vld [vmem:[%s15 + $0x148] sm:$0xf]
        %v6116 = vld [vmem:[%s15 + $0x14c] sm:$0xf]
        %v6117 = vld [vmem:[%s15 + $0x150] sm:$0xf]
        %v6118 = vld [vmem:[%s15 + $0x154] sm:$0xf]
        %v6119 = vld [vmem:[%s15 + $0x158] sm:$0xf]
        %v6120 = vld [vmem:[%s15 + $0x15c] sm:$0xf]
        %v6121 = vld [vmem:[%s15 + $0x160] sm:$0xf]
        %v6122 = vld [vmem:[%s15 + $0x164] sm:$0xf]
        %v6123 = vld [vmem:[%s15 + $0x168] sm:$0xf]
        %v6124 = vld [vmem:[%s15 + $0x16c] sm:$0xf]
        %v6125 = vld [vmem:[%s15 + $0x170] sm:$0xf]
        %v6126 = vld [vmem:[%s15 + $0x174] sm:$0xf]
        %v6127 = vld [vmem:[%s15 + $0x178] sm:$0xf]
        %v6128 = vld [vmem:[%s15 + $0x17c] sm:$0xf]
        %v6129 = vld [vmem:[%s15 + $0x180] sm:$0xf]
        %v6130 = vld [vmem:[%s15 + $0x184] sm:$0xf]
        %v6131 = vld [vmem:[%s15 + $0x188] sm:$0xf]
        %v6132 = vld [vmem:[%s15 + $0x18c] sm:$0xf]
        %v6133 = vld [vmem:[%s15 + $0x190] sm:$0xf]
        %v6134 = vld [vmem:[%s15 + $0x194] sm:$0xf]
        %v6135 = vld [vmem:[%s15 + $0x198] sm:$0xf]
        %v6136 = vld [vmem:[%s15 + $0x19c] sm:$0xf]
        %v6137 = vld [vmem:[%s15 + $0x1a0] sm:$0xf]
        %v6138 = vld [vmem:[%s15 + $0x1a4] sm:$0xf]
        %v6139 = vld [vmem:[%s15 + $0x1a8] sm:$0xf]
        %v6140 = vld [vmem:[%s15 + $0x1ac] sm:$0xf]
        %v6141 = vld [vmem:[%s15 + $0x1b0] sm:$0xf]
        %v6142 = vld [vmem:[%s15 + $0x1b4] sm:$0xf]
        %v6143 = vld [vmem:[%s15 + $0x1b8] sm:$0xf]
        %v6144 = vld [vmem:[%s15 + $0x1bc] sm:$0xf]
        %v6145 = vld [vmem:[%s15 + $0x1c0] sm:$0xf]
        %v6146 = vld [vmem:[%s15 + $0x1c4] sm:$0xf]
        %v6147 = vld [vmem:[%s15 + $0x1c8] sm:$0xf]
        %v6148 = vld [vmem:[%s15 + $0x1cc] sm:$0xf]
        %v6149 = vld [vmem:[%s15 + $0x1d0] sm:$0xf]
        %v6150 = vld [vmem:[%s15 + $0x1d4] sm:$0xf]
        %v6151 = vld [vmem:[%s15 + $0x1d8] sm:$0xf]
        %v6152 = vld [vmem:[%s15 + $0x1dc] sm:$0xf]
        %v6153 = vld [vmem:[%s15 + $0x1e0] sm:$0xf]
        %v6154 = vld [vmem:[%s15 + $0x1e4] sm:$0xf]
        %v6155 = vld [vmem:[%s15 + $0x1e8] sm:$0xf]
        %v6156 = vld [vmem:[%s15 + $0x1ec] sm:$0xf]
        %v6157 = vld [vmem:[%s15 + $0x1f0] sm:$0xf]
        %v6158 = vld [vmem:[%s15 + $0x1f4] sm:$0xf]
        %v6159 = vld [vmem:[%s15 + $0x1f8] sm:$0xf]
        %v6160 = vld [vmem:[%s15 + $0x1fc] sm:$0xf]
        %v6161 = vld [vmem:[%s16] sm:$0x1]
        %v6162 = vld [vmem:[%s16 + $0x1] sm:$0x1]
        %v6163 = vld [vmem:[%s16 + $0x2] sm:$0x1]
        %v6164 = vld [vmem:[%s16 + $0x3] sm:$0x1]
        %v6165 = vld [vmem:[%s16 + $0x4] sm:$0x1]
        %v6166 = vld [vmem:[%s16 + $0x5] sm:$0x1]
        %v6167 = vld [vmem:[%s16 + $0x6] sm:$0x1]
        %v6168 = vld [vmem:[%s16 + $0x7] sm:$0x1]
        %v6177 = vlaneseq
        %v6178 = vshrl.u32 %v6177, 7
        %v6179 = vsub.s32 0, %v6178
        %v6180 = vrot.slane %v6161, %v6179
        %v6181 = vlaneseq
        %v6182 = vshrl.u32 %v6181, 7
        %v6183 = vsub.s32 0, %v6182
        %v6184 = vrot.slane %v6162, %v6183
        %v6185 = vlaneseq
        %v6186 = vshrl.u32 %v6185, 7
        %v6187 = vsub.s32 0, %v6186
        %v6188 = vrot.slane %v6163, %v6187
        %v6189 = vlaneseq
        %v6190 = vshrl.u32 %v6189, 7
        %v6191 = vsub.s32 0, %v6190
        %v6192 = vrot.slane %v6164, %v6191
        %v6193 = vlaneseq
        %v6194 = vshrl.u32 %v6193, 7
        %v6195 = vsub.s32 0, %v6194
        %v6196 = vrot.slane %v6165, %v6195
        %v6197 = vlaneseq
        %v6198 = vshrl.u32 %v6197, 7
        %v6199 = vsub.s32 0, %v6198
        %v6200 = vrot.slane %v6166, %v6199
        %v6201 = vlaneseq
        %v6202 = vshrl.u32 %v6201, 7
        %v6203 = vsub.s32 0, %v6202
        %v6204 = vrot.slane %v6167, %v6203
        %v6205 = vlaneseq
        %v6206 = vshrl.u32 %v6205, 7
        %v6207 = vsub.s32 0, %v6206
        %v6208 = vrot.slane %v6168, %v6207
        %v6233 = vunpack.c.l.b16 %v6033
        %v6234 = vunpack.c.l.b16 %v6034
        %v6235 = vunpack.c.l.b16 %v6035
        %v6236 = vunpack.c.l.b16 %v6036
        %v6237 = vunpack.c.l.b16 %v6037
        %v6238 = vunpack.c.l.b16 %v6038
        %v6239 = vunpack.c.l.b16 %v6039
        %v6240 = vunpack.c.l.b16 %v6040
        %v6241 = vunpack.c.l.b16 %v6041
        %v6242 = vunpack.c.l.b16 %v6042
        %v6243 = vunpack.c.l.b16 %v6043
        %v6244 = vunpack.c.l.b16 %v6044
        %v6245 = vunpack.c.l.b16 %v6045
        %v6246 = vunpack.c.l.b16 %v6046
        %v6247 = vunpack.c.l.b16 %v6047
        %v6248 = vunpack.c.l.b16 %v6048
        %v6249 = vpack.c.b16 %v6234, %v6233
        %v6250 = vpack.c.b16 %v6236, %v6235
        %v6251 = vpack.c.b16 %v6238, %v6237
        %v6252 = vpack.c.b16 %v6240, %v6239
        %v6253 = vpack.c.b16 %v6242, %v6241
        %v6254 = vpack.c.b16 %v6244, %v6243
        %v6255 = vpack.c.b16 %v6246, %v6245
        %v6256 = vpack.c.b16 %v6248, %v6247
        %6265 = vmatprep.subr.bf16.mxu0 0
        %6266 = vmatpush1.bf16.msra.mxu0 %v6256
        %6267 = vmatprep.subr.bf16.mxu0 0
        %6268 = vmatpush1.bf16.msra.mxu0 %v6255
        %6269 = vmatprep.subr.bf16.mxu0 0
        %6270 = vmatpush1.bf16.msra.mxu0 %v6254
        %6271 = vmatprep.subr.bf16.mxu0 0
        %6272 = vmatpush1.bf16.msra.mxu0 %v6253
        %6273 = vmatprep.subr.bf16.mxu0 0
        %6274 = vmatpush1.bf16.msra.mxu0 %v6252
        %6275 = vmatprep.subr.bf16.mxu0 0
        %6276 = vmatpush1.bf16.msra.mxu0 %v6251
        %6277 = vmatprep.subr.bf16.mxu0 0
        %6278 = vmatpush1.bf16.msra.mxu0 %v6250
        %6279 = vmatprep.subr.bf16.mxu0 0
        %6280 = vmatpush1.bf16.msra.mxu0 %v6249
        %6281 = vmatprep.subr.bf16.mxu0 0
        %6282 = vmatpush2.bf16.msra.mxu0 0
        %6283 = vmatprep.subr.bf16.mxu0 0
        %6284 = vmatpush2.bf16.msra.mxu0 0
        %6285 = vmatprep.subr.bf16.mxu0 0
        %6286 = vmatpush2.bf16.msra.mxu0 0
        %6287 = vmatprep.subr.bf16.mxu0 0
        %6288 = vmatpush2.bf16.msra.mxu0 0
        %6289 = vmatprep.subr.bf16.mxu0 0
        %6290 = vmatpush2.bf16.msra.mxu0 0
        %6291 = vmatprep.subr.bf16.mxu0 0
        %6292 = vmatpush2.bf16.msra.mxu0 0
        %6293 = vmatprep.subr.bf16.mxu0 0
        %6294 = vmatpush2.bf16.msra.mxu0 0
        %6295 = vmatprep.subr.bf16.mxu0 0
        %6296 = vmatpush2.bf16.msra.mxu0 0
        %6297 = vmatprep.mubr.bf16.mxu0 0
        %6298 = vmatmul.mubr.bf16.gmra.mxu0 %v5144
        %v6299 = vpop.f32.mrf.mxu0
        %v6300 = vadd.f32 %v6180, %v6299
        %v6301 = vpop.f32.mrf.mxu0
        %v6302 = vpop.f32.mrf.mxu0
        %v6303 = vpop.f32.mrf.mxu0
        %6304 = vdwg.mxu0
        %v6321 = vunpack.c.l.b16 %v6049
        %v6322 = vunpack.c.l.b16 %v6050
        %v6323 = vunpack.c.l.b16 %v6051
        %v6324 = vunpack.c.l.b16 %v6052
        %v6325 = vunpack.c.l.b16 %v6053
        %v6326 = vunpack.c.l.b16 %v6054
        %v6327 = vunpack.c.l.b16 %v6055
        %v6328 = vunpack.c.l.b16 %v6056
        %v6329 = vunpack.c.l.b16 %v6057
        %v6330 = vunpack.c.l.b16 %v6058
        %v6331 = vunpack.c.l.b16 %v6059
        %v6332 = vunpack.c.l.b16 %v6060
        %v6333 = vunpack.c.l.b16 %v6061
        %v6334 = vunpack.c.l.b16 %v6062
        %v6335 = vunpack.c.l.b16 %v6063
        %v6336 = vunpack.c.l.b16 %v6064
        %v6337 = vpack.c.b16 %v6322, %v6321
        %v6338 = vpack.c.b16 %v6324, %v6323
        %v6339 = vpack.c.b16 %v6326, %v6325
        %v6340 = vpack.c.b16 %v6328, %v6327
        %v6341 = vpack.c.b16 %v6330, %v6329
        %v6342 = vpack.c.b16 %v6332, %v6331
        %v6343 = vpack.c.b16 %v6334, %v6333
        %v6344 = vpack.c.b16 %v6336, %v6335
        %6353 = vmatprep.subr.bf16.mxu0 0
        %6354 = vmatpush1.bf16.msra.mxu0 %v6344
        %6355 = vmatprep.subr.bf16.mxu0 0
        %6356 = vmatpush1.bf16.msra.mxu0 %v6343
        %6357 = vmatprep.subr.bf16.mxu0 0
        %6358 = vmatpush1.bf16.msra.mxu0 %v6342
        %6359 = vmatprep.subr.bf16.mxu0 0
        %6360 = vmatpush1.bf16.msra.mxu0 %v6341
        %6361 = vmatprep.subr.bf16.mxu0 0
        %6362 = vmatpush1.bf16.msra.mxu0 %v6340
        %6363 = vmatprep.subr.bf16.mxu0 0
        %6364 = vmatpush1.bf16.msra.mxu0 %v6339
        %6365 = vmatprep.subr.bf16.mxu0 0
        %6366 = vmatpush1.bf16.msra.mxu0 %v6338
        %6367 = vmatprep.subr.bf16.mxu0 0
        %6368 = vmatpush1.bf16.msra.mxu0 %v6337
        %6369 = vmatprep.subr.bf16.mxu0 0
        %6370 = vmatpush2.bf16.msra.mxu0 0
        %6371 = vmatprep.subr.bf16.mxu0 0
        %6372 = vmatpush2.bf16.msra.mxu0 0
        %6373 = vmatprep.subr.bf16.mxu0 0
        %6374 = vmatpush2.bf16.msra.mxu0 0
        %6375 = vmatprep.subr.bf16.mxu0 0
        %6376 = vmatpush2.bf16.msra.mxu0 0
        %6377 = vmatprep.subr.bf16.mxu0 0
        %6378 = vmatpush2.bf16.msra.mxu0 0
        %6379 = vmatprep.subr.bf16.mxu0 0
        %6380 = vmatpush2.bf16.msra.mxu0 0
        %6381 = vmatprep.subr.bf16.mxu0 0
        %6382 = vmatpush2.bf16.msra.mxu0 0
        %6383 = vmatprep.subr.bf16.mxu0 0
        %6384 = vmatpush2.bf16.msra.mxu0 0
        %6385 = vmatprep.mubr.bf16.mxu0 0
        %6386 = vmatmul.mubr.bf16.gmra.mxu0 %v5144
        %v6387 = vpop.f32.mrf.mxu0
        %v6388 = vadd.f32 %v6184, %v6387
        %v6389 = vpop.f32.mrf.mxu0
        %v6390 = vpop.f32.mrf.mxu0
        %v6391 = vpop.f32.mrf.mxu0
        %6392 = vdwg.mxu0
        %v6409 = vunpack.c.l.b16 %v6065
        %v6410 = vunpack.c.l.b16 %v6066
        %v6411 = vunpack.c.l.b16 %v6067
        %v6412 = vunpack.c.l.b16 %v6068
        %v6413 = vunpack.c.l.b16 %v6069
        %v6414 = vunpack.c.l.b16 %v6070
        %v6415 = vunpack.c.l.b16 %v6071
        %v6416 = vunpack.c.l.b16 %v6072
        %v6417 = vunpack.c.l.b16 %v6073
        %v6418 = vunpack.c.l.b16 %v6074
        %v6419 = vunpack.c.l.b16 %v6075
        %v6420 = vunpack.c.l.b16 %v6076
        %v6421 = vunpack.c.l.b16 %v6077
        %v6422 = vunpack.c.l.b16 %v6078
        %v6423 = vunpack.c.l.b16 %v6079
        %v6424 = vunpack.c.l.b16 %v6080
        %v6425 = vpack.c.b16 %v6410, %v6409
        %v6426 = vpack.c.b16 %v6412, %v6411
        %v6427 = vpack.c.b16 %v6414, %v6413
        %v6428 = vpack.c.b16 %v6416, %v6415
        %v6429 = vpack.c.b16 %v6418, %v6417
        %v6430 = vpack.c.b16 %v6420, %v6419
        %v6431 = vpack.c.b16 %v6422, %v6421
        %v6432 = vpack.c.b16 %v6424, %v6423
        %6441 = vmatprep.subr.bf16.mxu0 0
        %6442 = vmatpush1.bf16.msra.mxu0 %v6432
        %6443 = vmatprep.subr.bf16.mxu0 0
        %6444 = vmatpush1.bf16.msra.mxu0 %v6431
        %6445 = vmatprep.subr.bf16.mxu0 0
        %6446 = vmatpush1.bf16.msra.mxu0 %v6430
        %6447 = vmatprep.subr.bf16.mxu0 0
        %6448 = vmatpush1.bf16.msra.mxu0 %v6429
        %6449 = vmatprep.subr.bf16.mxu0 0
        %6450 = vmatpush1.bf16.msra.mxu0 %v6428
        %6451 = vmatprep.subr.bf16.mxu0 0
        %6452 = vmatpush1.bf16.msra.mxu0 %v6427
        %6453 = vmatprep.subr.bf16.mxu0 0
        %6454 = vmatpush1.bf16.msra.mxu0 %v6426
        %6455 = vmatprep.subr.bf16.mxu0 0
        %6456 = vmatpush1.bf16.msra.mxu0 %v6425
        %6457 = vmatprep.subr.bf16.mxu0 0
        %6458 = vmatpush2.bf16.msra.mxu0 0
        %6459 = vmatprep.subr.bf16.mxu0 0
        %6460 = vmatpush2.bf16.msra.mxu0 0
        %6461 = vmatprep.subr.bf16.mxu0 0
        %6462 = vmatpush2.bf16.msra.mxu0 0
        %6463 = vmatprep.subr.bf16.mxu0 0
        %6464 = vmatpush2.bf16.msra.mxu0 0
        %6465 = vmatprep.subr.bf16.mxu0 0
        %6466 = vmatpush2.bf16.msra.mxu0 0
        %6467 = vmatprep.subr.bf16.mxu0 0
        %6468 = vmatpush2.bf16.msra.mxu0 0
        %6469 = vmatprep.subr.bf16.mxu0 0
        %6470 = vmatpush2.bf16.msra.mxu0 0
        %6471 = vmatprep.subr.bf16.mxu0 0
        %6472 = vmatpush2.bf16.msra.mxu0 0
        %6473 = vmatprep.mubr.bf16.mxu0 0
        %6474 = vmatmul.mubr.bf16.gmra.mxu0 %v5144
        %v6475 = vpop.f32.mrf.mxu0
        %v6476 = vadd.f32 %v6188, %v6475
        %v6477 = vpop.f32.mrf.mxu0
        %v6478 = vpop.f32.mrf.mxu0
        %v6479 = vpop.f32.mrf.mxu0
        %6480 = vdwg.mxu0
        %v6497 = vunpack.c.l.b16 %v6081
        %v6498 = vunpack.c.l.b16 %v6082
        %v6499 = vunpack.c.l.b16 %v6083
        %v6500 = vunpack.c.l.b16 %v6084
        %v6501 = vunpack.c.l.b16 %v6085
        %v6502 = vunpack.c.l.b16 %v6086
        %v6503 = vunpack.c.l.b16 %v6087
        %v6504 = vunpack.c.l.b16 %v6088
        %v6505 = vunpack.c.l.b16 %v6089
        %v6506 = vunpack.c.l.b16 %v6090
        %v6507 = vunpack.c.l.b16 %v6091
        %v6508 = vunpack.c.l.b16 %v6092
        %v6509 = vunpack.c.l.b16 %v6093
        %v6510 = vunpack.c.l.b16 %v6094
        %v6511 = vunpack.c.l.b16 %v6095
        %v6512 = vunpack.c.l.b16 %v6096
        %v6513 = vpack.c.b16 %v6498, %v6497
        %v6514 = vpack.c.b16 %v6500, %v6499
        %v6515 = vpack.c.b16 %v6502, %v6501
        %v6516 = vpack.c.b16 %v6504, %v6503
        %v6517 = vpack.c.b16 %v6506, %v6505
        %v6518 = vpack.c.b16 %v6508, %v6507
        %v6519 = vpack.c.b16 %v6510, %v6509
        %v6520 = vpack.c.b16 %v6512, %v6511
        %6529 = vmatprep.subr.bf16.mxu0 0
        %6530 = vmatpush1.bf16.msra.mxu0 %v6520
        %6531 = vmatprep.subr.bf16.mxu0 0
        %6532 = vmatpush1.bf16.msra.mxu0 %v6519
        %6533 = vmatprep.subr.bf16.mxu0 0
        %6534 = vmatpush1.bf16.msra.mxu0 %v6518
        %6535 = vmatprep.subr.bf16.mxu0 0
        %6536 = vmatpush1.bf16.msra.mxu0 %v6517
        %6537 = vmatprep.subr.bf16.mxu0 0
        %6538 = vmatpush1.bf16.msra.mxu0 %v6516
        %6539 = vmatprep.subr.bf16.mxu0 0
        %6540 = vmatpush1.bf16.msra.mxu0 %v6515
        %6541 = vmatprep.subr.bf16.mxu0 0
        %6542 = vmatpush1.bf16.msra.mxu0 %v6514
        %6543 = vmatprep.subr.bf16.mxu0 0
        %6544 = vmatpush1.bf16.msra.mxu0 %v6513
        %6545 = vmatprep.subr.bf16.mxu0 0
        %6546 = vmatpush2.bf16.msra.mxu0 0
        %6547 = vmatprep.subr.bf16.mxu0 0
        %6548 = vmatpush2.bf16.msra.mxu0 0
        %6549 = vmatprep.subr.bf16.mxu0 0
        %6550 = vmatpush2.bf16.msra.mxu0 0
        %6551 = vmatprep.subr.bf16.mxu0 0
        %6552 = vmatpush2.bf16.msra.mxu0 0
        %6553 = vmatprep.subr.bf16.mxu0 0
        %6554 = vmatpush2.bf16.msra.mxu0 0
        %6555 = vmatprep.subr.bf16.mxu0 0
        %6556 = vmatpush2.bf16.msra.mxu0 0
        %6557 = vmatprep.subr.bf16.mxu0 0
        %6558 = vmatpush2.bf16.msra.mxu0 0
        %6559 = vmatprep.subr.bf16.mxu0 0
        %6560 = vmatpush2.bf16.msra.mxu0 0
        %6561 = vmatprep.mubr.bf16.mxu0 0
        %6562 = vmatmul.mubr.bf16.gmra.mxu0 %v5144
        %v6563 = vpop.f32.mrf.mxu0
        %v6564 = vadd.f32 %v6192, %v6563
        %v6565 = vpop.f32.mrf.mxu0
        %v6566 = vpop.f32.mrf.mxu0
        %v6567 = vpop.f32.mrf.mxu0
        %6568 = vdwg.mxu0
        %v6585 = vunpack.c.l.b16 %v6097
        %v6586 = vunpack.c.l.b16 %v6098
        %v6587 = vunpack.c.l.b16 %v6099
        %v6588 = vunpack.c.l.b16 %v6100
        %v6589 = vunpack.c.l.b16 %v6101
        %v6590 = vunpack.c.l.b16 %v6102
        %v6591 = vunpack.c.l.b16 %v6103
        %v6592 = vunpack.c.l.b16 %v6104
        %v6593 = vunpack.c.l.b16 %v6105
        %v6594 = vunpack.c.l.b16 %v6106
        %v6595 = vunpack.c.l.b16 %v6107
        %v6596 = vunpack.c.l.b16 %v6108
        %v6597 = vunpack.c.l.b16 %v6109
        %v6598 = vunpack.c.l.b16 %v6110
        %v6599 = vunpack.c.l.b16 %v6111
        %v6600 = vunpack.c.l.b16 %v6112
        %v6601 = vpack.c.b16 %v6586, %v6585
        %v6602 = vpack.c.b16 %v6588, %v6587
        %v6603 = vpack.c.b16 %v6590, %v6589
        %v6604 = vpack.c.b16 %v6592, %v6591
        %v6605 = vpack.c.b16 %v6594, %v6593
        %v6606 = vpack.c.b16 %v6596, %v6595
        %v6607 = vpack.c.b16 %v6598, %v6597
        %v6608 = vpack.c.b16 %v6600, %v6599
        %6617 = vmatprep.subr.bf16.mxu0 0
        %6618 = vmatpush1.bf16.msra.mxu0 %v6608
        %6619 = vmatprep.subr.bf16.mxu0 0
        %6620 = vmatpush1.bf16.msra.mxu0 %v6607
        %6621 = vmatprep.subr.bf16.mxu0 0
        %6622 = vmatpush1.bf16.msra.mxu0 %v6606
        %6623 = vmatprep.subr.bf16.mxu0 0
        %6624 = vmatpush1.bf16.msra.mxu0 %v6605
        %6625 = vmatprep.subr.bf16.mxu0 0
        %6626 = vmatpush1.bf16.msra.mxu0 %v6604
        %6627 = vmatprep.subr.bf16.mxu0 0
        %6628 = vmatpush1.bf16.msra.mxu0 %v6603
        %6629 = vmatprep.subr.bf16.mxu0 0
        %6630 = vmatpush1.bf16.msra.mxu0 %v6602
        %6631 = vmatprep.subr.bf16.mxu0 0
        %6632 = vmatpush1.bf16.msra.mxu0 %v6601
        %6633 = vmatprep.subr.bf16.mxu0 0
        %6634 = vmatpush2.bf16.msra.mxu0 0
        %6635 = vmatprep.subr.bf16.mxu0 0
        %6636 = vmatpush2.bf16.msra.mxu0 0
        %6637 = vmatprep.subr.bf16.mxu0 0
        %6638 = vmatpush2.bf16.msra.mxu0 0
        %6639 = vmatprep.subr.bf16.mxu0 0
        %6640 = vmatpush2.bf16.msra.mxu0 0
        %6641 = vmatprep.subr.bf16.mxu0 0
        %6642 = vmatpush2.bf16.msra.mxu0 0
        %6643 = vmatprep.subr.bf16.mxu0 0
        %6644 = vmatpush2.bf16.msra.mxu0 0
        %6645 = vmatprep.subr.bf16.mxu0 0
        %6646 = vmatpush2.bf16.msra.mxu0 0
        %6647 = vmatprep.subr.bf16.mxu0 0
        %6648 = vmatpush2.bf16.msra.mxu0 0
        %6649 = vmatprep.mubr.bf16.mxu0 0
        %6650 = vmatmul.mubr.bf16.gmra.mxu0 %v5144
        %v6651 = vpop.f32.mrf.mxu0
        %v6652 = vadd.f32 %v6196, %v6651
        %v6653 = vpop.f32.mrf.mxu0
        %v6654 = vpop.f32.mrf.mxu0
        %v6655 = vpop.f32.mrf.mxu0
        %6656 = vdwg.mxu0
        %v6673 = vunpack.c.l.b16 %v6113
        %v6674 = vunpack.c.l.b16 %v6114
        %v6675 = vunpack.c.l.b16 %v6115
        %v6676 = vunpack.c.l.b16 %v6116
        %v6677 = vunpack.c.l.b16 %v6117
        %v6678 = vunpack.c.l.b16 %v6118
        %v6679 = vunpack.c.l.b16 %v6119
        %v6680 = vunpack.c.l.b16 %v6120
        %v6681 = vunpack.c.l.b16 %v6121
        %v6682 = vunpack.c.l.b16 %v6122
        %v6683 = vunpack.c.l.b16 %v6123
        %v6684 = vunpack.c.l.b16 %v6124
        %v6685 = vunpack.c.l.b16 %v6125
        %v6686 = vunpack.c.l.b16 %v6126
        %v6687 = vunpack.c.l.b16 %v6127
        %v6688 = vunpack.c.l.b16 %v6128
        %v6689 = vpack.c.b16 %v6674, %v6673
        %v6690 = vpack.c.b16 %v6676, %v6675
        %v6691 = vpack.c.b16 %v6678, %v6677
        %v6692 = vpack.c.b16 %v6680, %v6679
        %v6693 = vpack.c.b16 %v6682, %v6681
        %v6694 = vpack.c.b16 %v6684, %v6683
        %v6695 = vpack.c.b16 %v6686, %v6685
        %v6696 = vpack.c.b16 %v6688, %v6687
        %6705 = vmatprep.subr.bf16.mxu0 0
        %6706 = vmatpush1.bf16.msra.mxu0 %v6696
        %6707 = vmatprep.subr.bf16.mxu0 0
        %6708 = vmatpush1.bf16.msra.mxu0 %v6695
        %6709 = vmatprep.subr.bf16.mxu0 0
        %6710 = vmatpush1.bf16.msra.mxu0 %v6694
        %6711 = vmatprep.subr.bf16.mxu0 0
        %6712 = vmatpush1.bf16.msra.mxu0 %v6693
        %6713 = vmatprep.subr.bf16.mxu0 0
        %6714 = vmatpush1.bf16.msra.mxu0 %v6692
        %6715 = vmatprep.subr.bf16.mxu0 0
        %6716 = vmatpush1.bf16.msra.mxu0 %v6691
        %6717 = vmatprep.subr.bf16.mxu0 0
        %6718 = vmatpush1.bf16.msra.mxu0 %v6690
        %6719 = vmatprep.subr.bf16.mxu0 0
        %6720 = vmatpush1.bf16.msra.mxu0 %v6689
        %6721 = vmatprep.subr.bf16.mxu0 0
        %6722 = vmatpush2.bf16.msra.mxu0 0
        %6723 = vmatprep.subr.bf16.mxu0 0
        %6724 = vmatpush2.bf16.msra.mxu0 0
        %6725 = vmatprep.subr.bf16.mxu0 0
        %6726 = vmatpush2.bf16.msra.mxu0 0
        %6727 = vmatprep.subr.bf16.mxu0 0
        %6728 = vmatpush2.bf16.msra.mxu0 0
        %6729 = vmatprep.subr.bf16.mxu0 0
        %6730 = vmatpush2.bf16.msra.mxu0 0
        %6731 = vmatprep.subr.bf16.mxu0 0
        %6732 = vmatpush2.bf16.msra.mxu0 0
        %6733 = vmatprep.subr.bf16.mxu0 0
        %6734 = vmatpush2.bf16.msra.mxu0 0
        %6735 = vmatprep.subr.bf16.mxu0 0
        %6736 = vmatpush2.bf16.msra.mxu0 0
        %6737 = vmatprep.mubr.bf16.mxu0 0
        %6738 = vmatmul.mubr.bf16.gmra.mxu0 %v5144
        %v6739 = vpop.f32.mrf.mxu0
        %v6740 = vadd.f32 %v6200, %v6739
        %v6741 = vpop.f32.mrf.mxu0
        %v6742 = vpop.f32.mrf.mxu0
        %v6743 = vpop.f32.mrf.mxu0
        %6744 = vdwg.mxu0
        %v6761 = vunpack.c.l.b16 %v6129
        %v6762 = vunpack.c.l.b16 %v6130
        %v6763 = vunpack.c.l.b16 %v6131
        %v6764 = vunpack.c.l.b16 %v6132
        %v6765 = vunpack.c.l.b16 %v6133
        %v6766 = vunpack.c.l.b16 %v6134
        %v6767 = vunpack.c.l.b16 %v6135
        %v6768 = vunpack.c.l.b16 %v6136
        %v6769 = vunpack.c.l.b16 %v6137
        %v6770 = vunpack.c.l.b16 %v6138
        %v6771 = vunpack.c.l.b16 %v6139
        %v6772 = vunpack.c.l.b16 %v6140
        %v6773 = vunpack.c.l.b16 %v6141
        %v6774 = vunpack.c.l.b16 %v6142
        %v6775 = vunpack.c.l.b16 %v6143
        %v6776 = vunpack.c.l.b16 %v6144
        %v6777 = vpack.c.b16 %v6762, %v6761
        %v6778 = vpack.c.b16 %v6764, %v6763
        %v6779 = vpack.c.b16 %v6766, %v6765
        %v6780 = vpack.c.b16 %v6768, %v6767
        %v6781 = vpack.c.b16 %v6770, %v6769
        %v6782 = vpack.c.b16 %v6772, %v6771
        %v6783 = vpack.c.b16 %v6774, %v6773
        %v6784 = vpack.c.b16 %v6776, %v6775
        %6793 = vmatprep.subr.bf16.mxu0 0
        %6794 = vmatpush1.bf16.msra.mxu0 %v6784
        %6795 = vmatprep.subr.bf16.mxu0 0
        %6796 = vmatpush1.bf16.msra.mxu0 %v6783
        %6797 = vmatprep.subr.bf16.mxu0 0
        %6798 = vmatpush1.bf16.msra.mxu0 %v6782
        %6799 = vmatprep.subr.bf16.mxu0 0
        %6800 = vmatpush1.bf16.msra.mxu0 %v6781
        %6801 = vmatprep.subr.bf16.mxu0 0
        %6802 = vmatpush1.bf16.msra.mxu0 %v6780
        %6803 = vmatprep.subr.bf16.mxu0 0
        %6804 = vmatpush1.bf16.msra.mxu0 %v6779
        %6805 = vmatprep.subr.bf16.mxu0 0
        %6806 = vmatpush1.bf16.msra.mxu0 %v6778
        %6807 = vmatprep.subr.bf16.mxu0 0
        %6808 = vmatpush1.bf16.msra.mxu0 %v6777
        %6809 = vmatprep.subr.bf16.mxu0 0
        %6810 = vmatpush2.bf16.msra.mxu0 0
        %6811 = vmatprep.subr.bf16.mxu0 0
        %6812 = vmatpush2.bf16.msra.mxu0 0
        %6813 = vmatprep.subr.bf16.mxu0 0
        %6814 = vmatpush2.bf16.msra.mxu0 0
        %6815 = vmatprep.subr.bf16.mxu0 0
        %6816 = vmatpush2.bf16.msra.mxu0 0
        %6817 = vmatprep.subr.bf16.mxu0 0
        %6818 = vmatpush2.bf16.msra.mxu0 0
        %6819 = vmatprep.subr.bf16.mxu0 0
        %6820 = vmatpush2.bf16.msra.mxu0 0
        %6821 = vmatprep.subr.bf16.mxu0 0
        %6822 = vmatpush2.bf16.msra.mxu0 0
        %6823 = vmatprep.subr.bf16.mxu0 0
        %6824 = vmatpush2.bf16.msra.mxu0 0
        %6825 = vmatprep.mubr.bf16.mxu0 0
        %6826 = vmatmul.mubr.bf16.gmra.mxu0 %v5144
        %v6827 = vpop.f32.mrf.mxu0
        %v6828 = vadd.f32 %v6204, %v6827
        %v6829 = vpop.f32.mrf.mxu0
        %v6830 = vpop.f32.mrf.mxu0
        %v6831 = vpop.f32.mrf.mxu0
        %6832 = vdwg.mxu0
        %v6849 = vunpack.c.l.b16 %v6145
        %v6850 = vunpack.c.l.b16 %v6146
        %v6851 = vunpack.c.l.b16 %v6147
        %v6852 = vunpack.c.l.b16 %v6148
        %v6853 = vunpack.c.l.b16 %v6149
        %v6854 = vunpack.c.l.b16 %v6150
        %v6855 = vunpack.c.l.b16 %v6151
        %v6856 = vunpack.c.l.b16 %v6152
        %v6857 = vunpack.c.l.b16 %v6153
        %v6858 = vunpack.c.l.b16 %v6154
        %v6859 = vunpack.c.l.b16 %v6155
        %v6860 = vunpack.c.l.b16 %v6156
        %v6861 = vunpack.c.l.b16 %v6157
        %v6862 = vunpack.c.l.b16 %v6158
        %v6863 = vunpack.c.l.b16 %v6159
        %v6864 = vunpack.c.l.b16 %v6160
        %v6865 = vpack.c.b16 %v6850, %v6849
        %v6866 = vpack.c.b16 %v6852, %v6851
        %v6867 = vpack.c.b16 %v6854, %v6853
        %v6868 = vpack.c.b16 %v6856, %v6855
        %v6869 = vpack.c.b16 %v6858, %v6857
        %v6870 = vpack.c.b16 %v6860, %v6859
        %v6871 = vpack.c.b16 %v6862, %v6861
        %v6872 = vpack.c.b16 %v6864, %v6863
        %6881 = vmatprep.subr.bf16.mxu0 0
        %6882 = vmatpush1.bf16.msra.mxu0 %v6872
        %6883 = vmatprep.subr.bf16.mxu0 0
        %6884 = vmatpush1.bf16.msra.mxu0 %v6871
        %6885 = vmatprep.subr.bf16.mxu0 0
        %6886 = vmatpush1.bf16.msra.mxu0 %v6870
        %6887 = vmatprep.subr.bf16.mxu0 0
        %6888 = vmatpush1.bf16.msra.mxu0 %v6869
        %6889 = vmatprep.subr.bf16.mxu0 0
        %6890 = vmatpush1.bf16.msra.mxu0 %v6868
        %6891 = vmatprep.subr.bf16.mxu0 0
        %6892 = vmatpush1.bf16.msra.mxu0 %v6867
        %6893 = vmatprep.subr.bf16.mxu0 0
        %6894 = vmatpush1.bf16.msra.mxu0 %v6866
        %6895 = vmatprep.subr.bf16.mxu0 0
        %6896 = vmatpush1.bf16.msra.mxu0 %v6865
        %6897 = vmatprep.subr.bf16.mxu0 0
        %6898 = vmatpush2.bf16.msra.mxu0 0
        %6899 = vmatprep.subr.bf16.mxu0 0
        %6900 = vmatpush2.bf16.msra.mxu0 0
        %6901 = vmatprep.subr.bf16.mxu0 0
        %6902 = vmatpush2.bf16.msra.mxu0 0
        %6903 = vmatprep.subr.bf16.mxu0 0
        %6904 = vmatpush2.bf16.msra.mxu0 0
        %6905 = vmatprep.subr.bf16.mxu0 0
        %6906 = vmatpush2.bf16.msra.mxu0 0
        %6907 = vmatprep.subr.bf16.mxu0 0
        %6908 = vmatpush2.bf16.msra.mxu0 0
        %6909 = vmatprep.subr.bf16.mxu0 0
        %6910 = vmatpush2.bf16.msra.mxu0 0
        %6911 = vmatprep.subr.bf16.mxu0 0
        %6912 = vmatpush2.bf16.msra.mxu0 0
        %6913 = vmatprep.mubr.bf16.mxu0 0
        %6914 = vmatmul.mubr.bf16.gmra.mxu0 %v5144
        %v6915 = vpop.f32.mrf.mxu0
        %v6916 = vadd.f32 %v6208, %v6915
        %v6917 = vpop.f32.mrf.mxu0
        %v6918 = vpop.f32.mrf.mxu0
        %v6919 = vpop.f32.mrf.mxu0
        %6920 = vdwg.mxu0
        %v6921 = vld [vmem:[%s17] sm:$0xf]
        %v6922 = vld [vmem:[%s17 + $0x4] sm:$0xf]
        %v6923 = vld [vmem:[%s17 + $0x8] sm:$0xf]
        %v6924 = vld [vmem:[%s17 + $0xc] sm:$0xf]
        %v6925 = vld [vmem:[%s17 + $0x10] sm:$0xf]
        %v6926 = vld [vmem:[%s17 + $0x14] sm:$0xf]
        %v6927 = vld [vmem:[%s17 + $0x18] sm:$0xf]
        %v6928 = vld [vmem:[%s17 + $0x1c] sm:$0xf]
        %v6929 = vld [vmem:[%s17 + $0x20] sm:$0xf]
        %v6930 = vld [vmem:[%s17 + $0x24] sm:$0xf]
        %v6931 = vld [vmem:[%s17 + $0x28] sm:$0xf]
        %v6932 = vld [vmem:[%s17 + $0x2c] sm:$0xf]
        %v6933 = vld [vmem:[%s17 + $0x30] sm:$0xf]
        %v6934 = vld [vmem:[%s17 + $0x34] sm:$0xf]
        %v6935 = vld [vmem:[%s17 + $0x38] sm:$0xf]
        %v6936 = vld [vmem:[%s17 + $0x3c] sm:$0xf]
        %v6937 = vld [vmem:[%s17 + $0x40] sm:$0xf]
        %v6938 = vld [vmem:[%s17 + $0x44] sm:$0xf]
        %v6939 = vld [vmem:[%s17 + $0x48] sm:$0xf]
        %v6940 = vld [vmem:[%s17 + $0x4c] sm:$0xf]
        %v6941 = vld [vmem:[%s17 + $0x50] sm:$0xf]
        %v6942 = vld [vmem:[%s17 + $0x54] sm:$0xf]
        %v6943 = vld [vmem:[%s17 + $0x58] sm:$0xf]
        %v6944 = vld [vmem:[%s17 + $0x5c] sm:$0xf]
        %v6945 = vld [vmem:[%s17 + $0x60] sm:$0xf]
        %v6946 = vld [vmem:[%s17 + $0x64] sm:$0xf]
        %v6947 = vld [vmem:[%s17 + $0x68] sm:$0xf]
        %v6948 = vld [vmem:[%s17 + $0x6c] sm:$0xf]
        %v6949 = vld [vmem:[%s17 + $0x70] sm:$0xf]
        %v6950 = vld [vmem:[%s17 + $0x74] sm:$0xf]
        %v6951 = vld [vmem:[%s17 + $0x78] sm:$0xf]
        %v6952 = vld [vmem:[%s17 + $0x7c] sm:$0xf]
        %v6953 = vld [vmem:[%s17 + $0x80] sm:$0xf]
        %v6954 = vld [vmem:[%s17 + $0x84] sm:$0xf]
        %v6955 = vld [vmem:[%s17 + $0x88] sm:$0xf]
        %v6956 = vld [vmem:[%s17 + $0x8c] sm:$0xf]
        %v6957 = vld [vmem:[%s17 + $0x90] sm:$0xf]
        %v6958 = vld [vmem:[%s17 + $0x94] sm:$0xf]
        %v6959 = vld [vmem:[%s17 + $0x98] sm:$0xf]
        %v6960 = vld [vmem:[%s17 + $0x9c] sm:$0xf]
        %v6961 = vld [vmem:[%s17 + $0xa0] sm:$0xf]
        %v6962 = vld [vmem:[%s17 + $0xa4] sm:$0xf]
        %v6963 = vld [vmem:[%s17 + $0xa8] sm:$0xf]
        %v6964 = vld [vmem:[%s17 + $0xac] sm:$0xf]
        %v6965 = vld [vmem:[%s17 + $0xb0] sm:$0xf]
        %v6966 = vld [vmem:[%s17 + $0xb4] sm:$0xf]
        %v6967 = vld [vmem:[%s17 + $0xb8] sm:$0xf]
        %v6968 = vld [vmem:[%s17 + $0xbc] sm:$0xf]
        %v6969 = vld [vmem:[%s17 + $0xc0] sm:$0xf]
        %v6970 = vld [vmem:[%s17 + $0xc4] sm:$0xf]
        %v6971 = vld [vmem:[%s17 + $0xc8] sm:$0xf]
        %v6972 = vld [vmem:[%s17 + $0xcc] sm:$0xf]
        %v6973 = vld [vmem:[%s17 + $0xd0] sm:$0xf]
        %v6974 = vld [vmem:[%s17 + $0xd4] sm:$0xf]
        %v6975 = vld [vmem:[%s17 + $0xd8] sm:$0xf]
        %v6976 = vld [vmem:[%s17 + $0xdc] sm:$0xf]
        %v6977 = vld [vmem:[%s17 + $0xe0] sm:$0xf]
        %v6978 = vld [vmem:[%s17 + $0xe4] sm:$0xf]
        %v6979 = vld [vmem:[%s17 + $0xe8] sm:$0xf]
        %v6980 = vld [vmem:[%s17 + $0xec] sm:$0xf]
        %v6981 = vld [vmem:[%s17 + $0xf0] sm:$0xf]
        %v6982 = vld [vmem:[%s17 + $0xf4] sm:$0xf]
        %v6983 = vld [vmem:[%s17 + $0xf8] sm:$0xf]
        %v6984 = vld [vmem:[%s17 + $0xfc] sm:$0xf]
        %v6985 = vld [vmem:[%s17 + $0x100] sm:$0xf]
        %v6986 = vld [vmem:[%s17 + $0x104] sm:$0xf]
        %v6987 = vld [vmem:[%s17 + $0x108] sm:$0xf]
        %v6988 = vld [vmem:[%s17 + $0x10c] sm:$0xf]
        %v6989 = vld [vmem:[%s17 + $0x110] sm:$0xf]
        %v6990 = vld [vmem:[%s17 + $0x114] sm:$0xf]
        %v6991 = vld [vmem:[%s17 + $0x118] sm:$0xf]
        %v6992 = vld [vmem:[%s17 + $0x11c] sm:$0xf]
        %v6993 = vld [vmem:[%s17 + $0x120] sm:$0xf]
        %v6994 = vld [vmem:[%s17 + $0x124] sm:$0xf]
        %v6995 = vld [vmem:[%s17 + $0x128] sm:$0xf]
        %v6996 = vld [vmem:[%s17 + $0x12c] sm:$0xf]
        %v6997 = vld [vmem:[%s17 + $0x130] sm:$0xf]
        %v6998 = vld [vmem:[%s17 + $0x134] sm:$0xf]
        %v6999 = vld [vmem:[%s17 + $0x138] sm:$0xf]
        %v7000 = vld [vmem:[%s17 + $0x13c] sm:$0xf]
        %v7001 = vld [vmem:[%s17 + $0x140] sm:$0xf]
        %v7002 = vld [vmem:[%s17 + $0x144] sm:$0xf]
        %v7003 = vld [vmem:[%s17 + $0x148] sm:$0xf]
        %v7004 = vld [vmem:[%s17 + $0x14c] sm:$0xf]
        %v7005 = vld [vmem:[%s17 + $0x150] sm:$0xf]
        %v7006 = vld [vmem:[%s17 + $0x154] sm:$0xf]
        %v7007 = vld [vmem:[%s17 + $0x158] sm:$0xf]
        %v7008 = vld [vmem:[%s17 + $0x15c] sm:$0xf]
        %v7009 = vld [vmem:[%s17 + $0x160] sm:$0xf]
        %v7010 = vld [vmem:[%s17 + $0x164] sm:$0xf]
        %v7011 = vld [vmem:[%s17 + $0x168] sm:$0xf]
        %v7012 = vld [vmem:[%s17 + $0x16c] sm:$0xf]
        %v7013 = vld [vmem:[%s17 + $0x170] sm:$0xf]
        %v7014 = vld [vmem:[%s17 + $0x174] sm:$0xf]
        %v7015 = vld [vmem:[%s17 + $0x178] sm:$0xf]
        %v7016 = vld [vmem:[%s17 + $0x17c] sm:$0xf]
        %v7017 = vld [vmem:[%s17 + $0x180] sm:$0xf]
        %v7018 = vld [vmem:[%s17 + $0x184] sm:$0xf]
        %v7019 = vld [vmem:[%s17 + $0x188] sm:$0xf]
        %v7020 = vld [vmem:[%s17 + $0x18c] sm:$0xf]
        %v7021 = vld [vmem:[%s17 + $0x190] sm:$0xf]
        %v7022 = vld [vmem:[%s17 + $0x194] sm:$0xf]
        %v7023 = vld [vmem:[%s17 + $0x198] sm:$0xf]
        %v7024 = vld [vmem:[%s17 + $0x19c] sm:$0xf]
        %v7025 = vld [vmem:[%s17 + $0x1a0] sm:$0xf]
        %v7026 = vld [vmem:[%s17 + $0x1a4] sm:$0xf]
        %v7027 = vld [vmem:[%s17 + $0x1a8] sm:$0xf]
        %v7028 = vld [vmem:[%s17 + $0x1ac] sm:$0xf]
        %v7029 = vld [vmem:[%s17 + $0x1b0] sm:$0xf]
        %v7030 = vld [vmem:[%s17 + $0x1b4] sm:$0xf]
        %v7031 = vld [vmem:[%s17 + $0x1b8] sm:$0xf]
        %v7032 = vld [vmem:[%s17 + $0x1bc] sm:$0xf]
        %v7033 = vld [vmem:[%s17 + $0x1c0] sm:$0xf]
        %v7034 = vld [vmem:[%s17 + $0x1c4] sm:$0xf]
        %v7035 = vld [vmem:[%s17 + $0x1c8] sm:$0xf]
        %v7036 = vld [vmem:[%s17 + $0x1cc] sm:$0xf]
        %v7037 = vld [vmem:[%s17 + $0x1d0] sm:$0xf]
        %v7038 = vld [vmem:[%s17 + $0x1d4] sm:$0xf]
        %v7039 = vld [vmem:[%s17 + $0x1d8] sm:$0xf]
        %v7040 = vld [vmem:[%s17 + $0x1dc] sm:$0xf]
        %v7041 = vld [vmem:[%s17 + $0x1e0] sm:$0xf]
        %v7042 = vld [vmem:[%s17 + $0x1e4] sm:$0xf]
        %v7043 = vld [vmem:[%s17 + $0x1e8] sm:$0xf]
        %v7044 = vld [vmem:[%s17 + $0x1ec] sm:$0xf]
        %v7045 = vld [vmem:[%s17 + $0x1f0] sm:$0xf]
        %v7046 = vld [vmem:[%s17 + $0x1f4] sm:$0xf]
        %v7047 = vld [vmem:[%s17 + $0x1f8] sm:$0xf]
        %v7048 = vld [vmem:[%s17 + $0x1fc] sm:$0xf]
        %v7049 = vld [vmem:[%s18] sm:$0x1]
        %v7050 = vld [vmem:[%s18 + $0x1] sm:$0x1]
        %v7051 = vld [vmem:[%s18 + $0x2] sm:$0x1]
        %v7052 = vld [vmem:[%s18 + $0x3] sm:$0x1]
        %v7053 = vld [vmem:[%s18 + $0x4] sm:$0x1]
        %v7054 = vld [vmem:[%s18 + $0x5] sm:$0x1]
        %v7055 = vld [vmem:[%s18 + $0x6] sm:$0x1]
        %v7056 = vld [vmem:[%s18 + $0x7] sm:$0x1]
        %v7065 = vlaneseq
        %v7066 = vshrl.u32 %v7065, 7
        %v7067 = vsub.s32 0, %v7066
        %v7068 = vrot.slane %v7049, %v7067
        %v7069 = vlaneseq
        %v7070 = vshrl.u32 %v7069, 7
        %v7071 = vsub.s32 0, %v7070
        %v7072 = vrot.slane %v7050, %v7071
        %v7073 = vlaneseq
        %v7074 = vshrl.u32 %v7073, 7
        %v7075 = vsub.s32 0, %v7074
        %v7076 = vrot.slane %v7051, %v7075
        %v7077 = vlaneseq
        %v7078 = vshrl.u32 %v7077, 7
        %v7079 = vsub.s32 0, %v7078
        %v7080 = vrot.slane %v7052, %v7079
        %v7081 = vlaneseq
        %v7082 = vshrl.u32 %v7081, 7
        %v7083 = vsub.s32 0, %v7082
        %v7084 = vrot.slane %v7053, %v7083
        %v7085 = vlaneseq
        %v7086 = vshrl.u32 %v7085, 7
        %v7087 = vsub.s32 0, %v7086
        %v7088 = vrot.slane %v7054, %v7087
        %v7089 = vlaneseq
        %v7090 = vshrl.u32 %v7089, 7
        %v7091 = vsub.s32 0, %v7090
        %v7092 = vrot.slane %v7055, %v7091
        %v7093 = vlaneseq
        %v7094 = vshrl.u32 %v7093, 7
        %v7095 = vsub.s32 0, %v7094
        %v7096 = vrot.slane %v7056, %v7095
        %v7121 = vunpack.c.l.b16 %v6921
        %v7122 = vunpack.c.l.b16 %v6922
        %v7123 = vunpack.c.l.b16 %v6923
        %v7124 = vunpack.c.l.b16 %v6924
        %v7125 = vunpack.c.l.b16 %v6925
        %v7126 = vunpack.c.l.b16 %v6926
        %v7127 = vunpack.c.l.b16 %v6927
        %v7128 = vunpack.c.l.b16 %v6928
        %v7129 = vunpack.c.l.b16 %v6929
        %v7130 = vunpack.c.l.b16 %v6930
        %v7131 = vunpack.c.l.b16 %v6931
        %v7132 = vunpack.c.l.b16 %v6932
        %v7133 = vunpack.c.l.b16 %v6933
        %v7134 = vunpack.c.l.b16 %v6934
        %v7135 = vunpack.c.l.b16 %v6935
        %v7136 = vunpack.c.l.b16 %v6936
        %v7137 = vpack.c.b16 %v7122, %v7121
        %v7138 = vpack.c.b16 %v7124, %v7123
        %v7139 = vpack.c.b16 %v7126, %v7125
        %v7140 = vpack.c.b16 %v7128, %v7127
        %v7141 = vpack.c.b16 %v7130, %v7129
        %v7142 = vpack.c.b16 %v7132, %v7131
        %v7143 = vpack.c.b16 %v7134, %v7133
        %v7144 = vpack.c.b16 %v7136, %v7135
        %7153 = vmatprep.subr.bf16.mxu0 0
        %7154 = vmatpush1.bf16.msra.mxu0 %v7144
        %7155 = vmatprep.subr.bf16.mxu0 0
        %7156 = vmatpush1.bf16.msra.mxu0 %v7143
        %7157 = vmatprep.subr.bf16.mxu0 0
        %7158 = vmatpush1.bf16.msra.mxu0 %v7142
        %7159 = vmatprep.subr.bf16.mxu0 0
        %7160 = vmatpush1.bf16.msra.mxu0 %v7141
        %7161 = vmatprep.subr.bf16.mxu0 0
        %7162 = vmatpush1.bf16.msra.mxu0 %v7140
        %7163 = vmatprep.subr.bf16.mxu0 0
        %7164 = vmatpush1.bf16.msra.mxu0 %v7139
        %7165 = vmatprep.subr.bf16.mxu0 0
        %7166 = vmatpush1.bf16.msra.mxu0 %v7138
        %7167 = vmatprep.subr.bf16.mxu0 0
        %7168 = vmatpush1.bf16.msra.mxu0 %v7137
        %7169 = vmatprep.subr.bf16.mxu0 0
        %7170 = vmatpush2.bf16.msra.mxu0 0
        %7171 = vmatprep.subr.bf16.mxu0 0
        %7172 = vmatpush2.bf16.msra.mxu0 0
        %7173 = vmatprep.subr.bf16.mxu0 0
        %7174 = vmatpush2.bf16.msra.mxu0 0
        %7175 = vmatprep.subr.bf16.mxu0 0
        %7176 = vmatpush2.bf16.msra.mxu0 0
        %7177 = vmatprep.subr.bf16.mxu0 0
        %7178 = vmatpush2.bf16.msra.mxu0 0
        %7179 = vmatprep.subr.bf16.mxu0 0
        %7180 = vmatpush2.bf16.msra.mxu0 0
        %7181 = vmatprep.subr.bf16.mxu0 0
        %7182 = vmatpush2.bf16.msra.mxu0 0
        %7183 = vmatprep.subr.bf16.mxu0 0
        %7184 = vmatpush2.bf16.msra.mxu0 0
        %7185 = vmatprep.mubr.bf16.mxu0 0
        %7186 = vmatmul.mubr.bf16.gmra.mxu0 %v5144
        %v7187 = vpop.f32.mrf.mxu0
        %v7188 = vadd.f32 %v7068, %v7187
        %v7189 = vpop.f32.mrf.mxu0
        %v7190 = vpop.f32.mrf.mxu0
        %v7191 = vpop.f32.mrf.mxu0
        %7192 = vdwg.mxu0
        %v7209 = vunpack.c.l.b16 %v6937
        %v7210 = vunpack.c.l.b16 %v6938
        %v7211 = vunpack.c.l.b16 %v6939
        %v7212 = vunpack.c.l.b16 %v6940
        %v7213 = vunpack.c.l.b16 %v6941
        %v7214 = vunpack.c.l.b16 %v6942
        %v7215 = vunpack.c.l.b16 %v6943
        %v7216 = vunpack.c.l.b16 %v6944
        %v7217 = vunpack.c.l.b16 %v6945
        %v7218 = vunpack.c.l.b16 %v6946
        %v7219 = vunpack.c.l.b16 %v6947
        %v7220 = vunpack.c.l.b16 %v6948
        %v7221 = vunpack.c.l.b16 %v6949
        %v7222 = vunpack.c.l.b16 %v6950
        %v7223 = vunpack.c.l.b16 %v6951
        %v7224 = vunpack.c.l.b16 %v6952
        %v7225 = vpack.c.b16 %v7210, %v7209
        %v7226 = vpack.c.b16 %v7212, %v7211
        %v7227 = vpack.c.b16 %v7214, %v7213
        %v7228 = vpack.c.b16 %v7216, %v7215
        %v7229 = vpack.c.b16 %v7218, %v7217
        %v7230 = vpack.c.b16 %v7220, %v7219
        %v7231 = vpack.c.b16 %v7222, %v7221
        %v7232 = vpack.c.b16 %v7224, %v7223
        %7241 = vmatprep.subr.bf16.mxu0 0
        %7242 = vmatpush1.bf16.msra.mxu0 %v7232
        %7243 = vmatprep.subr.bf16.mxu0 0
        %7244 = vmatpush1.bf16.msra.mxu0 %v7231
        %7245 = vmatprep.subr.bf16.mxu0 0
        %7246 = vmatpush1.bf16.msra.mxu0 %v7230
        %7247 = vmatprep.subr.bf16.mxu0 0
        %7248 = vmatpush1.bf16.msra.mxu0 %v7229
        %7249 = vmatprep.subr.bf16.mxu0 0
        %7250 = vmatpush1.bf16.msra.mxu0 %v7228
        %7251 = vmatprep.subr.bf16.mxu0 0
        %7252 = vmatpush1.bf16.msra.mxu0 %v7227
        %7253 = vmatprep.subr.bf16.mxu0 0
        %7254 = vmatpush1.bf16.msra.mxu0 %v7226
        %7255 = vmatprep.subr.bf16.mxu0 0
        %7256 = vmatpush1.bf16.msra.mxu0 %v7225
        %7257 = vmatprep.subr.bf16.mxu0 0
        %7258 = vmatpush2.bf16.msra.mxu0 0
        %7259 = vmatprep.subr.bf16.mxu0 0
        %7260 = vmatpush2.bf16.msra.mxu0 0
        %7261 = vmatprep.subr.bf16.mxu0 0
        %7262 = vmatpush2.bf16.msra.mxu0 0
        %7263 = vmatprep.subr.bf16.mxu0 0
        %7264 = vmatpush2.bf16.msra.mxu0 0
        %7265 = vmatprep.subr.bf16.mxu0 0
        %7266 = vmatpush2.bf16.msra.mxu0 0
        %7267 = vmatprep.subr.bf16.mxu0 0
        %7268 = vmatpush2.bf16.msra.mxu0 0
        %7269 = vmatprep.subr.bf16.mxu0 0
        %7270 = vmatpush2.bf16.msra.mxu0 0
        %7271 = vmatprep.subr.bf16.mxu0 0
        %7272 = vmatpush2.bf16.msra.mxu0 0
        %7273 = vmatprep.mubr.bf16.mxu0 0
        %7274 = vmatmul.mubr.bf16.gmra.mxu0 %v5144
        %v7275 = vpop.f32.mrf.mxu0
        %v7276 = vadd.f32 %v7072, %v7275
        %v7277 = vpop.f32.mrf.mxu0
        %v7278 = vpop.f32.mrf.mxu0
        %v7279 = vpop.f32.mrf.mxu0
        %7280 = vdwg.mxu0
        %v7297 = vunpack.c.l.b16 %v6953
        %v7298 = vunpack.c.l.b16 %v6954
        %v7299 = vunpack.c.l.b16 %v6955
        %v7300 = vunpack.c.l.b16 %v6956
        %v7301 = vunpack.c.l.b16 %v6957
        %v7302 = vunpack.c.l.b16 %v6958
        %v7303 = vunpack.c.l.b16 %v6959
        %v7304 = vunpack.c.l.b16 %v6960
        %v7305 = vunpack.c.l.b16 %v6961
        %v7306 = vunpack.c.l.b16 %v6962
        %v7307 = vunpack.c.l.b16 %v6963
        %v7308 = vunpack.c.l.b16 %v6964
        %v7309 = vunpack.c.l.b16 %v6965
        %v7310 = vunpack.c.l.b16 %v6966
        %v7311 = vunpack.c.l.b16 %v6967
        %v7312 = vunpack.c.l.b16 %v6968
        %v7313 = vpack.c.b16 %v7298, %v7297
        %v7314 = vpack.c.b16 %v7300, %v7299
        %v7315 = vpack.c.b16 %v7302, %v7301
        %v7316 = vpack.c.b16 %v7304, %v7303
        %v7317 = vpack.c.b16 %v7306, %v7305
        %v7318 = vpack.c.b16 %v7308, %v7307
        %v7319 = vpack.c.b16 %v7310, %v7309
        %v7320 = vpack.c.b16 %v7312, %v7311
        %7329 = vmatprep.subr.bf16.mxu0 0
        %7330 = vmatpush1.bf16.msra.mxu0 %v7320
        %7331 = vmatprep.subr.bf16.mxu0 0
        %7332 = vmatpush1.bf16.msra.mxu0 %v7319
        %7333 = vmatprep.subr.bf16.mxu0 0
        %7334 = vmatpush1.bf16.msra.mxu0 %v7318
        %7335 = vmatprep.subr.bf16.mxu0 0
        %7336 = vmatpush1.bf16.msra.mxu0 %v7317
        %7337 = vmatprep.subr.bf16.mxu0 0
        %7338 = vmatpush1.bf16.msra.mxu0 %v7316
        %7339 = vmatprep.subr.bf16.mxu0 0
        %7340 = vmatpush1.bf16.msra.mxu0 %v7315
        %7341 = vmatprep.subr.bf16.mxu0 0
        %7342 = vmatpush1.bf16.msra.mxu0 %v7314
        %7343 = vmatprep.subr.bf16.mxu0 0
        %7344 = vmatpush1.bf16.msra.mxu0 %v7313
        %7345 = vmatprep.subr.bf16.mxu0 0
        %7346 = vmatpush2.bf16.msra.mxu0 0
        %7347 = vmatprep.subr.bf16.mxu0 0
        %7348 = vmatpush2.bf16.msra.mxu0 0
        %7349 = vmatprep.subr.bf16.mxu0 0
        %7350 = vmatpush2.bf16.msra.mxu0 0
        %7351 = vmatprep.subr.bf16.mxu0 0
        %7352 = vmatpush2.bf16.msra.mxu0 0
        %7353 = vmatprep.subr.bf16.mxu0 0
        %7354 = vmatpush2.bf16.msra.mxu0 0
        %7355 = vmatprep.subr.bf16.mxu0 0
        %7356 = vmatpush2.bf16.msra.mxu0 0
        %7357 = vmatprep.subr.bf16.mxu0 0
        %7358 = vmatpush2.bf16.msra.mxu0 0
        %7359 = vmatprep.subr.bf16.mxu0 0
        %7360 = vmatpush2.bf16.msra.mxu0 0
        %7361 = vmatprep.mubr.bf16.mxu0 0
        %7362 = vmatmul.mubr.bf16.gmra.mxu0 %v5144
        %v7363 = vpop.f32.mrf.mxu0
        %v7364 = vadd.f32 %v7076, %v7363
        %v7365 = vpop.f32.mrf.mxu0
        %v7366 = vpop.f32.mrf.mxu0
        %v7367 = vpop.f32.mrf.mxu0
        %7368 = vdwg.mxu0
        %v7385 = vunpack.c.l.b16 %v6969
        %v7386 = vunpack.c.l.b16 %v6970
        %v7387 = vunpack.c.l.b16 %v6971
        %v7388 = vunpack.c.l.b16 %v6972
        %v7389 = vunpack.c.l.b16 %v6973
        %v7390 = vunpack.c.l.b16 %v6974
        %v7391 = vunpack.c.l.b16 %v6975
        %v7392 = vunpack.c.l.b16 %v6976
        %v7393 = vunpack.c.l.b16 %v6977
        %v7394 = vunpack.c.l.b16 %v6978
        %v7395 = vunpack.c.l.b16 %v6979
        %v7396 = vunpack.c.l.b16 %v6980
        %v7397 = vunpack.c.l.b16 %v6981
        %v7398 = vunpack.c.l.b16 %v6982
        %v7399 = vunpack.c.l.b16 %v6983
        %v7400 = vunpack.c.l.b16 %v6984
        %v7401 = vpack.c.b16 %v7386, %v7385
        %v7402 = vpack.c.b16 %v7388, %v7387
        %v7403 = vpack.c.b16 %v7390, %v7389
        %v7404 = vpack.c.b16 %v7392, %v7391
        %v7405 = vpack.c.b16 %v7394, %v7393
        %v7406 = vpack.c.b16 %v7396, %v7395
        %v7407 = vpack.c.b16 %v7398, %v7397
        %v7408 = vpack.c.b16 %v7400, %v7399
        %7417 = vmatprep.subr.bf16.mxu0 0
        %7418 = vmatpush1.bf16.msra.mxu0 %v7408
        %7419 = vmatprep.subr.bf16.mxu0 0
        %7420 = vmatpush1.bf16.msra.mxu0 %v7407
        %7421 = vmatprep.subr.bf16.mxu0 0
        %7422 = vmatpush1.bf16.msra.mxu0 %v7406
        %7423 = vmatprep.subr.bf16.mxu0 0
        %7424 = vmatpush1.bf16.msra.mxu0 %v7405
        %7425 = vmatprep.subr.bf16.mxu0 0
        %7426 = vmatpush1.bf16.msra.mxu0 %v7404
        %7427 = vmatprep.subr.bf16.mxu0 0
        %7428 = vmatpush1.bf16.msra.mxu0 %v7403
        %7429 = vmatprep.subr.bf16.mxu0 0
        %7430 = vmatpush1.bf16.msra.mxu0 %v7402
        %7431 = vmatprep.subr.bf16.mxu0 0
        %7432 = vmatpush1.bf16.msra.mxu0 %v7401
        %7433 = vmatprep.subr.bf16.mxu0 0
        %7434 = vmatpush2.bf16.msra.mxu0 0
        %7435 = vmatprep.subr.bf16.mxu0 0
        %7436 = vmatpush2.bf16.msra.mxu0 0
        %7437 = vmatprep.subr.bf16.mxu0 0
        %7438 = vmatpush2.bf16.msra.mxu0 0
        %7439 = vmatprep.subr.bf16.mxu0 0
        %7440 = vmatpush2.bf16.msra.mxu0 0
        %7441 = vmatprep.subr.bf16.mxu0 0
        %7442 = vmatpush2.bf16.msra.mxu0 0
        %7443 = vmatprep.subr.bf16.mxu0 0
        %7444 = vmatpush2.bf16.msra.mxu0 0
        %7445 = vmatprep.subr.bf16.mxu0 0
        %7446 = vmatpush2.bf16.msra.mxu0 0
        %7447 = vmatprep.subr.bf16.mxu0 0
        %7448 = vmatpush2.bf16.msra.mxu0 0
        %7449 = vmatprep.mubr.bf16.mxu0 0
        %7450 = vmatmul.mubr.bf16.gmra.mxu0 %v5144
        %v7451 = vpop.f32.mrf.mxu0
        %v7452 = vadd.f32 %v7080, %v7451
        %v7453 = vpop.f32.mrf.mxu0
        %v7454 = vpop.f32.mrf.mxu0
        %v7455 = vpop.f32.mrf.mxu0
        %7456 = vdwg.mxu0
        %v7473 = vunpack.c.l.b16 %v6985
        %v7474 = vunpack.c.l.b16 %v6986
        %v7475 = vunpack.c.l.b16 %v6987
        %v7476 = vunpack.c.l.b16 %v6988
        %v7477 = vunpack.c.l.b16 %v6989
        %v7478 = vunpack.c.l.b16 %v6990
        %v7479 = vunpack.c.l.b16 %v6991
        %v7480 = vunpack.c.l.b16 %v6992
        %v7481 = vunpack.c.l.b16 %v6993
        %v7482 = vunpack.c.l.b16 %v6994
        %v7483 = vunpack.c.l.b16 %v6995
        %v7484 = vunpack.c.l.b16 %v6996
        %v7485 = vunpack.c.l.b16 %v6997
        %v7486 = vunpack.c.l.b16 %v6998
        %v7487 = vunpack.c.l.b16 %v6999
        %v7488 = vunpack.c.l.b16 %v7000
        %v7489 = vpack.c.b16 %v7474, %v7473
        %v7490 = vpack.c.b16 %v7476, %v7475
        %v7491 = vpack.c.b16 %v7478, %v7477
        %v7492 = vpack.c.b16 %v7480, %v7479
        %v7493 = vpack.c.b16 %v7482, %v7481
        %v7494 = vpack.c.b16 %v7484, %v7483
        %v7495 = vpack.c.b16 %v7486, %v7485
        %v7496 = vpack.c.b16 %v7488, %v7487
        %7505 = vmatprep.subr.bf16.mxu0 0
        %7506 = vmatpush1.bf16.msra.mxu0 %v7496
        %7507 = vmatprep.subr.bf16.mxu0 0
        %7508 = vmatpush1.bf16.msra.mxu0 %v7495
        %7509 = vmatprep.subr.bf16.mxu0 0
        %7510 = vmatpush1.bf16.msra.mxu0 %v7494
        %7511 = vmatprep.subr.bf16.mxu0 0
        %7512 = vmatpush1.bf16.msra.mxu0 %v7493
        %7513 = vmatprep.subr.bf16.mxu0 0
        %7514 = vmatpush1.bf16.msra.mxu0 %v7492
        %7515 = vmatprep.subr.bf16.mxu0 0
        %7516 = vmatpush1.bf16.msra.mxu0 %v7491
        %7517 = vmatprep.subr.bf16.mxu0 0
        %7518 = vmatpush1.bf16.msra.mxu0 %v7490
        %7519 = vmatprep.subr.bf16.mxu0 0
        %7520 = vmatpush1.bf16.msra.mxu0 %v7489
        %7521 = vmatprep.subr.bf16.mxu0 0
        %7522 = vmatpush2.bf16.msra.mxu0 0
        %7523 = vmatprep.subr.bf16.mxu0 0
        %7524 = vmatpush2.bf16.msra.mxu0 0
        %7525 = vmatprep.subr.bf16.mxu0 0
        %7526 = vmatpush2.bf16.msra.mxu0 0
        %7527 = vmatprep.subr.bf16.mxu0 0
        %7528 = vmatpush2.bf16.msra.mxu0 0
        %7529 = vmatprep.subr.bf16.mxu0 0
        %7530 = vmatpush2.bf16.msra.mxu0 0
        %7531 = vmatprep.subr.bf16.mxu0 0
        %7532 = vmatpush2.bf16.msra.mxu0 0
        %7533 = vmatprep.subr.bf16.mxu0 0
        %7534 = vmatpush2.bf16.msra.mxu0 0
        %7535 = vmatprep.subr.bf16.mxu0 0
        %7536 = vmatpush2.bf16.msra.mxu0 0
        %7537 = vmatprep.mubr.bf16.mxu0 0
        %7538 = vmatmul.mubr.bf16.gmra.mxu0 %v5144
        %v7539 = vpop.f32.mrf.mxu0
        %v7540 = vadd.f32 %v7084, %v7539
        %v7541 = vpop.f32.mrf.mxu0
        %v7542 = vpop.f32.mrf.mxu0
        %v7543 = vpop.f32.mrf.mxu0
        %7544 = vdwg.mxu0
        %v7561 = vunpack.c.l.b16 %v7001
        %v7562 = vunpack.c.l.b16 %v7002
        %v7563 = vunpack.c.l.b16 %v7003
        %v7564 = vunpack.c.l.b16 %v7004
        %v7565 = vunpack.c.l.b16 %v7005
        %v7566 = vunpack.c.l.b16 %v7006
        %v7567 = vunpack.c.l.b16 %v7007
        %v7568 = vunpack.c.l.b16 %v7008
        %v7569 = vunpack.c.l.b16 %v7009
        %v7570 = vunpack.c.l.b16 %v7010
        %v7571 = vunpack.c.l.b16 %v7011
        %v7572 = vunpack.c.l.b16 %v7012
        %v7573 = vunpack.c.l.b16 %v7013
        %v7574 = vunpack.c.l.b16 %v7014
        %v7575 = vunpack.c.l.b16 %v7015
        %v7576 = vunpack.c.l.b16 %v7016
        %v7577 = vpack.c.b16 %v7562, %v7561
        %v7578 = vpack.c.b16 %v7564, %v7563
        %v7579 = vpack.c.b16 %v7566, %v7565
        %v7580 = vpack.c.b16 %v7568, %v7567
        %v7581 = vpack.c.b16 %v7570, %v7569
        %v7582 = vpack.c.b16 %v7572, %v7571
        %v7583 = vpack.c.b16 %v7574, %v7573
        %v7584 = vpack.c.b16 %v7576, %v7575
        %7593 = vmatprep.subr.bf16.mxu0 0
        %7594 = vmatpush1.bf16.msra.mxu0 %v7584
        %7595 = vmatprep.subr.bf16.mxu0 0
        %7596 = vmatpush1.bf16.msra.mxu0 %v7583
        %7597 = vmatprep.subr.bf16.mxu0 0
        %7598 = vmatpush1.bf16.msra.mxu0 %v7582
        %7599 = vmatprep.subr.bf16.mxu0 0
        %7600 = vmatpush1.bf16.msra.mxu0 %v7581
        %7601 = vmatprep.subr.bf16.mxu0 0
        %7602 = vmatpush1.bf16.msra.mxu0 %v7580
        %7603 = vmatprep.subr.bf16.mxu0 0
        %7604 = vmatpush1.bf16.msra.mxu0 %v7579
        %7605 = vmatprep.subr.bf16.mxu0 0
        %7606 = vmatpush1.bf16.msra.mxu0 %v7578
        %7607 = vmatprep.subr.bf16.mxu0 0
        %7608 = vmatpush1.bf16.msra.mxu0 %v7577
        %7609 = vmatprep.subr.bf16.mxu0 0
        %7610 = vmatpush2.bf16.msra.mxu0 0
        %7611 = vmatprep.subr.bf16.mxu0 0
        %7612 = vmatpush2.bf16.msra.mxu0 0
        %7613 = vmatprep.subr.bf16.mxu0 0
        %7614 = vmatpush2.bf16.msra.mxu0 0
        %7615 = vmatprep.subr.bf16.mxu0 0
        %7616 = vmatpush2.bf16.msra.mxu0 0
        %7617 = vmatprep.subr.bf16.mxu0 0
        %7618 = vmatpush2.bf16.msra.mxu0 0
        %7619 = vmatprep.subr.bf16.mxu0 0
        %7620 = vmatpush2.bf16.msra.mxu0 0
        %7621 = vmatprep.subr.bf16.mxu0 0
        %7622 = vmatpush2.bf16.msra.mxu0 0
        %7623 = vmatprep.subr.bf16.mxu0 0
        %7624 = vmatpush2.bf16.msra.mxu0 0
        %7625 = vmatprep.mubr.bf16.mxu0 0
        %7626 = vmatmul.mubr.bf16.gmra.mxu0 %v5144
        %v7627 = vpop.f32.mrf.mxu0
        %v7628 = vadd.f32 %v7088, %v7627
        %v7629 = vpop.f32.mrf.mxu0
        %v7630 = vpop.f32.mrf.mxu0
        %v7631 = vpop.f32.mrf.mxu0
        %7632 = vdwg.mxu0
        %v7649 = vunpack.c.l.b16 %v7017
        %v7650 = vunpack.c.l.b16 %v7018
        %v7651 = vunpack.c.l.b16 %v7019
        %v7652 = vunpack.c.l.b16 %v7020
        %v7653 = vunpack.c.l.b16 %v7021
        %v7654 = vunpack.c.l.b16 %v7022
        %v7655 = vunpack.c.l.b16 %v7023
        %v7656 = vunpack.c.l.b16 %v7024
        %v7657 = vunpack.c.l.b16 %v7025
        %v7658 = vunpack.c.l.b16 %v7026
        %v7659 = vunpack.c.l.b16 %v7027
        %v7660 = vunpack.c.l.b16 %v7028
        %v7661 = vunpack.c.l.b16 %v7029
        %v7662 = vunpack.c.l.b16 %v7030
        %v7663 = vunpack.c.l.b16 %v7031
        %v7664 = vunpack.c.l.b16 %v7032
        %v7665 = vpack.c.b16 %v7650, %v7649
        %v7666 = vpack.c.b16 %v7652, %v7651
        %v7667 = vpack.c.b16 %v7654, %v7653
        %v7668 = vpack.c.b16 %v7656, %v7655
        %v7669 = vpack.c.b16 %v7658, %v7657
        %v7670 = vpack.c.b16 %v7660, %v7659
        %v7671 = vpack.c.b16 %v7662, %v7661
        %v7672 = vpack.c.b16 %v7664, %v7663
        %7681 = vmatprep.subr.bf16.mxu0 0
        %7682 = vmatpush1.bf16.msra.mxu0 %v7672
        %7683 = vmatprep.subr.bf16.mxu0 0
        %7684 = vmatpush1.bf16.msra.mxu0 %v7671
        %7685 = vmatprep.subr.bf16.mxu0 0
        %7686 = vmatpush1.bf16.msra.mxu0 %v7670
        %7687 = vmatprep.subr.bf16.mxu0 0
        %7688 = vmatpush1.bf16.msra.mxu0 %v7669
        %7689 = vmatprep.subr.bf16.mxu0 0
        %7690 = vmatpush1.bf16.msra.mxu0 %v7668
        %7691 = vmatprep.subr.bf16.mxu0 0
        %7692 = vmatpush1.bf16.msra.mxu0 %v7667
        %7693 = vmatprep.subr.bf16.mxu0 0
        %7694 = vmatpush1.bf16.msra.mxu0 %v7666
        %7695 = vmatprep.subr.bf16.mxu0 0
        %7696 = vmatpush1.bf16.msra.mxu0 %v7665
        %7697 = vmatprep.subr.bf16.mxu0 0
        %7698 = vmatpush2.bf16.msra.mxu0 0
        %7699 = vmatprep.subr.bf16.mxu0 0
        %7700 = vmatpush2.bf16.msra.mxu0 0
        %7701 = vmatprep.subr.bf16.mxu0 0
        %7702 = vmatpush2.bf16.msra.mxu0 0
        %7703 = vmatprep.subr.bf16.mxu0 0
        %7704 = vmatpush2.bf16.msra.mxu0 0
        %7705 = vmatprep.subr.bf16.mxu0 0
        %7706 = vmatpush2.bf16.msra.mxu0 0
        %7707 = vmatprep.subr.bf16.mxu0 0
        %7708 = vmatpush2.bf16.msra.mxu0 0
        %7709 = vmatprep.subr.bf16.mxu0 0
        %7710 = vmatpush2.bf16.msra.mxu0 0
        %7711 = vmatprep.subr.bf16.mxu0 0
        %7712 = vmatpush2.bf16.msra.mxu0 0
        %7713 = vmatprep.mubr.bf16.mxu0 0
        %7714 = vmatmul.mubr.bf16.gmra.mxu0 %v5144
        %v7715 = vpop.f32.mrf.mxu0
        %v7716 = vadd.f32 %v7092, %v7715
        %v7717 = vpop.f32.mrf.mxu0
        %v7718 = vpop.f32.mrf.mxu0
        %v7719 = vpop.f32.mrf.mxu0
        %7720 = vdwg.mxu0
        %v7737 = vunpack.c.l.b16 %v7033
        %v7738 = vunpack.c.l.b16 %v7034
        %v7739 = vunpack.c.l.b16 %v7035
        %v7740 = vunpack.c.l.b16 %v7036
        %v7741 = vunpack.c.l.b16 %v7037
        %v7742 = vunpack.c.l.b16 %v7038
        %v7743 = vunpack.c.l.b16 %v7039
        %v7744 = vunpack.c.l.b16 %v7040
        %v7745 = vunpack.c.l.b16 %v7041
        %v7746 = vunpack.c.l.b16 %v7042
        %v7747 = vunpack.c.l.b16 %v7043
        %v7748 = vunpack.c.l.b16 %v7044
        %v7749 = vunpack.c.l.b16 %v7045
        %v7750 = vunpack.c.l.b16 %v7046
        %v7751 = vunpack.c.l.b16 %v7047
        %v7752 = vunpack.c.l.b16 %v7048
        %v7753 = vpack.c.b16 %v7738, %v7737
        %v7754 = vpack.c.b16 %v7740, %v7739
        %v7755 = vpack.c.b16 %v7742, %v7741
        %v7756 = vpack.c.b16 %v7744, %v7743
        %v7757 = vpack.c.b16 %v7746, %v7745
        %v7758 = vpack.c.b16 %v7748, %v7747
        %v7759 = vpack.c.b16 %v7750, %v7749
        %v7760 = vpack.c.b16 %v7752, %v7751
        %7769 = vmatprep.subr.bf16.mxu0 0
        %7770 = vmatpush1.bf16.msra.mxu0 %v7760
        %7771 = vmatprep.subr.bf16.mxu0 0
        %7772 = vmatpush1.bf16.msra.mxu0 %v7759
        %7773 = vmatprep.subr.bf16.mxu0 0
        %7774 = vmatpush1.bf16.msra.mxu0 %v7758
        %7775 = vmatprep.subr.bf16.mxu0 0
        %7776 = vmatpush1.bf16.msra.mxu0 %v7757
        %7777 = vmatprep.subr.bf16.mxu0 0
        %7778 = vmatpush1.bf16.msra.mxu0 %v7756
        %7779 = vmatprep.subr.bf16.mxu0 0
        %7780 = vmatpush1.bf16.msra.mxu0 %v7755
        %7781 = vmatprep.subr.bf16.mxu0 0
        %7782 = vmatpush1.bf16.msra.mxu0 %v7754
        %7783 = vmatprep.subr.bf16.mxu0 0
        %7784 = vmatpush1.bf16.msra.mxu0 %v7753
        %7785 = vmatprep.subr.bf16.mxu0 0
        %7786 = vmatpush2.bf16.msra.mxu0 0
        %7787 = vmatprep.subr.bf16.mxu0 0
        %7788 = vmatpush2.bf16.msra.mxu0 0
        %7789 = vmatprep.subr.bf16.mxu0 0
        %7790 = vmatpush2.bf16.msra.mxu0 0
        %7791 = vmatprep.subr.bf16.mxu0 0
        %7792 = vmatpush2.bf16.msra.mxu0 0
        %7793 = vmatprep.subr.bf16.mxu0 0
        %7794 = vmatpush2.bf16.msra.mxu0 0
        %7795 = vmatprep.subr.bf16.mxu0 0
        %7796 = vmatpush2.bf16.msra.mxu0 0
        %7797 = vmatprep.subr.bf16.mxu0 0
        %7798 = vmatpush2.bf16.msra.mxu0 0
        %7799 = vmatprep.subr.bf16.mxu0 0
        %7800 = vmatpush2.bf16.msra.mxu0 0
        %7801 = vmatprep.mubr.bf16.mxu0 0
        %7802 = vmatmul.mubr.bf16.gmra.mxu0 %v5144
        %v7803 = vpop.f32.mrf.mxu0
        %v7804 = vadd.f32 %v7096, %v7803
        %v7805 = vpop.f32.mrf.mxu0
        %v7806 = vpop.f32.mrf.mxu0
        %v7807 = vpop.f32.mrf.mxu0
        %7808 = vdwg.mxu0
        %v7809 = vpack.c.bf16 %v5412, %v5412
        %v7810 = vpack.c.bf16 %v5500, %v5500
        %v7811 = vpack.c.bf16 %v5588, %v5588
        %v7812 = vpack.c.bf16 %v5676, %v5676
        %v7813 = vpack.c.bf16 %v5764, %v5764
        %v7814 = vpack.c.bf16 %v5852, %v5852
        %v7815 = vpack.c.bf16 %v5940, %v5940
        %v7816 = vpack.c.bf16 %v6028, %v6028
        %v7817 = vpack.c.bf16 %v6300, %v6300
        %v7818 = vpack.c.bf16 %v6388, %v6388
        %v7819 = vpack.c.bf16 %v6476, %v6476
        %v7820 = vpack.c.bf16 %v6564, %v6564
        %v7821 = vpack.c.bf16 %v6652, %v6652
        %v7822 = vpack.c.bf16 %v6740, %v6740
        %v7823 = vpack.c.bf16 %v6828, %v6828
        %v7824 = vpack.c.bf16 %v6916, %v6916
        %v7826 = vsel %vm3499, %v7809, 0
        %v7829 = vsel %vm3499, %v7817, 0
        %7831 = vmatprep.subr.bf16.mxu0 0
        %7832 = vmatpush1.bf16.xpose.msra.mxu0 0
        %7833 = vmatprep.subr.bf16.mxu0 0
        %7834 = vmatpush1.bf16.xpose.msra.mxu0 0
        %7835 = vmatprep.subr.bf16.mxu0 0
        %7836 = vmatpush1.bf16.xpose.msra.mxu0 0
        %7837 = vmatprep.subr.bf16.mxu0 0
        %7838 = vmatpush1.bf16.xpose.msra.mxu0 0
        %7839 = vmatprep.subr.bf16.mxu0 0
        %7840 = vmatpush1.bf16.xpose.msra.mxu0 0
        %7841 = vmatprep.subr.bf16.mxu0 0
        %7842 = vmatpush1.bf16.xpose.msra.mxu0 0
        %7843 = vmatprep.subr.bf16.mxu0 0
        %7844 = vmatpush1.bf16.xpose.msra.mxu0 0
        %7845 = vmatprep.subr.bf16.mxu0 0
        %7846 = vmatpush1.bf16.xpose.msra.mxu0 %v7829
        %7847 = vmatprep.subr.bf16.mxu0 0
        %7848 = vmatpush2.bf16.xpose.msra.mxu0 0
        %7849 = vmatprep.subr.bf16.mxu0 0
        %7850 = vmatpush2.bf16.xpose.msra.mxu0 0
        %7851 = vmatprep.subr.bf16.mxu0 0
        %7852 = vmatpush2.bf16.xpose.msra.mxu0 0
        %7853 = vmatprep.subr.bf16.mxu0 0
        %7854 = vmatpush2.bf16.xpose.msra.mxu0 0
        %7855 = vmatprep.subr.bf16.mxu0 0
        %7856 = vmatpush2.bf16.xpose.msra.mxu0 0
        %7857 = vmatprep.subr.bf16.mxu0 0
        %7858 = vmatpush2.bf16.xpose.msra.mxu0 0
        %7859 = vmatprep.subr.bf16.mxu0 0
        %7860 = vmatpush2.bf16.xpose.msra.mxu0 0
        %7861 = vmatprep.subr.bf16.mxu0 0
        %7862 = vmatpush2.bf16.xpose.msra.mxu0 0
        %7863 = vmatprep.mubr.bf16.mxu0 0
        %7864 = vmatmul.mubr.bf16.gmra.mxu0 %v7826
        %v7865 = vpop.f32.mrf.mxu0
        %v7866 = vadd.f32 0.0, %v7865
        %v7867 = vpop.f32.mrf.mxu0
        %v7868 = vpop.f32.mrf.mxu0
        %v7869 = vpop.f32.mrf.mxu0
        %7870 = vdwg.mxu0
        %v7872 = vsel %vm3499, %v7810, 0
        %v7875 = vsel %vm3499, %v7818, 0
        %7877 = vmatprep.subr.bf16.mxu0 0
        %7878 = vmatpush1.bf16.xpose.msra.mxu0 0
        %7879 = vmatprep.subr.bf16.mxu0 0
        %7880 = vmatpush1.bf16.xpose.msra.mxu0 0
        %7881 = vmatprep.subr.bf16.mxu0 0
        %7882 = vmatpush1.bf16.xpose.msra.mxu0 0
        %7883 = vmatprep.subr.bf16.mxu0 0
        %7884 = vmatpush1.bf16.xpose.msra.mxu0 0
        %7885 = vmatprep.subr.bf16.mxu0 0
        %7886 = vmatpush1.bf16.xpose.msra.mxu0 0
        %7887 = vmatprep.subr.bf16.mxu0 0
        %7888 = vmatpush1.bf16.xpose.msra.mxu0 0
        %7889 = vmatprep.subr.bf16.mxu0 0
        %7890 = vmatpush1.bf16.xpose.msra.mxu0 0
        %7891 = vmatprep.subr.bf16.mxu0 0
        %7892 = vmatpush1.bf16.xpose.msra.mxu0 %v7875
        %7893 = vmatprep.subr.bf16.mxu0 0
        %7894 = vmatpush2.bf16.xpose.msra.mxu0 0
        %7895 = vmatprep.subr.bf16.mxu0 0
        %7896 = vmatpush2.bf16.xpose.msra.mxu0 0
        %7897 = vmatprep.subr.bf16.mxu0 0
        %7898 = vmatpush2.bf16.xpose.msra.mxu0 0
        %7899 = vmatprep.subr.bf16.mxu0 0
        %7900 = vmatpush2.bf16.xpose.msra.mxu0 0
        %7901 = vmatprep.subr.bf16.mxu0 0
        %7902 = vmatpush2.bf16.xpose.msra.mxu0 0
        %7903 = vmatprep.subr.bf16.mxu0 0
        %7904 = vmatpush2.bf16.xpose.msra.mxu0 0
        %7905 = vmatprep.subr.bf16.mxu0 0
        %7906 = vmatpush2.bf16.xpose.msra.mxu0 0
        %7907 = vmatprep.subr.bf16.mxu0 0
        %7908 = vmatpush2.bf16.xpose.msra.mxu0 0
        %7909 = vmatprep.mubr.bf16.mxu0 0
        %7910 = vmatmul.mubr.bf16.gmra.mxu0 %v7872
        %v7911 = vpop.f32.mrf.mxu0
        %v7912 = vadd.f32 0.0, %v7911
        %v7913 = vpop.f32.mrf.mxu0
        %v7914 = vpop.f32.mrf.mxu0
        %v7915 = vpop.f32.mrf.mxu0
        %7916 = vdwg.mxu0
        %v7918 = vsel %vm3499, %v7811, 0
        %v7921 = vsel %vm3499, %v7819, 0
        %7923 = vmatprep.subr.bf16.mxu0 0
        %7924 = vmatpush1.bf16.xpose.msra.mxu0 0
        %7925 = vmatprep.subr.bf16.mxu0 0
        %7926 = vmatpush1.bf16.xpose.msra.mxu0 0
        %7927 = vmatprep.subr.bf16.mxu0 0
        %7928 = vmatpush1.bf16.xpose.msra.mxu0 0
        %7929 = vmatprep.subr.bf16.mxu0 0
        %7930 = vmatpush1.bf16.xpose.msra.mxu0 0
        %7931 = vmatprep.subr.bf16.mxu0 0
        %7932 = vmatpush1.bf16.xpose.msra.mxu0 0
        %7933 = vmatprep.subr.bf16.mxu0 0
        %7934 = vmatpush1.bf16.xpose.msra.mxu0 0
        %7935 = vmatprep.subr.bf16.mxu0 0
        %7936 = vmatpush1.bf16.xpose.msra.mxu0 0
        %7937 = vmatprep.subr.bf16.mxu0 0
        %7938 = vmatpush1.bf16.xpose.msra.mxu0 %v7921
        %7939 = vmatprep.subr.bf16.mxu0 0
        %7940 = vmatpush2.bf16.xpose.msra.mxu0 0
        %7941 = vmatprep.subr.bf16.mxu0 0
        %7942 = vmatpush2.bf16.xpose.msra.mxu0 0
        %7943 = vmatprep.subr.bf16.mxu0 0
        %7944 = vmatpush2.bf16.xpose.msra.mxu0 0
        %7945 = vmatprep.subr.bf16.mxu0 0
        %7946 = vmatpush2.bf16.xpose.msra.mxu0 0
        %7947 = vmatprep.subr.bf16.mxu0 0
        %7948 = vmatpush2.bf16.xpose.msra.mxu0 0
        %7949 = vmatprep.subr.bf16.mxu0 0
        %7950 = vmatpush2.bf16.xpose.msra.mxu0 0
        %7951 = vmatprep.subr.bf16.mxu0 0
        %7952 = vmatpush2.bf16.xpose.msra.mxu0 0
        %7953 = vmatprep.subr.bf16.mxu0 0
        %7954 = vmatpush2.bf16.xpose.msra.mxu0 0
        %7955 = vmatprep.mubr.bf16.mxu0 0
        %7956 = vmatmul.mubr.bf16.gmra.mxu0 %v7918
        %v7957 = vpop.f32.mrf.mxu0
        %v7958 = vadd.f32 0.0, %v7957
        %v7959 = vpop.f32.mrf.mxu0
        %v7960 = vpop.f32.mrf.mxu0
        %v7961 = vpop.f32.mrf.mxu0
        %7962 = vdwg.mxu0
        %v7964 = vsel %vm3499, %v7812, 0
        %v7967 = vsel %vm3499, %v7820, 0
        %7969 = vmatprep.subr.bf16.mxu0 0
        %7970 = vmatpush1.bf16.xpose.msra.mxu0 0
        %7971 = vmatprep.subr.bf16.mxu0 0
        %7972 = vmatpush1.bf16.xpose.msra.mxu0 0
        %7973 = vmatprep.subr.bf16.mxu0 0
        %7974 = vmatpush1.bf16.xpose.msra.mxu0 0
        %7975 = vmatprep.subr.bf16.mxu0 0
        %7976 = vmatpush1.bf16.xpose.msra.mxu0 0
        %7977 = vmatprep.subr.bf16.mxu0 0
        %7978 = vmatpush1.bf16.xpose.msra.mxu0 0
        %7979 = vmatprep.subr.bf16.mxu0 0
        %7980 = vmatpush1.bf16.xpose.msra.mxu0 0
        %7981 = vmatprep.subr.bf16.mxu0 0
        %7982 = vmatpush1.bf16.xpose.msra.mxu0 0
        %7983 = vmatprep.subr.bf16.mxu0 0
        %7984 = vmatpush1.bf16.xpose.msra.mxu0 %v7967
        %7985 = vmatprep.subr.bf16.mxu0 0
        %7986 = vmatpush2.bf16.xpose.msra.mxu0 0
        %7987 = vmatprep.subr.bf16.mxu0 0
        %7988 = vmatpush2.bf16.xpose.msra.mxu0 0
        %7989 = vmatprep.subr.bf16.mxu0 0
        %7990 = vmatpush2.bf16.xpose.msra.mxu0 0
        %7991 = vmatprep.subr.bf16.mxu0 0
        %7992 = vmatpush2.bf16.xpose.msra.mxu0 0
        %7993 = vmatprep.subr.bf16.mxu0 0
        %7994 = vmatpush2.bf16.xpose.msra.mxu0 0
        %7995 = vmatprep.subr.bf16.mxu0 0
        %7996 = vmatpush2.bf16.xpose.msra.mxu0 0
        %7997 = vmatprep.subr.bf16.mxu0 0
        %7998 = vmatpush2.bf16.xpose.msra.mxu0 0
        %7999 = vmatprep.subr.bf16.mxu0 0
        %8000 = vmatpush2.bf16.xpose.msra.mxu0 0
        %8001 = vmatprep.mubr.bf16.mxu0 0
        %8002 = vmatmul.mubr.bf16.gmra.mxu0 %v7964
        %v8003 = vpop.f32.mrf.mxu0
        %v8004 = vadd.f32 0.0, %v8003
        %v8005 = vpop.f32.mrf.mxu0
        %v8006 = vpop.f32.mrf.mxu0
        %v8007 = vpop.f32.mrf.mxu0
        %8008 = vdwg.mxu0
        %v8010 = vsel %vm3499, %v7813, 0
        %v8013 = vsel %vm3499, %v7821, 0
        %8015 = vmatprep.subr.bf16.mxu0 0
        %8016 = vmatpush1.bf16.xpose.msra.mxu0 0
        %8017 = vmatprep.subr.bf16.mxu0 0
        %8018 = vmatpush1.bf16.xpose.msra.mxu0 0
        %8019 = vmatprep.subr.bf16.mxu0 0
        %8020 = vmatpush1.bf16.xpose.msra.mxu0 0
        %8021 = vmatprep.subr.bf16.mxu0 0
        %8022 = vmatpush1.bf16.xpose.msra.mxu0 0
        %8023 = vmatprep.subr.bf16.mxu0 0
        %8024 = vmatpush1.bf16.xpose.msra.mxu0 0
        %8025 = vmatprep.subr.bf16.mxu0 0
        %8026 = vmatpush1.bf16.xpose.msra.mxu0 0
        %8027 = vmatprep.subr.bf16.mxu0 0
        %8028 = vmatpush1.bf16.xpose.msra.mxu0 0
        %8029 = vmatprep.subr.bf16.mxu0 0
        %8030 = vmatpush1.bf16.xpose.msra.mxu0 %v8013
        %8031 = vmatprep.subr.bf16.mxu0 0
        %8032 = vmatpush2.bf16.xpose.msra.mxu0 0
        %8033 = vmatprep.subr.bf16.mxu0 0
        %8034 = vmatpush2.bf16.xpose.msra.mxu0 0
        %8035 = vmatprep.subr.bf16.mxu0 0
        %8036 = vmatpush2.bf16.xpose.msra.mxu0 0
        %8037 = vmatprep.subr.bf16.mxu0 0
        %8038 = vmatpush2.bf16.xpose.msra.mxu0 0
        %8039 = vmatprep.subr.bf16.mxu0 0
        %8040 = vmatpush2.bf16.xpose.msra.mxu0 0
        %8041 = vmatprep.subr.bf16.mxu0 0
        %8042 = vmatpush2.bf16.xpose.msra.mxu0 0
        %8043 = vmatprep.subr.bf16.mxu0 0
        %8044 = vmatpush2.bf16.xpose.msra.mxu0 0
        %8045 = vmatprep.subr.bf16.mxu0 0
        %8046 = vmatpush2.bf16.xpose.msra.mxu0 0
        %8047 = vmatprep.mubr.bf16.mxu0 0
        %8048 = vmatmul.mubr.bf16.gmra.mxu0 %v8010
        %v8049 = vpop.f32.mrf.mxu0
        %v8050 = vadd.f32 0.0, %v8049
        %v8051 = vpop.f32.mrf.mxu0
        %v8052 = vpop.f32.mrf.mxu0
        %v8053 = vpop.f32.mrf.mxu0
        %8054 = vdwg.mxu0
        %v8056 = vsel %vm3499, %v7814, 0
        %v8059 = vsel %vm3499, %v7822, 0
        %8061 = vmatprep.subr.bf16.mxu0 0
        %8062 = vmatpush1.bf16.xpose.msra.mxu0 0
        %8063 = vmatprep.subr.bf16.mxu0 0
        %8064 = vmatpush1.bf16.xpose.msra.mxu0 0
        %8065 = vmatprep.subr.bf16.mxu0 0
        %8066 = vmatpush1.bf16.xpose.msra.mxu0 0
        %8067 = vmatprep.subr.bf16.mxu0 0
        %8068 = vmatpush1.bf16.xpose.msra.mxu0 0
        %8069 = vmatprep.subr.bf16.mxu0 0
        %8070 = vmatpush1.bf16.xpose.msra.mxu0 0
        %8071 = vmatprep.subr.bf16.mxu0 0
        %8072 = vmatpush1.bf16.xpose.msra.mxu0 0
        %8073 = vmatprep.subr.bf16.mxu0 0
        %8074 = vmatpush1.bf16.xpose.msra.mxu0 0
        %8075 = vmatprep.subr.bf16.mxu0 0
        %8076 = vmatpush1.bf16.xpose.msra.mxu0 %v8059
        %8077 = vmatprep.subr.bf16.mxu0 0
        %8078 = vmatpush2.bf16.xpose.msra.mxu0 0
        %8079 = vmatprep.subr.bf16.mxu0 0
        %8080 = vmatpush2.bf16.xpose.msra.mxu0 0
        %8081 = vmatprep.subr.bf16.mxu0 0
        %8082 = vmatpush2.bf16.xpose.msra.mxu0 0
        %8083 = vmatprep.subr.bf16.mxu0 0
        %8084 = vmatpush2.bf16.xpose.msra.mxu0 0
        %8085 = vmatprep.subr.bf16.mxu0 0
        %8086 = vmatpush2.bf16.xpose.msra.mxu0 0
        %8087 = vmatprep.subr.bf16.mxu0 0
        %8088 = vmatpush2.bf16.xpose.msra.mxu0 0
        %8089 = vmatprep.subr.bf16.mxu0 0
        %8090 = vmatpush2.bf16.xpose.msra.mxu0 0
        %8091 = vmatprep.subr.bf16.mxu0 0
        %8092 = vmatpush2.bf16.xpose.msra.mxu0 0
        %8093 = vmatprep.mubr.bf16.mxu0 0
        %8094 = vmatmul.mubr.bf16.gmra.mxu0 %v8056
        %v8095 = vpop.f32.mrf.mxu0
        %v8096 = vadd.f32 0.0, %v8095
        %v8097 = vpop.f32.mrf.mxu0
        %v8098 = vpop.f32.mrf.mxu0
        %v8099 = vpop.f32.mrf.mxu0
        %8100 = vdwg.mxu0
        %v8102 = vsel %vm3499, %v7815, 0
        %v8105 = vsel %vm3499, %v7823, 0
        %8107 = vmatprep.subr.bf16.mxu0 0
        %8108 = vmatpush1.bf16.xpose.msra.mxu0 0
        %8109 = vmatprep.subr.bf16.mxu0 0
        %8110 = vmatpush1.bf16.xpose.msra.mxu0 0
        %8111 = vmatprep.subr.bf16.mxu0 0
        %8112 = vmatpush1.bf16.xpose.msra.mxu0 0
        %8113 = vmatprep.subr.bf16.mxu0 0
        %8114 = vmatpush1.bf16.xpose.msra.mxu0 0
        %8115 = vmatprep.subr.bf16.mxu0 0
        %8116 = vmatpush1.bf16.xpose.msra.mxu0 0
        %8117 = vmatprep.subr.bf16.mxu0 0
        %8118 = vmatpush1.bf16.xpose.msra.mxu0 0
        %8119 = vmatprep.subr.bf16.mxu0 0
        %8120 = vmatpush1.bf16.xpose.msra.mxu0 0
        %8121 = vmatprep.subr.bf16.mxu0 0
        %8122 = vmatpush1.bf16.xpose.msra.mxu0 %v8105
        %8123 = vmatprep.subr.bf16.mxu0 0
        %8124 = vmatpush2.bf16.xpose.msra.mxu0 0
        %8125 = vmatprep.subr.bf16.mxu0 0
        %8126 = vmatpush2.bf16.xpose.msra.mxu0 0
        %8127 = vmatprep.subr.bf16.mxu0 0
        %8128 = vmatpush2.bf16.xpose.msra.mxu0 0
        %8129 = vmatprep.subr.bf16.mxu0 0
        %8130 = vmatpush2.bf16.xpose.msra.mxu0 0
        %8131 = vmatprep.subr.bf16.mxu0 0
        %8132 = vmatpush2.bf16.xpose.msra.mxu0 0
        %8133 = vmatprep.subr.bf16.mxu0 0
        %8134 = vmatpush2.bf16.xpose.msra.mxu0 0
        %8135 = vmatprep.subr.bf16.mxu0 0
        %8136 = vmatpush2.bf16.xpose.msra.mxu0 0
        %8137 = vmatprep.subr.bf16.mxu0 0
        %8138 = vmatpush2.bf16.xpose.msra.mxu0 0
        %8139 = vmatprep.mubr.bf16.mxu0 0
        %8140 = vmatmul.mubr.bf16.gmra.mxu0 %v8102
        %v8141 = vpop.f32.mrf.mxu0
        %v8142 = vadd.f32 0.0, %v8141
        %v8143 = vpop.f32.mrf.mxu0
        %v8144 = vpop.f32.mrf.mxu0
        %v8145 = vpop.f32.mrf.mxu0
        %8146 = vdwg.mxu0
        %v8148 = vsel %vm3499, %v7816, 0
        %v8151 = vsel %vm3499, %v7824, 0
        %8153 = vmatprep.subr.bf16.mxu0 0
        %8154 = vmatpush1.bf16.xpose.msra.mxu0 0
        %8155 = vmatprep.subr.bf16.mxu0 0
        %8156 = vmatpush1.bf16.xpose.msra.mxu0 0
        %8157 = vmatprep.subr.bf16.mxu0 0
        %8158 = vmatpush1.bf16.xpose.msra.mxu0 0
        %8159 = vmatprep.subr.bf16.mxu0 0
        %8160 = vmatpush1.bf16.xpose.msra.mxu0 0
        %8161 = vmatprep.subr.bf16.mxu0 0
        %8162 = vmatpush1.bf16.xpose.msra.mxu0 0
        %8163 = vmatprep.subr.bf16.mxu0 0
        %8164 = vmatpush1.bf16.xpose.msra.mxu0 0
        %8165 = vmatprep.subr.bf16.mxu0 0
        %8166 = vmatpush1.bf16.xpose.msra.mxu0 0
        %8167 = vmatprep.subr.bf16.mxu0 0
        %8168 = vmatpush1.bf16.xpose.msra.mxu0 %v8151
        %8169 = vmatprep.subr.bf16.mxu0 0
        %8170 = vmatpush2.bf16.xpose.msra.mxu0 0
        %8171 = vmatprep.subr.bf16.mxu0 0
        %8172 = vmatpush2.bf16.xpose.msra.mxu0 0
        %8173 = vmatprep.subr.bf16.mxu0 0
        %8174 = vmatpush2.bf16.xpose.msra.mxu0 0
        %8175 = vmatprep.subr.bf16.mxu0 0
        %8176 = vmatpush2.bf16.xpose.msra.mxu0 0
        %8177 = vmatprep.subr.bf16.mxu0 0
        %8178 = vmatpush2.bf16.xpose.msra.mxu0 0
        %8179 = vmatprep.subr.bf16.mxu0 0
        %8180 = vmatpush2.bf16.xpose.msra.mxu0 0
        %8181 = vmatprep.subr.bf16.mxu0 0
        %8182 = vmatpush2.bf16.xpose.msra.mxu0 0
        %8183 = vmatprep.subr.bf16.mxu0 0
        %8184 = vmatpush2.bf16.xpose.msra.mxu0 0
        %8185 = vmatprep.mubr.bf16.mxu0 0
        %8186 = vmatmul.mubr.bf16.gmra.mxu0 %v8148
        %v8187 = vpop.f32.mrf.mxu0
        %v8188 = vadd.f32 0.0, %v8187
        %v8189 = vpop.f32.mrf.mxu0
        %v8190 = vpop.f32.mrf.mxu0
        %v8191 = vpop.f32.mrf.mxu0
        %8192 = vdwg.mxu0
        %v8193 = vsel %vm3868, %v7866, -inf
        %8194 = vmax.xlane.f32.xlu0 %v8193
        %v8195 = vpop.xlane.xlu0 %8194
        %v8196 = vsel %vm3868, %v7912, -inf
        %8197 = vmax.xlane.f32.xlu0 %v8196
        %v8198 = vpop.xlane.xlu0 %8197
        %v8199 = vsel %vm3868, %v7958, -inf
        %8200 = vmax.xlane.f32.xlu0 %v8199
        %v8201 = vpop.xlane.xlu0 %8200
        %v8202 = vsel %vm3868, %v8004, -inf
        %8203 = vmax.xlane.f32.xlu0 %v8202
        %v8204 = vpop.xlane.xlu0 %8203
        %v8205 = vsel %vm3868, %v8050, -inf
        %8206 = vmax.xlane.f32.xlu0 %v8205
        %v8207 = vpop.xlane.xlu0 %8206
        %v8208 = vsel %vm3868, %v8096, -inf
        %8209 = vmax.xlane.f32.xlu0 %v8208
        %v8210 = vpop.xlane.xlu0 %8209
        %v8211 = vsel %vm3868, %v8142, -inf
        %8212 = vmax.xlane.f32.xlu0 %v8211
        %v8213 = vpop.xlane.xlu0 %8212
        %v8214 = vsel %vm3868, %v8188, -inf
        %8215 = vmax.xlane.f32.xlu0 %v8214
        %v8216 = vpop.xlane.xlu0 %8215
        %v8217 = vsub.f32 %v7866, %v8195
        %v8218 = vsub.f32 %v7912, %v8198
        %v8219 = vsub.f32 %v7958, %v8201
        %v8220 = vsub.f32 %v8004, %v8204
        %v8221 = vsub.f32 %v8050, %v8207
        %v8222 = vsub.f32 %v8096, %v8210
        %v8223 = vsub.f32 %v8142, %v8213
        %v8224 = vsub.f32 %v8188, %v8216
        %v8225 = vmul.f32 %v8217, 1.442695
        %v8226 = vpow.pop %v8225
        %v8227 = vmul.f32 %v8218, 1.442695
        %v8228 = vpow.pop %v8227
        %v8229 = vmul.f32 %v8219, 1.442695
        %v8230 = vpow.pop %v8229
        %v8231 = vmul.f32 %v8220, 1.442695
        %v8232 = vpow.pop %v8231
        %v8233 = vmul.f32 %v8221, 1.442695
        %v8234 = vpow.pop %v8233
        %v8235 = vmul.f32 %v8222, 1.442695
        %v8236 = vpow.pop %v8235
        %v8237 = vmul.f32 %v8223, 1.442695
        %v8238 = vpow.pop %v8237
        %v8239 = vmul.f32 %v8224, 1.442695
        %v8240 = vpow.pop %v8239
        %v8241 = vsel %vm3868, %v8226, 0.0
        %8242 = vadd.xlane.f32.xlu0 %v8241
        %v8243 = vpop.xlane.xlu0 %8242
        %v8244 = vsel %vm3868, %v8228, 0.0
        %8245 = vadd.xlane.f32.xlu0 %v8244
        %v8246 = vpop.xlane.xlu0 %8245
        %v8247 = vsel %vm3868, %v8230, 0.0
        %8248 = vadd.xlane.f32.xlu0 %v8247
        %v8249 = vpop.xlane.xlu0 %8248
        %v8250 = vsel %vm3868, %v8232, 0.0
        %8251 = vadd.xlane.f32.xlu0 %v8250
        %v8252 = vpop.xlane.xlu0 %8251
        %v8253 = vsel %vm3868, %v8234, 0.0
        %8254 = vadd.xlane.f32.xlu0 %v8253
        %v8255 = vpop.xlane.xlu0 %8254
        %v8256 = vsel %vm3868, %v8236, 0.0
        %8257 = vadd.xlane.f32.xlu0 %v8256
        %v8258 = vpop.xlane.xlu0 %8257
        %v8259 = vsel %vm3868, %v8238, 0.0
        %8260 = vadd.xlane.f32.xlu0 %v8259
        %v8261 = vpop.xlane.xlu0 %8260
        %v8262 = vsel %vm3868, %v8240, 0.0
        %8263 = vadd.xlane.f32.xlu0 %v8262
        %v8264 = vpop.xlane.xlu0 %8263
        %v8265 = vrcp.pop %v8243
        %v8266 = vrcp.pop %v8246
        %v8267 = vrcp.pop %v8249
        %v8268 = vrcp.pop %v8252
        %v8269 = vrcp.pop %v8255
        %v8270 = vrcp.pop %v8258
        %v8271 = vrcp.pop %v8261
        %v8272 = vrcp.pop %v8264
        %v8273 = vmul.f32 %v8226, %v8265
        %v8274 = vmul.f32 %v8228, %v8266
        %v8275 = vmul.f32 %v8230, %v8267
        %v8276 = vmul.f32 %v8232, %v8268
        %v8277 = vmul.f32 %v8234, %v8269
        %v8278 = vmul.f32 %v8236, %v8270
        %v8279 = vmul.f32 %v8238, %v8271
        %v8280 = vmul.f32 %v8240, %v8272
        %v8281 = vpack.c.bf16 %v8273, %v8273
        %v8282 = vpack.c.bf16 %v8274, %v8274
        %v8283 = vpack.c.bf16 %v8275, %v8275
        %v8284 = vpack.c.bf16 %v8276, %v8276
        %v8285 = vpack.c.bf16 %v8277, %v8277
        %v8286 = vpack.c.bf16 %v8278, %v8278
        %v8287 = vpack.c.bf16 %v8279, %v8279
        %v8288 = vpack.c.bf16 %v8280, %v8280
        %v8289 = vpack.c.bf16 %v7188, %v7188
        %v8290 = vpack.c.bf16 %v7276, %v7276
        %v8291 = vpack.c.bf16 %v7364, %v7364
        %v8292 = vpack.c.bf16 %v7452, %v7452
        %v8293 = vpack.c.bf16 %v7540, %v7540
        %v8294 = vpack.c.bf16 %v7628, %v7628
        %v8295 = vpack.c.bf16 %v7716, %v7716
        %v8296 = vpack.c.bf16 %v7804, %v7804
        %v8298 = vsel %vm3868, %v8281, 0
        %v8301 = vsel %vm3976, %v8289, 0
        %8303 = vmatprep.subr.bf16.mxu0 0
        %8304 = vmatpush1.bf16.msra.mxu0 0
        %8305 = vmatprep.subr.bf16.mxu0 0
        %8306 = vmatpush1.bf16.msra.mxu0 0
        %8307 = vmatprep.subr.bf16.mxu0 0
        %8308 = vmatpush1.bf16.msra.mxu0 0
        %8309 = vmatprep.subr.bf16.mxu0 0
        %8310 = vmatpush1.bf16.msra.mxu0 0
        %8311 = vmatprep.subr.bf16.mxu0 0
        %8312 = vmatpush1.bf16.msra.mxu0 0
        %8313 = vmatprep.subr.bf16.mxu0 0
        %8314 = vmatpush1.bf16.msra.mxu0 0
        %8315 = vmatprep.subr.bf16.mxu0 0
        %8316 = vmatpush1.bf16.msra.mxu0 0
        %8317 = vmatprep.subr.bf16.mxu0 0
        %8318 = vmatpush1.bf16.msra.mxu0 %v8301
        %8319 = vmatprep.subr.bf16.mxu0 0
        %8320 = vmatpush2.bf16.msra.mxu0 0
        %8321 = vmatprep.subr.bf16.mxu0 0
        %8322 = vmatpush2.bf16.msra.mxu0 0
        %8323 = vmatprep.subr.bf16.mxu0 0
        %8324 = vmatpush2.bf16.msra.mxu0 0
        %8325 = vmatprep.subr.bf16.mxu0 0
        %8326 = vmatpush2.bf16.msra.mxu0 0
        %8327 = vmatprep.subr.bf16.mxu0 0
        %8328 = vmatpush2.bf16.msra.mxu0 0
        %8329 = vmatprep.subr.bf16.mxu0 0
        %8330 = vmatpush2.bf16.msra.mxu0 0
        %8331 = vmatprep.subr.bf16.mxu0 0
        %8332 = vmatpush2.bf16.msra.mxu0 0
        %8333 = vmatprep.subr.bf16.mxu0 0
        %8334 = vmatpush2.bf16.msra.mxu0 0
        %8335 = vmatprep.mubr.bf16.mxu0 0
        %8336 = vmatmul.mubr.bf16.gmra.mxu0 %v8298
        %v8337 = vpop.f32.mrf.mxu0
        %v8338 = vadd.f32 0.0, %v8337
        %v8339 = vpop.f32.mrf.mxu0
        %v8340 = vpop.f32.mrf.mxu0
        %v8341 = vpop.f32.mrf.mxu0
        %8342 = vdwg.mxu0
        %v8344 = vsel %vm3868, %v8282, 0
        %v8347 = vsel %vm3976, %v8290, 0
        %8349 = vmatprep.subr.bf16.mxu0 0
        %8350 = vmatpush1.bf16.msra.mxu0 0
        %8351 = vmatprep.subr.bf16.mxu0 0
        %8352 = vmatpush1.bf16.msra.mxu0 0
        %8353 = vmatprep.subr.bf16.mxu0 0
        %8354 = vmatpush1.bf16.msra.mxu0 0
        %8355 = vmatprep.subr.bf16.mxu0 0
        %8356 = vmatpush1.bf16.msra.mxu0 0
        %8357 = vmatprep.subr.bf16.mxu0 0
        %8358 = vmatpush1.bf16.msra.mxu0 0
        %8359 = vmatprep.subr.bf16.mxu0 0
        %8360 = vmatpush1.bf16.msra.mxu0 0
        %8361 = vmatprep.subr.bf16.mxu0 0
        %8362 = vmatpush1.bf16.msra.mxu0 0
        %8363 = vmatprep.subr.bf16.mxu0 0
        %8364 = vmatpush1.bf16.msra.mxu0 %v8347
        %8365 = vmatprep.subr.bf16.mxu0 0
        %8366 = vmatpush2.bf16.msra.mxu0 0
        %8367 = vmatprep.subr.bf16.mxu0 0
        %8368 = vmatpush2.bf16.msra.mxu0 0
        %8369 = vmatprep.subr.bf16.mxu0 0
        %8370 = vmatpush2.bf16.msra.mxu0 0
        %8371 = vmatprep.subr.bf16.mxu0 0
        %8372 = vmatpush2.bf16.msra.mxu0 0
        %8373 = vmatprep.subr.bf16.mxu0 0
        %8374 = vmatpush2.bf16.msra.mxu0 0
        %8375 = vmatprep.subr.bf16.mxu0 0
        %8376 = vmatpush2.bf16.msra.mxu0 0
        %8377 = vmatprep.subr.bf16.mxu0 0
        %8378 = vmatpush2.bf16.msra.mxu0 0
        %8379 = vmatprep.subr.bf16.mxu0 0
        %8380 = vmatpush2.bf16.msra.mxu0 0
        %8381 = vmatprep.mubr.bf16.mxu0 0
        %8382 = vmatmul.mubr.bf16.gmra.mxu0 %v8344
        %v8383 = vpop.f32.mrf.mxu0
        %v8384 = vadd.f32 0.0, %v8383
        %v8385 = vpop.f32.mrf.mxu0
        %v8386 = vpop.f32.mrf.mxu0
        %v8387 = vpop.f32.mrf.mxu0
        %8388 = vdwg.mxu0
        %v8390 = vsel %vm3868, %v8283, 0
        %v8393 = vsel %vm3976, %v8291, 0
        %8395 = vmatprep.subr.bf16.mxu0 0
        %8396 = vmatpush1.bf16.msra.mxu0 0
        %8397 = vmatprep.subr.bf16.mxu0 0
        %8398 = vmatpush1.bf16.msra.mxu0 0
        %8399 = vmatprep.subr.bf16.mxu0 0
        %8400 = vmatpush1.bf16.msra.mxu0 0
        %8401 = vmatprep.subr.bf16.mxu0 0
        %8402 = vmatpush1.bf16.msra.mxu0 0
        %8403 = vmatprep.subr.bf16.mxu0 0
        %8404 = vmatpush1.bf16.msra.mxu0 0
        %8405 = vmatprep.subr.bf16.mxu0 0
        %8406 = vmatpush1.bf16.msra.mxu0 0
        %8407 = vmatprep.subr.bf16.mxu0 0
        %8408 = vmatpush1.bf16.msra.mxu0 0
        %8409 = vmatprep.subr.bf16.mxu0 0
        %8410 = vmatpush1.bf16.msra.mxu0 %v8393
        %8411 = vmatprep.subr.bf16.mxu0 0
        %8412 = vmatpush2.bf16.msra.mxu0 0
        %8413 = vmatprep.subr.bf16.mxu0 0
        %8414 = vmatpush2.bf16.msra.mxu0 0
        %8415 = vmatprep.subr.bf16.mxu0 0
        %8416 = vmatpush2.bf16.msra.mxu0 0
        %8417 = vmatprep.subr.bf16.mxu0 0
        %8418 = vmatpush2.bf16.msra.mxu0 0
        %8419 = vmatprep.subr.bf16.mxu0 0
        %8420 = vmatpush2.bf16.msra.mxu0 0
        %8421 = vmatprep.subr.bf16.mxu0 0
        %8422 = vmatpush2.bf16.msra.mxu0 0
        %8423 = vmatprep.subr.bf16.mxu0 0
        %8424 = vmatpush2.bf16.msra.mxu0 0
        %8425 = vmatprep.subr.bf16.mxu0 0
        %8426 = vmatpush2.bf16.msra.mxu0 0
        %8427 = vmatprep.mubr.bf16.mxu0 0
        %8428 = vmatmul.mubr.bf16.gmra.mxu0 %v8390
        %v8429 = vpop.f32.mrf.mxu0
        %v8430 = vadd.f32 0.0, %v8429
        %v8431 = vpop.f32.mrf.mxu0
        %v8432 = vpop.f32.mrf.mxu0
        %v8433 = vpop.f32.mrf.mxu0
        %8434 = vdwg.mxu0
        %v8436 = vsel %vm3868, %v8284, 0
        %v8439 = vsel %vm3976, %v8292, 0
        %8441 = vmatprep.subr.bf16.mxu0 0
        %8442 = vmatpush1.bf16.msra.mxu0 0
        %8443 = vmatprep.subr.bf16.mxu0 0
        %8444 = vmatpush1.bf16.msra.mxu0 0
        %8445 = vmatprep.subr.bf16.mxu0 0
        %8446 = vmatpush1.bf16.msra.mxu0 0
        %8447 = vmatprep.subr.bf16.mxu0 0
        %8448 = vmatpush1.bf16.msra.mxu0 0
        %8449 = vmatprep.subr.bf16.mxu0 0
        %8450 = vmatpush1.bf16.msra.mxu0 0
        %8451 = vmatprep.subr.bf16.mxu0 0
        %8452 = vmatpush1.bf16.msra.mxu0 0
        %8453 = vmatprep.subr.bf16.mxu0 0
        %8454 = vmatpush1.bf16.msra.mxu0 0
        %8455 = vmatprep.subr.bf16.mxu0 0
        %8456 = vmatpush1.bf16.msra.mxu0 %v8439
        %8457 = vmatprep.subr.bf16.mxu0 0
        %8458 = vmatpush2.bf16.msra.mxu0 0
        %8459 = vmatprep.subr.bf16.mxu0 0
        %8460 = vmatpush2.bf16.msra.mxu0 0
        %8461 = vmatprep.subr.bf16.mxu0 0
        %8462 = vmatpush2.bf16.msra.mxu0 0
        %8463 = vmatprep.subr.bf16.mxu0 0
        %8464 = vmatpush2.bf16.msra.mxu0 0
        %8465 = vmatprep.subr.bf16.mxu0 0
        %8466 = vmatpush2.bf16.msra.mxu0 0
        %8467 = vmatprep.subr.bf16.mxu0 0
        %8468 = vmatpush2.bf16.msra.mxu0 0
        %8469 = vmatprep.subr.bf16.mxu0 0
        %8470 = vmatpush2.bf16.msra.mxu0 0
        %8471 = vmatprep.subr.bf16.mxu0 0
        %8472 = vmatpush2.bf16.msra.mxu0 0
        %8473 = vmatprep.mubr.bf16.mxu0 0
        %8474 = vmatmul.mubr.bf16.gmra.mxu0 %v8436
        %v8475 = vpop.f32.mrf.mxu0
        %v8476 = vadd.f32 0.0, %v8475
        %v8477 = vpop.f32.mrf.mxu0
        %v8478 = vpop.f32.mrf.mxu0
        %v8479 = vpop.f32.mrf.mxu0
        %8480 = vdwg.mxu0
        %v8482 = vsel %vm3868, %v8285, 0
        %v8485 = vsel %vm3976, %v8293, 0
        %8487 = vmatprep.subr.bf16.mxu0 0
        %8488 = vmatpush1.bf16.msra.mxu0 0
        %8489 = vmatprep.subr.bf16.mxu0 0
        %8490 = vmatpush1.bf16.msra.mxu0 0
        %8491 = vmatprep.subr.bf16.mxu0 0
        %8492 = vmatpush1.bf16.msra.mxu0 0
        %8493 = vmatprep.subr.bf16.mxu0 0
        %8494 = vmatpush1.bf16.msra.mxu0 0
        %8495 = vmatprep.subr.bf16.mxu0 0
        %8496 = vmatpush1.bf16.msra.mxu0 0
        %8497 = vmatprep.subr.bf16.mxu0 0
        %8498 = vmatpush1.bf16.msra.mxu0 0
        %8499 = vmatprep.subr.bf16.mxu0 0
        %8500 = vmatpush1.bf16.msra.mxu0 0
        %8501 = vmatprep.subr.bf16.mxu0 0
        %8502 = vmatpush1.bf16.msra.mxu0 %v8485
        %8503 = vmatprep.subr.bf16.mxu0 0
        %8504 = vmatpush2.bf16.msra.mxu0 0
        %8505 = vmatprep.subr.bf16.mxu0 0
        %8506 = vmatpush2.bf16.msra.mxu0 0
        %8507 = vmatprep.subr.bf16.mxu0 0
        %8508 = vmatpush2.bf16.msra.mxu0 0
        %8509 = vmatprep.subr.bf16.mxu0 0
        %8510 = vmatpush2.bf16.msra.mxu0 0
        %8511 = vmatprep.subr.bf16.mxu0 0
        %8512 = vmatpush2.bf16.msra.mxu0 0
        %8513 = vmatprep.subr.bf16.mxu0 0
        %8514 = vmatpush2.bf16.msra.mxu0 0
        %8515 = vmatprep.subr.bf16.mxu0 0
        %8516 = vmatpush2.bf16.msra.mxu0 0
        %8517 = vmatprep.subr.bf16.mxu0 0
        %8518 = vmatpush2.bf16.msra.mxu0 0
        %8519 = vmatprep.mubr.bf16.mxu0 0
        %8520 = vmatmul.mubr.bf16.gmra.mxu0 %v8482
        %v8521 = vpop.f32.mrf.mxu0
        %v8522 = vadd.f32 0.0, %v8521
        %v8523 = vpop.f32.mrf.mxu0
        %v8524 = vpop.f32.mrf.mxu0
        %v8525 = vpop.f32.mrf.mxu0
        %8526 = vdwg.mxu0
        %v8528 = vsel %vm3868, %v8286, 0
        %v8531 = vsel %vm3976, %v8294, 0
        %8533 = vmatprep.subr.bf16.mxu0 0
        %8534 = vmatpush1.bf16.msra.mxu0 0
        %8535 = vmatprep.subr.bf16.mxu0 0
        %8536 = vmatpush1.bf16.msra.mxu0 0
        %8537 = vmatprep.subr.bf16.mxu0 0
        %8538 = vmatpush1.bf16.msra.mxu0 0
        %8539 = vmatprep.subr.bf16.mxu0 0
        %8540 = vmatpush1.bf16.msra.mxu0 0
        %8541 = vmatprep.subr.bf16.mxu0 0
        %8542 = vmatpush1.bf16.msra.mxu0 0
        %8543 = vmatprep.subr.bf16.mxu0 0
        %8544 = vmatpush1.bf16.msra.mxu0 0
        %8545 = vmatprep.subr.bf16.mxu0 0
        %8546 = vmatpush1.bf16.msra.mxu0 0
        %8547 = vmatprep.subr.bf16.mxu0 0
        %8548 = vmatpush1.bf16.msra.mxu0 %v8531
        %8549 = vmatprep.subr.bf16.mxu0 0
        %8550 = vmatpush2.bf16.msra.mxu0 0
        %8551 = vmatprep.subr.bf16.mxu0 0
        %8552 = vmatpush2.bf16.msra.mxu0 0
        %8553 = vmatprep.subr.bf16.mxu0 0
        %8554 = vmatpush2.bf16.msra.mxu0 0
        %8555 = vmatprep.subr.bf16.mxu0 0
        %8556 = vmatpush2.bf16.msra.mxu0 0
        %8557 = vmatprep.subr.bf16.mxu0 0
        %8558 = vmatpush2.bf16.msra.mxu0 0
        %8559 = vmatprep.subr.bf16.mxu0 0
        %8560 = vmatpush2.bf16.msra.mxu0 0
        %8561 = vmatprep.subr.bf16.mxu0 0
        %8562 = vmatpush2.bf16.msra.mxu0 0
        %8563 = vmatprep.subr.bf16.mxu0 0
        %8564 = vmatpush2.bf16.msra.mxu0 0
        %8565 = vmatprep.mubr.bf16.mxu0 0
        %8566 = vmatmul.mubr.bf16.gmra.mxu0 %v8528
        %v8567 = vpop.f32.mrf.mxu0
        %v8568 = vadd.f32 0.0, %v8567
        %v8569 = vpop.f32.mrf.mxu0
        %v8570 = vpop.f32.mrf.mxu0
        %v8571 = vpop.f32.mrf.mxu0
        %8572 = vdwg.mxu0
        %v8574 = vsel %vm3868, %v8287, 0
        %v8577 = vsel %vm3976, %v8295, 0
        %8579 = vmatprep.subr.bf16.mxu0 0
        %8580 = vmatpush1.bf16.msra.mxu0 0
        %8581 = vmatprep.subr.bf16.mxu0 0
        %8582 = vmatpush1.bf16.msra.mxu0 0
        %8583 = vmatprep.subr.bf16.mxu0 0
        %8584 = vmatpush1.bf16.msra.mxu0 0
        %8585 = vmatprep.subr.bf16.mxu0 0
        %8586 = vmatpush1.bf16.msra.mxu0 0
        %8587 = vmatprep.subr.bf16.mxu0 0
        %8588 = vmatpush1.bf16.msra.mxu0 0
        %8589 = vmatprep.subr.bf16.mxu0 0
        %8590 = vmatpush1.bf16.msra.mxu0 0
        %8591 = vmatprep.subr.bf16.mxu0 0
        %8592 = vmatpush1.bf16.msra.mxu0 0
        %8593 = vmatprep.subr.bf16.mxu0 0
        %8594 = vmatpush1.bf16.msra.mxu0 %v8577
        %8595 = vmatprep.subr.bf16.mxu0 0
        %8596 = vmatpush2.bf16.msra.mxu0 0
        %8597 = vmatprep.subr.bf16.mxu0 0
        %8598 = vmatpush2.bf16.msra.mxu0 0
        %8599 = vmatprep.subr.bf16.mxu0 0
        %8600 = vmatpush2.bf16.msra.mxu0 0
        %8601 = vmatprep.subr.bf16.mxu0 0
        %8602 = vmatpush2.bf16.msra.mxu0 0
        %8603 = vmatprep.subr.bf16.mxu0 0
        %8604 = vmatpush2.bf16.msra.mxu0 0
        %8605 = vmatprep.subr.bf16.mxu0 0
        %8606 = vmatpush2.bf16.msra.mxu0 0
        %8607 = vmatprep.subr.bf16.mxu0 0
        %8608 = vmatpush2.bf16.msra.mxu0 0
        %8609 = vmatprep.subr.bf16.mxu0 0
        %8610 = vmatpush2.bf16.msra.mxu0 0
        %8611 = vmatprep.mubr.bf16.mxu0 0
        %8612 = vmatmul.mubr.bf16.gmra.mxu0 %v8574
        %v8613 = vpop.f32.mrf.mxu0
        %v8614 = vadd.f32 0.0, %v8613
        %v8615 = vpop.f32.mrf.mxu0
        %v8616 = vpop.f32.mrf.mxu0
        %v8617 = vpop.f32.mrf.mxu0
        %8618 = vdwg.mxu0
        %v8620 = vsel %vm3868, %v8288, 0
        %v8623 = vsel %vm3976, %v8296, 0
        %8625 = vmatprep.subr.bf16.mxu0 0
        %8626 = vmatpush1.bf16.msra.mxu0 0
        %8627 = vmatprep.subr.bf16.mxu0 0
        %8628 = vmatpush1.bf16.msra.mxu0 0
        %8629 = vmatprep.subr.bf16.mxu0 0
        %8630 = vmatpush1.bf16.msra.mxu0 0
        %8631 = vmatprep.subr.bf16.mxu0 0
        %8632 = vmatpush1.bf16.msra.mxu0 0
        %8633 = vmatprep.subr.bf16.mxu0 0
        %8634 = vmatpush1.bf16.msra.mxu0 0
        %8635 = vmatprep.subr.bf16.mxu0 0
        %8636 = vmatpush1.bf16.msra.mxu0 0
        %8637 = vmatprep.subr.bf16.mxu0 0
        %8638 = vmatpush1.bf16.msra.mxu0 0
        %8639 = vmatprep.subr.bf16.mxu0 0
        %8640 = vmatpush1.bf16.msra.mxu0 %v8623
        %8641 = vmatprep.subr.bf16.mxu0 0
        %8642 = vmatpush2.bf16.msra.mxu0 0
        %8643 = vmatprep.subr.bf16.mxu0 0
        %8644 = vmatpush2.bf16.msra.mxu0 0
        %8645 = vmatprep.subr.bf16.mxu0 0
        %8646 = vmatpush2.bf16.msra.mxu0 0
        %8647 = vmatprep.subr.bf16.mxu0 0
        %8648 = vmatpush2.bf16.msra.mxu0 0
        %8649 = vmatprep.subr.bf16.mxu0 0
        %8650 = vmatpush2.bf16.msra.mxu0 0
        %8651 = vmatprep.subr.bf16.mxu0 0
        %8652 = vmatpush2.bf16.msra.mxu0 0
        %8653 = vmatprep.subr.bf16.mxu0 0
        %8654 = vmatpush2.bf16.msra.mxu0 0
        %8655 = vmatprep.subr.bf16.mxu0 0
        %8656 = vmatpush2.bf16.msra.mxu0 0
        %8657 = vmatprep.mubr.bf16.mxu0 0
        %8658 = vmatmul.mubr.bf16.gmra.mxu0 %v8620
        %v8659 = vpop.f32.mrf.mxu0
        %v8660 = vadd.f32 0.0, %v8659
        %v8661 = vpop.f32.mrf.mxu0
        %v8662 = vpop.f32.mrf.mxu0
        %v8663 = vpop.f32.mrf.mxu0
        %8664 = vdwg.mxu0
        %v8665 = vpack.c.bf16 %v8338, %v8338
        %v8666 = vpack.c.bf16 %v8384, %v8384
        %v8667 = vpack.c.bf16 %v8430, %v8430
        %v8668 = vpack.c.bf16 %v8476, %v8476
        %v8669 = vpack.c.bf16 %v8522, %v8522
        %v8670 = vpack.c.bf16 %v8568, %v8568
        %v8671 = vpack.c.bf16 %v8614, %v8614
        %v8672 = vpack.c.bf16 %v8660, %v8660
        %v8673 = vld [vmem:[%s19] sm:$0xf]
        %v8674 = vld [vmem:[%s19 + $0x4] sm:$0xf]
        %v8675 = vld [vmem:[%s19 + $0x8] sm:$0xf]
        %v8676 = vld [vmem:[%s19 + $0xc] sm:$0xf]
        %v8677 = vld [vmem:[%s19 + $0x10] sm:$0xf]
        %v8678 = vld [vmem:[%s19 + $0x14] sm:$0xf]
        %v8679 = vld [vmem:[%s19 + $0x18] sm:$0xf]
        %v8680 = vld [vmem:[%s19 + $0x1c] sm:$0xf]
        %v8681 = vld [vmem:[%s19 + $0x20] sm:$0xf]
        %v8682 = vld [vmem:[%s19 + $0x24] sm:$0xf]
        %v8683 = vld [vmem:[%s19 + $0x28] sm:$0xf]
        %v8684 = vld [vmem:[%s19 + $0x2c] sm:$0xf]
        %v8685 = vld [vmem:[%s19 + $0x30] sm:$0xf]
        %v8686 = vld [vmem:[%s19 + $0x34] sm:$0xf]
        %v8687 = vld [vmem:[%s19 + $0x38] sm:$0xf]
        %v8688 = vld [vmem:[%s19 + $0x3c] sm:$0xf]
        %v8691 = vunpack.c.l.b16 %v8673
        %v8692 = vunpack.c.l.b16 %v8674
        %v8693 = vpack.c.b16 %v8692, %v8691
        %v8696 = vsel %vm3499, %v8665, 0
        %8698 = vmatprep.subr.bf16.mxu0 0
        %8699 = vmatpush1.bf16.msra.mxu0 0
        %8700 = vmatprep.subr.bf16.mxu0 0
        %8701 = vmatpush1.bf16.msra.mxu0 0
        %8702 = vmatprep.subr.bf16.mxu0 0
        %8703 = vmatpush1.bf16.msra.mxu0 0
        %8704 = vmatprep.subr.bf16.mxu0 0
        %8705 = vmatpush1.bf16.msra.mxu0 0
        %8706 = vmatprep.subr.bf16.mxu0 0
        %8707 = vmatpush1.bf16.msra.mxu0 0
        %8708 = vmatprep.subr.bf16.mxu0 0
        %8709 = vmatpush1.bf16.msra.mxu0 0
        %8710 = vmatprep.subr.bf16.mxu0 0
        %8711 = vmatpush1.bf16.msra.mxu0 0
        %8712 = vmatprep.subr.bf16.mxu0 0
        %8713 = vmatpush1.bf16.msra.mxu0 %v8693
        %8714 = vmatprep.subr.bf16.mxu0 0
        %8715 = vmatpush2.bf16.msra.mxu0 0
        %8716 = vmatprep.subr.bf16.mxu0 0
        %8717 = vmatpush2.bf16.msra.mxu0 0
        %8718 = vmatprep.subr.bf16.mxu0 0
        %8719 = vmatpush2.bf16.msra.mxu0 0
        %8720 = vmatprep.subr.bf16.mxu0 0
        %8721 = vmatpush2.bf16.msra.mxu0 0
        %8722 = vmatprep.subr.bf16.mxu0 0
        %8723 = vmatpush2.bf16.msra.mxu0 0
        %8724 = vmatprep.subr.bf16.mxu0 0
        %8725 = vmatpush2.bf16.msra.mxu0 0
        %8726 = vmatprep.subr.bf16.mxu0 0
        %8727 = vmatpush2.bf16.msra.mxu0 0
        %8728 = vmatprep.subr.bf16.mxu0 0
        %8729 = vmatpush2.bf16.msra.mxu0 0
        %8730 = vmatprep.mubr.bf16.mxu0 0
        %8731 = vmatmul.mubr.bf16.gmra.mxu0 %v8696
        %v8732 = vpop.f32.mrf.mxu0
        %v8733 = vadd.f32 0.0, %v8732
        %v8734 = vpop.f32.mrf.mxu0
        %v8735 = vpop.f32.mrf.mxu0
        %v8736 = vpop.f32.mrf.mxu0
        %8737 = vdwg.mxu0
        %v8740 = vunpack.c.l.b16 %v8675
        %v8741 = vunpack.c.l.b16 %v8676
        %v8742 = vpack.c.b16 %v8741, %v8740
        %v8745 = vsel %vm3499, %v8666, 0
        %8747 = vmatprep.subr.bf16.mxu0 0
        %8748 = vmatpush1.bf16.msra.mxu0 0
        %8749 = vmatprep.subr.bf16.mxu0 0
        %8750 = vmatpush1.bf16.msra.mxu0 0
        %8751 = vmatprep.subr.bf16.mxu0 0
        %8752 = vmatpush1.bf16.msra.mxu0 0
        %8753 = vmatprep.subr.bf16.mxu0 0
        %8754 = vmatpush1.bf16.msra.mxu0 0
        %8755 = vmatprep.subr.bf16.mxu0 0
        %8756 = vmatpush1.bf16.msra.mxu0 0
        %8757 = vmatprep.subr.bf16.mxu0 0
        %8758 = vmatpush1.bf16.msra.mxu0 0
        %8759 = vmatprep.subr.bf16.mxu0 0
        %8760 = vmatpush1.bf16.msra.mxu0 0
        %8761 = vmatprep.subr.bf16.mxu0 0
        %8762 = vmatpush1.bf16.msra.mxu0 %v8742
        %8763 = vmatprep.subr.bf16.mxu0 0
        %8764 = vmatpush2.bf16.msra.mxu0 0
        %8765 = vmatprep.subr.bf16.mxu0 0
        %8766 = vmatpush2.bf16.msra.mxu0 0
        %8767 = vmatprep.subr.bf16.mxu0 0
        %8768 = vmatpush2.bf16.msra.mxu0 0
        %8769 = vmatprep.subr.bf16.mxu0 0
        %8770 = vmatpush2.bf16.msra.mxu0 0
        %8771 = vmatprep.subr.bf16.mxu0 0
        %8772 = vmatpush2.bf16.msra.mxu0 0
        %8773 = vmatprep.subr.bf16.mxu0 0
        %8774 = vmatpush2.bf16.msra.mxu0 0
        %8775 = vmatprep.subr.bf16.mxu0 0
        %8776 = vmatpush2.bf16.msra.mxu0 0
        %8777 = vmatprep.subr.bf16.mxu0 0
        %8778 = vmatpush2.bf16.msra.mxu0 0
        %8779 = vmatprep.mubr.bf16.mxu0 0
        %8780 = vmatmul.mubr.bf16.gmra.mxu0 %v8745
        %v8781 = vpop.f32.mrf.mxu0
        %v8782 = vadd.f32 0.0, %v8781
        %v8783 = vpop.f32.mrf.mxu0
        %v8784 = vpop.f32.mrf.mxu0
        %v8785 = vpop.f32.mrf.mxu0
        %8786 = vdwg.mxu0
        %v8789 = vunpack.c.l.b16 %v8677
        %v8790 = vunpack.c.l.b16 %v8678
        %v8791 = vpack.c.b16 %v8790, %v8789
        %v8794 = vsel %vm3499, %v8667, 0
        %8796 = vmatprep.subr.bf16.mxu0 0
        %8797 = vmatpush1.bf16.msra.mxu0 0
        %8798 = vmatprep.subr.bf16.mxu0 0
        %8799 = vmatpush1.bf16.msra.mxu0 0
        %8800 = vmatprep.subr.bf16.mxu0 0
        %8801 = vmatpush1.bf16.msra.mxu0 0
        %8802 = vmatprep.subr.bf16.mxu0 0
        %8803 = vmatpush1.bf16.msra.mxu0 0
        %8804 = vmatprep.subr.bf16.mxu0 0
        %8805 = vmatpush1.bf16.msra.mxu0 0
        %8806 = vmatprep.subr.bf16.mxu0 0
        %8807 = vmatpush1.bf16.msra.mxu0 0
        %8808 = vmatprep.subr.bf16.mxu0 0
        %8809 = vmatpush1.bf16.msra.mxu0 0
        %8810 = vmatprep.subr.bf16.mxu0 0
        %8811 = vmatpush1.bf16.msra.mxu0 %v8791
        %8812 = vmatprep.subr.bf16.mxu0 0
        %8813 = vmatpush2.bf16.msra.mxu0 0
        %8814 = vmatprep.subr.bf16.mxu0 0
        %8815 = vmatpush2.bf16.msra.mxu0 0
        %8816 = vmatprep.subr.bf16.mxu0 0
        %8817 = vmatpush2.bf16.msra.mxu0 0
        %8818 = vmatprep.subr.bf16.mxu0 0
        %8819 = vmatpush2.bf16.msra.mxu0 0
        %8820 = vmatprep.subr.bf16.mxu0 0
        %8821 = vmatpush2.bf16.msra.mxu0 0
        %8822 = vmatprep.subr.bf16.mxu0 0
        %8823 = vmatpush2.bf16.msra.mxu0 0
        %8824 = vmatprep.subr.bf16.mxu0 0
        %8825 = vmatpush2.bf16.msra.mxu0 0
        %8826 = vmatprep.subr.bf16.mxu0 0
        %8827 = vmatpush2.bf16.msra.mxu0 0
        %8828 = vmatprep.mubr.bf16.mxu0 0
        %8829 = vmatmul.mubr.bf16.gmra.mxu0 %v8794
        %v8830 = vpop.f32.mrf.mxu0
        %v8831 = vadd.f32 0.0, %v8830
        %v8832 = vpop.f32.mrf.mxu0
        %v8833 = vpop.f32.mrf.mxu0
        %v8834 = vpop.f32.mrf.mxu0
        %8835 = vdwg.mxu0
        %v8838 = vunpack.c.l.b16 %v8679
        %v8839 = vunpack.c.l.b16 %v8680
        %v8840 = vpack.c.b16 %v8839, %v8838
        %v8843 = vsel %vm3499, %v8668, 0
        %8845 = vmatprep.subr.bf16.mxu0 0
        %8846 = vmatpush1.bf16.msra.mxu0 0
        %8847 = vmatprep.subr.bf16.mxu0 0
        %8848 = vmatpush1.bf16.msra.mxu0 0
        %8849 = vmatprep.subr.bf16.mxu0 0
        %8850 = vmatpush1.bf16.msra.mxu0 0
        %8851 = vmatprep.subr.bf16.mxu0 0
        %8852 = vmatpush1.bf16.msra.mxu0 0
        %8853 = vmatprep.subr.bf16.mxu0 0
        %8854 = vmatpush1.bf16.msra.mxu0 0
        %8855 = vmatprep.subr.bf16.mxu0 0
        %8856 = vmatpush1.bf16.msra.mxu0 0
        %8857 = vmatprep.subr.bf16.mxu0 0
        %8858 = vmatpush1.bf16.msra.mxu0 0
        %8859 = vmatprep.subr.bf16.mxu0 0
        %8860 = vmatpush1.bf16.msra.mxu0 %v8840
        %8861 = vmatprep.subr.bf16.mxu0 0
        %8862 = vmatpush2.bf16.msra.mxu0 0
        %8863 = vmatprep.subr.bf16.mxu0 0
        %8864 = vmatpush2.bf16.msra.mxu0 0
        %8865 = vmatprep.subr.bf16.mxu0 0
        %8866 = vmatpush2.bf16.msra.mxu0 0
        %8867 = vmatprep.subr.bf16.mxu0 0
        %8868 = vmatpush2.bf16.msra.mxu0 0
        %8869 = vmatprep.subr.bf16.mxu0 0
        %8870 = vmatpush2.bf16.msra.mxu0 0
        %8871 = vmatprep.subr.bf16.mxu0 0
        %8872 = vmatpush2.bf16.msra.mxu0 0
        %8873 = vmatprep.subr.bf16.mxu0 0
        %8874 = vmatpush2.bf16.msra.mxu0 0
        %8875 = vmatprep.subr.bf16.mxu0 0
        %8876 = vmatpush2.bf16.msra.mxu0 0
        %8877 = vmatprep.mubr.bf16.mxu0 0
        %8878 = vmatmul.mubr.bf16.gmra.mxu0 %v8843
        %v8879 = vpop.f32.mrf.mxu0
        %v8880 = vadd.f32 0.0, %v8879
        %v8881 = vpop.f32.mrf.mxu0
        %v8882 = vpop.f32.mrf.mxu0
        %v8883 = vpop.f32.mrf.mxu0
        %8884 = vdwg.mxu0
        %v8887 = vunpack.c.l.b16 %v8681
        %v8888 = vunpack.c.l.b16 %v8682
        %v8889 = vpack.c.b16 %v8888, %v8887
        %v8892 = vsel %vm3499, %v8669, 0
        %8894 = vmatprep.subr.bf16.mxu0 0
        %8895 = vmatpush1.bf16.msra.mxu0 0
        %8896 = vmatprep.subr.bf16.mxu0 0
        %8897 = vmatpush1.bf16.msra.mxu0 0
        %8898 = vmatprep.subr.bf16.mxu0 0
        %8899 = vmatpush1.bf16.msra.mxu0 0
        %8900 = vmatprep.subr.bf16.mxu0 0
        %8901 = vmatpush1.bf16.msra.mxu0 0
        %8902 = vmatprep.subr.bf16.mxu0 0
        %8903 = vmatpush1.bf16.msra.mxu0 0
        %8904 = vmatprep.subr.bf16.mxu0 0
        %8905 = vmatpush1.bf16.msra.mxu0 0
        %8906 = vmatprep.subr.bf16.mxu0 0
        %8907 = vmatpush1.bf16.msra.mxu0 0
        %8908 = vmatprep.subr.bf16.mxu0 0
        %8909 = vmatpush1.bf16.msra.mxu0 %v8889
        %8910 = vmatprep.subr.bf16.mxu0 0
        %8911 = vmatpush2.bf16.msra.mxu0 0
        %8912 = vmatprep.subr.bf16.mxu0 0
        %8913 = vmatpush2.bf16.msra.mxu0 0
        %8914 = vmatprep.subr.bf16.mxu0 0
        %8915 = vmatpush2.bf16.msra.mxu0 0
        %8916 = vmatprep.subr.bf16.mxu0 0
        %8917 = vmatpush2.bf16.msra.mxu0 0
        %8918 = vmatprep.subr.bf16.mxu0 0
        %8919 = vmatpush2.bf16.msra.mxu0 0
        %8920 = vmatprep.subr.bf16.mxu0 0
        %8921 = vmatpush2.bf16.msra.mxu0 0
        %8922 = vmatprep.subr.bf16.mxu0 0
        %8923 = vmatpush2.bf16.msra.mxu0 0
        %8924 = vmatprep.subr.bf16.mxu0 0
        %8925 = vmatpush2.bf16.msra.mxu0 0
        %8926 = vmatprep.mubr.bf16.mxu0 0
        %8927 = vmatmul.mubr.bf16.gmra.mxu0 %v8892
        %v8928 = vpop.f32.mrf.mxu0
        %v8929 = vadd.f32 0.0, %v8928
        %v8930 = vpop.f32.mrf.mxu0
        %v8931 = vpop.f32.mrf.mxu0
        %v8932 = vpop.f32.mrf.mxu0
        %8933 = vdwg.mxu0
        %v8936 = vunpack.c.l.b16 %v8683
        %v8937 = vunpack.c.l.b16 %v8684
        %v8938 = vpack.c.b16 %v8937, %v8936
        %v8941 = vsel %vm3499, %v8670, 0
        %8943 = vmatprep.subr.bf16.mxu0 0
        %8944 = vmatpush1.bf16.msra.mxu0 0
        %8945 = vmatprep.subr.bf16.mxu0 0
        %8946 = vmatpush1.bf16.msra.mxu0 0
        %8947 = vmatprep.subr.bf16.mxu0 0
        %8948 = vmatpush1.bf16.msra.mxu0 0
        %8949 = vmatprep.subr.bf16.mxu0 0
        %8950 = vmatpush1.bf16.msra.mxu0 0
        %8951 = vmatprep.subr.bf16.mxu0 0
        %8952 = vmatpush1.bf16.msra.mxu0 0
        %8953 = vmatprep.subr.bf16.mxu0 0
        %8954 = vmatpush1.bf16.msra.mxu0 0
        %8955 = vmatprep.subr.bf16.mxu0 0
        %8956 = vmatpush1.bf16.msra.mxu0 0
        %8957 = vmatprep.subr.bf16.mxu0 0
        %8958 = vmatpush1.bf16.msra.mxu0 %v8938
        %8959 = vmatprep.subr.bf16.mxu0 0
        %8960 = vmatpush2.bf16.msra.mxu0 0
        %8961 = vmatprep.subr.bf16.mxu0 0
        %8962 = vmatpush2.bf16.msra.mxu0 0
        %8963 = vmatprep.subr.bf16.mxu0 0
        %8964 = vmatpush2.bf16.msra.mxu0 0
        %8965 = vmatprep.subr.bf16.mxu0 0
        %8966 = vmatpush2.bf16.msra.mxu0 0
        %8967 = vmatprep.subr.bf16.mxu0 0
        %8968 = vmatpush2.bf16.msra.mxu0 0
        %8969 = vmatprep.subr.bf16.mxu0 0
        %8970 = vmatpush2.bf16.msra.mxu0 0
        %8971 = vmatprep.subr.bf16.mxu0 0
        %8972 = vmatpush2.bf16.msra.mxu0 0
        %8973 = vmatprep.subr.bf16.mxu0 0
        %8974 = vmatpush2.bf16.msra.mxu0 0
        %8975 = vmatprep.mubr.bf16.mxu0 0
        %8976 = vmatmul.mubr.bf16.gmra.mxu0 %v8941
        %v8977 = vpop.f32.mrf.mxu0
        %v8978 = vadd.f32 0.0, %v8977
        %v8979 = vpop.f32.mrf.mxu0
        %v8980 = vpop.f32.mrf.mxu0
        %v8981 = vpop.f32.mrf.mxu0
        %8982 = vdwg.mxu0
        %v8985 = vunpack.c.l.b16 %v8685
        %v8986 = vunpack.c.l.b16 %v8686
        %v8987 = vpack.c.b16 %v8986, %v8985
        %v8990 = vsel %vm3499, %v8671, 0
        %8992 = vmatprep.subr.bf16.mxu0 0
        %8993 = vmatpush1.bf16.msra.mxu0 0
        %8994 = vmatprep.subr.bf16.mxu0 0
        %8995 = vmatpush1.bf16.msra.mxu0 0
        %8996 = vmatprep.subr.bf16.mxu0 0
        %8997 = vmatpush1.bf16.msra.mxu0 0
        %8998 = vmatprep.subr.bf16.mxu0 0
        %8999 = vmatpush1.bf16.msra.mxu0 0
        %9000 = vmatprep.subr.bf16.mxu0 0
        %9001 = vmatpush1.bf16.msra.mxu0 0
        %9002 = vmatprep.subr.bf16.mxu0 0
        %9003 = vmatpush1.bf16.msra.mxu0 0
        %9004 = vmatprep.subr.bf16.mxu0 0
        %9005 = vmatpush1.bf16.msra.mxu0 0
        %9006 = vmatprep.subr.bf16.mxu0 0
        %9007 = vmatpush1.bf16.msra.mxu0 %v8987
        %9008 = vmatprep.subr.bf16.mxu0 0
        %9009 = vmatpush2.bf16.msra.mxu0 0
        %9010 = vmatprep.subr.bf16.mxu0 0
        %9011 = vmatpush2.bf16.msra.mxu0 0
        %9012 = vmatprep.subr.bf16.mxu0 0
        %9013 = vmatpush2.bf16.msra.mxu0 0
        %9014 = vmatprep.subr.bf16.mxu0 0
        %9015 = vmatpush2.bf16.msra.mxu0 0
        %9016 = vmatprep.subr.bf16.mxu0 0
        %9017 = vmatpush2.bf16.msra.mxu0 0
        %9018 = vmatprep.subr.bf16.mxu0 0
        %9019 = vmatpush2.bf16.msra.mxu0 0
        %9020 = vmatprep.subr.bf16.mxu0 0
        %9021 = vmatpush2.bf16.msra.mxu0 0
        %9022 = vmatprep.subr.bf16.mxu0 0
        %9023 = vmatpush2.bf16.msra.mxu0 0
        %9024 = vmatprep.mubr.bf16.mxu0 0
        %9025 = vmatmul.mubr.bf16.gmra.mxu0 %v8990
        %v9026 = vpop.f32.mrf.mxu0
        %v9027 = vadd.f32 0.0, %v9026
        %v9028 = vpop.f32.mrf.mxu0
        %v9029 = vpop.f32.mrf.mxu0
        %v9030 = vpop.f32.mrf.mxu0
        %9031 = vdwg.mxu0
        %v9034 = vunpack.c.l.b16 %v8687
        %v9035 = vunpack.c.l.b16 %v8688
        %v9036 = vpack.c.b16 %v9035, %v9034
        %v9039 = vsel %vm3499, %v8672, 0
        %9041 = vmatprep.subr.bf16.mxu0 0
        %9042 = vmatpush1.bf16.msra.mxu0 0
        %9043 = vmatprep.subr.bf16.mxu0 0
        %9044 = vmatpush1.bf16.msra.mxu0 0
        %9045 = vmatprep.subr.bf16.mxu0 0
        %9046 = vmatpush1.bf16.msra.mxu0 0
        %9047 = vmatprep.subr.bf16.mxu0 0
        %9048 = vmatpush1.bf16.msra.mxu0 0
        %9049 = vmatprep.subr.bf16.mxu0 0
        %9050 = vmatpush1.bf16.msra.mxu0 0
        %9051 = vmatprep.subr.bf16.mxu0 0
        %9052 = vmatpush1.bf16.msra.mxu0 0
        %9053 = vmatprep.subr.bf16.mxu0 0
        %9054 = vmatpush1.bf16.msra.mxu0 0
        %9055 = vmatprep.subr.bf16.mxu0 0
        %9056 = vmatpush1.bf16.msra.mxu0 %v9036
        %9057 = vmatprep.subr.bf16.mxu0 0
        %9058 = vmatpush2.bf16.msra.mxu0 0
        %9059 = vmatprep.subr.bf16.mxu0 0
        %9060 = vmatpush2.bf16.msra.mxu0 0
        %9061 = vmatprep.subr.bf16.mxu0 0
        %9062 = vmatpush2.bf16.msra.mxu0 0
        %9063 = vmatprep.subr.bf16.mxu0 0
        %9064 = vmatpush2.bf16.msra.mxu0 0
        %9065 = vmatprep.subr.bf16.mxu0 0
        %9066 = vmatpush2.bf16.msra.mxu0 0
        %9067 = vmatprep.subr.bf16.mxu0 0
        %9068 = vmatpush2.bf16.msra.mxu0 0
        %9069 = vmatprep.subr.bf16.mxu0 0
        %9070 = vmatpush2.bf16.msra.mxu0 0
        %9071 = vmatprep.subr.bf16.mxu0 0
        %9072 = vmatpush2.bf16.msra.mxu0 0
        %9073 = vmatprep.mubr.bf16.mxu0 0
        %9074 = vmatmul.mubr.bf16.gmra.mxu0 %v9039
        %v9075 = vpop.f32.mrf.mxu0
        %v9076 = vadd.f32 0.0, %v9075
        %v9077 = vpop.f32.mrf.mxu0
        %v9078 = vpop.f32.mrf.mxu0
        %v9079 = vpop.f32.mrf.mxu0
        %9080 = vdwg.mxu0
        %v9081 = vadd.f32 %v8733, %v8782
        %v9082 = vadd.f32 %v9081, %v8831
        %v9083 = vadd.f32 %v9082, %v8880
        %v9084 = vadd.f32 %v9083, %v8929
        %v9085 = vadd.f32 %v9084, %v8978
        %v9086 = vadd.f32 %v9085, %v9027
        %v9087 = vadd.f32 %v9086, %v9076
        %v9088 = vld [vmem:[%s20] sm:$0x1]
        %v9090 = vlaneseq
        %v9091 = vshrl.u32 %v9090, 7
        %v9092 = vsub.s32 0, %v9091
        %v9093 = vrot.slane %v9088, %v9092
        %v9095 = vadd.f32 %v9087, %v9093
        %v9096 = vadd.f32 %v5143, %v9095
        %9097 = vadd.xlane.f32.xlu0 %v9096
        %v9098 = vpop.xlane.xlu0 %9097
        %v9099 = vmul.f32 %v9098, %v4776
        %v9100 = vsub.f32 %v9096, %v9099
        %v9101 = vmul.f32 %v9100, %v9100
        %9102 = vadd.xlane.f32.xlu0 %v9101
        %v9103 = vpop.xlane.xlu0 %9102
        %v9104 = vmul.f32 %v9103, %v4776
        %v9105 = vadd.f32 %v9104, 1e-05
        %v9106 = vrsqrt.pop %v9105
        %v9107 = vmul.f32 %v9100, %v9106
        %v9108 = vmul.f32 %v9107, %v4790
        %v9109 = vadd.f32 %v9108, %v4797
        %v9110 = vpack.c.bf16 %v9109, %v9109
        %v9111 = vld [vmem:[%s21] sm:$0xff]
        %v9112 = vld [vmem:[%s21 + $0x8] sm:$0xff]
        %v9113 = vld [vmem:[%s21 + $0x10] sm:$0xff]
        %v9114 = vld [vmem:[%s21 + $0x18] sm:$0xff]
        %v9115 = vld [vmem:[%s21 + $0x20] sm:$0xff]
        %v9116 = vld [vmem:[%s21 + $0x28] sm:$0xff]
        %v9117 = vld [vmem:[%s21 + $0x30] sm:$0xff]
        %v9118 = vld [vmem:[%s21 + $0x38] sm:$0xff]
        %v9119 = vld [vmem:[%s21 + $0x40] sm:$0xff]
        %v9120 = vld [vmem:[%s21 + $0x48] sm:$0xff]
        %v9121 = vld [vmem:[%s21 + $0x50] sm:$0xff]
        %v9122 = vld [vmem:[%s21 + $0x58] sm:$0xff]
        %v9123 = vld [vmem:[%s21 + $0x60] sm:$0xff]
        %v9124 = vld [vmem:[%s21 + $0x68] sm:$0xff]
        %v9125 = vld [vmem:[%s21 + $0x70] sm:$0xff]
        %v9126 = vld [vmem:[%s21 + $0x78] sm:$0xff]
        %v9127 = vld [vmem:[%s22] sm:$0x3]
        %v9129 = vlaneseq
        %v9130 = vshrl.u32 %v9129, 7
        %v9131 = vsub.s32 0, %v9130
        %v9132 = vrot.slane %v9127, %v9131
        %v9133 = vlaneseq
        %v9134 = vshrl.u32 %v9133, 7
        %v9135 = vsub.s32 1, %v9134
        %v9136 = vrot.slane %v9127, %v9135
        %v9155 = vunpack.c.l.b16 %v9111
        %v9156 = vunpack.c.h.b16 %v9111
        %v9157 = vunpack.c.l.b16 %v9112
        %v9158 = vunpack.c.h.b16 %v9112
        %v9159 = vunpack.c.l.b16 %v9113
        %v9160 = vunpack.c.h.b16 %v9113
        %v9161 = vunpack.c.l.b16 %v9114
        %v9162 = vunpack.c.h.b16 %v9114
        %v9163 = vunpack.c.l.b16 %v9115
        %v9164 = vunpack.c.h.b16 %v9115
        %v9165 = vunpack.c.l.b16 %v9116
        %v9166 = vunpack.c.h.b16 %v9116
        %v9167 = vunpack.c.l.b16 %v9117
        %v9168 = vunpack.c.h.b16 %v9117
        %v9169 = vunpack.c.l.b16 %v9118
        %v9170 = vunpack.c.h.b16 %v9118
        %v9171 = vunpack.c.l.b16 %v9119
        %v9172 = vunpack.c.h.b16 %v9119
        %v9173 = vunpack.c.l.b16 %v9120
        %v9174 = vunpack.c.h.b16 %v9120
        %v9175 = vunpack.c.l.b16 %v9121
        %v9176 = vunpack.c.h.b16 %v9121
        %v9177 = vunpack.c.l.b16 %v9122
        %v9178 = vunpack.c.h.b16 %v9122
        %v9179 = vunpack.c.l.b16 %v9123
        %v9180 = vunpack.c.h.b16 %v9123
        %v9181 = vunpack.c.l.b16 %v9124
        %v9182 = vunpack.c.h.b16 %v9124
        %v9183 = vunpack.c.l.b16 %v9125
        %v9184 = vunpack.c.h.b16 %v9125
        %v9185 = vunpack.c.l.b16 %v9126
        %v9186 = vunpack.c.h.b16 %v9126
        %v9187 = vpack.c.b16 %v9157, %v9155
        %v9188 = vpack.c.b16 %v9158, %v9156
        %v9189 = vpack.c.b16 %v9161, %v9159
        %v9190 = vpack.c.b16 %v9162, %v9160
        %v9191 = vpack.c.b16 %v9165, %v9163
        %v9192 = vpack.c.b16 %v9166, %v9164
        %v9193 = vpack.c.b16 %v9169, %v9167
        %v9194 = vpack.c.b16 %v9170, %v9168
        %v9195 = vpack.c.b16 %v9173, %v9171
        %v9196 = vpack.c.b16 %v9174, %v9172
        %v9197 = vpack.c.b16 %v9177, %v9175
        %v9198 = vpack.c.b16 %v9178, %v9176
        %v9199 = vpack.c.b16 %v9181, %v9179
        %v9200 = vpack.c.b16 %v9182, %v9180
        %v9201 = vpack.c.b16 %v9185, %v9183
        %v9202 = vpack.c.b16 %v9186, %v9184
        %9219 = vmatprep.subr.bf16.mxu0 %v9202
        %9220 = vmatpush1.bf16.msra.mxu0 %v9201
        %9221 = vmatprep.subr.bf16.mxu0 %v9200
        %9222 = vmatpush1.bf16.msra.mxu0 %v9199
        %9223 = vmatprep.subr.bf16.mxu0 %v9198
        %9224 = vmatpush1.bf16.msra.mxu0 %v9197
        %9225 = vmatprep.subr.bf16.mxu0 %v9196
        %9226 = vmatpush1.bf16.msra.mxu0 %v9195
        %9227 = vmatprep.subr.bf16.mxu0 %v9194
        %9228 = vmatpush1.bf16.msra.mxu0 %v9193
        %9229 = vmatprep.subr.bf16.mxu0 %v9192
        %9230 = vmatpush1.bf16.msra.mxu0 %v9191
        %9231 = vmatprep.subr.bf16.mxu0 %v9190
        %9232 = vmatpush1.bf16.msra.mxu0 %v9189
        %9233 = vmatprep.subr.bf16.mxu0 %v9188
        %9234 = vmatpush1.bf16.msra.mxu0 %v9187
        %9235 = vmatprep.subr.bf16.mxu0 0
        %9236 = vmatpush2.bf16.msra.mxu0 0
        %9237 = vmatprep.subr.bf16.mxu0 0
        %9238 = vmatpush2.bf16.msra.mxu0 0
        %9239 = vmatprep.subr.bf16.mxu0 0
        %9240 = vmatpush2.bf16.msra.mxu0 0
        %9241 = vmatprep.subr.bf16.mxu0 0
        %9242 = vmatpush2.bf16.msra.mxu0 0
        %9243 = vmatprep.subr.bf16.mxu0 0
        %9244 = vmatpush2.bf16.msra.mxu0 0
        %9245 = vmatprep.subr.bf16.mxu0 0
        %9246 = vmatpush2.bf16.msra.mxu0 0
        %9247 = vmatprep.subr.bf16.mxu0 0
        %9248 = vmatpush2.bf16.msra.mxu0 0
        %9249 = vmatprep.subr.bf16.mxu0 0
        %9250 = vmatpush2.bf16.msra.mxu0 0
        %9251 = vmatprep.mubr.bf16.mxu0 0
        %9252 = vmatmul.mubr.bf16.gmra.mxu0 %v9110
        %v9253 = vpop.f32.mrf.mxu0
        %v9254 = vadd.f32 %v9132, %v9253
        %v9255 = vpop.f32.mrf.mxu0
        %v9256 = vadd.f32 %v9136, %v9255
        %v9257 = vpop.f32.mrf.mxu0
        %v9258 = vpop.f32.mrf.mxu0
        %9259 = vdwg.mxu0
        %v9260 = vmax.f32 %v9254, 0.0
        %v9261 = vmax.f32 %v9256, 0.0
        %v9262 = vpack.c.bf16 %v9260, %v9260
        %v9263 = vpack.c.bf16 %v9261, %v9261
        %v9264 = vld [vmem:[%s23] sm:$0xf]
        %v9265 = vld [vmem:[%s23 + $0x4] sm:$0xf]
        %v9266 = vld [vmem:[%s23 + $0x8] sm:$0xf]
        %v9267 = vld [vmem:[%s23 + $0xc] sm:$0xf]
        %v9268 = vld [vmem:[%s23 + $0x10] sm:$0xf]
        %v9269 = vld [vmem:[%s23 + $0x14] sm:$0xf]
        %v9270 = vld [vmem:[%s23 + $0x18] sm:$0xf]
        %v9271 = vld [vmem:[%s23 + $0x1c] sm:$0xf]
        %v9272 = vld [vmem:[%s23 + $0x20] sm:$0xf]
        %v9273 = vld [vmem:[%s23 + $0x24] sm:$0xf]
        %v9274 = vld [vmem:[%s23 + $0x28] sm:$0xf]
        %v9275 = vld [vmem:[%s23 + $0x2c] sm:$0xf]
        %v9276 = vld [vmem:[%s23 + $0x30] sm:$0xf]
        %v9277 = vld [vmem:[%s23 + $0x34] sm:$0xf]
        %v9278 = vld [vmem:[%s23 + $0x38] sm:$0xf]
        %v9279 = vld [vmem:[%s23 + $0x3c] sm:$0xf]
        %v9280 = vld [vmem:[%s23 + $0x40] sm:$0xf]
        %v9281 = vld [vmem:[%s23 + $0x44] sm:$0xf]
        %v9282 = vld [vmem:[%s23 + $0x48] sm:$0xf]
        %v9283 = vld [vmem:[%s23 + $0x4c] sm:$0xf]
        %v9284 = vld [vmem:[%s23 + $0x50] sm:$0xf]
        %v9285 = vld [vmem:[%s23 + $0x54] sm:$0xf]
        %v9286 = vld [vmem:[%s23 + $0x58] sm:$0xf]
        %v9287 = vld [vmem:[%s23 + $0x5c] sm:$0xf]
        %v9288 = vld [vmem:[%s23 + $0x60] sm:$0xf]
        %v9289 = vld [vmem:[%s23 + $0x64] sm:$0xf]
        %v9290 = vld [vmem:[%s23 + $0x68] sm:$0xf]
        %v9291 = vld [vmem:[%s23 + $0x6c] sm:$0xf]
        %v9292 = vld [vmem:[%s23 + $0x70] sm:$0xf]
        %v9293 = vld [vmem:[%s23 + $0x74] sm:$0xf]
        %v9294 = vld [vmem:[%s23 + $0x78] sm:$0xf]
        %v9295 = vld [vmem:[%s23 + $0x7c] sm:$0xf]
        %v9296 = vld [vmem:[%s24] sm:$0x1]
        %v9298 = vlaneseq
        %v9299 = vshrl.u32 %v9298, 7
        %v9300 = vsub.s32 0, %v9299
        %v9301 = vrot.slane %v9296, %v9300
        %v9335 = vunpack.c.l.b16 %v9264
        %v9336 = vunpack.c.l.b16 %v9265
        %v9337 = vunpack.c.l.b16 %v9266
        %v9338 = vunpack.c.l.b16 %v9267
        %v9339 = vunpack.c.l.b16 %v9268
        %v9340 = vunpack.c.l.b16 %v9269
        %v9341 = vunpack.c.l.b16 %v9270
        %v9342 = vunpack.c.l.b16 %v9271
        %v9343 = vunpack.c.l.b16 %v9272
        %v9344 = vunpack.c.l.b16 %v9273
        %v9345 = vunpack.c.l.b16 %v9274
        %v9346 = vunpack.c.l.b16 %v9275
        %v9347 = vunpack.c.l.b16 %v9276
        %v9348 = vunpack.c.l.b16 %v9277
        %v9349 = vunpack.c.l.b16 %v9278
        %v9350 = vunpack.c.l.b16 %v9279
        %v9351 = vunpack.c.l.b16 %v9280
        %v9352 = vunpack.c.l.b16 %v9281
        %v9353 = vunpack.c.l.b16 %v9282
        %v9354 = vunpack.c.l.b16 %v9283
        %v9355 = vunpack.c.l.b16 %v9284
        %v9356 = vunpack.c.l.b16 %v9285
        %v9357 = vunpack.c.l.b16 %v9286
        %v9358 = vunpack.c.l.b16 %v9287
        %v9359 = vunpack.c.l.b16 %v9288
        %v9360 = vunpack.c.l.b16 %v9289
        %v9361 = vunpack.c.l.b16 %v9290
        %v9362 = vunpack.c.l.b16 %v9291
        %v9363 = vunpack.c.l.b16 %v9292
        %v9364 = vunpack.c.l.b16 %v9293
        %v9365 = vunpack.c.l.b16 %v9294
        %v9366 = vunpack.c.l.b16 %v9295
        %v9367 = vpack.c.b16 %v9336, %v9335
        %v9368 = vpack.c.b16 %v9338, %v9337
        %v9369 = vpack.c.b16 %v9340, %v9339
        %v9370 = vpack.c.b16 %v9342, %v9341
        %v9371 = vpack.c.b16 %v9344, %v9343
        %v9372 = vpack.c.b16 %v9346, %v9345
        %v9373 = vpack.c.b16 %v9348, %v9347
        %v9374 = vpack.c.b16 %v9350, %v9349
        %v9375 = vpack.c.b16 %v9352, %v9351
        %v9376 = vpack.c.b16 %v9354, %v9353
        %v9377 = vpack.c.b16 %v9356, %v9355
        %v9378 = vpack.c.b16 %v9358, %v9357
        %v9379 = vpack.c.b16 %v9360, %v9359
        %v9380 = vpack.c.b16 %v9362, %v9361
        %v9381 = vpack.c.b16 %v9364, %v9363
        %v9382 = vpack.c.b16 %v9366, %v9365
        %9399 = vmatprep.subr.bf16.mxu0 0
        %9400 = vmatpush1.bf16.msra.mxu0 %v9374
        %9401 = vmatprep.subr.bf16.mxu0 0
        %9402 = vmatpush1.bf16.msra.mxu0 %v9373
        %9403 = vmatprep.subr.bf16.mxu0 0
        %9404 = vmatpush1.bf16.msra.mxu0 %v9372
        %9405 = vmatprep.subr.bf16.mxu0 0
        %9406 = vmatpush1.bf16.msra.mxu0 %v9371
        %9407 = vmatprep.subr.bf16.mxu0 0
        %9408 = vmatpush1.bf16.msra.mxu0 %v9370
        %9409 = vmatprep.subr.bf16.mxu0 0
        %9410 = vmatpush1.bf16.msra.mxu0 %v9369
        %9411 = vmatprep.subr.bf16.mxu0 0
        %9412 = vmatpush1.bf16.msra.mxu0 %v9368
        %9413 = vmatprep.subr.bf16.mxu0 0
        %9414 = vmatpush1.bf16.msra.mxu0 %v9367
        %9415 = vmatprep.subr.bf16.mxu0 0
        %9416 = vmatpush2.bf16.msra.mxu0 %v9382
        %9417 = vmatprep.subr.bf16.mxu0 0
        %9418 = vmatpush2.bf16.msra.mxu0 %v9381
        %9419 = vmatprep.subr.bf16.mxu0 0
        %9420 = vmatpush2.bf16.msra.mxu0 %v9380
        %9421 = vmatprep.subr.bf16.mxu0 0
        %9422 = vmatpush2.bf16.msra.mxu0 %v9379
        %9423 = vmatprep.subr.bf16.mxu0 0
        %9424 = vmatpush2.bf16.msra.mxu0 %v9378
        %9425 = vmatprep.subr.bf16.mxu0 0
        %9426 = vmatpush2.bf16.msra.mxu0 %v9377
        %9427 = vmatprep.subr.bf16.mxu0 0
        %9428 = vmatpush2.bf16.msra.mxu0 %v9376
        %9429 = vmatprep.subr.bf16.mxu0 0
        %9430 = vmatpush2.bf16.msra.mxu0 %v9375
        %9431 = vmatprep.mubr.bf16.mxu0 %v9263
        %9432 = vmatmul.mubr.bf16.gmra.mxu0 %v9262
        %v9433 = vpop.f32.mrf.mxu0
        %v9434 = vadd.f32 %v9301, %v9433
        %v9435 = vpop.f32.mrf.mxu0
        %v9436 = vpop.f32.mrf.mxu0
        %v9437 = vpop.f32.mrf.mxu0
        %9438 = vdwg.mxu0
        %v9439 = vmax.f32 %v9434, 0.0
        %v9440 = vadd.f32 %v9109, %v9439
        %9441 = vadd.xlane.f32.xlu0 %v9440
        %v9442 = vpop.xlane.xlu0 %9441
        %v9443 = vmul.f32 %v9442, %v4776
        %v9444 = vsub.f32 %v9440, %v9443
        %v9445 = vmul.f32 %v9444, %v9444
        %9446 = vadd.xlane.f32.xlu0 %v9445
        %v9447 = vpop.xlane.xlu0 %9446
        %v9448 = vmul.f32 %v9447, %v4776
        %v9449 = vadd.f32 %v9448, 1e-05
        %v9450 = vrsqrt.pop %v9449
        %v9451 = vmul.f32 %v9444, %v9450
        %v9452 = vmul.f32 %v9451, %v4790
        %v9453 = vadd.f32 %v9452, %v4797
        %9454 = vst [vmem:[%s809] sm:$0xff] %v9453
        %s9455 = sand.u32 %s621, 1
        %s9456 = scalar_lea.sflag [#allocation3], %s9455
        %s9457 = sand.u32 %s621, 1
        %s9458 = smul.addr %s9457, 8
        %s9459 = scalar_lea.vmem [#allocation2], %s9458
        // Predicated region
        $region129: #{encoder_forward.1} parent=127 // pred_check
          %p9460 = pneg %p631
        $region130: #{encoder_forward.1} parent=127 // pred_check_branch
          %9462 = sbr.rel (%p9460) target = $region132
        $region131: #{encoder_forward.1} parent=127 // pred_region
          %s9464 = ssub.s32 128, 128
          %9465 = vsyncadd %s9456, %s9464
          %s9466 = smul.addr %s41, 128
          %s9467 = scalar_lea.hbm %s27, %s9466
          %s9469 = sshll.u32 %s9459, 4
          %s9470 = int_to_ptr.vmem [resolvable:$true] %s9469
          %9472 = dma.vmem_to_hbm [thread:$0]  %s9470, 128, %s9467, %s9456
        $region132: #{encoder_forward.1} parent=127 // pred_fallthru
          _
      $region128: #{encoder_forward.1} parent=5 // pred_fallthru
        _
      %p9473 = scmp.le.s32.totalorder 2, %s36
      // Predicated region
      $region133: #{encoder_forward.1} parent=5 // pred_check
        %p9474 = pneg %p9473
      $region134: #{encoder_forward.1} parent=5 // pred_check_branch
        %9476 = sbr.rel (%p9474) target = $region136
      $region135: #{encoder_forward.1} parent=5 // pred_region
        %s9477 = ssub.s32 %s36, 2
        // Predicated region
        $region137: #{encoder_forward.1} parent=135 // pred_check
          %p9478 = pneg %p637
        $region138: #{encoder_forward.1} parent=135 // pred_check_branch
          %9480 = sbr.rel (%p9478) target = $region140
        $region139: #{encoder_forward.1} parent=135 // pred_region
          %s9481 = sand.u32 %s622, 1
          %s9482 = scalar_lea.sflag [#allocation3], %s9481
          %s9483 = sand.u32 %s622, 1
          %s9484 = smul.addr %s9483, 8
          %s9485 = scalar_lea.vmem [#allocation2], %s9484
          %9486 = dma.done %s9482, 128
        $region140: #{encoder_forward.1} parent=135 // pred_fallthru
          _
      $region136: #{encoder_forward.1} parent=5 // pred_fallthru
        _
    $region6: #{encoder_forward.1} parent=1 // loop_footer
      %s40 = sadd.s32 1, %s36
    $region7: #{encoder_forward.1} parent=1 // loop_footer_branch
      %35 = sbr.rel target = $region3
    $region8: #{encoder_forward.1} parent=1 // loop_exit
      _
    %9487 = vsyncpa [#allocation3], 1
    %s9488 = scalar_lea.sflag [#allocation3], 1
    %9489 = vsyncpa %s9488, 1

</llo_original>
